<compile_context>
chip_gen: v7x
topology: tpu7x:2x2x1
jax: 0.10.0
libtpu: 0.0.40
codegen_flags: <defaults>
</compile_context>

<pallas_src>
import math
import functools

import jax
import jax.numpy as jnp
from jax.experimental import pallas as pl
from jax.experimental.pallas import tpu as pltpu


# ----------------------------- in-kernel helpers -----------------------------

def _erf(x):
    # Abramowitz & Stegun 7.1.26 polynomial, |err| < 1.5e-7: keeps PyTorch's *exact*
    # GELU semantics within f32 tolerance using only ops guaranteed to lower in Mosaic.
    # Kept in f32 (v5e has no bf16 VPU path, bf16 here would only add casts).
    a1, a2, a3, a4, a5 = 0.254829592, -0.284496736, 1.421413741, -1.453152027, 1.061405429
    p = 0.3275911
    sgn = jnp.where(x >= 0.0, 1.0, -1.0)
    ax = jnp.abs(x)
    t = 1.0 / (1.0 + p * ax)
    poly = ((((a5 * t + a4) * t + a3) * t + a2) * t + a1) * t
    return sgn * (1.0 - poly * jnp.exp(-ax * ax))


def _gelu_exact(x):
    # TODO(synk): switch to a tanh-based GELU (EUP) if the approximate variant is acceptable;
    # exact-erf is kept to match nn.GELU(approximate='none') semantics.
    return 0.5 * x * (1.0 + _erf(x * (1.0 / math.sqrt(2.0))))


def _layernorm(x, gamma, beta, eps=1e-5):
    mean = jnp.mean(x, axis=-1, keepdims=True)
    var = jnp.mean(jnp.square(x - mean), axis=-1, keepdims=True)
    return (x - mean) * jax.lax.rsqrt(var + eps) * gamma + beta


# --------------------------------- the kernel --------------------------------

def _vit_block_kernel(BB, N, H, HD,
                      x_ref, g1_ref, b1_ref, wq_ref, wk_ref, wv_ref,
                      wp_ref, bp_ref, g2_ref, b2_ref,
                      wfc1_ref, bf1_ref, wfc2_ref, bf2_ref,
                      o_ref):
    C = H * HD
    M = BB * N            # all tokens of this grid step as one matmul slab (big-M MXU rows)
    G = BB * H            # (batch, head) groups for attention
    scale = HD ** -0.5    # F.scaled_dot_product_attention default scale
    mm = wq_ref.dtype     # MXU operand dtype (f32 or bf16); accumulation is always f32

    x = x_ref[...].astype(jnp.float32)                                  # (M, C)

    # ---------------- attention branch: x + proj(MHSA(LN1(x))) ----------------
    h1 = _layernorm(x, g1_ref[0], b1_ref[0])
    h1m = h1.astype(mm)
    # Fold the softmax scale into Q here: (M, C) elements instead of (G, N, N) later.
    q = jnp.dot(h1m, wq_ref[...], preferred_element_type=jnp.float32) * scale   # (M, C)
    k = jnp.dot(h1m, wk_ref[...], preferred_element_type=jnp.float32)
    v = jnp.dot(h1m, wv_ref[...], preferred_element_type=jnp.float32)

    # Head-major groups g = b*H + h so the attention einsums are standard batched matmuls.
    # TODO(synk): Mosaic dot_general only reliably supports leading batch dims, so the
    # head-major relayout stays an explicit (tiny) transpose instead of a non-leading-batch
    # dot_general; at production C this is a one-time relayout dwarfed by the dense matmuls.
    def to_heads(t):                                                     # (M,C) -> (G,N,HD)
        return t.reshape(BB, N, H, HD).transpose(0, 2, 1, 3).reshape(G, N, HD)

    qg, kg, vg = to_heads(q), to_heads(k), to_heads(v)

    s = jnp.einsum('gnd,gmd->gnm', qg.astype(mm), kg.astype(mm),
                   preferred_element_type=jnp.float32)                   # (G, N, N)
    s = s - jnp.max(s, axis=-1, keepdims=True)
    e = jnp.exp(s)                                                       # unnormalized probs
    # Unnormalized weighted sum, then rescale the (G,N,HD) result in f32:
    # cheaper than normalizing the (G,N,N) probs whenever N > HD, and the
    # reciprocal rides the EUP slot instead of a VALU divide.
    og = jnp.einsum('gnm,gmd->gnd', e.astype(mm), vg.astype(mm),
                    preferred_element_type=jnp.float32)                  # (G, N, HD)
    og = og * pl.reciprocal(jnp.sum(e, axis=-1, keepdims=True), approx=True)
    attn = og.reshape(BB, H, N, HD).transpose(0, 2, 1, 3).reshape(M, C)  # back to (M, C)
    attn = jnp.dot(attn.astype(mm), wp_ref[...],
                   preferred_element_type=jnp.float32) + bp_ref[0]
    x1 = x + attn

    # ---------------- MLP branch: x1 + fc2(GELU(fc1(LN2(x1)))) ----------------
    h2 = _layernorm(x1, g2_ref[0], b2_ref[0])
    f1 = jnp.dot(h2.astype(mm), wfc1_ref[...],
                 preferred_element_type=jnp.float32) + bf1_ref[0]
    f1 = _gelu_exact(f1)
    f2 = jnp.dot(f1.astype(mm), wfc2_ref[...],
                 preferred_element_type=jnp.float32) + bf2_ref[0]

    # TODO(synk): at production C (>=768, multiple of 128) the store is already lane-dense;
    # at the toy C=64 an in-kernel repack to a 128-lane slab costs more than the masked store.
    o_ref[...] = (x1 + f2).astype(o_ref.dtype)


# --------------------------------- wrapper -----------------------------------

def vit_block_pallas(x, params, num_heads, *, matmul_dtype=jnp.float32, batch_block=None):
    B, N, C = x.shape
    HD = C // num_heads
    Hm = params['w_fc1'].shape[1]

    # batch_block = B  -> single grid step (best for the single-TC v5e/v6e).
    # batch_block = B//2 (or less) keeps >=2 parallel blocks for v7x's 2 TensorCores.
    BB = B if batch_block is None else batch_block
    assert B % BB == 0, "batch_block must divide B"
    num_blocks = B // BB
    M = BB * N

    # One (B*N, C) token slab: big-M matmuls instead of B separate M=N matmuls.
    xf = x.reshape(B * N, C)

    # Split QKV at trace time -> three dots, no lane-offset slicing inside the kernel.
    w_qkv = params['w_qkv']
    mm = jnp.dtype(matmul_dtype)
    wq = w_qkv[:, 0 * C:1 * C].astype(mm)
    wk = w_qkv[:, 1 * C:2 * C].astype(mm)
    wv = w_qkv[:, 2 * C:3 * C].astype(mm)
    wp = params['w_proj'].astype(mm)
    wfc1 = params['w_fc1'].astype(mm)
    wfc2 = params['w_fc2'].astype(mm)
    # TODO(synk): at production dims (C=768, Hm=3072) tile wfc1/wfc2 along Hm with an extra
    # 'arbitrary' grid axis + accumulator scratch instead of keeping them fully resident
    # (v7x has only 64 MiB physical VMEM).

    kernel = functools.partial(_vit_block_kernel, BB, N, num_heads, HD)

    def whole(shape):
        # parameter tensors: one full-extent block, identical for every grid step
        return pl.BlockSpec(shape, lambda b: tuple(0 for _ in shape))

    in_specs = [
        pl.BlockSpec((M, C), lambda b: (b, 0)),         # token slab block
        whole((1, C)), whole((1, C)),                   # LN1 gamma / beta
        whole((C, C)), whole((C, C)), whole((C, C)),    # Wq, Wk, Wv (qkv_bias=False)
        whole((C, C)), whole((1, C)),                   # proj weight / bias
        whole((1, C)), whole((1, C)),                   # LN2 gamma / beta
        whole((C, Hm)), whole((1, Hm)),                 # fc1 weight / bias
        whole((Hm, C)), whole((1, C)),                  # fc2 weight / bias
    ]

    # advisory cost estimate for the XLA scheduler
    G = BB * num_heads
    flops = (2 * M * C * 3 * C            # qkv projections
             + 2 * 2 * G * N * N * HD     # scores + attn@v
             + 2 * M * C * C              # output projection
             + 2 * 2 * M * C * Hm         # fc1 + fc2
             ) * num_blocks
    transcendentals = (G * N * N + M * Hm) * num_blocks
    bytes_accessed = (2 * xf.size * xf.dtype.itemsize
                      + sum(int(w.size) * w.dtype.itemsize
                            for w in (wq, wk, wv, wp, wfc1, wfc2))
                      + 4 * (6 * C + Hm))

    out = pl.pallas_call(
        kernel,
        out_shape=jax.ShapeDtypeStruct((B * N, C), x.dtype),
        grid=(num_blocks,),
        in_specs=in_specs,
        out_specs=pl.BlockSpec((M, C), lambda b: (b, 0)),
        compiler_params=pltpu.CompilerParams(
            dimension_semantics=("parallel",),
            vmem_limit_bytes=32 * 1024 * 1024,
        ),
        cost_estimate=pl.CostEstimate(flops=flops,
                                      transcendentals=transcendentals,
                                      bytes_accessed=bytes_accessed),
    )(xf, params['ln1_g'], params['ln1_b'], wq, wk, wv,
      wp, params['b_proj'], params['ln2_g'], params['ln2_b'],
      wfc1, params['b_fc1'], wfc2, params['b_fc2'])

    return out.reshape(B, N, C)


# -------------------------- pure-JAX reference (check) ------------------------

def vit_block_ref(x, p, num_heads):
    B, N, C = x.shape
    HD = C // num_heads

    def ln(v, g, b):
        m = jnp.mean(v, -1, keepdims=True)
        var = jnp.mean(jnp.square(v - m), -1, keepdims=True)
        return (v - m) * jax.lax.rsqrt(var + 1e-5) * g + b

    h = ln(x, p['ln1_g'][0], p['ln1_b'][0])
    qkv = h @ p['w_qkv']
    q, k, v = jnp.split(qkv, 3, axis=-1)
    q = q.reshape(B, N, num_heads, HD).transpose(0, 2, 1, 3)
    k = k.reshape(B, N, num_heads, HD).transpose(0, 2, 1, 3)
    v = v.reshape(B, N, num_heads, HD).transpose(0, 2, 1, 3)
    s = jnp.einsum('bhnd,bhmd->bhnm', q, k) * (HD ** -0.5)
    a = jax.nn.softmax(s, axis=-1)
    o = jnp.einsum('bhnm,bhmd->bhnd', a, v).transpose(0, 2, 1, 3).reshape(B, N, C)
    x1 = x + (o @ p['w_proj'] + p['b_proj'][0])

    h2 = ln(x1, p['ln2_g'][0], p['ln2_b'][0])
    f1 = jax.nn.gelu(h2 @ p['w_fc1'] + p['b_fc1'][0], approximate=False)
    return x1 + (f1 @ p['w_fc2'] + p['b_fc2'][0])


# ----------------------------------- main -------------------------------------

if __name__ == "__main__":
    B, N, C = 2, 16, 64          # batch, num_patches, dim
    num_heads = 8                # -> head_dim = 8
    mlp_ratio = 4.0
    Hm = int(C * mlp_ratio)

    key = jax.random.PRNGKey(0)
    ks = jax.random.split(key, 12)
    f32 = jnp.float32

    params = {
        'ln1_g':  1.0 + 0.01 * jax.random.normal(ks[0], (1, C), f32),
        'ln1_b':  0.01 * jax.random.normal(ks[1], (1, C), f32),
        'w_qkv':  0.02 * jax.random.normal(ks[2], (C, 3 * C), f32),
        'w_proj': 0.02 * jax.random.normal(ks[3], (C, C), f32),
        'b_proj': 0.01 * jax.random.normal(ks[4], (1, C), f32),
        'ln2_g':  1.0 + 0.01 * jax.random.normal(ks[5], (1, C), f32),
        'ln2_b':  0.01 * jax.random.normal(ks[6], (1, C), f32),
        'w_fc1':  0.02 * jax.random.normal(ks[7], (C, Hm), f32),
        'b_fc1':  0.01 * jax.random.normal(ks[8], (1, Hm), f32),
        'w_fc2':  0.02 * jax.random.normal(ks[9], (Hm, C), f32),
        'b_fc2':  0.01 * jax.random.normal(ks[10], (1, C), f32),
    }
    x = jax.random.normal(ks[11], (B, N, C), f32)

    ref = jax.block_until_ready(vit_block_ref(x, params, num_heads))

    # f32 MXU operands: faithful path, tight tolerance.
    out_f32 = jax.block_until_ready(vit_block_pallas(x, params, num_heads))
    assert out_f32.shape == (B, N, C)
    assert jnp.allclose(out_f32, ref, rtol=1e-3, atol=2e-4), "f32 kernel mismatch vs reference"

    # bf16 MXU operands (v6e/v7x fast path), f32 accumulation, f32 LN/softmax/GELU.
    out_bf16 = jax.block_until_ready(
        vit_block_pallas(x, params, num_heads, matmul_dtype=jnp.bfloat16))
    assert jnp.allclose(out_bf16, ref, rtol=2e-2, atol=2e-2), "bf16 kernel mismatch vs reference"

    print("KERNEL_OK")
</pallas_src>

<mosaic_0001>
module attributes {stable_mosaic.version = 11 : i64} {
  func.func @_vit_block_kernel(%arg0: i32, %arg1: memref<32x64xf32, #tpu.memory_space<vmem>>, %arg2: memref<1x64xf32, #tpu.memory_space<vmem>>, %arg3: memref<1x64xf32, #tpu.memory_space<vmem>>, %arg4: memref<64x64xf32, #tpu.memory_space<vmem>>, %arg5: memref<64x64xf32, #tpu.memory_space<vmem>>, %arg6: memref<64x64xf32, #tpu.memory_space<vmem>>, %arg7: memref<64x64xf32, #tpu.memory_space<vmem>>, %arg8: memref<1x64xf32, #tpu.memory_space<vmem>>, %arg9: memref<1x64xf32, #tpu.memory_space<vmem>>, %arg10: memref<1x64xf32, #tpu.memory_space<vmem>>, %arg11: memref<64x256xf32, #tpu.memory_space<vmem>>, %arg12: memref<1x256xf32, #tpu.memory_space<vmem>>, %arg13: memref<256x64xf32, #tpu.memory_space<vmem>>, %arg14: memref<1x64xf32, #tpu.memory_space<vmem>>, %arg15: memref<32x64xf32, #tpu.memory_space<vmem>>) attributes {dimension_semantics = [#tpu.dimension_semantics<parallel>], iteration_bounds = array<i64: 1>, scalar_prefetch = 0 : i64, scratch_operands = 0 : i64, tpu.core_type = #tpu.core_type<tc>, window_params = [{transform_indices = @transform_0, window_bounds = array<i64: 32, 64>}, {pipeline_mode = #tpu.pipeline_mode<synchronous>, transform_indices = @transform_1, window_bounds = array<i64: 1, 64>}, {pipeline_mode = #tpu.pipeline_mode<synchronous>, transform_indices = @transform_2, window_bounds = array<i64: 1, 64>}, {pipeline_mode = #tpu.pipeline_mode<synchronous>, transform_indices = @transform_3, window_bounds = array<i64: 64, 64>}, {pipeline_mode = #tpu.pipeline_mode<synchronous>, transform_indices = @transform_4, window_bounds = array<i64: 64, 64>}, {pipeline_mode = #tpu.pipeline_mode<synchronous>, transform_indices = @transform_5, window_bounds = array<i64: 64, 64>}, {pipeline_mode = #tpu.pipeline_mode<synchronous>, transform_indices = @transform_6, window_bounds = array<i64: 64, 64>}, {pipeline_mode = #tpu.pipeline_mode<synchronous>, transform_indices = @transform_7, window_bounds = array<i64: 1, 64>}, {pipeline_mode = #tpu.pipeline_mode<synchronous>, transform_indices = @transform_8, window_bounds = array<i64: 1, 64>}, {pipeline_mode = #tpu.pipeline_mode<synchronous>, transform_indices = @transform_9, window_bounds = array<i64: 1, 64>}, {pipeline_mode = #tpu.pipeline_mode<synchronous>, transform_indices = @transform_10, window_bounds = array<i64: 64, 256>}, {pipeline_mode = #tpu.pipeline_mode<synchronous>, transform_indices = @transform_11, window_bounds = array<i64: 1, 256>}, {pipeline_mode = #tpu.pipeline_mode<synchronous>, transform_indices = @transform_12, window_bounds = array<i64: 256, 64>}, {pipeline_mode = #tpu.pipeline_mode<synchronous>, transform_indices = @transform_13, window_bounds = array<i64: 1, 64>}, {transform_indices = @transform_14, window_bounds = array<i64: 32, 64>}]} {
    %c0 = arith.constant 0 : index
    %c0_0 = arith.constant 0 : index
    %0 = vector.load %arg1[%c0, %c0_0] : memref<32x64xf32, #tpu.memory_space<vmem>>, vector<32x64xf32>
    %c0_1 = arith.constant 0 : index
    %c0_2 = arith.constant 0 : index
    %1 = vector.load %arg2[%c0_1, %c0_2] : memref<1x64xf32, #tpu.memory_space<vmem>>, vector<1x64xf32>
    %2 = vector.shape_cast %1 : vector<1x64xf32> to vector<64xf32>
    %c0_3 = arith.constant 0 : index
    %c0_4 = arith.constant 0 : index
    %3 = vector.load %arg3[%c0_3, %c0_4] : memref<1x64xf32, #tpu.memory_space<vmem>>, vector<1x64xf32>
    %4 = vector.shape_cast %3 : vector<1x64xf32> to vector<64xf32>
    %cst = arith.constant dense<0.000000e+00> : vector<32xf32>
    %5 = vector.multi_reduction <add>, %0, %cst [1] : vector<32x64xf32> to vector<32xf32>
    %6 = vector.shape_cast %5 : vector<32xf32> to vector<32x1xf32>
    %cst_5 = arith.constant 6.400000e+01 : f32
    %7 = vector.broadcast %cst_5 : f32 to vector<32x1xf32>
    %8 = arith.divf %6, %7 : vector<32x1xf32>
    %9 = vector.broadcast %8 : vector<32x1xf32> to vector<32x64xf32>
    %10 = arith.subf %0, %9 : vector<32x64xf32>
    %11 = arith.mulf %10, %10 : vector<32x64xf32>
    %cst_6 = arith.constant dense<0.000000e+00> : vector<32xf32>
    %12 = vector.multi_reduction <add>, %11, %cst_6 [1] : vector<32x64xf32> to vector<32xf32>
    %13 = vector.shape_cast %12 : vector<32xf32> to vector<32x1xf32>
    %cst_7 = arith.constant 6.400000e+01 : f32
    %14 = vector.broadcast %cst_7 : f32 to vector<32x1xf32>
    %15 = arith.divf %13, %14 : vector<32x1xf32>
    %16 = vector.broadcast %8 : vector<32x1xf32> to vector<32x64xf32>
    %17 = arith.subf %0, %16 : vector<32x64xf32>
    %cst_8 = arith.constant 9.99999974E-6 : f32
    %18 = vector.broadcast %cst_8 : f32 to vector<32x1xf32>
    %19 = arith.addf %15, %18 : vector<32x1xf32>
    %20 = math.rsqrt %19 : vector<32x1xf32>
    %21 = vector.broadcast %20 : vector<32x1xf32> to vector<32x64xf32>
    %22 = arith.mulf %17, %21 : vector<32x64xf32>
    %23 = vector.shape_cast %2 : vector<64xf32> to vector<1x64xf32>
    %24 = vector.broadcast %23 : vector<1x64xf32> to vector<32x64xf32>
    %25 = arith.mulf %22, %24 : vector<32x64xf32>
    %26 = vector.shape_cast %4 : vector<64xf32> to vector<1x64xf32>
    %27 = vector.broadcast %26 : vector<1x64xf32> to vector<32x64xf32>
    %28 = arith.addf %25, %27 : vector<32x64xf32>
    %c0_9 = arith.constant 0 : index
    %c0_10 = arith.constant 0 : index
    %29 = vector.load %arg4[%c0_9, %c0_10] : memref<64x64xf32, #tpu.memory_space<vmem>>, vector<64x64xf32>
    %cst_11 = arith.constant dense<0.000000e+00> : vector<32x64xf32>
    %30 = tpu.matmul %28, %29, %cst_11 {dimension_numbers = #tpu.dot_dimension_numbers<[1], [0], [0], [1], [0, 0, 1, 1], [], []>} : vector<32x64xf32>, vector<64x64xf32>, vector<32x64xf32> -> vector<32x64xf32>
    %cst_12 = arith.constant 0.353553385 : f32
    %31 = vector.broadcast %cst_12 : f32 to vector<32x64xf32>
    %32 = arith.mulf %30, %31 : vector<32x64xf32>
    %c0_13 = arith.constant 0 : index
    %c0_14 = arith.constant 0 : index
    %33 = vector.load %arg5[%c0_13, %c0_14] : memref<64x64xf32, #tpu.memory_space<vmem>>, vector<64x64xf32>
    %cst_15 = arith.constant dense<0.000000e+00> : vector<32x64xf32>
    %34 = tpu.matmul %28, %33, %cst_15 {dimension_numbers = #tpu.dot_dimension_numbers<[1], [0], [0], [1], [0, 0, 1, 1], [], []>} : vector<32x64xf32>, vector<64x64xf32>, vector<32x64xf32> -> vector<32x64xf32>
    %c0_16 = arith.constant 0 : index
    %c0_17 = arith.constant 0 : index
    %35 = vector.load %arg6[%c0_16, %c0_17] : memref<64x64xf32, #tpu.memory_space<vmem>>, vector<64x64xf32>
    %cst_18 = arith.constant dense<0.000000e+00> : vector<32x64xf32>
    %36 = tpu.matmul %28, %35, %cst_18 {dimension_numbers = #tpu.dot_dimension_numbers<[1], [0], [0], [1], [0, 0, 1, 1], [], []>} : vector<32x64xf32>, vector<64x64xf32>, vector<32x64xf32> -> vector<32x64xf32>
    %37 = vector.shape_cast %32 : vector<32x64xf32> to vector<2x16x8x8xf32>
    %38 = tpu.transpose %37, [0, 2, 1, 3] : vector<2x16x8x8xf32> -> vector<2x8x16x8xf32>
    %39 = vector.shape_cast %38 : vector<2x8x16x8xf32> to vector<16x16x8xf32>
    %40 = vector.shape_cast %34 : vector<32x64xf32> to vector<2x16x8x8xf32>
    %41 = tpu.transpose %40, [0, 2, 1, 3] : vector<2x16x8x8xf32> -> vector<2x8x16x8xf32>
    %42 = vector.shape_cast %41 : vector<2x8x16x8xf32> to vector<16x16x8xf32>
    %43 = vector.shape_cast %36 : vector<32x64xf32> to vector<2x16x8x8xf32>
    %44 = tpu.transpose %43, [0, 2, 1, 3] : vector<2x16x8x8xf32> -> vector<2x8x16x8xf32>
    %45 = vector.shape_cast %44 : vector<2x8x16x8xf32> to vector<16x16x8xf32>
    "tpu.trace_start"() <{level = 10 : i32, message = "gnd,gmd->gnm"}> : () -> ()
    %cst_19 = arith.constant dense<0.000000e+00> : vector<16x16x16xf32>
    %46 = tpu.matmul %39, %42, %cst_19 {dimension_numbers = #tpu.dot_dimension_numbers<[2], [2], [1], [1], [0, 0, 0, 1, 1, 1], [0], [0]>} : vector<16x16x8xf32>, vector<16x16x8xf32>, vector<16x16x16xf32> -> vector<16x16x16xf32>
    "tpu.trace_stop"() : () -> ()
    %cst_20 = arith.constant dense<0xFF800000> : vector<16x16xf32>
    %47 = vector.multi_reduction <maximumf>, %46, %cst_20 [2] : vector<16x16x16xf32> to vector<16x16xf32>
    %48 = vector.shape_cast %47 : vector<16x16xf32> to vector<16x16x1xf32>
    %49 = vector.broadcast %48 : vector<16x16x1xf32> to vector<16x16x16xf32>
    %50 = arith.subf %46, %49 : vector<16x16x16xf32>
    %51 = math.exp %50 : vector<16x16x16xf32>
    "tpu.trace_start"() <{level = 10 : i32, message = "gnm,gmd->gnd"}> : () -> ()
    %cst_21 = arith.constant dense<0.000000e+00> : vector<16x16x8xf32>
    %52 = tpu.matmul %51, %45, %cst_21 {dimension_numbers = #tpu.dot_dimension_numbers<[2], [1], [1], [2], [0, 0, 0, 1, 1, 2], [0], [0]>} : vector<16x16x16xf32>, vector<16x16x8xf32>, vector<16x16x8xf32> -> vector<16x16x8xf32>
    "tpu.trace_stop"() : () -> ()
    %cst_22 = arith.constant dense<0.000000e+00> : vector<16x16xf32>
    %53 = vector.multi_reduction <add>, %51, %cst_22 [2] : vector<16x16x16xf32> to vector<16x16xf32>
    %54 = vector.shape_cast %53 : vector<16x16xf32> to vector<16x16x1xf32>
    %55 = tpu.reciprocal %54 {approx = true} : vector<16x16x1xf32> -> vector<16x16x1xf32>
    %56 = vector.broadcast %55 : vector<16x16x1xf32> to vector<16x16x8xf32>
    %57 = arith.mulf %52, %56 : vector<16x16x8xf32>
    %58 = vector.shape_cast %57 : vector<16x16x8xf32> to vector<2x8x16x8xf32>
    %59 = tpu.transpose %58, [0, 2, 1, 3] : vector<2x8x16x8xf32> -> vector<2x16x8x8xf32>
    %60 = vector.shape_cast %59 : vector<2x16x8x8xf32> to vector<32x64xf32>
    %c0_23 = arith.constant 0 : index
    %c0_24 = arith.constant 0 : index
    %61 = vector.load %arg7[%c0_23, %c0_24] : memref<64x64xf32, #tpu.memory_space<vmem>>, vector<64x64xf32>
    %cst_25 = arith.constant dense<0.000000e+00> : vector<32x64xf32>
    %62 = tpu.matmul %60, %61, %cst_25 {dimension_numbers = #tpu.dot_dimension_numbers<[1], [0], [0], [1], [0, 0, 1, 1], [], []>} : vector<32x64xf32>, vector<64x64xf32>, vector<32x64xf32> -> vector<32x64xf32>
    %c0_26 = arith.constant 0 : index
    %c0_27 = arith.constant 0 : index
    %63 = vector.load %arg8[%c0_26, %c0_27] : memref<1x64xf32, #tpu.memory_space<vmem>>, vector<1x64xf32>
    %64 = vector.shape_cast %63 : vector<1x64xf32> to vector<64xf32>
    %65 = vector.shape_cast %64 : vector<64xf32> to vector<1x64xf32>
    %66 = vector.broadcast %65 : vector<1x64xf32> to vector<32x64xf32>
    %67 = arith.addf %62, %66 : vector<32x64xf32>
    %68 = arith.addf %0, %67 : vector<32x64xf32>
    %c0_28 = arith.constant 0 : index
    %c0_29 = arith.constant 0 : index
    %69 = vector.load %arg9[%c0_28, %c0_29] : memref<1x64xf32, #tpu.memory_space<vmem>>, vector<1x64xf32>
    %70 = vector.shape_cast %69 : vector<1x64xf32> to vector<64xf32>
    %c0_30 = arith.constant 0 : index
    %c0_31 = arith.constant 0 : index
    %71 = vector.load %arg10[%c0_30, %c0_31] : memref<1x64xf32, #tpu.memory_space<vmem>>, vector<1x64xf32>
    %72 = vector.shape_cast %71 : vector<1x64xf32> to vector<64xf32>
    %cst_32 = arith.constant dense<0.000000e+00> : vector<32xf32>
    %73 = vector.multi_reduction <add>, %68, %cst_32 [1] : vector<32x64xf32> to vector<32xf32>
    %74 = vector.shape_cast %73 : vector<32xf32> to vector<32x1xf32>
    %cst_33 = arith.constant 6.400000e+01 : f32
    %75 = vector.broadcast %cst_33 : f32 to vector<32x1xf32>
    %76 = arith.divf %74, %75 : vector<32x1xf32>
    %77 = vector.broadcast %76 : vector<32x1xf32> to vector<32x64xf32>
    %78 = arith.subf %68, %77 : vector<32x64xf32>
    %79 = arith.mulf %78, %78 : vector<32x64xf32>
    %cst_34 = arith.constant dense<0.000000e+00> : vector<32xf32>
    %80 = vector.multi_reduction <add>, %79, %cst_34 [1] : vector<32x64xf32> to vector<32xf32>
    %81 = vector.shape_cast %80 : vector<32xf32> to vector<32x1xf32>
    %cst_35 = arith.constant 6.400000e+01 : f32
    %82 = vector.broadcast %cst_35 : f32 to vector<32x1xf32>
    %83 = arith.divf %81, %82 : vector<32x1xf32>
    %84 = vector.broadcast %76 : vector<32x1xf32> to vector<32x64xf32>
    %85 = arith.subf %68, %84 : vector<32x64xf32>
    %cst_36 = arith.constant 9.99999974E-6 : f32
    %86 = vector.broadcast %cst_36 : f32 to vector<32x1xf32>
    %87 = arith.addf %83, %86 : vector<32x1xf32>
    %88 = math.rsqrt %87 : vector<32x1xf32>
    %89 = vector.broadcast %88 : vector<32x1xf32> to vector<32x64xf32>
    %90 = arith.mulf %85, %89 : vector<32x64xf32>
    %91 = vector.shape_cast %70 : vector<64xf32> to vector<1x64xf32>
    %92 = vector.broadcast %91 : vector<1x64xf32> to vector<32x64xf32>
    %93 = arith.mulf %90, %92 : vector<32x64xf32>
    %94 = vector.shape_cast %72 : vector<64xf32> to vector<1x64xf32>
    %95 = vector.broadcast %94 : vector<1x64xf32> to vector<32x64xf32>
    %96 = arith.addf %93, %95 : vector<32x64xf32>
    %c0_37 = arith.constant 0 : index
    %c0_38 = arith.constant 0 : index
    %97 = vector.load %arg11[%c0_37, %c0_38] : memref<64x256xf32, #tpu.memory_space<vmem>>, vector<64x256xf32>
    %cst_39 = arith.constant dense<0.000000e+00> : vector<32x256xf32>
    %98 = tpu.matmul %96, %97, %cst_39 {dimension_numbers = #tpu.dot_dimension_numbers<[1], [0], [0], [1], [0, 0, 1, 1], [], []>} : vector<32x64xf32>, vector<64x256xf32>, vector<32x256xf32> -> vector<32x256xf32>
    %c0_40 = arith.constant 0 : index
    %c0_41 = arith.constant 0 : index
    %99 = vector.load %arg12[%c0_40, %c0_41] : memref<1x256xf32, #tpu.memory_space<vmem>>, vector<1x256xf32>
    %100 = vector.shape_cast %99 : vector<1x256xf32> to vector<256xf32>
    %101 = vector.shape_cast %100 : vector<256xf32> to vector<1x256xf32>
    %102 = vector.broadcast %101 : vector<1x256xf32> to vector<32x256xf32>
    %103 = arith.addf %98, %102 : vector<32x256xf32>
    %cst_42 = arith.constant 5.000000e-01 : f32
    %104 = vector.broadcast %cst_42 : f32 to vector<32x256xf32>
    %105 = arith.mulf %104, %103 : vector<32x256xf32>
    %cst_43 = arith.constant 0.707106769 : f32
    %106 = vector.broadcast %cst_43 : f32 to vector<32x256xf32>
    %107 = arith.mulf %103, %106 : vector<32x256xf32>
    %cst_44 = arith.constant 0.000000e+00 : f32
    %108 = vector.broadcast %cst_44 : f32 to vector<32x256xf32>
    %109 = arith.cmpf oge, %107, %108 : vector<32x256xf32>
    %cst_45 = arith.constant 1.000000e+00 : f32
    %cst_46 = arith.constant -1.000000e+00 : f32
    %110 = vector.broadcast %cst_45 : f32 to vector<32x256xf32>
    %111 = vector.broadcast %cst_46 : f32 to vector<32x256xf32>
    %112 = arith.select %109, %110, %111 : vector<32x256xi1>, vector<32x256xf32>
    %113 = math.absf %107 : vector<32x256xf32>
    %cst_47 = arith.constant 0.327591091 : f32
    %114 = vector.broadcast %cst_47 : f32 to vector<32x256xf32>
    %115 = arith.mulf %114, %113 : vector<32x256xf32>
    %cst_48 = arith.constant 1.000000e+00 : f32
    %116 = vector.broadcast %cst_48 : f32 to vector<32x256xf32>
    %117 = arith.addf %116, %115 : vector<32x256xf32>
    %cst_49 = arith.constant 1.000000e+00 : f32
    %118 = vector.broadcast %cst_49 : f32 to vector<32x256xf32>
    %119 = arith.divf %118, %117 : vector<32x256xf32>
    %cst_50 = arith.constant 1.06140542 : f32
    %120 = vector.broadcast %cst_50 : f32 to vector<32x256xf32>
    %121 = arith.mulf %120, %119 : vector<32x256xf32>
    %cst_51 = arith.constant -1.45315206 : f32
    %122 = vector.broadcast %cst_51 : f32 to vector<32x256xf32>
    %123 = arith.addf %121, %122 : vector<32x256xf32>
    %124 = arith.mulf %123, %119 : vector<32x256xf32>
    %cst_52 = arith.constant 1.42141378 : f32
    %125 = vector.broadcast %cst_52 : f32 to vector<32x256xf32>
    %126 = arith.addf %124, %125 : vector<32x256xf32>
    %127 = arith.mulf %126, %119 : vector<32x256xf32>
    %cst_53 = arith.constant -0.284496725 : f32
    %128 = vector.broadcast %cst_53 : f32 to vector<32x256xf32>
    %129 = arith.addf %127, %128 : vector<32x256xf32>
    %130 = arith.mulf %129, %119 : vector<32x256xf32>
    %cst_54 = arith.constant 0.254829586 : f32
    %131 = vector.broadcast %cst_54 : f32 to vector<32x256xf32>
    %132 = arith.addf %130, %131 : vector<32x256xf32>
    %133 = arith.mulf %132, %119 : vector<32x256xf32>
    %cst_55 = arith.constant 0.000000e+00 : f32
    %134 = vector.broadcast %cst_55 : f32 to vector<32x256xf32>
    %135 = arith.subf %134, %113 : vector<32x256xf32>
    %136 = arith.mulf %135, %113 : vector<32x256xf32>
    %137 = math.exp %136 : vector<32x256xf32>
    %138 = arith.mulf %133, %137 : vector<32x256xf32>
    %cst_56 = arith.constant 1.000000e+00 : f32
    %139 = vector.broadcast %cst_56 : f32 to vector<32x256xf32>
    %140 = arith.subf %139, %138 : vector<32x256xf32>
    %141 = arith.mulf %112, %140 : vector<32x256xf32>
    %cst_57 = arith.constant 1.000000e+00 : f32
    %142 = vector.broadcast %cst_57 : f32 to vector<32x256xf32>
    %143 = arith.addf %142, %141 : vector<32x256xf32>
    %144 = arith.mulf %105, %143 : vector<32x256xf32>
    %c0_58 = arith.constant 0 : index
    %c0_59 = arith.constant 0 : index
    %145 = vector.load %arg13[%c0_58, %c0_59] : memref<256x64xf32, #tpu.memory_space<vmem>>, vector<256x64xf32>
    %cst_60 = arith.constant dense<0.000000e+00> : vector<32x64xf32>
    %146 = tpu.matmul %144, %145, %cst_60 {dimension_numbers = #tpu.dot_dimension_numbers<[1], [0], [0], [1], [0, 0, 1, 1], [], []>} : vector<32x256xf32>, vector<256x64xf32>, vector<32x64xf32> -> vector<32x64xf32>
    %c0_61 = arith.constant 0 : index
    %c0_62 = arith.constant 0 : index
    %147 = vector.load %arg14[%c0_61, %c0_62] : memref<1x64xf32, #tpu.memory_space<vmem>>, vector<1x64xf32>
    %148 = vector.shape_cast %147 : vector<1x64xf32> to vector<64xf32>
    %149 = vector.shape_cast %148 : vector<64xf32> to vector<1x64xf32>
    %150 = vector.broadcast %149 : vector<1x64xf32> to vector<32x64xf32>
    %151 = arith.addf %146, %150 : vector<32x64xf32>
    %152 = arith.addf %68, %151 : vector<32x64xf32>
    %c0_63 = arith.constant 0 : index
    %c0_64 = arith.constant 0 : index
    %153 = vector.load %arg15[%c0_63, %c0_64] : memref<32x64xf32, #tpu.memory_space<vmem>>, vector<32x64xf32>
    tpu.vector_store %arg15[%c0_63, %c0_64], %152 {strides = array<i32>} : memref<32x64xf32, #tpu.memory_space<vmem>>, vector<32x64xf32>,
    return
  }
  func.func @transform_0(%arg0: i32) -> (i32, i32) {
    %c0_i32 = arith.constant 0 : i32
    %c0_i32_0 = arith.constant 0 : i32
    return %arg0, %c0_i32 : i32, i32
  }
  func.func @transform_1(%arg0: i32) -> (i32, i32) {
    %c0_i32 = arith.constant 0 : i32
    %c0_i32_0 = arith.constant 0 : i32
    %c0_i32_1 = arith.constant 0 : i32
    return %c0_i32, %c0_i32_0 : i32, i32
  }
  func.func @transform_2(%arg0: i32) -> (i32, i32) {
    %c0_i32 = arith.constant 0 : i32
    %c0_i32_0 = arith.constant 0 : i32
    %c0_i32_1 = arith.constant 0 : i32
    return %c0_i32, %c0_i32_0 : i32, i32
  }
  func.func @transform_3(%arg0: i32) -> (i32, i32) {
    %c0_i32 = arith.constant 0 : i32
    %c0_i32_0 = arith.constant 0 : i32
    %c0_i32_1 = arith.constant 0 : i32
    return %c0_i32, %c0_i32_0 : i32, i32
  }
  func.func @transform_4(%arg0: i32) -> (i32, i32) {
    %c0_i32 = arith.constant 0 : i32
    %c0_i32_0 = arith.constant 0 : i32
    %c0_i32_1 = arith.constant 0 : i32
    return %c0_i32, %c0_i32_0 : i32, i32
  }
  func.func @transform_5(%arg0: i32) -> (i32, i32) {
    %c0_i32 = arith.constant 0 : i32
    %c0_i32_0 = arith.constant 0 : i32
    %c0_i32_1 = arith.constant 0 : i32
    return %c0_i32, %c0_i32_0 : i32, i32
  }
  func.func @transform_6(%arg0: i32) -> (i32, i32) {
    %c0_i32 = arith.constant 0 : i32
    %c0_i32_0 = arith.constant 0 : i32
    %c0_i32_1 = arith.constant 0 : i32
    return %c0_i32, %c0_i32_0 : i32, i32
  }
  func.func @transform_7(%arg0: i32) -> (i32, i32) {
    %c0_i32 = arith.constant 0 : i32
    %c0_i32_0 = arith.constant 0 : i32
    %c0_i32_1 = arith.constant 0 : i32
    return %c0_i32, %c0_i32_0 : i32, i32
  }
  func.func @transform_8(%arg0: i32) -> (i32, i32) {
    %c0_i32 = arith.constant 0 : i32
    %c0_i32_0 = arith.constant 0 : i32
    %c0_i32_1 = arith.constant 0 : i32
    return %c0_i32, %c0_i32_0 : i32, i32
  }
  func.func @transform_9(%arg0: i32) -> (i32, i32) {
    %c0_i32 = arith.constant 0 : i32
    %c0_i32_0 = arith.constant 0 : i32
    %c0_i32_1 = arith.constant 0 : i32
    return %c0_i32, %c0_i32_0 : i32, i32
  }
  func.func @transform_10(%arg0: i32) -> (i32, i32) {
    %c0_i32 = arith.constant 0 : i32
    %c0_i32_0 = arith.constant 0 : i32
    %c0_i32_1 = arith.constant 0 : i32
    return %c0_i32, %c0_i32_0 : i32, i32
  }
  func.func @transform_11(%arg0: i32) -> (i32, i32) {
    %c0_i32 = arith.constant 0 : i32
    %c0_i32_0 = arith.constant 0 : i32
    %c0_i32_1 = arith.constant 0 : i32
    return %c0_i32, %c0_i32_0 : i32, i32
  }
  func.func @transform_12(%arg0: i32) -> (i32, i32) {
    %c0_i32 = arith.constant 0 : i32
    %c0_i32_0 = arith.constant 0 : i32
    %c0_i32_1 = arith.constant 0 : i32
    return %c0_i32, %c0_i32_0 : i32, i32
  }
  func.func @transform_13(%arg0: i32) -> (i32, i32) {
    %c0_i32 = arith.constant 0 : i32
    %c0_i32_0 = arith.constant 0 : i32
    %c0_i32_1 = arith.constant 0 : i32
    return %c0_i32, %c0_i32_0 : i32, i32
  }
  func.func @transform_14(%arg0: i32) -> (i32, i32) {
    %c0_i32 = arith.constant 0 : i32
    %c0_i32_0 = arith.constant 0 : i32
    return %arg0, %c0_i32 : i32, i32
  }
}

</mosaic_0001>

<llo_original>
// kernel: tpu_custom_call.1
$region0: #{tpu_custom_call.1}
  #allocation0 [shape = 'u32[]', space=smem, size = 0x4, offset = 0x4, fixed_abs, tag = 'smem constant byte address 0x4 - core index']
  #allocation1 [shape = 'u32[144,128]{1,0:T(1,128)}', space=vmem, size = 0x12000, scoped, tag = 'internal scratch']
  %s0 = inlined_call_operand.hbm [shape: f32[32,64], index: 0, kind: input, shape index: {}]
  %s1 = inlined_call_operand.hbm [shape: f32[1,64], index: 1, kind: input, shape index: {}]
  %s2 = inlined_call_operand.vmem [shape: f32[1,64], index: 2, kind: input, shape index: {}]
  %s3 = inlined_call_operand.vmem [shape: f32[64,64], index: 3, kind: input, shape index: {}]
  %s4 = inlined_call_operand.vmem [shape: f32[64,64], index: 4, kind: input, shape index: {}]
  %s5 = inlined_call_operand.vmem [shape: f32[64,64], index: 5, kind: input, shape index: {}]
  %s6 = inlined_call_operand.vmem [shape: f32[64,64], index: 6, kind: input, shape index: {}]
  %s7 = inlined_call_operand.vmem [shape: f32[1,64], index: 7, kind: input, shape index: {}]
  %s8 = inlined_call_operand.vmem [shape: f32[1,64], index: 8, kind: input, shape index: {}]
  %s9 = inlined_call_operand.vmem [shape: f32[1,64], index: 9, kind: input, shape index: {}]
  %s10 = inlined_call_operand.vmem [shape: f32[64,256], index: 10, kind: input, shape index: {}]
  %s11 = inlined_call_operand.vmem [shape: f32[1,256], index: 11, kind: input, shape index: {}]
  %s12 = inlined_call_operand.vmem [shape: f32[256,64], index: 12, kind: input, shape index: {}]
  %s13 = inlined_call_operand.vmem [shape: f32[1,64], index: 13, kind: input, shape index: {}]
  %s14 = inlined_call_operand.hbm [shape: f32[32,64], index: 14, kind: output, shape index: {}]
  %s15 = sld [smem:[#allocation0]]
  $region74: #{tpu_custom_call.1} parent=0
    _
  %s17 = ssub.s32 1, %s15
  %s18 = scalar_select 0, %s17, %s15
  $region1: #{tpu_custom_call.1} parent=0
    #allocation2 [shape = 'u8[16384]{0}', space=vmem, size = 0x4000, scoped, tag = 'input window, operand 0, single buffered']
    #allocation3 [shape = 's32[1]{0}', space=sflag, size = 0x4, scoped, tag = 'scoped memory for tpu_custom_call.1']
    #allocation4 [shape = 's32[1]{0}', space=sflag, size = 0x4, scoped, tag = 'scoped memory for tpu_custom_call.1']
    #allocation5 [shape = 'u8[512]{0}', space=vmem, size = 0x400, scoped, tag = 'input window, operand 1, single buffered']
    #allocation6 [shape = 's32[1]{0}', space=sflag, size = 0x4, scoped, tag = 'scoped memory for tpu_custom_call.1']
    #allocation7 [shape = 'u8[16384]{0}', space=vmem, size = 0x4000, scoped, tag = 'output window, operand 0, single buffered']
    %19 = vsyncpa [#allocation3], 0
    %20 = vsyncpa [#allocation6], 0
    %21 = vsyncpa [#allocation4], 0
    // Predicated region
    $region2: #{tpu_custom_call.1} parent=1 // pred_check
      _
    $region3: #{tpu_custom_call.1} parent=1 // pred_check_branch
      %23 = sbr.rel (0) target = $region5
    $region4: #{tpu_custom_call.1} parent=1 // pred_region
      %s25 = ssub.s32 512, 512
      %26 = vsyncadd [#allocation3], %s25
      %s27 = sshll.u32 [#allocation2], 4
      %s28 = int_to_ptr.vmem [resolvable:$true] %s27
      %33 = dma.hbm_to_vmem [thread:$0]  %s0, 512, %s28, [#allocation3], 128, 128, 8
    $region5: #{tpu_custom_call.1} parent=1 // pred_fallthru
      _
    // Predicated region
    $region6: #{tpu_custom_call.1} parent=1 // pred_check
      _
    $region7: #{tpu_custom_call.1} parent=1 // pred_check_branch
      %35 = sbr.rel (0) target = $region9
    $region8: #{tpu_custom_call.1} parent=1 // pred_region
      %s37 = ssub.s32 16, 16
      %38 = vsyncadd [#allocation6], %s37
      %s40 = sshll.u32 [#allocation5], 4
      %s41 = int_to_ptr.vmem [resolvable:$true] %s40
      %43 = dma.hbm_to_vmem [thread:$0]  %s1, 16, %s41, [#allocation6]
    $region9: #{tpu_custom_call.1} parent=1 // pred_fallthru
      _
    // Predicated region
    $region10: #{tpu_custom_call.1} parent=1 // pred_check
      _
    $region11: #{tpu_custom_call.1} parent=1 // pred_check_branch
      %45 = sbr.rel (0) target = $region13
    $region12: #{tpu_custom_call.1} parent=1 // pred_region
      _
    $region13: #{tpu_custom_call.1} parent=1 // pred_fallthru
      _
    // Predicated region
    $region14: #{tpu_custom_call.1} parent=1 // pred_check
      _
    $region15: #{tpu_custom_call.1} parent=1 // pred_check_branch
      %47 = sbr.rel (0) target = $region17
    $region16: #{tpu_custom_call.1} parent=1 // pred_region
      _
    $region17: #{tpu_custom_call.1} parent=1 // pred_fallthru
      _
    // Predicated region
    $region18: #{tpu_custom_call.1} parent=1 // pred_check
      _
    $region19: #{tpu_custom_call.1} parent=1 // pred_check_branch
      %49 = sbr.rel (0) target = $region21
    $region20: #{tpu_custom_call.1} parent=1 // pred_region
      _
    $region21: #{tpu_custom_call.1} parent=1 // pred_fallthru
      _
    // Predicated region
    $region22: #{tpu_custom_call.1} parent=1 // pred_check
      _
    $region23: #{tpu_custom_call.1} parent=1 // pred_check_branch
      %51 = sbr.rel (0) target = $region25
    $region24: #{tpu_custom_call.1} parent=1 // pred_region
      _
    $region25: #{tpu_custom_call.1} parent=1 // pred_fallthru
      _
    // Predicated region
    $region26: #{tpu_custom_call.1} parent=1 // pred_check
      _
    $region27: #{tpu_custom_call.1} parent=1 // pred_check_branch
      %53 = sbr.rel (0) target = $region29
    $region28: #{tpu_custom_call.1} parent=1 // pred_region
      _
    $region29: #{tpu_custom_call.1} parent=1 // pred_fallthru
      _
    // Predicated region
    $region30: #{tpu_custom_call.1} parent=1 // pred_check
      _
    $region31: #{tpu_custom_call.1} parent=1 // pred_check_branch
      %55 = sbr.rel (0) target = $region33
    $region32: #{tpu_custom_call.1} parent=1 // pred_region
      _
    $region33: #{tpu_custom_call.1} parent=1 // pred_fallthru
      _
    // Predicated region
    $region34: #{tpu_custom_call.1} parent=1 // pred_check
      _
    $region35: #{tpu_custom_call.1} parent=1 // pred_check_branch
      %57 = sbr.rel (0) target = $region37
    $region36: #{tpu_custom_call.1} parent=1 // pred_region
      _
    $region37: #{tpu_custom_call.1} parent=1 // pred_fallthru
      _
    // Predicated region
    $region38: #{tpu_custom_call.1} parent=1 // pred_check
      _
    $region39: #{tpu_custom_call.1} parent=1 // pred_check_branch
      %59 = sbr.rel (0) target = $region41
    $region40: #{tpu_custom_call.1} parent=1 // pred_region
      _
    $region41: #{tpu_custom_call.1} parent=1 // pred_fallthru
      _
    // Predicated region
    $region42: #{tpu_custom_call.1} parent=1 // pred_check
      _
    $region43: #{tpu_custom_call.1} parent=1 // pred_check_branch
      %61 = sbr.rel (0) target = $region45
    $region44: #{tpu_custom_call.1} parent=1 // pred_region
      _
    $region45: #{tpu_custom_call.1} parent=1 // pred_fallthru
      _
    // Predicated region
    $region46: #{tpu_custom_call.1} parent=1 // pred_check
      _
    $region47: #{tpu_custom_call.1} parent=1 // pred_check_branch
      %63 = sbr.rel (0) target = $region49
    $region48: #{tpu_custom_call.1} parent=1 // pred_region
      _
    $region49: #{tpu_custom_call.1} parent=1 // pred_fallthru
      _
    // Predicated region
    $region50: #{tpu_custom_call.1} parent=1 // pred_check
      _
    $region51: #{tpu_custom_call.1} parent=1 // pred_check_branch
      %65 = sbr.rel (0) target = $region53
    $region52: #{tpu_custom_call.1} parent=1 // pred_region
      _
    $region53: #{tpu_custom_call.1} parent=1 // pred_fallthru
      _
    // Predicated region
    $region54: #{tpu_custom_call.1} parent=1 // pred_check
      _
    $region55: #{tpu_custom_call.1} parent=1 // pred_check_branch
      %67 = sbr.rel (0) target = $region57
    $region56: #{tpu_custom_call.1} parent=1 // pred_region
      _
    $region57: #{tpu_custom_call.1} parent=1 // pred_fallthru
      _
    // Predicated region
    $region58: #{tpu_custom_call.1} parent=1 // pred_check
      _
    $region59: #{tpu_custom_call.1} parent=1 // pred_check_branch
      %69 = sbr.rel (0) target = $region61
    $region60: #{tpu_custom_call.1} parent=1 // pred_region
      %70 = dma.done [#allocation3], 512
    $region61: #{tpu_custom_call.1} parent=1 // pred_fallthru
      _
    // Predicated region
    $region62: #{tpu_custom_call.1} parent=1 // pred_check
      _
    $region63: #{tpu_custom_call.1} parent=1 // pred_check_branch
      %72 = sbr.rel (0) target = $region65
    $region64: #{tpu_custom_call.1} parent=1 // pred_region
      %73 = dma.done [#allocation6], 16
    $region65: #{tpu_custom_call.1} parent=1 // pred_fallthru
      _
    %v74 = vld [vmem:[#allocation2] sm:$0xff]
    %v75 = vld [vmem:[#allocation2 + $0x8] sm:$0xff]
    %v76 = vld [vmem:[#allocation2 + $0x10] sm:$0xff]
    %v77 = vld [vmem:[#allocation2 + $0x18] sm:$0xff]
    %v78 = vld [vmem:[#allocation5] sm:$0x1]
    %v79 = vld [vmem:[%s2] sm:$0x1]
    %vm80 = vcmask 523264
    %v81 = vsel %vm80, %v74, 0.0
    %82 = vadd.xlane.f32.xlu0 %v81
    %v83 = vpop.xlane.xlu0 %82
    %v84 = vsel %vm80, %v75, 0.0
    %85 = vadd.xlane.f32.xlu0 %v84
    %v86 = vpop.xlane.xlu0 %85
    %v87 = vsel %vm80, %v76, 0.0
    %88 = vadd.xlane.f32.xlu0 %v87
    %v89 = vpop.xlane.xlu0 %88
    %v90 = vsel %vm80, %v77, 0.0
    %91 = vadd.xlane.f32.xlu0 %v90
    %v92 = vpop.xlane.xlu0 %91
    %v93 = vrcp.pop 64.0
    %v94 = vmul.f32 %v83, %v93
    %v95 = vmul.f32 %v86, %v93
    %v96 = vmul.f32 %v89, %v93
    %v97 = vmul.f32 %v92, %v93
    %v98 = vsub.f32 %v74, %v94
    %v99 = vsub.f32 %v75, %v95
    %v100 = vsub.f32 %v76, %v96
    %v101 = vsub.f32 %v77, %v97
    %v102 = vmul.f32 %v98, %v98
    %v103 = vmul.f32 %v99, %v99
    %v104 = vmul.f32 %v100, %v100
    %v105 = vmul.f32 %v101, %v101
    %v106 = vsel %vm80, %v102, 0.0
    %107 = vadd.xlane.f32.xlu0 %v106
    %v108 = vpop.xlane.xlu0 %107
    %v109 = vsel %vm80, %v103, 0.0
    %110 = vadd.xlane.f32.xlu0 %v109
    %v111 = vpop.xlane.xlu0 %110
    %v112 = vsel %vm80, %v104, 0.0
    %113 = vadd.xlane.f32.xlu0 %v112
    %v114 = vpop.xlane.xlu0 %113
    %v115 = vsel %vm80, %v105, 0.0
    %116 = vadd.xlane.f32.xlu0 %v115
    %v117 = vpop.xlane.xlu0 %116
    %v118 = vmul.f32 %v108, %v93
    %v119 = vmul.f32 %v111, %v93
    %v120 = vmul.f32 %v114, %v93
    %v121 = vmul.f32 %v117, %v93
    %v122 = vadd.f32 %v118, 1e-05
    %v123 = vadd.f32 %v119, 1e-05
    %v124 = vadd.f32 %v120, 1e-05
    %v125 = vadd.f32 %v121, 1e-05
    %v126 = vrsqrt.pop %v122
    %v127 = vrsqrt.pop %v123
    %v128 = vrsqrt.pop %v124
    %v129 = vrsqrt.pop %v125
    %v130 = vmul.f32 %v98, %v126
    %v131 = vmul.f32 %v99, %v127
    %v132 = vmul.f32 %v100, %v128
    %v133 = vmul.f32 %v101, %v129
    %v135 = vlaneseq
    %v136 = vshrl.u32 %v135, 7
    %v137 = vsub.s32 0, %v136
    %v138 = vrot.slane %v78, %v137
    %v140 = vmul.f32 %v130, %v138
    %v141 = vmul.f32 %v131, %v138
    %v142 = vmul.f32 %v132, %v138
    %v143 = vmul.f32 %v133, %v138
    %v145 = vlaneseq
    %v146 = vshrl.u32 %v145, 7
    %v147 = vsub.s32 0, %v146
    %v148 = vrot.slane %v79, %v147
    %v150 = vadd.f32 %v140, %v148
    %v151 = vadd.f32 %v141, %v148
    %v152 = vadd.f32 %v142, %v148
    %v153 = vadd.f32 %v143, %v148
    %v154 = vld [vmem:[%s3] sm:$0xff]
    %v155 = vld [vmem:[%s3 + $0x8] sm:$0xff]
    %v156 = vld [vmem:[%s3 + $0x10] sm:$0xff]
    %v157 = vld [vmem:[%s3 + $0x18] sm:$0xff]
    %v158 = vld [vmem:[%s3 + $0x20] sm:$0xff]
    %v159 = vld [vmem:[%s3 + $0x28] sm:$0xff]
    %v160 = vld [vmem:[%s3 + $0x30] sm:$0xff]
    %v161 = vld [vmem:[%s3 + $0x38] sm:$0xff]
    %v163 = vsel %vm80, %v150, 0
    %v166 = vsel %vm80, %v151, 0
    %v169 = vsel %vm80, %v152, 0
    %v172 = vsel %vm80, %v153, 0
    %174 = vmatprep.subr.mxu0 0.0
    %175 = vmatpush1.msra.mxu0 %v154
    %176 = vmatprep.subr.mxu0 0.0
    %177 = vmatpush1.msra.mxu0 %v155
    %178 = vmatprep.subr.mxu0 0.0
    %179 = vmatpush1.msra.mxu0 %v156
    %180 = vmatprep.subr.mxu0 0.0
    %181 = vmatpush1.msra.mxu0 %v157
    %182 = vmatprep.subr.mxu0 0.0
    %183 = vmatpush1.msra.mxu0 %v158
    %184 = vmatprep.subr.mxu0 0.0
    %185 = vmatpush1.msra.mxu0 %v159
    %186 = vmatprep.subr.mxu0 0.0
    %187 = vmatpush1.msra.mxu0 %v160
    %188 = vmatprep.subr.mxu0 0.0
    %189 = vmatpush1.msra.mxu0 %v161
    %190 = vmatprep.subr.mxu0 0.0
    %191 = vmatpush1.msra.mxu0 0.0
    %192 = vmatprep.subr.mxu0 0.0
    %193 = vmatpush1.msra.mxu0 0.0
    %194 = vmatprep.subr.mxu0 0.0
    %195 = vmatpush1.msra.mxu0 0.0
    %196 = vmatprep.subr.mxu0 0.0
    %197 = vmatpush1.msra.mxu0 0.0
    %198 = vmatprep.subr.mxu0 0.0
    %199 = vmatpush1.msra.mxu0 0.0
    %200 = vmatprep.subr.mxu0 0.0
    %201 = vmatpush1.msra.mxu0 0.0
    %202 = vmatprep.subr.mxu0 0.0
    %203 = vmatpush1.msra.mxu0 0.0
    %204 = vmatprep.subr.mxu0 0.0
    %205 = vmatpush1.msra.mxu0 0.0
    %206 = vmatprep.subr.mxu0 0.0
    %207 = vmatpush1.msra.mxu0 0.0
    %208 = vmatprep.subr.mxu0 0.0
    %209 = vmatpush1.msra.mxu0 0.0
    %210 = vmatprep.subr.mxu0 0.0
    %211 = vmatpush1.msra.mxu0 0.0
    %212 = vmatprep.subr.mxu0 0.0
    %213 = vmatpush1.msra.mxu0 0.0
    %214 = vmatprep.subr.mxu0 0.0
    %215 = vmatpush1.msra.mxu0 0.0
    %216 = vmatprep.subr.mxu0 0.0
    %217 = vmatpush1.msra.mxu0 0.0
    %218 = vmatprep.subr.mxu0 0.0
    %219 = vmatpush1.msra.mxu0 0.0
    %220 = vmatprep.subr.mxu0 0.0
    %221 = vmatpush1.msra.mxu0 0.0
    %222 = vmatprep.subr.mxu0 0.0
    %223 = vmatpush1.msra.mxu0 0.0
    %224 = vmatprep.subr.mxu0 0.0
    %225 = vmatpush1.msra.mxu0 0.0
    %226 = vmatprep.subr.mxu0 0.0
    %227 = vmatpush1.msra.mxu0 0.0
    %228 = vmatprep.subr.mxu0 0.0
    %229 = vmatpush1.msra.mxu0 0.0
    %230 = vmatprep.subr.mxu0 0.0
    %231 = vmatpush1.msra.mxu0 0.0
    %232 = vmatprep.subr.mxu0 0.0
    %233 = vmatpush1.msra.mxu0 0.0
    %234 = vmatprep.subr.mxu0 0.0
    %235 = vmatpush1.msra.mxu0 0.0
    %236 = vmatprep.subr.mxu0 0.0
    %237 = vmatpush1.msra.mxu0 0.0
    %238 = vmatprep.mubr.f32.mxu0 0.0
    %239 = vmatmul.mubr.f32.gmra.mrb[0].mxu0 %v163
    %v240 = vpop.f32.mrb[0].mxu0
    %v241 = vadd.f32 0.0, %v240
    %v242 = vpop.f32.mrb[0].mxu0
    %243 = vmatprep.mubr.f32.mxu0 0.0
    %244 = vmatmul.mubr.f32.gmra.mrb[0].mxu0 %v166
    %v245 = vpop.f32.mrb[0].mxu0
    %v246 = vadd.f32 0.0, %v245
    %v247 = vpop.f32.mrb[0].mxu0
    %248 = vmatprep.mubr.f32.mxu0 0.0
    %249 = vmatmul.mubr.f32.gmra.mrb[0].mxu0 %v169
    %v250 = vpop.f32.mrb[0].mxu0
    %v251 = vadd.f32 0.0, %v250
    %v252 = vpop.f32.mrb[0].mxu0
    %253 = vmatprep.mubr.f32.mxu0 0.0
    %254 = vmatmul.mubr.f32.gmra.mrb[0].mxu0 %v172
    %v255 = vpop.f32.mrb[0].mxu0
    %v256 = vadd.f32 0.0, %v255
    %v257 = vpop.f32.mrb[0].mxu0
    %258 = vdwg.mxu0
    %v259 = vmul.f32 %v241, 0.35355338
    %v260 = vmul.f32 %v246, 0.35355338
    %v261 = vmul.f32 %v251, 0.35355338
    %v262 = vmul.f32 %v256, 0.35355338
    %v263 = vld [vmem:[%s4] sm:$0xff]
    %v264 = vld [vmem:[%s4 + $0x8] sm:$0xff]
    %v265 = vld [vmem:[%s4 + $0x10] sm:$0xff]
    %v266 = vld [vmem:[%s4 + $0x18] sm:$0xff]
    %v267 = vld [vmem:[%s4 + $0x20] sm:$0xff]
    %v268 = vld [vmem:[%s4 + $0x28] sm:$0xff]
    %v269 = vld [vmem:[%s4 + $0x30] sm:$0xff]
    %v270 = vld [vmem:[%s4 + $0x38] sm:$0xff]
    %271 = vmatprep.subr.mxu0 0.0
    %272 = vmatpush1.msra.mxu0 %v263
    %273 = vmatprep.subr.mxu0 0.0
    %274 = vmatpush1.msra.mxu0 %v264
    %275 = vmatprep.subr.mxu0 0.0
    %276 = vmatpush1.msra.mxu0 %v265
    %277 = vmatprep.subr.mxu0 0.0
    %278 = vmatpush1.msra.mxu0 %v266
    %279 = vmatprep.subr.mxu0 0.0
    %280 = vmatpush1.msra.mxu0 %v267
    %281 = vmatprep.subr.mxu0 0.0
    %282 = vmatpush1.msra.mxu0 %v268
    %283 = vmatprep.subr.mxu0 0.0
    %284 = vmatpush1.msra.mxu0 %v269
    %285 = vmatprep.subr.mxu0 0.0
    %286 = vmatpush1.msra.mxu0 %v270
    %287 = vmatprep.subr.mxu0 0.0
    %288 = vmatpush1.msra.mxu0 0.0
    %289 = vmatprep.subr.mxu0 0.0
    %290 = vmatpush1.msra.mxu0 0.0
    %291 = vmatprep.subr.mxu0 0.0
    %292 = vmatpush1.msra.mxu0 0.0
    %293 = vmatprep.subr.mxu0 0.0
    %294 = vmatpush1.msra.mxu0 0.0
    %295 = vmatprep.subr.mxu0 0.0
    %296 = vmatpush1.msra.mxu0 0.0
    %297 = vmatprep.subr.mxu0 0.0
    %298 = vmatpush1.msra.mxu0 0.0
    %299 = vmatprep.subr.mxu0 0.0
    %300 = vmatpush1.msra.mxu0 0.0
    %301 = vmatprep.subr.mxu0 0.0
    %302 = vmatpush1.msra.mxu0 0.0
    %303 = vmatprep.subr.mxu0 0.0
    %304 = vmatpush1.msra.mxu0 0.0
    %305 = vmatprep.subr.mxu0 0.0
    %306 = vmatpush1.msra.mxu0 0.0
    %307 = vmatprep.subr.mxu0 0.0
    %308 = vmatpush1.msra.mxu0 0.0
    %309 = vmatprep.subr.mxu0 0.0
    %310 = vmatpush1.msra.mxu0 0.0
    %311 = vmatprep.subr.mxu0 0.0
    %312 = vmatpush1.msra.mxu0 0.0
    %313 = vmatprep.subr.mxu0 0.0
    %314 = vmatpush1.msra.mxu0 0.0
    %315 = vmatprep.subr.mxu0 0.0
    %316 = vmatpush1.msra.mxu0 0.0
    %317 = vmatprep.subr.mxu0 0.0
    %318 = vmatpush1.msra.mxu0 0.0
    %319 = vmatprep.subr.mxu0 0.0
    %320 = vmatpush1.msra.mxu0 0.0
    %321 = vmatprep.subr.mxu0 0.0
    %322 = vmatpush1.msra.mxu0 0.0
    %323 = vmatprep.subr.mxu0 0.0
    %324 = vmatpush1.msra.mxu0 0.0
    %325 = vmatprep.subr.mxu0 0.0
    %326 = vmatpush1.msra.mxu0 0.0
    %327 = vmatprep.subr.mxu0 0.0
    %328 = vmatpush1.msra.mxu0 0.0
    %329 = vmatprep.subr.mxu0 0.0
    %330 = vmatpush1.msra.mxu0 0.0
    %331 = vmatprep.subr.mxu0 0.0
    %332 = vmatpush1.msra.mxu0 0.0
    %333 = vmatprep.subr.mxu0 0.0
    %334 = vmatpush1.msra.mxu0 0.0
    %335 = vmatprep.mubr.f32.mxu0 0.0
    %336 = vmatmul.mubr.f32.gmra.mrb[0].mxu0 %v163
    %v337 = vpop.f32.mrb[0].mxu0
    %v338 = vadd.f32 0.0, %v337
    %v339 = vpop.f32.mrb[0].mxu0
    %340 = vmatprep.mubr.f32.mxu0 0.0
    %341 = vmatmul.mubr.f32.gmra.mrb[0].mxu0 %v166
    %v342 = vpop.f32.mrb[0].mxu0
    %v343 = vadd.f32 0.0, %v342
    %v344 = vpop.f32.mrb[0].mxu0
    %345 = vmatprep.mubr.f32.mxu0 0.0
    %346 = vmatmul.mubr.f32.gmra.mrb[0].mxu0 %v169
    %v347 = vpop.f32.mrb[0].mxu0
    %v348 = vadd.f32 0.0, %v347
    %v349 = vpop.f32.mrb[0].mxu0
    %350 = vmatprep.mubr.f32.mxu0 0.0
    %351 = vmatmul.mubr.f32.gmra.mrb[0].mxu0 %v172
    %v352 = vpop.f32.mrb[0].mxu0
    %v353 = vadd.f32 0.0, %v352
    %v354 = vpop.f32.mrb[0].mxu0
    %355 = vdwg.mxu0
    %v356 = vld [vmem:[%s5] sm:$0xff]
    %v357 = vld [vmem:[%s5 + $0x8] sm:$0xff]
    %v358 = vld [vmem:[%s5 + $0x10] sm:$0xff]
    %v359 = vld [vmem:[%s5 + $0x18] sm:$0xff]
    %v360 = vld [vmem:[%s5 + $0x20] sm:$0xff]
    %v361 = vld [vmem:[%s5 + $0x28] sm:$0xff]
    %v362 = vld [vmem:[%s5 + $0x30] sm:$0xff]
    %v363 = vld [vmem:[%s5 + $0x38] sm:$0xff]
    %364 = vmatprep.subr.mxu0 0.0
    %365 = vmatpush1.msra.mxu0 %v356
    %366 = vmatprep.subr.mxu0 0.0
    %367 = vmatpush1.msra.mxu0 %v357
    %368 = vmatprep.subr.mxu0 0.0
    %369 = vmatpush1.msra.mxu0 %v358
    %370 = vmatprep.subr.mxu0 0.0
    %371 = vmatpush1.msra.mxu0 %v359
    %372 = vmatprep.subr.mxu0 0.0
    %373 = vmatpush1.msra.mxu0 %v360
    %374 = vmatprep.subr.mxu0 0.0
    %375 = vmatpush1.msra.mxu0 %v361
    %376 = vmatprep.subr.mxu0 0.0
    %377 = vmatpush1.msra.mxu0 %v362
    %378 = vmatprep.subr.mxu0 0.0
    %379 = vmatpush1.msra.mxu0 %v363
    %380 = vmatprep.subr.mxu0 0.0
    %381 = vmatpush1.msra.mxu0 0.0
    %382 = vmatprep.subr.mxu0 0.0
    %383 = vmatpush1.msra.mxu0 0.0
    %384 = vmatprep.subr.mxu0 0.0
    %385 = vmatpush1.msra.mxu0 0.0
    %386 = vmatprep.subr.mxu0 0.0
    %387 = vmatpush1.msra.mxu0 0.0
    %388 = vmatprep.subr.mxu0 0.0
    %389 = vmatpush1.msra.mxu0 0.0
    %390 = vmatprep.subr.mxu0 0.0
    %391 = vmatpush1.msra.mxu0 0.0
    %392 = vmatprep.subr.mxu0 0.0
    %393 = vmatpush1.msra.mxu0 0.0
    %394 = vmatprep.subr.mxu0 0.0
    %395 = vmatpush1.msra.mxu0 0.0
    %396 = vmatprep.subr.mxu0 0.0
    %397 = vmatpush1.msra.mxu0 0.0
    %398 = vmatprep.subr.mxu0 0.0
    %399 = vmatpush1.msra.mxu0 0.0
    %400 = vmatprep.subr.mxu0 0.0
    %401 = vmatpush1.msra.mxu0 0.0
    %402 = vmatprep.subr.mxu0 0.0
    %403 = vmatpush1.msra.mxu0 0.0
    %404 = vmatprep.subr.mxu0 0.0
    %405 = vmatpush1.msra.mxu0 0.0
    %406 = vmatprep.subr.mxu0 0.0
    %407 = vmatpush1.msra.mxu0 0.0
    %408 = vmatprep.subr.mxu0 0.0
    %409 = vmatpush1.msra.mxu0 0.0
    %410 = vmatprep.subr.mxu0 0.0
    %411 = vmatpush1.msra.mxu0 0.0
    %412 = vmatprep.subr.mxu0 0.0
    %413 = vmatpush1.msra.mxu0 0.0
    %414 = vmatprep.subr.mxu0 0.0
    %415 = vmatpush1.msra.mxu0 0.0
    %416 = vmatprep.subr.mxu0 0.0
    %417 = vmatpush1.msra.mxu0 0.0
    %418 = vmatprep.subr.mxu0 0.0
    %419 = vmatpush1.msra.mxu0 0.0
    %420 = vmatprep.subr.mxu0 0.0
    %421 = vmatpush1.msra.mxu0 0.0
    %422 = vmatprep.subr.mxu0 0.0
    %423 = vmatpush1.msra.mxu0 0.0
    %424 = vmatprep.subr.mxu0 0.0
    %425 = vmatpush1.msra.mxu0 0.0
    %426 = vmatprep.subr.mxu0 0.0
    %427 = vmatpush1.msra.mxu0 0.0
    %428 = vmatprep.mubr.f32.mxu0 0.0
    %429 = vmatmul.mubr.f32.gmra.mrb[0].mxu0 %v163
    %v430 = vpop.f32.mrb[0].mxu0
    %v431 = vadd.f32 0.0, %v430
    %v432 = vpop.f32.mrb[0].mxu0
    %433 = vmatprep.mubr.f32.mxu0 0.0
    %434 = vmatmul.mubr.f32.gmra.mrb[0].mxu0 %v166
    %v435 = vpop.f32.mrb[0].mxu0
    %v436 = vadd.f32 0.0, %v435
    %v437 = vpop.f32.mrb[0].mxu0
    %438 = vmatprep.mubr.f32.mxu0 0.0
    %439 = vmatmul.mubr.f32.gmra.mrb[0].mxu0 %v169
    %v440 = vpop.f32.mrb[0].mxu0
    %v441 = vadd.f32 0.0, %v440
    %v442 = vpop.f32.mrb[0].mxu0
    %443 = vmatprep.mubr.f32.mxu0 0.0
    %444 = vmatmul.mubr.f32.gmra.mrb[0].mxu0 %v172
    %v445 = vpop.f32.mrb[0].mxu0
    %v446 = vadd.f32 0.0, %v445
    %v447 = vpop.f32.mrb[0].mxu0
    %448 = vdwg.mxu0
    %453 = vrot.lane.b32.xlu0 %v259, 120
    %v454 = vpop.permute.xlu0 %453
    %455 = vrot.lane.b32.xlu0 %v260, 120
    %v456 = vpop.permute.xlu0 %455
    %457 = vrot.lane.b32.xlu0 %v261, 120
    %v458 = vpop.permute.xlu0 %457
    %459 = vrot.lane.b32.xlu0 %v262, 120
    %v460 = vpop.permute.xlu0 %459
    %465 = vrot.lane.b32.xlu0 %v259, 112
    %v466 = vpop.permute.xlu0 %465
    %467 = vrot.lane.b32.xlu0 %v260, 112
    %v468 = vpop.permute.xlu0 %467
    %469 = vrot.lane.b32.xlu0 %v261, 112
    %v470 = vpop.permute.xlu0 %469
    %471 = vrot.lane.b32.xlu0 %v262, 112
    %v472 = vpop.permute.xlu0 %471
    %477 = vrot.lane.b32.xlu0 %v259, 104
    %v478 = vpop.permute.xlu0 %477
    %479 = vrot.lane.b32.xlu0 %v260, 104
    %v480 = vpop.permute.xlu0 %479
    %481 = vrot.lane.b32.xlu0 %v261, 104
    %v482 = vpop.permute.xlu0 %481
    %483 = vrot.lane.b32.xlu0 %v262, 104
    %v484 = vpop.permute.xlu0 %483
    %489 = vrot.lane.b32.xlu0 %v259, 96
    %v490 = vpop.permute.xlu0 %489
    %491 = vrot.lane.b32.xlu0 %v260, 96
    %v492 = vpop.permute.xlu0 %491
    %493 = vrot.lane.b32.xlu0 %v261, 96
    %v494 = vpop.permute.xlu0 %493
    %495 = vrot.lane.b32.xlu0 %v262, 96
    %v496 = vpop.permute.xlu0 %495
    %501 = vrot.lane.b32.xlu0 %v259, 88
    %v502 = vpop.permute.xlu0 %501
    %503 = vrot.lane.b32.xlu0 %v260, 88
    %v504 = vpop.permute.xlu0 %503
    %505 = vrot.lane.b32.xlu0 %v261, 88
    %v506 = vpop.permute.xlu0 %505
    %507 = vrot.lane.b32.xlu0 %v262, 88
    %v508 = vpop.permute.xlu0 %507
    %513 = vrot.lane.b32.xlu0 %v259, 80
    %v514 = vpop.permute.xlu0 %513
    %515 = vrot.lane.b32.xlu0 %v260, 80
    %v516 = vpop.permute.xlu0 %515
    %517 = vrot.lane.b32.xlu0 %v261, 80
    %v518 = vpop.permute.xlu0 %517
    %519 = vrot.lane.b32.xlu0 %v262, 80
    %v520 = vpop.permute.xlu0 %519
    %525 = vrot.lane.b32.xlu0 %v259, 72
    %v526 = vpop.permute.xlu0 %525
    %527 = vrot.lane.b32.xlu0 %v260, 72
    %v528 = vpop.permute.xlu0 %527
    %529 = vrot.lane.b32.xlu0 %v261, 72
    %v530 = vpop.permute.xlu0 %529
    %531 = vrot.lane.b32.xlu0 %v262, 72
    %v532 = vpop.permute.xlu0 %531
    %v537 = vcombine.low %v259, %v466
    %v538 = vcombine.high %v259, %v466
    %v540 = vunpack.c.l.s4 1983009808
    %v541 = vunpack.c.0.s8 %v540
    %v542 = vlaneseq
    %v543 = vshrl.u32 %v542, 7
    %v544 = vsub.s32 %v541, %v543
    %v545 = vrot.slane %v537, %v544
    %v547 = vunpack.c.l.s4 1983009808
    %v548 = vunpack.c.0.s8 %v547
    %v549 = vlaneseq
    %v550 = vshrl.u32 %v549, 7
    %v551 = vsub.s32 %v548, %v550
    %v552 = vrot.slane %v538, %v551
    %v553 = vcombine.low %v454, %v478
    %v554 = vcombine.high %v454, %v478
    %v556 = vunpack.c.l.s4 1983009808
    %v557 = vunpack.c.0.s8 %v556
    %v558 = vlaneseq
    %v559 = vshrl.u32 %v558, 7
    %v560 = vsub.s32 %v557, %v559
    %v561 = vrot.slane %v553, %v560
    %v563 = vunpack.c.l.s4 1983009808
    %v564 = vunpack.c.0.s8 %v563
    %v565 = vlaneseq
    %v566 = vshrl.u32 %v565, 7
    %v567 = vsub.s32 %v564, %v566
    %v568 = vrot.slane %v554, %v567
    %v569 = vcombine.low %v490, %v514
    %v570 = vcombine.high %v490, %v514
    %v572 = vunpack.c.l.s4 1983009808
    %v573 = vunpack.c.0.s8 %v572
    %v574 = vlaneseq
    %v575 = vshrl.u32 %v574, 7
    %v576 = vsub.s32 %v573, %v575
    %v577 = vrot.slane %v569, %v576
    %v579 = vunpack.c.l.s4 1983009808
    %v580 = vunpack.c.0.s8 %v579
    %v581 = vlaneseq
    %v582 = vshrl.u32 %v581, 7
    %v583 = vsub.s32 %v580, %v582
    %v584 = vrot.slane %v570, %v583
    %v585 = vcombine.low %v502, %v526
    %v586 = vcombine.high %v502, %v526
    %v588 = vunpack.c.l.s4 1983009808
    %v589 = vunpack.c.0.s8 %v588
    %v590 = vlaneseq
    %v591 = vshrl.u32 %v590, 7
    %v592 = vsub.s32 %v589, %v591
    %v593 = vrot.slane %v585, %v592
    %v595 = vunpack.c.l.s4 1983009808
    %v596 = vunpack.c.0.s8 %v595
    %v597 = vlaneseq
    %v598 = vshrl.u32 %v597, 7
    %v599 = vsub.s32 %v596, %v598
    %v600 = vrot.slane %v586, %v599
    %v601 = vcombine.low %v545, %v561
    %v602 = vcombine.high %v545, %v561
    %v604 = vunpack.c.l.s4 1934713408
    %v605 = vunpack.c.0.s8 %v604
    %v606 = vlaneseq
    %v607 = vshrl.u32 %v606, 7
    %v608 = vsub.s32 %v605, %v607
    %v609 = vrot.slane %v601, %v608
    %v611 = vunpack.c.l.s4 1934713408
    %v612 = vunpack.c.0.s8 %v611
    %v613 = vlaneseq
    %v614 = vshrl.u32 %v613, 7
    %v615 = vsub.s32 %v612, %v614
    %v616 = vrot.slane %v602, %v615
    %v617 = vcombine.low %v552, %v568
    %v618 = vcombine.high %v552, %v568
    %v620 = vunpack.c.l.s4 1934713408
    %v621 = vunpack.c.0.s8 %v620
    %v622 = vlaneseq
    %v623 = vshrl.u32 %v622, 7
    %v624 = vsub.s32 %v621, %v623
    %v625 = vrot.slane %v617, %v624
    %v627 = vunpack.c.l.s4 1934713408
    %v628 = vunpack.c.0.s8 %v627
    %v629 = vlaneseq
    %v630 = vshrl.u32 %v629, 7
    %v631 = vsub.s32 %v628, %v630
    %v632 = vrot.slane %v618, %v631
    %v633 = vcombine.low %v577, %v593
    %v634 = vcombine.high %v577, %v593
    %v636 = vunpack.c.l.s4 1934713408
    %v637 = vunpack.c.0.s8 %v636
    %v638 = vlaneseq
    %v639 = vshrl.u32 %v638, 7
    %v640 = vsub.s32 %v637, %v639
    %v641 = vrot.slane %v633, %v640
    %v643 = vunpack.c.l.s4 1934713408
    %v644 = vunpack.c.0.s8 %v643
    %v645 = vlaneseq
    %v646 = vshrl.u32 %v645, 7
    %v647 = vsub.s32 %v644, %v646
    %v648 = vrot.slane %v634, %v647
    %v649 = vcombine.low %v584, %v600
    %v650 = vcombine.high %v584, %v600
    %v652 = vunpack.c.l.s4 1934713408
    %v653 = vunpack.c.0.s8 %v652
    %v654 = vlaneseq
    %v655 = vshrl.u32 %v654, 7
    %v656 = vsub.s32 %v653, %v655
    %v657 = vrot.slane %v649, %v656
    %v659 = vunpack.c.l.s4 1934713408
    %v660 = vunpack.c.0.s8 %v659
    %v661 = vlaneseq
    %v662 = vshrl.u32 %v661, 7
    %v663 = vsub.s32 %v660, %v662
    %v664 = vrot.slane %v650, %v663
    %v665 = vcombine.low %v609, %v641
    %v666 = vcombine.high %v609, %v641
    %v667 = vcombine.low %v616, %v648
    %v668 = vcombine.high %v616, %v648
    %v669 = vcombine.low %v625, %v657
    %v670 = vcombine.high %v625, %v657
    %v671 = vcombine.low %v632, %v664
    %v672 = vcombine.high %v632, %v664
    %v673 = vcombine.low %v260, %v468
    %v674 = vcombine.high %v260, %v468
    %v676 = vunpack.c.l.s4 1983009808
    %v677 = vunpack.c.0.s8 %v676
    %v678 = vlaneseq
    %v679 = vshrl.u32 %v678, 7
    %v680 = vsub.s32 %v677, %v679
    %v681 = vrot.slane %v673, %v680
    %v683 = vunpack.c.l.s4 1983009808
    %v684 = vunpack.c.0.s8 %v683
    %v685 = vlaneseq
    %v686 = vshrl.u32 %v685, 7
    %v687 = vsub.s32 %v684, %v686
    %v688 = vrot.slane %v674, %v687
    %v689 = vcombine.low %v456, %v480
    %v690 = vcombine.high %v456, %v480
    %v692 = vunpack.c.l.s4 1983009808
    %v693 = vunpack.c.0.s8 %v692
    %v694 = vlaneseq
    %v695 = vshrl.u32 %v694, 7
    %v696 = vsub.s32 %v693, %v695
    %v697 = vrot.slane %v689, %v696
    %v699 = vunpack.c.l.s4 1983009808
    %v700 = vunpack.c.0.s8 %v699
    %v701 = vlaneseq
    %v702 = vshrl.u32 %v701, 7
    %v703 = vsub.s32 %v700, %v702
    %v704 = vrot.slane %v690, %v703
    %v705 = vcombine.low %v492, %v516
    %v706 = vcombine.high %v492, %v516
    %v708 = vunpack.c.l.s4 1983009808
    %v709 = vunpack.c.0.s8 %v708
    %v710 = vlaneseq
    %v711 = vshrl.u32 %v710, 7
    %v712 = vsub.s32 %v709, %v711
    %v713 = vrot.slane %v705, %v712
    %v715 = vunpack.c.l.s4 1983009808
    %v716 = vunpack.c.0.s8 %v715
    %v717 = vlaneseq
    %v718 = vshrl.u32 %v717, 7
    %v719 = vsub.s32 %v716, %v718
    %v720 = vrot.slane %v706, %v719
    %v721 = vcombine.low %v504, %v528
    %v722 = vcombine.high %v504, %v528
    %v724 = vunpack.c.l.s4 1983009808
    %v725 = vunpack.c.0.s8 %v724
    %v726 = vlaneseq
    %v727 = vshrl.u32 %v726, 7
    %v728 = vsub.s32 %v725, %v727
    %v729 = vrot.slane %v721, %v728
    %v731 = vunpack.c.l.s4 1983009808
    %v732 = vunpack.c.0.s8 %v731
    %v733 = vlaneseq
    %v734 = vshrl.u32 %v733, 7
    %v735 = vsub.s32 %v732, %v734
    %v736 = vrot.slane %v722, %v735
    %v737 = vcombine.low %v681, %v697
    %v738 = vcombine.high %v681, %v697
    %v740 = vunpack.c.l.s4 1934713408
    %v741 = vunpack.c.0.s8 %v740
    %v742 = vlaneseq
    %v743 = vshrl.u32 %v742, 7
    %v744 = vsub.s32 %v741, %v743
    %v745 = vrot.slane %v737, %v744
    %v747 = vunpack.c.l.s4 1934713408
    %v748 = vunpack.c.0.s8 %v747
    %v749 = vlaneseq
    %v750 = vshrl.u32 %v749, 7
    %v751 = vsub.s32 %v748, %v750
    %v752 = vrot.slane %v738, %v751
    %v753 = vcombine.low %v688, %v704
    %v754 = vcombine.high %v688, %v704
    %v756 = vunpack.c.l.s4 1934713408
    %v757 = vunpack.c.0.s8 %v756
    %v758 = vlaneseq
    %v759 = vshrl.u32 %v758, 7
    %v760 = vsub.s32 %v757, %v759
    %v761 = vrot.slane %v753, %v760
    %v763 = vunpack.c.l.s4 1934713408
    %v764 = vunpack.c.0.s8 %v763
    %v765 = vlaneseq
    %v766 = vshrl.u32 %v765, 7
    %v767 = vsub.s32 %v764, %v766
    %v768 = vrot.slane %v754, %v767
    %v769 = vcombine.low %v713, %v729
    %v770 = vcombine.high %v713, %v729
    %v772 = vunpack.c.l.s4 1934713408
    %v773 = vunpack.c.0.s8 %v772
    %v774 = vlaneseq
    %v775 = vshrl.u32 %v774, 7
    %v776 = vsub.s32 %v773, %v775
    %v777 = vrot.slane %v769, %v776
    %v779 = vunpack.c.l.s4 1934713408
    %v780 = vunpack.c.0.s8 %v779
    %v781 = vlaneseq
    %v782 = vshrl.u32 %v781, 7
    %v783 = vsub.s32 %v780, %v782
    %v784 = vrot.slane %v770, %v783
    %v785 = vcombine.low %v720, %v736
    %v786 = vcombine.high %v720, %v736
    %v788 = vunpack.c.l.s4 1934713408
    %v789 = vunpack.c.0.s8 %v788
    %v790 = vlaneseq
    %v791 = vshrl.u32 %v790, 7
    %v792 = vsub.s32 %v789, %v791
    %v793 = vrot.slane %v785, %v792
    %v795 = vunpack.c.l.s4 1934713408
    %v796 = vunpack.c.0.s8 %v795
    %v797 = vlaneseq
    %v798 = vshrl.u32 %v797, 7
    %v799 = vsub.s32 %v796, %v798
    %v800 = vrot.slane %v786, %v799
    %v801 = vcombine.low %v745, %v777
    %v802 = vcombine.high %v745, %v777
    %v803 = vcombine.low %v752, %v784
    %v804 = vcombine.high %v752, %v784
    %v805 = vcombine.low %v761, %v793
    %v806 = vcombine.high %v761, %v793
    %v807 = vcombine.low %v768, %v800
    %v808 = vcombine.high %v768, %v800
    %v809 = vcombine.low %v261, %v470
    %v810 = vcombine.high %v261, %v470
    %v812 = vunpack.c.l.s4 1983009808
    %v813 = vunpack.c.0.s8 %v812
    %v814 = vlaneseq
    %v815 = vshrl.u32 %v814, 7
    %v816 = vsub.s32 %v813, %v815
    %v817 = vrot.slane %v809, %v816
    %v819 = vunpack.c.l.s4 1983009808
    %v820 = vunpack.c.0.s8 %v819
    %v821 = vlaneseq
    %v822 = vshrl.u32 %v821, 7
    %v823 = vsub.s32 %v820, %v822
    %v824 = vrot.slane %v810, %v823
    %v825 = vcombine.low %v458, %v482
    %v826 = vcombine.high %v458, %v482
    %v828 = vunpack.c.l.s4 1983009808
    %v829 = vunpack.c.0.s8 %v828
    %v830 = vlaneseq
    %v831 = vshrl.u32 %v830, 7
    %v832 = vsub.s32 %v829, %v831
    %v833 = vrot.slane %v825, %v832
    %v835 = vunpack.c.l.s4 1983009808
    %v836 = vunpack.c.0.s8 %v835
    %v837 = vlaneseq
    %v838 = vshrl.u32 %v837, 7
    %v839 = vsub.s32 %v836, %v838
    %v840 = vrot.slane %v826, %v839
    %v841 = vcombine.low %v494, %v518
    %v842 = vcombine.high %v494, %v518
    %v844 = vunpack.c.l.s4 1983009808
    %v845 = vunpack.c.0.s8 %v844
    %v846 = vlaneseq
    %v847 = vshrl.u32 %v846, 7
    %v848 = vsub.s32 %v845, %v847
    %v849 = vrot.slane %v841, %v848
    %v851 = vunpack.c.l.s4 1983009808
    %v852 = vunpack.c.0.s8 %v851
    %v853 = vlaneseq
    %v854 = vshrl.u32 %v853, 7
    %v855 = vsub.s32 %v852, %v854
    %v856 = vrot.slane %v842, %v855
    %v857 = vcombine.low %v506, %v530
    %v858 = vcombine.high %v506, %v530
    %v860 = vunpack.c.l.s4 1983009808
    %v861 = vunpack.c.0.s8 %v860
    %v862 = vlaneseq
    %v863 = vshrl.u32 %v862, 7
    %v864 = vsub.s32 %v861, %v863
    %v865 = vrot.slane %v857, %v864
    %v867 = vunpack.c.l.s4 1983009808
    %v868 = vunpack.c.0.s8 %v867
    %v869 = vlaneseq
    %v870 = vshrl.u32 %v869, 7
    %v871 = vsub.s32 %v868, %v870
    %v872 = vrot.slane %v858, %v871
    %v873 = vcombine.low %v817, %v833
    %v874 = vcombine.high %v817, %v833
    %v876 = vunpack.c.l.s4 1934713408
    %v877 = vunpack.c.0.s8 %v876
    %v878 = vlaneseq
    %v879 = vshrl.u32 %v878, 7
    %v880 = vsub.s32 %v877, %v879
    %v881 = vrot.slane %v873, %v880
    %v883 = vunpack.c.l.s4 1934713408
    %v884 = vunpack.c.0.s8 %v883
    %v885 = vlaneseq
    %v886 = vshrl.u32 %v885, 7
    %v887 = vsub.s32 %v884, %v886
    %v888 = vrot.slane %v874, %v887
    %v889 = vcombine.low %v824, %v840
    %v890 = vcombine.high %v824, %v840
    %v892 = vunpack.c.l.s4 1934713408
    %v893 = vunpack.c.0.s8 %v892
    %v894 = vlaneseq
    %v895 = vshrl.u32 %v894, 7
    %v896 = vsub.s32 %v893, %v895
    %v897 = vrot.slane %v889, %v896
    %v899 = vunpack.c.l.s4 1934713408
    %v900 = vunpack.c.0.s8 %v899
    %v901 = vlaneseq
    %v902 = vshrl.u32 %v901, 7
    %v903 = vsub.s32 %v900, %v902
    %v904 = vrot.slane %v890, %v903
    %v905 = vcombine.low %v849, %v865
    %v906 = vcombine.high %v849, %v865
    %v908 = vunpack.c.l.s4 1934713408
    %v909 = vunpack.c.0.s8 %v908
    %v910 = vlaneseq
    %v911 = vshrl.u32 %v910, 7
    %v912 = vsub.s32 %v909, %v911
    %v913 = vrot.slane %v905, %v912
    %v915 = vunpack.c.l.s4 1934713408
    %v916 = vunpack.c.0.s8 %v915
    %v917 = vlaneseq
    %v918 = vshrl.u32 %v917, 7
    %v919 = vsub.s32 %v916, %v918
    %v920 = vrot.slane %v906, %v919
    %v921 = vcombine.low %v856, %v872
    %v922 = vcombine.high %v856, %v872
    %v924 = vunpack.c.l.s4 1934713408
    %v925 = vunpack.c.0.s8 %v924
    %v926 = vlaneseq
    %v927 = vshrl.u32 %v926, 7
    %v928 = vsub.s32 %v925, %v927
    %v929 = vrot.slane %v921, %v928
    %v931 = vunpack.c.l.s4 1934713408
    %v932 = vunpack.c.0.s8 %v931
    %v933 = vlaneseq
    %v934 = vshrl.u32 %v933, 7
    %v935 = vsub.s32 %v932, %v934
    %v936 = vrot.slane %v922, %v935
    %v937 = vcombine.low %v881, %v913
    %v938 = vcombine.high %v881, %v913
    %v939 = vcombine.low %v888, %v920
    %v940 = vcombine.high %v888, %v920
    %v941 = vcombine.low %v897, %v929
    %v942 = vcombine.high %v897, %v929
    %v943 = vcombine.low %v904, %v936
    %v944 = vcombine.high %v904, %v936
    %v945 = vcombine.low %v262, %v472
    %v946 = vcombine.high %v262, %v472
    %v948 = vunpack.c.l.s4 1983009808
    %v949 = vunpack.c.0.s8 %v948
    %v950 = vlaneseq
    %v951 = vshrl.u32 %v950, 7
    %v952 = vsub.s32 %v949, %v951
    %v953 = vrot.slane %v945, %v952
    %v955 = vunpack.c.l.s4 1983009808
    %v956 = vunpack.c.0.s8 %v955
    %v957 = vlaneseq
    %v958 = vshrl.u32 %v957, 7
    %v959 = vsub.s32 %v956, %v958
    %v960 = vrot.slane %v946, %v959
    %v961 = vcombine.low %v460, %v484
    %v962 = vcombine.high %v460, %v484
    %v964 = vunpack.c.l.s4 1983009808
    %v965 = vunpack.c.0.s8 %v964
    %v966 = vlaneseq
    %v967 = vshrl.u32 %v966, 7
    %v968 = vsub.s32 %v965, %v967
    %v969 = vrot.slane %v961, %v968
    %v971 = vunpack.c.l.s4 1983009808
    %v972 = vunpack.c.0.s8 %v971
    %v973 = vlaneseq
    %v974 = vshrl.u32 %v973, 7
    %v975 = vsub.s32 %v972, %v974
    %v976 = vrot.slane %v962, %v975
    %v977 = vcombine.low %v496, %v520
    %v978 = vcombine.high %v496, %v520
    %v980 = vunpack.c.l.s4 1983009808
    %v981 = vunpack.c.0.s8 %v980
    %v982 = vlaneseq
    %v983 = vshrl.u32 %v982, 7
    %v984 = vsub.s32 %v981, %v983
    %v985 = vrot.slane %v977, %v984
    %v987 = vunpack.c.l.s4 1983009808
    %v988 = vunpack.c.0.s8 %v987
    %v989 = vlaneseq
    %v990 = vshrl.u32 %v989, 7
    %v991 = vsub.s32 %v988, %v990
    %v992 = vrot.slane %v978, %v991
    %v993 = vcombine.low %v508, %v532
    %v994 = vcombine.high %v508, %v532
    %v996 = vunpack.c.l.s4 1983009808
    %v997 = vunpack.c.0.s8 %v996
    %v998 = vlaneseq
    %v999 = vshrl.u32 %v998, 7
    %v1000 = vsub.s32 %v997, %v999
    %v1001 = vrot.slane %v993, %v1000
    %v1003 = vunpack.c.l.s4 1983009808
    %v1004 = vunpack.c.0.s8 %v1003
    %v1005 = vlaneseq
    %v1006 = vshrl.u32 %v1005, 7
    %v1007 = vsub.s32 %v1004, %v1006
    %v1008 = vrot.slane %v994, %v1007
    %v1009 = vcombine.low %v953, %v969
    %v1010 = vcombine.high %v953, %v969
    %v1012 = vunpack.c.l.s4 1934713408
    %v1013 = vunpack.c.0.s8 %v1012
    %v1014 = vlaneseq
    %v1015 = vshrl.u32 %v1014, 7
    %v1016 = vsub.s32 %v1013, %v1015
    %v1017 = vrot.slane %v1009, %v1016
    %v1019 = vunpack.c.l.s4 1934713408
    %v1020 = vunpack.c.0.s8 %v1019
    %v1021 = vlaneseq
    %v1022 = vshrl.u32 %v1021, 7
    %v1023 = vsub.s32 %v1020, %v1022
    %v1024 = vrot.slane %v1010, %v1023
    %v1025 = vcombine.low %v960, %v976
    %v1026 = vcombine.high %v960, %v976
    %v1028 = vunpack.c.l.s4 1934713408
    %v1029 = vunpack.c.0.s8 %v1028
    %v1030 = vlaneseq
    %v1031 = vshrl.u32 %v1030, 7
    %v1032 = vsub.s32 %v1029, %v1031
    %v1033 = vrot.slane %v1025, %v1032
    %v1035 = vunpack.c.l.s4 1934713408
    %v1036 = vunpack.c.0.s8 %v1035
    %v1037 = vlaneseq
    %v1038 = vshrl.u32 %v1037, 7
    %v1039 = vsub.s32 %v1036, %v1038
    %v1040 = vrot.slane %v1026, %v1039
    %v1041 = vcombine.low %v985, %v1001
    %v1042 = vcombine.high %v985, %v1001
    %v1044 = vunpack.c.l.s4 1934713408
    %v1045 = vunpack.c.0.s8 %v1044
    %v1046 = vlaneseq
    %v1047 = vshrl.u32 %v1046, 7
    %v1048 = vsub.s32 %v1045, %v1047
    %v1049 = vrot.slane %v1041, %v1048
    %v1051 = vunpack.c.l.s4 1934713408
    %v1052 = vunpack.c.0.s8 %v1051
    %v1053 = vlaneseq
    %v1054 = vshrl.u32 %v1053, 7
    %v1055 = vsub.s32 %v1052, %v1054
    %v1056 = vrot.slane %v1042, %v1055
    %v1057 = vcombine.low %v992, %v1008
    %v1058 = vcombine.high %v992, %v1008
    %v1060 = vunpack.c.l.s4 1934713408
    %v1061 = vunpack.c.0.s8 %v1060
    %v1062 = vlaneseq
    %v1063 = vshrl.u32 %v1062, 7
    %v1064 = vsub.s32 %v1061, %v1063
    %v1065 = vrot.slane %v1057, %v1064
    %v1067 = vunpack.c.l.s4 1934713408
    %v1068 = vunpack.c.0.s8 %v1067
    %v1069 = vlaneseq
    %v1070 = vshrl.u32 %v1069, 7
    %v1071 = vsub.s32 %v1068, %v1070
    %v1072 = vrot.slane %v1058, %v1071
    %v1073 = vcombine.low %v1017, %v1049
    %v1074 = vcombine.high %v1017, %v1049
    %v1075 = vcombine.low %v1024, %v1056
    %v1076 = vcombine.high %v1024, %v1056
    %v1077 = vcombine.low %v1033, %v1065
    %v1078 = vcombine.high %v1033, %v1065
    %v1079 = vcombine.low %v1040, %v1072
    %v1080 = vcombine.high %v1040, %v1072
    %v1081 = vcombine.low %v665, %v667
    %v1082 = vcombine.high %v665, %v667
    %v1084 = vunpack.c.l.s4 1983009808
    %v1085 = vunpack.c.0.s8 %v1084
    %v1086 = vlaneseq
    %v1087 = vshrl.u32 %v1086, 7
    %v1088 = vsub.s32 %v1085, %v1087
    %v1089 = vrot.slane %v1081, %v1088
    %v1091 = vunpack.c.l.s4 1983009808
    %v1092 = vunpack.c.0.s8 %v1091
    %v1093 = vlaneseq
    %v1094 = vshrl.u32 %v1093, 7
    %v1095 = vsub.s32 %v1092, %v1094
    %v1096 = vrot.slane %v1082, %v1095
    %v1097 = vcombine.low %v666, %v668
    %v1098 = vcombine.high %v666, %v668
    %v1100 = vunpack.c.l.s4 1983009808
    %v1101 = vunpack.c.0.s8 %v1100
    %v1102 = vlaneseq
    %v1103 = vshrl.u32 %v1102, 7
    %v1104 = vsub.s32 %v1101, %v1103
    %v1105 = vrot.slane %v1097, %v1104
    %v1107 = vunpack.c.l.s4 1983009808
    %v1108 = vunpack.c.0.s8 %v1107
    %v1109 = vlaneseq
    %v1110 = vshrl.u32 %v1109, 7
    %v1111 = vsub.s32 %v1108, %v1110
    %v1112 = vrot.slane %v1098, %v1111
    %v1113 = vcombine.low %v669, %v671
    %v1114 = vcombine.high %v669, %v671
    %v1116 = vunpack.c.l.s4 1983009808
    %v1117 = vunpack.c.0.s8 %v1116
    %v1118 = vlaneseq
    %v1119 = vshrl.u32 %v1118, 7
    %v1120 = vsub.s32 %v1117, %v1119
    %v1121 = vrot.slane %v1113, %v1120
    %v1123 = vunpack.c.l.s4 1983009808
    %v1124 = vunpack.c.0.s8 %v1123
    %v1125 = vlaneseq
    %v1126 = vshrl.u32 %v1125, 7
    %v1127 = vsub.s32 %v1124, %v1126
    %v1128 = vrot.slane %v1114, %v1127
    %v1129 = vcombine.low %v670, %v672
    %v1130 = vcombine.high %v670, %v672
    %v1132 = vunpack.c.l.s4 1983009808
    %v1133 = vunpack.c.0.s8 %v1132
    %v1134 = vlaneseq
    %v1135 = vshrl.u32 %v1134, 7
    %v1136 = vsub.s32 %v1133, %v1135
    %v1137 = vrot.slane %v1129, %v1136
    %v1139 = vunpack.c.l.s4 1983009808
    %v1140 = vunpack.c.0.s8 %v1139
    %v1141 = vlaneseq
    %v1142 = vshrl.u32 %v1141, 7
    %v1143 = vsub.s32 %v1140, %v1142
    %v1144 = vrot.slane %v1130, %v1143
    %v1145 = vcombine.low %v1089, %v1105
    %v1146 = vcombine.high %v1089, %v1105
    %v1148 = vunpack.c.l.s4 1934713408
    %v1149 = vunpack.c.0.s8 %v1148
    %v1150 = vlaneseq
    %v1151 = vshrl.u32 %v1150, 7
    %v1152 = vsub.s32 %v1149, %v1151
    %v1153 = vrot.slane %v1145, %v1152
    %v1155 = vunpack.c.l.s4 1934713408
    %v1156 = vunpack.c.0.s8 %v1155
    %v1157 = vlaneseq
    %v1158 = vshrl.u32 %v1157, 7
    %v1159 = vsub.s32 %v1156, %v1158
    %v1160 = vrot.slane %v1146, %v1159
    %v1161 = vcombine.low %v1096, %v1112
    %v1162 = vcombine.high %v1096, %v1112
    %v1164 = vunpack.c.l.s4 1934713408
    %v1165 = vunpack.c.0.s8 %v1164
    %v1166 = vlaneseq
    %v1167 = vshrl.u32 %v1166, 7
    %v1168 = vsub.s32 %v1165, %v1167
    %v1169 = vrot.slane %v1161, %v1168
    %v1171 = vunpack.c.l.s4 1934713408
    %v1172 = vunpack.c.0.s8 %v1171
    %v1173 = vlaneseq
    %v1174 = vshrl.u32 %v1173, 7
    %v1175 = vsub.s32 %v1172, %v1174
    %v1176 = vrot.slane %v1162, %v1175
    %v1177 = vcombine.low %v1121, %v1137
    %v1178 = vcombine.high %v1121, %v1137
    %v1180 = vunpack.c.l.s4 1934713408
    %v1181 = vunpack.c.0.s8 %v1180
    %v1182 = vlaneseq
    %v1183 = vshrl.u32 %v1182, 7
    %v1184 = vsub.s32 %v1181, %v1183
    %v1185 = vrot.slane %v1177, %v1184
    %v1187 = vunpack.c.l.s4 1934713408
    %v1188 = vunpack.c.0.s8 %v1187
    %v1189 = vlaneseq
    %v1190 = vshrl.u32 %v1189, 7
    %v1191 = vsub.s32 %v1188, %v1190
    %v1192 = vrot.slane %v1178, %v1191
    %v1193 = vcombine.low %v1128, %v1144
    %v1194 = vcombine.high %v1128, %v1144
    %v1196 = vunpack.c.l.s4 1934713408
    %v1197 = vunpack.c.0.s8 %v1196
    %v1198 = vlaneseq
    %v1199 = vshrl.u32 %v1198, 7
    %v1200 = vsub.s32 %v1197, %v1199
    %v1201 = vrot.slane %v1193, %v1200
    %v1203 = vunpack.c.l.s4 1934713408
    %v1204 = vunpack.c.0.s8 %v1203
    %v1205 = vlaneseq
    %v1206 = vshrl.u32 %v1205, 7
    %v1207 = vsub.s32 %v1204, %v1206
    %v1208 = vrot.slane %v1194, %v1207
    %v1209 = vcombine.low %v1153, %v1185
    %v1210 = vcombine.high %v1153, %v1185
    %v1211 = vcombine.low %v1160, %v1192
    %v1212 = vcombine.high %v1160, %v1192
    %v1213 = vcombine.low %v1169, %v1201
    %v1214 = vcombine.high %v1169, %v1201
    %v1215 = vcombine.low %v1176, %v1208
    %v1216 = vcombine.high %v1176, %v1208
    %v1217 = vcombine.low %v801, %v803
    %v1218 = vcombine.high %v801, %v803
    %v1220 = vunpack.c.l.s4 1983009808
    %v1221 = vunpack.c.0.s8 %v1220
    %v1222 = vlaneseq
    %v1223 = vshrl.u32 %v1222, 7
    %v1224 = vsub.s32 %v1221, %v1223
    %v1225 = vrot.slane %v1217, %v1224
    %v1227 = vunpack.c.l.s4 1983009808
    %v1228 = vunpack.c.0.s8 %v1227
    %v1229 = vlaneseq
    %v1230 = vshrl.u32 %v1229, 7
    %v1231 = vsub.s32 %v1228, %v1230
    %v1232 = vrot.slane %v1218, %v1231
    %v1233 = vcombine.low %v802, %v804
    %v1234 = vcombine.high %v802, %v804
    %v1236 = vunpack.c.l.s4 1983009808
    %v1237 = vunpack.c.0.s8 %v1236
    %v1238 = vlaneseq
    %v1239 = vshrl.u32 %v1238, 7
    %v1240 = vsub.s32 %v1237, %v1239
    %v1241 = vrot.slane %v1233, %v1240
    %v1243 = vunpack.c.l.s4 1983009808
    %v1244 = vunpack.c.0.s8 %v1243
    %v1245 = vlaneseq
    %v1246 = vshrl.u32 %v1245, 7
    %v1247 = vsub.s32 %v1244, %v1246
    %v1248 = vrot.slane %v1234, %v1247
    %v1249 = vcombine.low %v805, %v807
    %v1250 = vcombine.high %v805, %v807
    %v1252 = vunpack.c.l.s4 1983009808
    %v1253 = vunpack.c.0.s8 %v1252
    %v1254 = vlaneseq
    %v1255 = vshrl.u32 %v1254, 7
    %v1256 = vsub.s32 %v1253, %v1255
    %v1257 = vrot.slane %v1249, %v1256
    %v1259 = vunpack.c.l.s4 1983009808
    %v1260 = vunpack.c.0.s8 %v1259
    %v1261 = vlaneseq
    %v1262 = vshrl.u32 %v1261, 7
    %v1263 = vsub.s32 %v1260, %v1262
    %v1264 = vrot.slane %v1250, %v1263
    %v1265 = vcombine.low %v806, %v808
    %v1266 = vcombine.high %v806, %v808
    %v1268 = vunpack.c.l.s4 1983009808
    %v1269 = vunpack.c.0.s8 %v1268
    %v1270 = vlaneseq
    %v1271 = vshrl.u32 %v1270, 7
    %v1272 = vsub.s32 %v1269, %v1271
    %v1273 = vrot.slane %v1265, %v1272
    %v1275 = vunpack.c.l.s4 1983009808
    %v1276 = vunpack.c.0.s8 %v1275
    %v1277 = vlaneseq
    %v1278 = vshrl.u32 %v1277, 7
    %v1279 = vsub.s32 %v1276, %v1278
    %v1280 = vrot.slane %v1266, %v1279
    %v1281 = vcombine.low %v1225, %v1241
    %v1282 = vcombine.high %v1225, %v1241
    %v1284 = vunpack.c.l.s4 1934713408
    %v1285 = vunpack.c.0.s8 %v1284
    %v1286 = vlaneseq
    %v1287 = vshrl.u32 %v1286, 7
    %v1288 = vsub.s32 %v1285, %v1287
    %v1289 = vrot.slane %v1281, %v1288
    %v1291 = vunpack.c.l.s4 1934713408
    %v1292 = vunpack.c.0.s8 %v1291
    %v1293 = vlaneseq
    %v1294 = vshrl.u32 %v1293, 7
    %v1295 = vsub.s32 %v1292, %v1294
    %v1296 = vrot.slane %v1282, %v1295
    %v1297 = vcombine.low %v1232, %v1248
    %v1298 = vcombine.high %v1232, %v1248
    %v1300 = vunpack.c.l.s4 1934713408
    %v1301 = vunpack.c.0.s8 %v1300
    %v1302 = vlaneseq
    %v1303 = vshrl.u32 %v1302, 7
    %v1304 = vsub.s32 %v1301, %v1303
    %v1305 = vrot.slane %v1297, %v1304
    %v1307 = vunpack.c.l.s4 1934713408
    %v1308 = vunpack.c.0.s8 %v1307
    %v1309 = vlaneseq
    %v1310 = vshrl.u32 %v1309, 7
    %v1311 = vsub.s32 %v1308, %v1310
    %v1312 = vrot.slane %v1298, %v1311
    %v1313 = vcombine.low %v1257, %v1273
    %v1314 = vcombine.high %v1257, %v1273
    %v1316 = vunpack.c.l.s4 1934713408
    %v1317 = vunpack.c.0.s8 %v1316
    %v1318 = vlaneseq
    %v1319 = vshrl.u32 %v1318, 7
    %v1320 = vsub.s32 %v1317, %v1319
    %v1321 = vrot.slane %v1313, %v1320
    %v1323 = vunpack.c.l.s4 1934713408
    %v1324 = vunpack.c.0.s8 %v1323
    %v1325 = vlaneseq
    %v1326 = vshrl.u32 %v1325, 7
    %v1327 = vsub.s32 %v1324, %v1326
    %v1328 = vrot.slane %v1314, %v1327
    %v1329 = vcombine.low %v1264, %v1280
    %v1330 = vcombine.high %v1264, %v1280
    %v1332 = vunpack.c.l.s4 1934713408
    %v1333 = vunpack.c.0.s8 %v1332
    %v1334 = vlaneseq
    %v1335 = vshrl.u32 %v1334, 7
    %v1336 = vsub.s32 %v1333, %v1335
    %v1337 = vrot.slane %v1329, %v1336
    %v1339 = vunpack.c.l.s4 1934713408
    %v1340 = vunpack.c.0.s8 %v1339
    %v1341 = vlaneseq
    %v1342 = vshrl.u32 %v1341, 7
    %v1343 = vsub.s32 %v1340, %v1342
    %v1344 = vrot.slane %v1330, %v1343
    %v1345 = vcombine.low %v1289, %v1321
    %v1346 = vcombine.high %v1289, %v1321
    %v1347 = vcombine.low %v1296, %v1328
    %v1348 = vcombine.high %v1296, %v1328
    %v1349 = vcombine.low %v1305, %v1337
    %v1350 = vcombine.high %v1305, %v1337
    %v1351 = vcombine.low %v1312, %v1344
    %v1352 = vcombine.high %v1312, %v1344
    %v1353 = vcombine.low %v937, %v939
    %v1354 = vcombine.high %v937, %v939
    %v1356 = vunpack.c.l.s4 1983009808
    %v1357 = vunpack.c.0.s8 %v1356
    %v1358 = vlaneseq
    %v1359 = vshrl.u32 %v1358, 7
    %v1360 = vsub.s32 %v1357, %v1359
    %v1361 = vrot.slane %v1353, %v1360
    %v1363 = vunpack.c.l.s4 1983009808
    %v1364 = vunpack.c.0.s8 %v1363
    %v1365 = vlaneseq
    %v1366 = vshrl.u32 %v1365, 7
    %v1367 = vsub.s32 %v1364, %v1366
    %v1368 = vrot.slane %v1354, %v1367
    %v1369 = vcombine.low %v938, %v940
    %v1370 = vcombine.high %v938, %v940
    %v1372 = vunpack.c.l.s4 1983009808
    %v1373 = vunpack.c.0.s8 %v1372
    %v1374 = vlaneseq
    %v1375 = vshrl.u32 %v1374, 7
    %v1376 = vsub.s32 %v1373, %v1375
    %v1377 = vrot.slane %v1369, %v1376
    %v1379 = vunpack.c.l.s4 1983009808
    %v1380 = vunpack.c.0.s8 %v1379
    %v1381 = vlaneseq
    %v1382 = vshrl.u32 %v1381, 7
    %v1383 = vsub.s32 %v1380, %v1382
    %v1384 = vrot.slane %v1370, %v1383
    %v1385 = vcombine.low %v941, %v943
    %v1386 = vcombine.high %v941, %v943
    %v1388 = vunpack.c.l.s4 1983009808
    %v1389 = vunpack.c.0.s8 %v1388
    %v1390 = vlaneseq
    %v1391 = vshrl.u32 %v1390, 7
    %v1392 = vsub.s32 %v1389, %v1391
    %v1393 = vrot.slane %v1385, %v1392
    %v1395 = vunpack.c.l.s4 1983009808
    %v1396 = vunpack.c.0.s8 %v1395
    %v1397 = vlaneseq
    %v1398 = vshrl.u32 %v1397, 7
    %v1399 = vsub.s32 %v1396, %v1398
    %v1400 = vrot.slane %v1386, %v1399
    %v1401 = vcombine.low %v942, %v944
    %v1402 = vcombine.high %v942, %v944
    %v1404 = vunpack.c.l.s4 1983009808
    %v1405 = vunpack.c.0.s8 %v1404
    %v1406 = vlaneseq
    %v1407 = vshrl.u32 %v1406, 7
    %v1408 = vsub.s32 %v1405, %v1407
    %v1409 = vrot.slane %v1401, %v1408
    %v1411 = vunpack.c.l.s4 1983009808
    %v1412 = vunpack.c.0.s8 %v1411
    %v1413 = vlaneseq
    %v1414 = vshrl.u32 %v1413, 7
    %v1415 = vsub.s32 %v1412, %v1414
    %v1416 = vrot.slane %v1402, %v1415
    %v1417 = vcombine.low %v1361, %v1377
    %v1418 = vcombine.high %v1361, %v1377
    %v1420 = vunpack.c.l.s4 1934713408
    %v1421 = vunpack.c.0.s8 %v1420
    %v1422 = vlaneseq
    %v1423 = vshrl.u32 %v1422, 7
    %v1424 = vsub.s32 %v1421, %v1423
    %v1425 = vrot.slane %v1417, %v1424
    %v1427 = vunpack.c.l.s4 1934713408
    %v1428 = vunpack.c.0.s8 %v1427
    %v1429 = vlaneseq
    %v1430 = vshrl.u32 %v1429, 7
    %v1431 = vsub.s32 %v1428, %v1430
    %v1432 = vrot.slane %v1418, %v1431
    %v1433 = vcombine.low %v1368, %v1384
    %v1434 = vcombine.high %v1368, %v1384
    %v1436 = vunpack.c.l.s4 1934713408
    %v1437 = vunpack.c.0.s8 %v1436
    %v1438 = vlaneseq
    %v1439 = vshrl.u32 %v1438, 7
    %v1440 = vsub.s32 %v1437, %v1439
    %v1441 = vrot.slane %v1433, %v1440
    %v1443 = vunpack.c.l.s4 1934713408
    %v1444 = vunpack.c.0.s8 %v1443
    %v1445 = vlaneseq
    %v1446 = vshrl.u32 %v1445, 7
    %v1447 = vsub.s32 %v1444, %v1446
    %v1448 = vrot.slane %v1434, %v1447
    %v1449 = vcombine.low %v1393, %v1409
    %v1450 = vcombine.high %v1393, %v1409
    %v1452 = vunpack.c.l.s4 1934713408
    %v1453 = vunpack.c.0.s8 %v1452
    %v1454 = vlaneseq
    %v1455 = vshrl.u32 %v1454, 7
    %v1456 = vsub.s32 %v1453, %v1455
    %v1457 = vrot.slane %v1449, %v1456
    %v1459 = vunpack.c.l.s4 1934713408
    %v1460 = vunpack.c.0.s8 %v1459
    %v1461 = vlaneseq
    %v1462 = vshrl.u32 %v1461, 7
    %v1463 = vsub.s32 %v1460, %v1462
    %v1464 = vrot.slane %v1450, %v1463
    %v1465 = vcombine.low %v1400, %v1416
    %v1466 = vcombine.high %v1400, %v1416
    %v1468 = vunpack.c.l.s4 1934713408
    %v1469 = vunpack.c.0.s8 %v1468
    %v1470 = vlaneseq
    %v1471 = vshrl.u32 %v1470, 7
    %v1472 = vsub.s32 %v1469, %v1471
    %v1473 = vrot.slane %v1465, %v1472
    %v1475 = vunpack.c.l.s4 1934713408
    %v1476 = vunpack.c.0.s8 %v1475
    %v1477 = vlaneseq
    %v1478 = vshrl.u32 %v1477, 7
    %v1479 = vsub.s32 %v1476, %v1478
    %v1480 = vrot.slane %v1466, %v1479
    %v1481 = vcombine.low %v1425, %v1457
    %v1482 = vcombine.high %v1425, %v1457
    %v1483 = vcombine.low %v1432, %v1464
    %v1484 = vcombine.high %v1432, %v1464
    %v1485 = vcombine.low %v1441, %v1473
    %v1486 = vcombine.high %v1441, %v1473
    %v1487 = vcombine.low %v1448, %v1480
    %v1488 = vcombine.high %v1448, %v1480
    %v1489 = vcombine.low %v1073, %v1075
    %v1490 = vcombine.high %v1073, %v1075
    %v1492 = vunpack.c.l.s4 1983009808
    %v1493 = vunpack.c.0.s8 %v1492
    %v1494 = vlaneseq
    %v1495 = vshrl.u32 %v1494, 7
    %v1496 = vsub.s32 %v1493, %v1495
    %v1497 = vrot.slane %v1489, %v1496
    %v1499 = vunpack.c.l.s4 1983009808
    %v1500 = vunpack.c.0.s8 %v1499
    %v1501 = vlaneseq
    %v1502 = vshrl.u32 %v1501, 7
    %v1503 = vsub.s32 %v1500, %v1502
    %v1504 = vrot.slane %v1490, %v1503
    %v1505 = vcombine.low %v1074, %v1076
    %v1506 = vcombine.high %v1074, %v1076
    %v1508 = vunpack.c.l.s4 1983009808
    %v1509 = vunpack.c.0.s8 %v1508
    %v1510 = vlaneseq
    %v1511 = vshrl.u32 %v1510, 7
    %v1512 = vsub.s32 %v1509, %v1511
    %v1513 = vrot.slane %v1505, %v1512
    %v1515 = vunpack.c.l.s4 1983009808
    %v1516 = vunpack.c.0.s8 %v1515
    %v1517 = vlaneseq
    %v1518 = vshrl.u32 %v1517, 7
    %v1519 = vsub.s32 %v1516, %v1518
    %v1520 = vrot.slane %v1506, %v1519
    %v1521 = vcombine.low %v1077, %v1079
    %v1522 = vcombine.high %v1077, %v1079
    %v1524 = vunpack.c.l.s4 1983009808
    %v1525 = vunpack.c.0.s8 %v1524
    %v1526 = vlaneseq
    %v1527 = vshrl.u32 %v1526, 7
    %v1528 = vsub.s32 %v1525, %v1527
    %v1529 = vrot.slane %v1521, %v1528
    %v1531 = vunpack.c.l.s4 1983009808
    %v1532 = vunpack.c.0.s8 %v1531
    %v1533 = vlaneseq
    %v1534 = vshrl.u32 %v1533, 7
    %v1535 = vsub.s32 %v1532, %v1534
    %v1536 = vrot.slane %v1522, %v1535
    %v1537 = vcombine.low %v1078, %v1080
    %v1538 = vcombine.high %v1078, %v1080
    %v1540 = vunpack.c.l.s4 1983009808
    %v1541 = vunpack.c.0.s8 %v1540
    %v1542 = vlaneseq
    %v1543 = vshrl.u32 %v1542, 7
    %v1544 = vsub.s32 %v1541, %v1543
    %v1545 = vrot.slane %v1537, %v1544
    %v1547 = vunpack.c.l.s4 1983009808
    %v1548 = vunpack.c.0.s8 %v1547
    %v1549 = vlaneseq
    %v1550 = vshrl.u32 %v1549, 7
    %v1551 = vsub.s32 %v1548, %v1550
    %v1552 = vrot.slane %v1538, %v1551
    %v1553 = vcombine.low %v1497, %v1513
    %v1554 = vcombine.high %v1497, %v1513
    %v1556 = vunpack.c.l.s4 1934713408
    %v1557 = vunpack.c.0.s8 %v1556
    %v1558 = vlaneseq
    %v1559 = vshrl.u32 %v1558, 7
    %v1560 = vsub.s32 %v1557, %v1559
    %v1561 = vrot.slane %v1553, %v1560
    %v1563 = vunpack.c.l.s4 1934713408
    %v1564 = vunpack.c.0.s8 %v1563
    %v1565 = vlaneseq
    %v1566 = vshrl.u32 %v1565, 7
    %v1567 = vsub.s32 %v1564, %v1566
    %v1568 = vrot.slane %v1554, %v1567
    %v1569 = vcombine.low %v1504, %v1520
    %v1570 = vcombine.high %v1504, %v1520
    %v1572 = vunpack.c.l.s4 1934713408
    %v1573 = vunpack.c.0.s8 %v1572
    %v1574 = vlaneseq
    %v1575 = vshrl.u32 %v1574, 7
    %v1576 = vsub.s32 %v1573, %v1575
    %v1577 = vrot.slane %v1569, %v1576
    %v1579 = vunpack.c.l.s4 1934713408
    %v1580 = vunpack.c.0.s8 %v1579
    %v1581 = vlaneseq
    %v1582 = vshrl.u32 %v1581, 7
    %v1583 = vsub.s32 %v1580, %v1582
    %v1584 = vrot.slane %v1570, %v1583
    %v1585 = vcombine.low %v1529, %v1545
    %v1586 = vcombine.high %v1529, %v1545
    %v1588 = vunpack.c.l.s4 1934713408
    %v1589 = vunpack.c.0.s8 %v1588
    %v1590 = vlaneseq
    %v1591 = vshrl.u32 %v1590, 7
    %v1592 = vsub.s32 %v1589, %v1591
    %v1593 = vrot.slane %v1585, %v1592
    %v1595 = vunpack.c.l.s4 1934713408
    %v1596 = vunpack.c.0.s8 %v1595
    %v1597 = vlaneseq
    %v1598 = vshrl.u32 %v1597, 7
    %v1599 = vsub.s32 %v1596, %v1598
    %v1600 = vrot.slane %v1586, %v1599
    %v1601 = vcombine.low %v1536, %v1552
    %v1602 = vcombine.high %v1536, %v1552
    %v1604 = vunpack.c.l.s4 1934713408
    %v1605 = vunpack.c.0.s8 %v1604
    %v1606 = vlaneseq
    %v1607 = vshrl.u32 %v1606, 7
    %v1608 = vsub.s32 %v1605, %v1607
    %v1609 = vrot.slane %v1601, %v1608
    %v1611 = vunpack.c.l.s4 1934713408
    %v1612 = vunpack.c.0.s8 %v1611
    %v1613 = vlaneseq
    %v1614 = vshrl.u32 %v1613, 7
    %v1615 = vsub.s32 %v1612, %v1614
    %v1616 = vrot.slane %v1602, %v1615
    %v1617 = vcombine.low %v1561, %v1593
    %v1618 = vcombine.high %v1561, %v1593
    %v1619 = vcombine.low %v1568, %v1600
    %v1620 = vcombine.high %v1568, %v1600
    %v1621 = vcombine.low %v1577, %v1609
    %v1622 = vcombine.high %v1577, %v1609
    %v1623 = vcombine.low %v1584, %v1616
    %v1624 = vcombine.high %v1584, %v1616
    %1629 = vrot.lane.b32.xlu0 %v338, 120
    %v1630 = vpop.permute.xlu0 %1629
    %1631 = vrot.lane.b32.xlu0 %v343, 120
    %v1632 = vpop.permute.xlu0 %1631
    %1633 = vrot.lane.b32.xlu0 %v348, 120
    %v1634 = vpop.permute.xlu0 %1633
    %1635 = vrot.lane.b32.xlu0 %v353, 120
    %v1636 = vpop.permute.xlu0 %1635
    %1641 = vrot.lane.b32.xlu0 %v338, 112
    %v1642 = vpop.permute.xlu0 %1641
    %1643 = vrot.lane.b32.xlu0 %v343, 112
    %v1644 = vpop.permute.xlu0 %1643
    %1645 = vrot.lane.b32.xlu0 %v348, 112
    %v1646 = vpop.permute.xlu0 %1645
    %1647 = vrot.lane.b32.xlu0 %v353, 112
    %v1648 = vpop.permute.xlu0 %1647
    %1653 = vrot.lane.b32.xlu0 %v338, 104
    %v1654 = vpop.permute.xlu0 %1653
    %1655 = vrot.lane.b32.xlu0 %v343, 104
    %v1656 = vpop.permute.xlu0 %1655
    %1657 = vrot.lane.b32.xlu0 %v348, 104
    %v1658 = vpop.permute.xlu0 %1657
    %1659 = vrot.lane.b32.xlu0 %v353, 104
    %v1660 = vpop.permute.xlu0 %1659
    %1665 = vrot.lane.b32.xlu0 %v338, 96
    %v1666 = vpop.permute.xlu0 %1665
    %1667 = vrot.lane.b32.xlu0 %v343, 96
    %v1668 = vpop.permute.xlu0 %1667
    %1669 = vrot.lane.b32.xlu0 %v348, 96
    %v1670 = vpop.permute.xlu0 %1669
    %1671 = vrot.lane.b32.xlu0 %v353, 96
    %v1672 = vpop.permute.xlu0 %1671
    %1677 = vrot.lane.b32.xlu0 %v338, 88
    %v1678 = vpop.permute.xlu0 %1677
    %1679 = vrot.lane.b32.xlu0 %v343, 88
    %v1680 = vpop.permute.xlu0 %1679
    %1681 = vrot.lane.b32.xlu0 %v348, 88
    %v1682 = vpop.permute.xlu0 %1681
    %1683 = vrot.lane.b32.xlu0 %v353, 88
    %v1684 = vpop.permute.xlu0 %1683
    %1689 = vrot.lane.b32.xlu0 %v338, 80
    %v1690 = vpop.permute.xlu0 %1689
    %1691 = vrot.lane.b32.xlu0 %v343, 80
    %v1692 = vpop.permute.xlu0 %1691
    %1693 = vrot.lane.b32.xlu0 %v348, 80
    %v1694 = vpop.permute.xlu0 %1693
    %1695 = vrot.lane.b32.xlu0 %v353, 80
    %v1696 = vpop.permute.xlu0 %1695
    %1701 = vrot.lane.b32.xlu0 %v338, 72
    %v1702 = vpop.permute.xlu0 %1701
    %1703 = vrot.lane.b32.xlu0 %v343, 72
    %v1704 = vpop.permute.xlu0 %1703
    %1705 = vrot.lane.b32.xlu0 %v348, 72
    %v1706 = vpop.permute.xlu0 %1705
    %1707 = vrot.lane.b32.xlu0 %v353, 72
    %v1708 = vpop.permute.xlu0 %1707
    %v1713 = vcombine.low %v338, %v1642
    %v1714 = vcombine.high %v338, %v1642
    %v1716 = vunpack.c.l.s4 1983009808
    %v1717 = vunpack.c.0.s8 %v1716
    %v1718 = vlaneseq
    %v1719 = vshrl.u32 %v1718, 7
    %v1720 = vsub.s32 %v1717, %v1719
    %v1721 = vrot.slane %v1713, %v1720
    %v1723 = vunpack.c.l.s4 1983009808
    %v1724 = vunpack.c.0.s8 %v1723
    %v1725 = vlaneseq
    %v1726 = vshrl.u32 %v1725, 7
    %v1727 = vsub.s32 %v1724, %v1726
    %v1728 = vrot.slane %v1714, %v1727
    %v1729 = vcombine.low %v1630, %v1654
    %v1730 = vcombine.high %v1630, %v1654
    %v1732 = vunpack.c.l.s4 1983009808
    %v1733 = vunpack.c.0.s8 %v1732
    %v1734 = vlaneseq
    %v1735 = vshrl.u32 %v1734, 7
    %v1736 = vsub.s32 %v1733, %v1735
    %v1737 = vrot.slane %v1729, %v1736
    %v1739 = vunpack.c.l.s4 1983009808
    %v1740 = vunpack.c.0.s8 %v1739
    %v1741 = vlaneseq
    %v1742 = vshrl.u32 %v1741, 7
    %v1743 = vsub.s32 %v1740, %v1742
    %v1744 = vrot.slane %v1730, %v1743
    %v1745 = vcombine.low %v1666, %v1690
    %v1746 = vcombine.high %v1666, %v1690
    %v1748 = vunpack.c.l.s4 1983009808
    %v1749 = vunpack.c.0.s8 %v1748
    %v1750 = vlaneseq
    %v1751 = vshrl.u32 %v1750, 7
    %v1752 = vsub.s32 %v1749, %v1751
    %v1753 = vrot.slane %v1745, %v1752
    %v1755 = vunpack.c.l.s4 1983009808
    %v1756 = vunpack.c.0.s8 %v1755
    %v1757 = vlaneseq
    %v1758 = vshrl.u32 %v1757, 7
    %v1759 = vsub.s32 %v1756, %v1758
    %v1760 = vrot.slane %v1746, %v1759
    %v1761 = vcombine.low %v1678, %v1702
    %v1762 = vcombine.high %v1678, %v1702
    %v1764 = vunpack.c.l.s4 1983009808
    %v1765 = vunpack.c.0.s8 %v1764
    %v1766 = vlaneseq
    %v1767 = vshrl.u32 %v1766, 7
    %v1768 = vsub.s32 %v1765, %v1767
    %v1769 = vrot.slane %v1761, %v1768
    %v1771 = vunpack.c.l.s4 1983009808
    %v1772 = vunpack.c.0.s8 %v1771
    %v1773 = vlaneseq
    %v1774 = vshrl.u32 %v1773, 7
    %v1775 = vsub.s32 %v1772, %v1774
    %v1776 = vrot.slane %v1762, %v1775
    %v1777 = vcombine.low %v1721, %v1737
    %v1778 = vcombine.high %v1721, %v1737
    %v1780 = vunpack.c.l.s4 1934713408
    %v1781 = vunpack.c.0.s8 %v1780
    %v1782 = vlaneseq
    %v1783 = vshrl.u32 %v1782, 7
    %v1784 = vsub.s32 %v1781, %v1783
    %v1785 = vrot.slane %v1777, %v1784
    %v1787 = vunpack.c.l.s4 1934713408
    %v1788 = vunpack.c.0.s8 %v1787
    %v1789 = vlaneseq
    %v1790 = vshrl.u32 %v1789, 7
    %v1791 = vsub.s32 %v1788, %v1790
    %v1792 = vrot.slane %v1778, %v1791
    %v1793 = vcombine.low %v1728, %v1744
    %v1794 = vcombine.high %v1728, %v1744
    %v1796 = vunpack.c.l.s4 1934713408
    %v1797 = vunpack.c.0.s8 %v1796
    %v1798 = vlaneseq
    %v1799 = vshrl.u32 %v1798, 7
    %v1800 = vsub.s32 %v1797, %v1799
    %v1801 = vrot.slane %v1793, %v1800
    %v1803 = vunpack.c.l.s4 1934713408
    %v1804 = vunpack.c.0.s8 %v1803
    %v1805 = vlaneseq
    %v1806 = vshrl.u32 %v1805, 7
    %v1807 = vsub.s32 %v1804, %v1806
    %v1808 = vrot.slane %v1794, %v1807
    %v1809 = vcombine.low %v1753, %v1769
    %v1810 = vcombine.high %v1753, %v1769
    %v1812 = vunpack.c.l.s4 1934713408
    %v1813 = vunpack.c.0.s8 %v1812
    %v1814 = vlaneseq
    %v1815 = vshrl.u32 %v1814, 7
    %v1816 = vsub.s32 %v1813, %v1815
    %v1817 = vrot.slane %v1809, %v1816
    %v1819 = vunpack.c.l.s4 1934713408
    %v1820 = vunpack.c.0.s8 %v1819
    %v1821 = vlaneseq
    %v1822 = vshrl.u32 %v1821, 7
    %v1823 = vsub.s32 %v1820, %v1822
    %v1824 = vrot.slane %v1810, %v1823
    %v1825 = vcombine.low %v1760, %v1776
    %v1826 = vcombine.high %v1760, %v1776
    %v1828 = vunpack.c.l.s4 1934713408
    %v1829 = vunpack.c.0.s8 %v1828
    %v1830 = vlaneseq
    %v1831 = vshrl.u32 %v1830, 7
    %v1832 = vsub.s32 %v1829, %v1831
    %v1833 = vrot.slane %v1825, %v1832
    %v1835 = vunpack.c.l.s4 1934713408
    %v1836 = vunpack.c.0.s8 %v1835
    %v1837 = vlaneseq
    %v1838 = vshrl.u32 %v1837, 7
    %v1839 = vsub.s32 %v1836, %v1838
    %v1840 = vrot.slane %v1826, %v1839
    %v1841 = vcombine.low %v1785, %v1817
    %v1842 = vcombine.high %v1785, %v1817
    %v1843 = vcombine.low %v1792, %v1824
    %v1844 = vcombine.high %v1792, %v1824
    %v1845 = vcombine.low %v1801, %v1833
    %v1846 = vcombine.high %v1801, %v1833
    %v1847 = vcombine.low %v1808, %v1840
    %v1848 = vcombine.high %v1808, %v1840
    %v1849 = vcombine.low %v343, %v1644
    %v1850 = vcombine.high %v343, %v1644
    %v1852 = vunpack.c.l.s4 1983009808
    %v1853 = vunpack.c.0.s8 %v1852
    %v1854 = vlaneseq
    %v1855 = vshrl.u32 %v1854, 7
    %v1856 = vsub.s32 %v1853, %v1855
    %v1857 = vrot.slane %v1849, %v1856
    %v1859 = vunpack.c.l.s4 1983009808
    %v1860 = vunpack.c.0.s8 %v1859
    %v1861 = vlaneseq
    %v1862 = vshrl.u32 %v1861, 7
    %v1863 = vsub.s32 %v1860, %v1862
    %v1864 = vrot.slane %v1850, %v1863
    %v1865 = vcombine.low %v1632, %v1656
    %v1866 = vcombine.high %v1632, %v1656
    %v1868 = vunpack.c.l.s4 1983009808
    %v1869 = vunpack.c.0.s8 %v1868
    %v1870 = vlaneseq
    %v1871 = vshrl.u32 %v1870, 7
    %v1872 = vsub.s32 %v1869, %v1871
    %v1873 = vrot.slane %v1865, %v1872
    %v1875 = vunpack.c.l.s4 1983009808
    %v1876 = vunpack.c.0.s8 %v1875
    %v1877 = vlaneseq
    %v1878 = vshrl.u32 %v1877, 7
    %v1879 = vsub.s32 %v1876, %v1878
    %v1880 = vrot.slane %v1866, %v1879
    %v1881 = vcombine.low %v1668, %v1692
    %v1882 = vcombine.high %v1668, %v1692
    %v1884 = vunpack.c.l.s4 1983009808
    %v1885 = vunpack.c.0.s8 %v1884
    %v1886 = vlaneseq
    %v1887 = vshrl.u32 %v1886, 7
    %v1888 = vsub.s32 %v1885, %v1887
    %v1889 = vrot.slane %v1881, %v1888
    %v1891 = vunpack.c.l.s4 1983009808
    %v1892 = vunpack.c.0.s8 %v1891
    %v1893 = vlaneseq
    %v1894 = vshrl.u32 %v1893, 7
    %v1895 = vsub.s32 %v1892, %v1894
    %v1896 = vrot.slane %v1882, %v1895
    %v1897 = vcombine.low %v1680, %v1704
    %v1898 = vcombine.high %v1680, %v1704
    %v1900 = vunpack.c.l.s4 1983009808
    %v1901 = vunpack.c.0.s8 %v1900
    %v1902 = vlaneseq
    %v1903 = vshrl.u32 %v1902, 7
    %v1904 = vsub.s32 %v1901, %v1903
    %v1905 = vrot.slane %v1897, %v1904
    %v1907 = vunpack.c.l.s4 1983009808
    %v1908 = vunpack.c.0.s8 %v1907
    %v1909 = vlaneseq
    %v1910 = vshrl.u32 %v1909, 7
    %v1911 = vsub.s32 %v1908, %v1910
    %v1912 = vrot.slane %v1898, %v1911
    %v1913 = vcombine.low %v1857, %v1873
    %v1914 = vcombine.high %v1857, %v1873
    %v1916 = vunpack.c.l.s4 1934713408
    %v1917 = vunpack.c.0.s8 %v1916
    %v1918 = vlaneseq
    %v1919 = vshrl.u32 %v1918, 7
    %v1920 = vsub.s32 %v1917, %v1919
    %v1921 = vrot.slane %v1913, %v1920
    %v1923 = vunpack.c.l.s4 1934713408
    %v1924 = vunpack.c.0.s8 %v1923
    %v1925 = vlaneseq
    %v1926 = vshrl.u32 %v1925, 7
    %v1927 = vsub.s32 %v1924, %v1926
    %v1928 = vrot.slane %v1914, %v1927
    %v1929 = vcombine.low %v1864, %v1880
    %v1930 = vcombine.high %v1864, %v1880
    %v1932 = vunpack.c.l.s4 1934713408
    %v1933 = vunpack.c.0.s8 %v1932
    %v1934 = vlaneseq
    %v1935 = vshrl.u32 %v1934, 7
    %v1936 = vsub.s32 %v1933, %v1935
    %v1937 = vrot.slane %v1929, %v1936
    %v1939 = vunpack.c.l.s4 1934713408
    %v1940 = vunpack.c.0.s8 %v1939
    %v1941 = vlaneseq
    %v1942 = vshrl.u32 %v1941, 7
    %v1943 = vsub.s32 %v1940, %v1942
    %v1944 = vrot.slane %v1930, %v1943
    %v1945 = vcombine.low %v1889, %v1905
    %v1946 = vcombine.high %v1889, %v1905
    %v1948 = vunpack.c.l.s4 1934713408
    %v1949 = vunpack.c.0.s8 %v1948
    %v1950 = vlaneseq
    %v1951 = vshrl.u32 %v1950, 7
    %v1952 = vsub.s32 %v1949, %v1951
    %v1953 = vrot.slane %v1945, %v1952
    %v1955 = vunpack.c.l.s4 1934713408
    %v1956 = vunpack.c.0.s8 %v1955
    %v1957 = vlaneseq
    %v1958 = vshrl.u32 %v1957, 7
    %v1959 = vsub.s32 %v1956, %v1958
    %v1960 = vrot.slane %v1946, %v1959
    %v1961 = vcombine.low %v1896, %v1912
    %v1962 = vcombine.high %v1896, %v1912
    %v1964 = vunpack.c.l.s4 1934713408
    %v1965 = vunpack.c.0.s8 %v1964
    %v1966 = vlaneseq
    %v1967 = vshrl.u32 %v1966, 7
    %v1968 = vsub.s32 %v1965, %v1967
    %v1969 = vrot.slane %v1961, %v1968
    %v1971 = vunpack.c.l.s4 1934713408
    %v1972 = vunpack.c.0.s8 %v1971
    %v1973 = vlaneseq
    %v1974 = vshrl.u32 %v1973, 7
    %v1975 = vsub.s32 %v1972, %v1974
    %v1976 = vrot.slane %v1962, %v1975
    %v1977 = vcombine.low %v1921, %v1953
    %v1978 = vcombine.high %v1921, %v1953
    %v1979 = vcombine.low %v1928, %v1960
    %v1980 = vcombine.high %v1928, %v1960
    %v1981 = vcombine.low %v1937, %v1969
    %v1982 = vcombine.high %v1937, %v1969
    %v1983 = vcombine.low %v1944, %v1976
    %v1984 = vcombine.high %v1944, %v1976
    %v1985 = vcombine.low %v348, %v1646
    %v1986 = vcombine.high %v348, %v1646
    %v1988 = vunpack.c.l.s4 1983009808
    %v1989 = vunpack.c.0.s8 %v1988
    %v1990 = vlaneseq
    %v1991 = vshrl.u32 %v1990, 7
    %v1992 = vsub.s32 %v1989, %v1991
    %v1993 = vrot.slane %v1985, %v1992
    %v1995 = vunpack.c.l.s4 1983009808
    %v1996 = vunpack.c.0.s8 %v1995
    %v1997 = vlaneseq
    %v1998 = vshrl.u32 %v1997, 7
    %v1999 = vsub.s32 %v1996, %v1998
    %v2000 = vrot.slane %v1986, %v1999
    %v2001 = vcombine.low %v1634, %v1658
    %v2002 = vcombine.high %v1634, %v1658
    %v2004 = vunpack.c.l.s4 1983009808
    %v2005 = vunpack.c.0.s8 %v2004
    %v2006 = vlaneseq
    %v2007 = vshrl.u32 %v2006, 7
    %v2008 = vsub.s32 %v2005, %v2007
    %v2009 = vrot.slane %v2001, %v2008
    %v2011 = vunpack.c.l.s4 1983009808
    %v2012 = vunpack.c.0.s8 %v2011
    %v2013 = vlaneseq
    %v2014 = vshrl.u32 %v2013, 7
    %v2015 = vsub.s32 %v2012, %v2014
    %v2016 = vrot.slane %v2002, %v2015
    %v2017 = vcombine.low %v1670, %v1694
    %v2018 = vcombine.high %v1670, %v1694
    %v2020 = vunpack.c.l.s4 1983009808
    %v2021 = vunpack.c.0.s8 %v2020
    %v2022 = vlaneseq
    %v2023 = vshrl.u32 %v2022, 7
    %v2024 = vsub.s32 %v2021, %v2023
    %v2025 = vrot.slane %v2017, %v2024
    %v2027 = vunpack.c.l.s4 1983009808
    %v2028 = vunpack.c.0.s8 %v2027
    %v2029 = vlaneseq
    %v2030 = vshrl.u32 %v2029, 7
    %v2031 = vsub.s32 %v2028, %v2030
    %v2032 = vrot.slane %v2018, %v2031
    %v2033 = vcombine.low %v1682, %v1706
    %v2034 = vcombine.high %v1682, %v1706
    %v2036 = vunpack.c.l.s4 1983009808
    %v2037 = vunpack.c.0.s8 %v2036
    %v2038 = vlaneseq
    %v2039 = vshrl.u32 %v2038, 7
    %v2040 = vsub.s32 %v2037, %v2039
    %v2041 = vrot.slane %v2033, %v2040
    %v2043 = vunpack.c.l.s4 1983009808
    %v2044 = vunpack.c.0.s8 %v2043
    %v2045 = vlaneseq
    %v2046 = vshrl.u32 %v2045, 7
    %v2047 = vsub.s32 %v2044, %v2046
    %v2048 = vrot.slane %v2034, %v2047
    %v2049 = vcombine.low %v1993, %v2009
    %v2050 = vcombine.high %v1993, %v2009
    %v2052 = vunpack.c.l.s4 1934713408
    %v2053 = vunpack.c.0.s8 %v2052
    %v2054 = vlaneseq
    %v2055 = vshrl.u32 %v2054, 7
    %v2056 = vsub.s32 %v2053, %v2055
    %v2057 = vrot.slane %v2049, %v2056
    %v2059 = vunpack.c.l.s4 1934713408
    %v2060 = vunpack.c.0.s8 %v2059
    %v2061 = vlaneseq
    %v2062 = vshrl.u32 %v2061, 7
    %v2063 = vsub.s32 %v2060, %v2062
    %v2064 = vrot.slane %v2050, %v2063
    %v2065 = vcombine.low %v2000, %v2016
    %v2066 = vcombine.high %v2000, %v2016
    %v2068 = vunpack.c.l.s4 1934713408
    %v2069 = vunpack.c.0.s8 %v2068
    %v2070 = vlaneseq
    %v2071 = vshrl.u32 %v2070, 7
    %v2072 = vsub.s32 %v2069, %v2071
    %v2073 = vrot.slane %v2065, %v2072
    %v2075 = vunpack.c.l.s4 1934713408
    %v2076 = vunpack.c.0.s8 %v2075
    %v2077 = vlaneseq
    %v2078 = vshrl.u32 %v2077, 7
    %v2079 = vsub.s32 %v2076, %v2078
    %v2080 = vrot.slane %v2066, %v2079
    %v2081 = vcombine.low %v2025, %v2041
    %v2082 = vcombine.high %v2025, %v2041
    %v2084 = vunpack.c.l.s4 1934713408
    %v2085 = vunpack.c.0.s8 %v2084
    %v2086 = vlaneseq
    %v2087 = vshrl.u32 %v2086, 7
    %v2088 = vsub.s32 %v2085, %v2087
    %v2089 = vrot.slane %v2081, %v2088
    %v2091 = vunpack.c.l.s4 1934713408
    %v2092 = vunpack.c.0.s8 %v2091
    %v2093 = vlaneseq
    %v2094 = vshrl.u32 %v2093, 7
    %v2095 = vsub.s32 %v2092, %v2094
    %v2096 = vrot.slane %v2082, %v2095
    %v2097 = vcombine.low %v2032, %v2048
    %v2098 = vcombine.high %v2032, %v2048
    %v2100 = vunpack.c.l.s4 1934713408
    %v2101 = vunpack.c.0.s8 %v2100
    %v2102 = vlaneseq
    %v2103 = vshrl.u32 %v2102, 7
    %v2104 = vsub.s32 %v2101, %v2103
    %v2105 = vrot.slane %v2097, %v2104
    %v2107 = vunpack.c.l.s4 1934713408
    %v2108 = vunpack.c.0.s8 %v2107
    %v2109 = vlaneseq
    %v2110 = vshrl.u32 %v2109, 7
    %v2111 = vsub.s32 %v2108, %v2110
    %v2112 = vrot.slane %v2098, %v2111
    %v2113 = vcombine.low %v2057, %v2089
    %v2114 = vcombine.high %v2057, %v2089
    %v2115 = vcombine.low %v2064, %v2096
    %v2116 = vcombine.high %v2064, %v2096
    %v2117 = vcombine.low %v2073, %v2105
    %v2118 = vcombine.high %v2073, %v2105
    %v2119 = vcombine.low %v2080, %v2112
    %v2120 = vcombine.high %v2080, %v2112
    %v2121 = vcombine.low %v353, %v1648
    %v2122 = vcombine.high %v353, %v1648
    %v2124 = vunpack.c.l.s4 1983009808
    %v2125 = vunpack.c.0.s8 %v2124
    %v2126 = vlaneseq
    %v2127 = vshrl.u32 %v2126, 7
    %v2128 = vsub.s32 %v2125, %v2127
    %v2129 = vrot.slane %v2121, %v2128
    %v2131 = vunpack.c.l.s4 1983009808
    %v2132 = vunpack.c.0.s8 %v2131
    %v2133 = vlaneseq
    %v2134 = vshrl.u32 %v2133, 7
    %v2135 = vsub.s32 %v2132, %v2134
    %v2136 = vrot.slane %v2122, %v2135
    %v2137 = vcombine.low %v1636, %v1660
    %v2138 = vcombine.high %v1636, %v1660
    %v2140 = vunpack.c.l.s4 1983009808
    %v2141 = vunpack.c.0.s8 %v2140
    %v2142 = vlaneseq
    %v2143 = vshrl.u32 %v2142, 7
    %v2144 = vsub.s32 %v2141, %v2143
    %v2145 = vrot.slane %v2137, %v2144
    %v2147 = vunpack.c.l.s4 1983009808
    %v2148 = vunpack.c.0.s8 %v2147
    %v2149 = vlaneseq
    %v2150 = vshrl.u32 %v2149, 7
    %v2151 = vsub.s32 %v2148, %v2150
    %v2152 = vrot.slane %v2138, %v2151
    %v2153 = vcombine.low %v1672, %v1696
    %v2154 = vcombine.high %v1672, %v1696
    %v2156 = vunpack.c.l.s4 1983009808
    %v2157 = vunpack.c.0.s8 %v2156
    %v2158 = vlaneseq
    %v2159 = vshrl.u32 %v2158, 7
    %v2160 = vsub.s32 %v2157, %v2159
    %v2161 = vrot.slane %v2153, %v2160
    %v2163 = vunpack.c.l.s4 1983009808
    %v2164 = vunpack.c.0.s8 %v2163
    %v2165 = vlaneseq
    %v2166 = vshrl.u32 %v2165, 7
    %v2167 = vsub.s32 %v2164, %v2166
    %v2168 = vrot.slane %v2154, %v2167
    %v2169 = vcombine.low %v1684, %v1708
    %v2170 = vcombine.high %v1684, %v1708
    %v2172 = vunpack.c.l.s4 1983009808
    %v2173 = vunpack.c.0.s8 %v2172
    %v2174 = vlaneseq
    %v2175 = vshrl.u32 %v2174, 7
    %v2176 = vsub.s32 %v2173, %v2175
    %v2177 = vrot.slane %v2169, %v2176
    %v2179 = vunpack.c.l.s4 1983009808
    %v2180 = vunpack.c.0.s8 %v2179
    %v2181 = vlaneseq
    %v2182 = vshrl.u32 %v2181, 7
    %v2183 = vsub.s32 %v2180, %v2182
    %v2184 = vrot.slane %v2170, %v2183
    %v2185 = vcombine.low %v2129, %v2145
    %v2186 = vcombine.high %v2129, %v2145
    %v2188 = vunpack.c.l.s4 1934713408
    %v2189 = vunpack.c.0.s8 %v2188
    %v2190 = vlaneseq
    %v2191 = vshrl.u32 %v2190, 7
    %v2192 = vsub.s32 %v2189, %v2191
    %v2193 = vrot.slane %v2185, %v2192
    %v2195 = vunpack.c.l.s4 1934713408
    %v2196 = vunpack.c.0.s8 %v2195
    %v2197 = vlaneseq
    %v2198 = vshrl.u32 %v2197, 7
    %v2199 = vsub.s32 %v2196, %v2198
    %v2200 = vrot.slane %v2186, %v2199
    %v2201 = vcombine.low %v2136, %v2152
    %v2202 = vcombine.high %v2136, %v2152
    %v2204 = vunpack.c.l.s4 1934713408
    %v2205 = vunpack.c.0.s8 %v2204
    %v2206 = vlaneseq
    %v2207 = vshrl.u32 %v2206, 7
    %v2208 = vsub.s32 %v2205, %v2207
    %v2209 = vrot.slane %v2201, %v2208
    %v2211 = vunpack.c.l.s4 1934713408
    %v2212 = vunpack.c.0.s8 %v2211
    %v2213 = vlaneseq
    %v2214 = vshrl.u32 %v2213, 7
    %v2215 = vsub.s32 %v2212, %v2214
    %v2216 = vrot.slane %v2202, %v2215
    %v2217 = vcombine.low %v2161, %v2177
    %v2218 = vcombine.high %v2161, %v2177
    %v2220 = vunpack.c.l.s4 1934713408
    %v2221 = vunpack.c.0.s8 %v2220
    %v2222 = vlaneseq
    %v2223 = vshrl.u32 %v2222, 7
    %v2224 = vsub.s32 %v2221, %v2223
    %v2225 = vrot.slane %v2217, %v2224
    %v2227 = vunpack.c.l.s4 1934713408
    %v2228 = vunpack.c.0.s8 %v2227
    %v2229 = vlaneseq
    %v2230 = vshrl.u32 %v2229, 7
    %v2231 = vsub.s32 %v2228, %v2230
    %v2232 = vrot.slane %v2218, %v2231
    %v2233 = vcombine.low %v2168, %v2184
    %v2234 = vcombine.high %v2168, %v2184
    %v2236 = vunpack.c.l.s4 1934713408
    %v2237 = vunpack.c.0.s8 %v2236
    %v2238 = vlaneseq
    %v2239 = vshrl.u32 %v2238, 7
    %v2240 = vsub.s32 %v2237, %v2239
    %v2241 = vrot.slane %v2233, %v2240
    %v2243 = vunpack.c.l.s4 1934713408
    %v2244 = vunpack.c.0.s8 %v2243
    %v2245 = vlaneseq
    %v2246 = vshrl.u32 %v2245, 7
    %v2247 = vsub.s32 %v2244, %v2246
    %v2248 = vrot.slane %v2234, %v2247
    %v2249 = vcombine.low %v2193, %v2225
    %v2250 = vcombine.high %v2193, %v2225
    %v2251 = vcombine.low %v2200, %v2232
    %v2252 = vcombine.high %v2200, %v2232
    %v2253 = vcombine.low %v2209, %v2241
    %v2254 = vcombine.high %v2209, %v2241
    %v2255 = vcombine.low %v2216, %v2248
    %v2256 = vcombine.high %v2216, %v2248
    %v2257 = vcombine.low %v1841, %v1843
    %v2258 = vcombine.high %v1841, %v1843
    %v2260 = vunpack.c.l.s4 1983009808
    %v2261 = vunpack.c.0.s8 %v2260
    %v2262 = vlaneseq
    %v2263 = vshrl.u32 %v2262, 7
    %v2264 = vsub.s32 %v2261, %v2263
    %v2265 = vrot.slane %v2257, %v2264
    %v2267 = vunpack.c.l.s4 1983009808
    %v2268 = vunpack.c.0.s8 %v2267
    %v2269 = vlaneseq
    %v2270 = vshrl.u32 %v2269, 7
    %v2271 = vsub.s32 %v2268, %v2270
    %v2272 = vrot.slane %v2258, %v2271
    %v2273 = vcombine.low %v1842, %v1844
    %v2274 = vcombine.high %v1842, %v1844
    %v2276 = vunpack.c.l.s4 1983009808
    %v2277 = vunpack.c.0.s8 %v2276
    %v2278 = vlaneseq
    %v2279 = vshrl.u32 %v2278, 7
    %v2280 = vsub.s32 %v2277, %v2279
    %v2281 = vrot.slane %v2273, %v2280
    %v2283 = vunpack.c.l.s4 1983009808
    %v2284 = vunpack.c.0.s8 %v2283
    %v2285 = vlaneseq
    %v2286 = vshrl.u32 %v2285, 7
    %v2287 = vsub.s32 %v2284, %v2286
    %v2288 = vrot.slane %v2274, %v2287
    %v2289 = vcombine.low %v1845, %v1847
    %v2290 = vcombine.high %v1845, %v1847
    %v2292 = vunpack.c.l.s4 1983009808
    %v2293 = vunpack.c.0.s8 %v2292
    %v2294 = vlaneseq
    %v2295 = vshrl.u32 %v2294, 7
    %v2296 = vsub.s32 %v2293, %v2295
    %v2297 = vrot.slane %v2289, %v2296
    %v2299 = vunpack.c.l.s4 1983009808
    %v2300 = vunpack.c.0.s8 %v2299
    %v2301 = vlaneseq
    %v2302 = vshrl.u32 %v2301, 7
    %v2303 = vsub.s32 %v2300, %v2302
    %v2304 = vrot.slane %v2290, %v2303
    %v2305 = vcombine.low %v1846, %v1848
    %v2306 = vcombine.high %v1846, %v1848
    %v2308 = vunpack.c.l.s4 1983009808
    %v2309 = vunpack.c.0.s8 %v2308
    %v2310 = vlaneseq
    %v2311 = vshrl.u32 %v2310, 7
    %v2312 = vsub.s32 %v2309, %v2311
    %v2313 = vrot.slane %v2305, %v2312
    %v2315 = vunpack.c.l.s4 1983009808
    %v2316 = vunpack.c.0.s8 %v2315
    %v2317 = vlaneseq
    %v2318 = vshrl.u32 %v2317, 7
    %v2319 = vsub.s32 %v2316, %v2318
    %v2320 = vrot.slane %v2306, %v2319
    %v2321 = vcombine.low %v2265, %v2281
    %v2322 = vcombine.high %v2265, %v2281
    %v2324 = vunpack.c.l.s4 1934713408
    %v2325 = vunpack.c.0.s8 %v2324
    %v2326 = vlaneseq
    %v2327 = vshrl.u32 %v2326, 7
    %v2328 = vsub.s32 %v2325, %v2327
    %v2329 = vrot.slane %v2321, %v2328
    %v2331 = vunpack.c.l.s4 1934713408
    %v2332 = vunpack.c.0.s8 %v2331
    %v2333 = vlaneseq
    %v2334 = vshrl.u32 %v2333, 7
    %v2335 = vsub.s32 %v2332, %v2334
    %v2336 = vrot.slane %v2322, %v2335
    %v2337 = vcombine.low %v2272, %v2288
    %v2338 = vcombine.high %v2272, %v2288
    %v2340 = vunpack.c.l.s4 1934713408
    %v2341 = vunpack.c.0.s8 %v2340
    %v2342 = vlaneseq
    %v2343 = vshrl.u32 %v2342, 7
    %v2344 = vsub.s32 %v2341, %v2343
    %v2345 = vrot.slane %v2337, %v2344
    %v2347 = vunpack.c.l.s4 1934713408
    %v2348 = vunpack.c.0.s8 %v2347
    %v2349 = vlaneseq
    %v2350 = vshrl.u32 %v2349, 7
    %v2351 = vsub.s32 %v2348, %v2350
    %v2352 = vrot.slane %v2338, %v2351
    %v2353 = vcombine.low %v2297, %v2313
    %v2354 = vcombine.high %v2297, %v2313
    %v2356 = vunpack.c.l.s4 1934713408
    %v2357 = vunpack.c.0.s8 %v2356
    %v2358 = vlaneseq
    %v2359 = vshrl.u32 %v2358, 7
    %v2360 = vsub.s32 %v2357, %v2359
    %v2361 = vrot.slane %v2353, %v2360
    %v2363 = vunpack.c.l.s4 1934713408
    %v2364 = vunpack.c.0.s8 %v2363
    %v2365 = vlaneseq
    %v2366 = vshrl.u32 %v2365, 7
    %v2367 = vsub.s32 %v2364, %v2366
    %v2368 = vrot.slane %v2354, %v2367
    %v2369 = vcombine.low %v2304, %v2320
    %v2370 = vcombine.high %v2304, %v2320
    %v2372 = vunpack.c.l.s4 1934713408
    %v2373 = vunpack.c.0.s8 %v2372
    %v2374 = vlaneseq
    %v2375 = vshrl.u32 %v2374, 7
    %v2376 = vsub.s32 %v2373, %v2375
    %v2377 = vrot.slane %v2369, %v2376
    %v2379 = vunpack.c.l.s4 1934713408
    %v2380 = vunpack.c.0.s8 %v2379
    %v2381 = vlaneseq
    %v2382 = vshrl.u32 %v2381, 7
    %v2383 = vsub.s32 %v2380, %v2382
    %v2384 = vrot.slane %v2370, %v2383
    %v2385 = vcombine.low %v2329, %v2361
    %v2386 = vcombine.high %v2329, %v2361
    %v2387 = vcombine.low %v2336, %v2368
    %v2388 = vcombine.high %v2336, %v2368
    %v2389 = vcombine.low %v2345, %v2377
    %v2390 = vcombine.high %v2345, %v2377
    %v2391 = vcombine.low %v2352, %v2384
    %v2392 = vcombine.high %v2352, %v2384
    %v2393 = vcombine.low %v1977, %v1979
    %v2394 = vcombine.high %v1977, %v1979
    %v2396 = vunpack.c.l.s4 1983009808
    %v2397 = vunpack.c.0.s8 %v2396
    %v2398 = vlaneseq
    %v2399 = vshrl.u32 %v2398, 7
    %v2400 = vsub.s32 %v2397, %v2399
    %v2401 = vrot.slane %v2393, %v2400
    %v2403 = vunpack.c.l.s4 1983009808
    %v2404 = vunpack.c.0.s8 %v2403
    %v2405 = vlaneseq
    %v2406 = vshrl.u32 %v2405, 7
    %v2407 = vsub.s32 %v2404, %v2406
    %v2408 = vrot.slane %v2394, %v2407
    %v2409 = vcombine.low %v1978, %v1980
    %v2410 = vcombine.high %v1978, %v1980
    %v2412 = vunpack.c.l.s4 1983009808
    %v2413 = vunpack.c.0.s8 %v2412
    %v2414 = vlaneseq
    %v2415 = vshrl.u32 %v2414, 7
    %v2416 = vsub.s32 %v2413, %v2415
    %v2417 = vrot.slane %v2409, %v2416
    %v2419 = vunpack.c.l.s4 1983009808
    %v2420 = vunpack.c.0.s8 %v2419
    %v2421 = vlaneseq
    %v2422 = vshrl.u32 %v2421, 7
    %v2423 = vsub.s32 %v2420, %v2422
    %v2424 = vrot.slane %v2410, %v2423
    %v2425 = vcombine.low %v1981, %v1983
    %v2426 = vcombine.high %v1981, %v1983
    %v2428 = vunpack.c.l.s4 1983009808
    %v2429 = vunpack.c.0.s8 %v2428
    %v2430 = vlaneseq
    %v2431 = vshrl.u32 %v2430, 7
    %v2432 = vsub.s32 %v2429, %v2431
    %v2433 = vrot.slane %v2425, %v2432
    %v2435 = vunpack.c.l.s4 1983009808
    %v2436 = vunpack.c.0.s8 %v2435
    %v2437 = vlaneseq
    %v2438 = vshrl.u32 %v2437, 7
    %v2439 = vsub.s32 %v2436, %v2438
    %v2440 = vrot.slane %v2426, %v2439
    %v2441 = vcombine.low %v1982, %v1984
    %v2442 = vcombine.high %v1982, %v1984
    %v2444 = vunpack.c.l.s4 1983009808
    %v2445 = vunpack.c.0.s8 %v2444
    %v2446 = vlaneseq
    %v2447 = vshrl.u32 %v2446, 7
    %v2448 = vsub.s32 %v2445, %v2447
    %v2449 = vrot.slane %v2441, %v2448
    %v2451 = vunpack.c.l.s4 1983009808
    %v2452 = vunpack.c.0.s8 %v2451
    %v2453 = vlaneseq
    %v2454 = vshrl.u32 %v2453, 7
    %v2455 = vsub.s32 %v2452, %v2454
    %v2456 = vrot.slane %v2442, %v2455
    %v2457 = vcombine.low %v2401, %v2417
    %v2458 = vcombine.high %v2401, %v2417
    %v2460 = vunpack.c.l.s4 1934713408
    %v2461 = vunpack.c.0.s8 %v2460
    %v2462 = vlaneseq
    %v2463 = vshrl.u32 %v2462, 7
    %v2464 = vsub.s32 %v2461, %v2463
    %v2465 = vrot.slane %v2457, %v2464
    %v2467 = vunpack.c.l.s4 1934713408
    %v2468 = vunpack.c.0.s8 %v2467
    %v2469 = vlaneseq
    %v2470 = vshrl.u32 %v2469, 7
    %v2471 = vsub.s32 %v2468, %v2470
    %v2472 = vrot.slane %v2458, %v2471
    %v2473 = vcombine.low %v2408, %v2424
    %v2474 = vcombine.high %v2408, %v2424
    %v2476 = vunpack.c.l.s4 1934713408
    %v2477 = vunpack.c.0.s8 %v2476
    %v2478 = vlaneseq
    %v2479 = vshrl.u32 %v2478, 7
    %v2480 = vsub.s32 %v2477, %v2479
    %v2481 = vrot.slane %v2473, %v2480
    %v2483 = vunpack.c.l.s4 1934713408
    %v2484 = vunpack.c.0.s8 %v2483
    %v2485 = vlaneseq
    %v2486 = vshrl.u32 %v2485, 7
    %v2487 = vsub.s32 %v2484, %v2486
    %v2488 = vrot.slane %v2474, %v2487
    %v2489 = vcombine.low %v2433, %v2449
    %v2490 = vcombine.high %v2433, %v2449
    %v2492 = vunpack.c.l.s4 1934713408
    %v2493 = vunpack.c.0.s8 %v2492
    %v2494 = vlaneseq
    %v2495 = vshrl.u32 %v2494, 7
    %v2496 = vsub.s32 %v2493, %v2495
    %v2497 = vrot.slane %v2489, %v2496
    %v2499 = vunpack.c.l.s4 1934713408
    %v2500 = vunpack.c.0.s8 %v2499
    %v2501 = vlaneseq
    %v2502 = vshrl.u32 %v2501, 7
    %v2503 = vsub.s32 %v2500, %v2502
    %v2504 = vrot.slane %v2490, %v2503
    %v2505 = vcombine.low %v2440, %v2456
    %v2506 = vcombine.high %v2440, %v2456
    %v2508 = vunpack.c.l.s4 1934713408
    %v2509 = vunpack.c.0.s8 %v2508
    %v2510 = vlaneseq
    %v2511 = vshrl.u32 %v2510, 7
    %v2512 = vsub.s32 %v2509, %v2511
    %v2513 = vrot.slane %v2505, %v2512
    %v2515 = vunpack.c.l.s4 1934713408
    %v2516 = vunpack.c.0.s8 %v2515
    %v2517 = vlaneseq
    %v2518 = vshrl.u32 %v2517, 7
    %v2519 = vsub.s32 %v2516, %v2518
    %v2520 = vrot.slane %v2506, %v2519
    %v2521 = vcombine.low %v2465, %v2497
    %v2522 = vcombine.high %v2465, %v2497
    %v2523 = vcombine.low %v2472, %v2504
    %v2524 = vcombine.high %v2472, %v2504
    %v2525 = vcombine.low %v2481, %v2513
    %v2526 = vcombine.high %v2481, %v2513
    %v2527 = vcombine.low %v2488, %v2520
    %v2528 = vcombine.high %v2488, %v2520
    %v2529 = vcombine.low %v2113, %v2115
    %v2530 = vcombine.high %v2113, %v2115
    %v2532 = vunpack.c.l.s4 1983009808
    %v2533 = vunpack.c.0.s8 %v2532
    %v2534 = vlaneseq
    %v2535 = vshrl.u32 %v2534, 7
    %v2536 = vsub.s32 %v2533, %v2535
    %v2537 = vrot.slane %v2529, %v2536
    %v2539 = vunpack.c.l.s4 1983009808
    %v2540 = vunpack.c.0.s8 %v2539
    %v2541 = vlaneseq
    %v2542 = vshrl.u32 %v2541, 7
    %v2543 = vsub.s32 %v2540, %v2542
    %v2544 = vrot.slane %v2530, %v2543
    %v2545 = vcombine.low %v2114, %v2116
    %v2546 = vcombine.high %v2114, %v2116
    %v2548 = vunpack.c.l.s4 1983009808
    %v2549 = vunpack.c.0.s8 %v2548
    %v2550 = vlaneseq
    %v2551 = vshrl.u32 %v2550, 7
    %v2552 = vsub.s32 %v2549, %v2551
    %v2553 = vrot.slane %v2545, %v2552
    %v2555 = vunpack.c.l.s4 1983009808
    %v2556 = vunpack.c.0.s8 %v2555
    %v2557 = vlaneseq
    %v2558 = vshrl.u32 %v2557, 7
    %v2559 = vsub.s32 %v2556, %v2558
    %v2560 = vrot.slane %v2546, %v2559
    %v2561 = vcombine.low %v2117, %v2119
    %v2562 = vcombine.high %v2117, %v2119
    %v2564 = vunpack.c.l.s4 1983009808
    %v2565 = vunpack.c.0.s8 %v2564
    %v2566 = vlaneseq
    %v2567 = vshrl.u32 %v2566, 7
    %v2568 = vsub.s32 %v2565, %v2567
    %v2569 = vrot.slane %v2561, %v2568
    %v2571 = vunpack.c.l.s4 1983009808
    %v2572 = vunpack.c.0.s8 %v2571
    %v2573 = vlaneseq
    %v2574 = vshrl.u32 %v2573, 7
    %v2575 = vsub.s32 %v2572, %v2574
    %v2576 = vrot.slane %v2562, %v2575
    %v2577 = vcombine.low %v2118, %v2120
    %v2578 = vcombine.high %v2118, %v2120
    %v2580 = vunpack.c.l.s4 1983009808
    %v2581 = vunpack.c.0.s8 %v2580
    %v2582 = vlaneseq
    %v2583 = vshrl.u32 %v2582, 7
    %v2584 = vsub.s32 %v2581, %v2583
    %v2585 = vrot.slane %v2577, %v2584
    %v2587 = vunpack.c.l.s4 1983009808
    %v2588 = vunpack.c.0.s8 %v2587
    %v2589 = vlaneseq
    %v2590 = vshrl.u32 %v2589, 7
    %v2591 = vsub.s32 %v2588, %v2590
    %v2592 = vrot.slane %v2578, %v2591
    %v2593 = vcombine.low %v2537, %v2553
    %v2594 = vcombine.high %v2537, %v2553
    %v2596 = vunpack.c.l.s4 1934713408
    %v2597 = vunpack.c.0.s8 %v2596
    %v2598 = vlaneseq
    %v2599 = vshrl.u32 %v2598, 7
    %v2600 = vsub.s32 %v2597, %v2599
    %v2601 = vrot.slane %v2593, %v2600
    %v2603 = vunpack.c.l.s4 1934713408
    %v2604 = vunpack.c.0.s8 %v2603
    %v2605 = vlaneseq
    %v2606 = vshrl.u32 %v2605, 7
    %v2607 = vsub.s32 %v2604, %v2606
    %v2608 = vrot.slane %v2594, %v2607
    %v2609 = vcombine.low %v2544, %v2560
    %v2610 = vcombine.high %v2544, %v2560
    %v2612 = vunpack.c.l.s4 1934713408
    %v2613 = vunpack.c.0.s8 %v2612
    %v2614 = vlaneseq
    %v2615 = vshrl.u32 %v2614, 7
    %v2616 = vsub.s32 %v2613, %v2615
    %v2617 = vrot.slane %v2609, %v2616
    %v2619 = vunpack.c.l.s4 1934713408
    %v2620 = vunpack.c.0.s8 %v2619
    %v2621 = vlaneseq
    %v2622 = vshrl.u32 %v2621, 7
    %v2623 = vsub.s32 %v2620, %v2622
    %v2624 = vrot.slane %v2610, %v2623
    %v2625 = vcombine.low %v2569, %v2585
    %v2626 = vcombine.high %v2569, %v2585
    %v2628 = vunpack.c.l.s4 1934713408
    %v2629 = vunpack.c.0.s8 %v2628
    %v2630 = vlaneseq
    %v2631 = vshrl.u32 %v2630, 7
    %v2632 = vsub.s32 %v2629, %v2631
    %v2633 = vrot.slane %v2625, %v2632
    %v2635 = vunpack.c.l.s4 1934713408
    %v2636 = vunpack.c.0.s8 %v2635
    %v2637 = vlaneseq
    %v2638 = vshrl.u32 %v2637, 7
    %v2639 = vsub.s32 %v2636, %v2638
    %v2640 = vrot.slane %v2626, %v2639
    %v2641 = vcombine.low %v2576, %v2592
    %v2642 = vcombine.high %v2576, %v2592
    %v2644 = vunpack.c.l.s4 1934713408
    %v2645 = vunpack.c.0.s8 %v2644
    %v2646 = vlaneseq
    %v2647 = vshrl.u32 %v2646, 7
    %v2648 = vsub.s32 %v2645, %v2647
    %v2649 = vrot.slane %v2641, %v2648
    %v2651 = vunpack.c.l.s4 1934713408
    %v2652 = vunpack.c.0.s8 %v2651
    %v2653 = vlaneseq
    %v2654 = vshrl.u32 %v2653, 7
    %v2655 = vsub.s32 %v2652, %v2654
    %v2656 = vrot.slane %v2642, %v2655
    %v2657 = vcombine.low %v2601, %v2633
    %v2658 = vcombine.high %v2601, %v2633
    %v2659 = vcombine.low %v2608, %v2640
    %v2660 = vcombine.high %v2608, %v2640
    %v2661 = vcombine.low %v2617, %v2649
    %v2662 = vcombine.high %v2617, %v2649
    %v2663 = vcombine.low %v2624, %v2656
    %v2664 = vcombine.high %v2624, %v2656
    %v2665 = vcombine.low %v2249, %v2251
    %v2666 = vcombine.high %v2249, %v2251
    %v2668 = vunpack.c.l.s4 1983009808
    %v2669 = vunpack.c.0.s8 %v2668
    %v2670 = vlaneseq
    %v2671 = vshrl.u32 %v2670, 7
    %v2672 = vsub.s32 %v2669, %v2671
    %v2673 = vrot.slane %v2665, %v2672
    %v2675 = vunpack.c.l.s4 1983009808
    %v2676 = vunpack.c.0.s8 %v2675
    %v2677 = vlaneseq
    %v2678 = vshrl.u32 %v2677, 7
    %v2679 = vsub.s32 %v2676, %v2678
    %v2680 = vrot.slane %v2666, %v2679
    %v2681 = vcombine.low %v2250, %v2252
    %v2682 = vcombine.high %v2250, %v2252
    %v2684 = vunpack.c.l.s4 1983009808
    %v2685 = vunpack.c.0.s8 %v2684
    %v2686 = vlaneseq
    %v2687 = vshrl.u32 %v2686, 7
    %v2688 = vsub.s32 %v2685, %v2687
    %v2689 = vrot.slane %v2681, %v2688
    %v2691 = vunpack.c.l.s4 1983009808
    %v2692 = vunpack.c.0.s8 %v2691
    %v2693 = vlaneseq
    %v2694 = vshrl.u32 %v2693, 7
    %v2695 = vsub.s32 %v2692, %v2694
    %v2696 = vrot.slane %v2682, %v2695
    %v2697 = vcombine.low %v2253, %v2255
    %v2698 = vcombine.high %v2253, %v2255
    %v2700 = vunpack.c.l.s4 1983009808
    %v2701 = vunpack.c.0.s8 %v2700
    %v2702 = vlaneseq
    %v2703 = vshrl.u32 %v2702, 7
    %v2704 = vsub.s32 %v2701, %v2703
    %v2705 = vrot.slane %v2697, %v2704
    %v2707 = vunpack.c.l.s4 1983009808
    %v2708 = vunpack.c.0.s8 %v2707
    %v2709 = vlaneseq
    %v2710 = vshrl.u32 %v2709, 7
    %v2711 = vsub.s32 %v2708, %v2710
    %v2712 = vrot.slane %v2698, %v2711
    %v2713 = vcombine.low %v2254, %v2256
    %v2714 = vcombine.high %v2254, %v2256
    %v2716 = vunpack.c.l.s4 1983009808
    %v2717 = vunpack.c.0.s8 %v2716
    %v2718 = vlaneseq
    %v2719 = vshrl.u32 %v2718, 7
    %v2720 = vsub.s32 %v2717, %v2719
    %v2721 = vrot.slane %v2713, %v2720
    %v2723 = vunpack.c.l.s4 1983009808
    %v2724 = vunpack.c.0.s8 %v2723
    %v2725 = vlaneseq
    %v2726 = vshrl.u32 %v2725, 7
    %v2727 = vsub.s32 %v2724, %v2726
    %v2728 = vrot.slane %v2714, %v2727
    %v2729 = vcombine.low %v2673, %v2689
    %v2730 = vcombine.high %v2673, %v2689
    %v2732 = vunpack.c.l.s4 1934713408
    %v2733 = vunpack.c.0.s8 %v2732
    %v2734 = vlaneseq
    %v2735 = vshrl.u32 %v2734, 7
    %v2736 = vsub.s32 %v2733, %v2735
    %v2737 = vrot.slane %v2729, %v2736
    %v2739 = vunpack.c.l.s4 1934713408
    %v2740 = vunpack.c.0.s8 %v2739
    %v2741 = vlaneseq
    %v2742 = vshrl.u32 %v2741, 7
    %v2743 = vsub.s32 %v2740, %v2742
    %v2744 = vrot.slane %v2730, %v2743
    %v2745 = vcombine.low %v2680, %v2696
    %v2746 = vcombine.high %v2680, %v2696
    %v2748 = vunpack.c.l.s4 1934713408
    %v2749 = vunpack.c.0.s8 %v2748
    %v2750 = vlaneseq
    %v2751 = vshrl.u32 %v2750, 7
    %v2752 = vsub.s32 %v2749, %v2751
    %v2753 = vrot.slane %v2745, %v2752
    %v2755 = vunpack.c.l.s4 1934713408
    %v2756 = vunpack.c.0.s8 %v2755
    %v2757 = vlaneseq
    %v2758 = vshrl.u32 %v2757, 7
    %v2759 = vsub.s32 %v2756, %v2758
    %v2760 = vrot.slane %v2746, %v2759
    %v2761 = vcombine.low %v2705, %v2721
    %v2762 = vcombine.high %v2705, %v2721
    %v2764 = vunpack.c.l.s4 1934713408
    %v2765 = vunpack.c.0.s8 %v2764
    %v2766 = vlaneseq
    %v2767 = vshrl.u32 %v2766, 7
    %v2768 = vsub.s32 %v2765, %v2767
    %v2769 = vrot.slane %v2761, %v2768
    %v2771 = vunpack.c.l.s4 1934713408
    %v2772 = vunpack.c.0.s8 %v2771
    %v2773 = vlaneseq
    %v2774 = vshrl.u32 %v2773, 7
    %v2775 = vsub.s32 %v2772, %v2774
    %v2776 = vrot.slane %v2762, %v2775
    %v2777 = vcombine.low %v2712, %v2728
    %v2778 = vcombine.high %v2712, %v2728
    %v2780 = vunpack.c.l.s4 1934713408
    %v2781 = vunpack.c.0.s8 %v2780
    %v2782 = vlaneseq
    %v2783 = vshrl.u32 %v2782, 7
    %v2784 = vsub.s32 %v2781, %v2783
    %v2785 = vrot.slane %v2777, %v2784
    %v2787 = vunpack.c.l.s4 1934713408
    %v2788 = vunpack.c.0.s8 %v2787
    %v2789 = vlaneseq
    %v2790 = vshrl.u32 %v2789, 7
    %v2791 = vsub.s32 %v2788, %v2790
    %v2792 = vrot.slane %v2778, %v2791
    %v2793 = vcombine.low %v2737, %v2769
    %v2794 = vcombine.high %v2737, %v2769
    %v2795 = vcombine.low %v2744, %v2776
    %v2796 = vcombine.high %v2744, %v2776
    %v2797 = vcombine.low %v2753, %v2785
    %v2798 = vcombine.high %v2753, %v2785
    %v2799 = vcombine.low %v2760, %v2792
    %v2800 = vcombine.high %v2760, %v2792
    %2805 = vrot.lane.b32.xlu0 %v431, 120
    %v2806 = vpop.permute.xlu0 %2805
    %2807 = vrot.lane.b32.xlu0 %v436, 120
    %v2808 = vpop.permute.xlu0 %2807
    %2809 = vrot.lane.b32.xlu0 %v441, 120
    %v2810 = vpop.permute.xlu0 %2809
    %2811 = vrot.lane.b32.xlu0 %v446, 120
    %v2812 = vpop.permute.xlu0 %2811
    %2817 = vrot.lane.b32.xlu0 %v431, 112
    %v2818 = vpop.permute.xlu0 %2817
    %2819 = vrot.lane.b32.xlu0 %v436, 112
    %v2820 = vpop.permute.xlu0 %2819
    %2821 = vrot.lane.b32.xlu0 %v441, 112
    %v2822 = vpop.permute.xlu0 %2821
    %2823 = vrot.lane.b32.xlu0 %v446, 112
    %v2824 = vpop.permute.xlu0 %2823
    %2829 = vrot.lane.b32.xlu0 %v431, 104
    %v2830 = vpop.permute.xlu0 %2829
    %2831 = vrot.lane.b32.xlu0 %v436, 104
    %v2832 = vpop.permute.xlu0 %2831
    %2833 = vrot.lane.b32.xlu0 %v441, 104
    %v2834 = vpop.permute.xlu0 %2833
    %2835 = vrot.lane.b32.xlu0 %v446, 104
    %v2836 = vpop.permute.xlu0 %2835
    %2841 = vrot.lane.b32.xlu0 %v431, 96
    %v2842 = vpop.permute.xlu0 %2841
    %2843 = vrot.lane.b32.xlu0 %v436, 96
    %v2844 = vpop.permute.xlu0 %2843
    %2845 = vrot.lane.b32.xlu0 %v441, 96
    %v2846 = vpop.permute.xlu0 %2845
    %2847 = vrot.lane.b32.xlu0 %v446, 96
    %v2848 = vpop.permute.xlu0 %2847
    %2853 = vrot.lane.b32.xlu0 %v431, 88
    %v2854 = vpop.permute.xlu0 %2853
    %2855 = vrot.lane.b32.xlu0 %v436, 88
    %v2856 = vpop.permute.xlu0 %2855
    %2857 = vrot.lane.b32.xlu0 %v441, 88
    %v2858 = vpop.permute.xlu0 %2857
    %2859 = vrot.lane.b32.xlu0 %v446, 88
    %v2860 = vpop.permute.xlu0 %2859
    %2865 = vrot.lane.b32.xlu0 %v431, 80
    %v2866 = vpop.permute.xlu0 %2865
    %2867 = vrot.lane.b32.xlu0 %v436, 80
    %v2868 = vpop.permute.xlu0 %2867
    %2869 = vrot.lane.b32.xlu0 %v441, 80
    %v2870 = vpop.permute.xlu0 %2869
    %2871 = vrot.lane.b32.xlu0 %v446, 80
    %v2872 = vpop.permute.xlu0 %2871
    %2877 = vrot.lane.b32.xlu0 %v431, 72
    %v2878 = vpop.permute.xlu0 %2877
    %2879 = vrot.lane.b32.xlu0 %v436, 72
    %v2880 = vpop.permute.xlu0 %2879
    %2881 = vrot.lane.b32.xlu0 %v441, 72
    %v2882 = vpop.permute.xlu0 %2881
    %2883 = vrot.lane.b32.xlu0 %v446, 72
    %v2884 = vpop.permute.xlu0 %2883
    %v2889 = vcombine.low %v431, %v2818
    %v2890 = vcombine.high %v431, %v2818
    %v2892 = vunpack.c.l.s4 1983009808
    %v2893 = vunpack.c.0.s8 %v2892
    %v2894 = vlaneseq
    %v2895 = vshrl.u32 %v2894, 7
    %v2896 = vsub.s32 %v2893, %v2895
    %v2897 = vrot.slane %v2889, %v2896
    %v2899 = vunpack.c.l.s4 1983009808
    %v2900 = vunpack.c.0.s8 %v2899
    %v2901 = vlaneseq
    %v2902 = vshrl.u32 %v2901, 7
    %v2903 = vsub.s32 %v2900, %v2902
    %v2904 = vrot.slane %v2890, %v2903
    %v2905 = vcombine.low %v2806, %v2830
    %v2906 = vcombine.high %v2806, %v2830
    %v2908 = vunpack.c.l.s4 1983009808
    %v2909 = vunpack.c.0.s8 %v2908
    %v2910 = vlaneseq
    %v2911 = vshrl.u32 %v2910, 7
    %v2912 = vsub.s32 %v2909, %v2911
    %v2913 = vrot.slane %v2905, %v2912
    %v2915 = vunpack.c.l.s4 1983009808
    %v2916 = vunpack.c.0.s8 %v2915
    %v2917 = vlaneseq
    %v2918 = vshrl.u32 %v2917, 7
    %v2919 = vsub.s32 %v2916, %v2918
    %v2920 = vrot.slane %v2906, %v2919
    %v2921 = vcombine.low %v2842, %v2866
    %v2922 = vcombine.high %v2842, %v2866
    %v2924 = vunpack.c.l.s4 1983009808
    %v2925 = vunpack.c.0.s8 %v2924
    %v2926 = vlaneseq
    %v2927 = vshrl.u32 %v2926, 7
    %v2928 = vsub.s32 %v2925, %v2927
    %v2929 = vrot.slane %v2921, %v2928
    %v2931 = vunpack.c.l.s4 1983009808
    %v2932 = vunpack.c.0.s8 %v2931
    %v2933 = vlaneseq
    %v2934 = vshrl.u32 %v2933, 7
    %v2935 = vsub.s32 %v2932, %v2934
    %v2936 = vrot.slane %v2922, %v2935
    %v2937 = vcombine.low %v2854, %v2878
    %v2938 = vcombine.high %v2854, %v2878
    %v2940 = vunpack.c.l.s4 1983009808
    %v2941 = vunpack.c.0.s8 %v2940
    %v2942 = vlaneseq
    %v2943 = vshrl.u32 %v2942, 7
    %v2944 = vsub.s32 %v2941, %v2943
    %v2945 = vrot.slane %v2937, %v2944
    %v2947 = vunpack.c.l.s4 1983009808
    %v2948 = vunpack.c.0.s8 %v2947
    %v2949 = vlaneseq
    %v2950 = vshrl.u32 %v2949, 7
    %v2951 = vsub.s32 %v2948, %v2950
    %v2952 = vrot.slane %v2938, %v2951
    %v2953 = vcombine.low %v2897, %v2913
    %v2954 = vcombine.high %v2897, %v2913
    %v2956 = vunpack.c.l.s4 1934713408
    %v2957 = vunpack.c.0.s8 %v2956
    %v2958 = vlaneseq
    %v2959 = vshrl.u32 %v2958, 7
    %v2960 = vsub.s32 %v2957, %v2959
    %v2961 = vrot.slane %v2953, %v2960
    %v2963 = vunpack.c.l.s4 1934713408
    %v2964 = vunpack.c.0.s8 %v2963
    %v2965 = vlaneseq
    %v2966 = vshrl.u32 %v2965, 7
    %v2967 = vsub.s32 %v2964, %v2966
    %v2968 = vrot.slane %v2954, %v2967
    %v2969 = vcombine.low %v2904, %v2920
    %v2970 = vcombine.high %v2904, %v2920
    %v2972 = vunpack.c.l.s4 1934713408
    %v2973 = vunpack.c.0.s8 %v2972
    %v2974 = vlaneseq
    %v2975 = vshrl.u32 %v2974, 7
    %v2976 = vsub.s32 %v2973, %v2975
    %v2977 = vrot.slane %v2969, %v2976
    %v2979 = vunpack.c.l.s4 1934713408
    %v2980 = vunpack.c.0.s8 %v2979
    %v2981 = vlaneseq
    %v2982 = vshrl.u32 %v2981, 7
    %v2983 = vsub.s32 %v2980, %v2982
    %v2984 = vrot.slane %v2970, %v2983
    %v2985 = vcombine.low %v2929, %v2945
    %v2986 = vcombine.high %v2929, %v2945
    %v2988 = vunpack.c.l.s4 1934713408
    %v2989 = vunpack.c.0.s8 %v2988
    %v2990 = vlaneseq
    %v2991 = vshrl.u32 %v2990, 7
    %v2992 = vsub.s32 %v2989, %v2991
    %v2993 = vrot.slane %v2985, %v2992
    %v2995 = vunpack.c.l.s4 1934713408
    %v2996 = vunpack.c.0.s8 %v2995
    %v2997 = vlaneseq
    %v2998 = vshrl.u32 %v2997, 7
    %v2999 = vsub.s32 %v2996, %v2998
    %v3000 = vrot.slane %v2986, %v2999
    %v3001 = vcombine.low %v2936, %v2952
    %v3002 = vcombine.high %v2936, %v2952
    %v3004 = vunpack.c.l.s4 1934713408
    %v3005 = vunpack.c.0.s8 %v3004
    %v3006 = vlaneseq
    %v3007 = vshrl.u32 %v3006, 7
    %v3008 = vsub.s32 %v3005, %v3007
    %v3009 = vrot.slane %v3001, %v3008
    %v3011 = vunpack.c.l.s4 1934713408
    %v3012 = vunpack.c.0.s8 %v3011
    %v3013 = vlaneseq
    %v3014 = vshrl.u32 %v3013, 7
    %v3015 = vsub.s32 %v3012, %v3014
    %v3016 = vrot.slane %v3002, %v3015
    %v3017 = vcombine.low %v2961, %v2993
    %v3018 = vcombine.high %v2961, %v2993
    %v3019 = vcombine.low %v2968, %v3000
    %v3020 = vcombine.high %v2968, %v3000
    %v3021 = vcombine.low %v2977, %v3009
    %v3022 = vcombine.high %v2977, %v3009
    %v3023 = vcombine.low %v2984, %v3016
    %v3024 = vcombine.high %v2984, %v3016
    %v3025 = vcombine.low %v436, %v2820
    %v3026 = vcombine.high %v436, %v2820
    %v3028 = vunpack.c.l.s4 1983009808
    %v3029 = vunpack.c.0.s8 %v3028
    %v3030 = vlaneseq
    %v3031 = vshrl.u32 %v3030, 7
    %v3032 = vsub.s32 %v3029, %v3031
    %v3033 = vrot.slane %v3025, %v3032
    %v3035 = vunpack.c.l.s4 1983009808
    %v3036 = vunpack.c.0.s8 %v3035
    %v3037 = vlaneseq
    %v3038 = vshrl.u32 %v3037, 7
    %v3039 = vsub.s32 %v3036, %v3038
    %v3040 = vrot.slane %v3026, %v3039
    %v3041 = vcombine.low %v2808, %v2832
    %v3042 = vcombine.high %v2808, %v2832
    %v3044 = vunpack.c.l.s4 1983009808
    %v3045 = vunpack.c.0.s8 %v3044
    %v3046 = vlaneseq
    %v3047 = vshrl.u32 %v3046, 7
    %v3048 = vsub.s32 %v3045, %v3047
    %v3049 = vrot.slane %v3041, %v3048
    %v3051 = vunpack.c.l.s4 1983009808
    %v3052 = vunpack.c.0.s8 %v3051
    %v3053 = vlaneseq
    %v3054 = vshrl.u32 %v3053, 7
    %v3055 = vsub.s32 %v3052, %v3054
    %v3056 = vrot.slane %v3042, %v3055
    %v3057 = vcombine.low %v2844, %v2868
    %v3058 = vcombine.high %v2844, %v2868
    %v3060 = vunpack.c.l.s4 1983009808
    %v3061 = vunpack.c.0.s8 %v3060
    %v3062 = vlaneseq
    %v3063 = vshrl.u32 %v3062, 7
    %v3064 = vsub.s32 %v3061, %v3063
    %v3065 = vrot.slane %v3057, %v3064
    %v3067 = vunpack.c.l.s4 1983009808
    %v3068 = vunpack.c.0.s8 %v3067
    %v3069 = vlaneseq
    %v3070 = vshrl.u32 %v3069, 7
    %v3071 = vsub.s32 %v3068, %v3070
    %v3072 = vrot.slane %v3058, %v3071
    %v3073 = vcombine.low %v2856, %v2880
    %v3074 = vcombine.high %v2856, %v2880
    %v3076 = vunpack.c.l.s4 1983009808
    %v3077 = vunpack.c.0.s8 %v3076
    %v3078 = vlaneseq
    %v3079 = vshrl.u32 %v3078, 7
    %v3080 = vsub.s32 %v3077, %v3079
    %v3081 = vrot.slane %v3073, %v3080
    %v3083 = vunpack.c.l.s4 1983009808
    %v3084 = vunpack.c.0.s8 %v3083
    %v3085 = vlaneseq
    %v3086 = vshrl.u32 %v3085, 7
    %v3087 = vsub.s32 %v3084, %v3086
    %v3088 = vrot.slane %v3074, %v3087
    %v3089 = vcombine.low %v3033, %v3049
    %v3090 = vcombine.high %v3033, %v3049
    %v3092 = vunpack.c.l.s4 1934713408
    %v3093 = vunpack.c.0.s8 %v3092
    %v3094 = vlaneseq
    %v3095 = vshrl.u32 %v3094, 7
    %v3096 = vsub.s32 %v3093, %v3095
    %v3097 = vrot.slane %v3089, %v3096
    %v3099 = vunpack.c.l.s4 1934713408
    %v3100 = vunpack.c.0.s8 %v3099
    %v3101 = vlaneseq
    %v3102 = vshrl.u32 %v3101, 7
    %v3103 = vsub.s32 %v3100, %v3102
    %v3104 = vrot.slane %v3090, %v3103
    %v3105 = vcombine.low %v3040, %v3056
    %v3106 = vcombine.high %v3040, %v3056
    %v3108 = vunpack.c.l.s4 1934713408
    %v3109 = vunpack.c.0.s8 %v3108
    %v3110 = vlaneseq
    %v3111 = vshrl.u32 %v3110, 7
    %v3112 = vsub.s32 %v3109, %v3111
    %v3113 = vrot.slane %v3105, %v3112
    %v3115 = vunpack.c.l.s4 1934713408
    %v3116 = vunpack.c.0.s8 %v3115
    %v3117 = vlaneseq
    %v3118 = vshrl.u32 %v3117, 7
    %v3119 = vsub.s32 %v3116, %v3118
    %v3120 = vrot.slane %v3106, %v3119
    %v3121 = vcombine.low %v3065, %v3081
    %v3122 = vcombine.high %v3065, %v3081
    %v3124 = vunpack.c.l.s4 1934713408
    %v3125 = vunpack.c.0.s8 %v3124
    %v3126 = vlaneseq
    %v3127 = vshrl.u32 %v3126, 7
    %v3128 = vsub.s32 %v3125, %v3127
    %v3129 = vrot.slane %v3121, %v3128
    %v3131 = vunpack.c.l.s4 1934713408
    %v3132 = vunpack.c.0.s8 %v3131
    %v3133 = vlaneseq
    %v3134 = vshrl.u32 %v3133, 7
    %v3135 = vsub.s32 %v3132, %v3134
    %v3136 = vrot.slane %v3122, %v3135
    %v3137 = vcombine.low %v3072, %v3088
    %v3138 = vcombine.high %v3072, %v3088
    %v3140 = vunpack.c.l.s4 1934713408
    %v3141 = vunpack.c.0.s8 %v3140
    %v3142 = vlaneseq
    %v3143 = vshrl.u32 %v3142, 7
    %v3144 = vsub.s32 %v3141, %v3143
    %v3145 = vrot.slane %v3137, %v3144
    %v3147 = vunpack.c.l.s4 1934713408
    %v3148 = vunpack.c.0.s8 %v3147
    %v3149 = vlaneseq
    %v3150 = vshrl.u32 %v3149, 7
    %v3151 = vsub.s32 %v3148, %v3150
    %v3152 = vrot.slane %v3138, %v3151
    %v3153 = vcombine.low %v3097, %v3129
    %v3154 = vcombine.high %v3097, %v3129
    %v3155 = vcombine.low %v3104, %v3136
    %v3156 = vcombine.high %v3104, %v3136
    %v3157 = vcombine.low %v3113, %v3145
    %v3158 = vcombine.high %v3113, %v3145
    %v3159 = vcombine.low %v3120, %v3152
    %v3160 = vcombine.high %v3120, %v3152
    %v3161 = vcombine.low %v441, %v2822
    %v3162 = vcombine.high %v441, %v2822
    %v3164 = vunpack.c.l.s4 1983009808
    %v3165 = vunpack.c.0.s8 %v3164
    %v3166 = vlaneseq
    %v3167 = vshrl.u32 %v3166, 7
    %v3168 = vsub.s32 %v3165, %v3167
    %v3169 = vrot.slane %v3161, %v3168
    %v3171 = vunpack.c.l.s4 1983009808
    %v3172 = vunpack.c.0.s8 %v3171
    %v3173 = vlaneseq
    %v3174 = vshrl.u32 %v3173, 7
    %v3175 = vsub.s32 %v3172, %v3174
    %v3176 = vrot.slane %v3162, %v3175
    %v3177 = vcombine.low %v2810, %v2834
    %v3178 = vcombine.high %v2810, %v2834
    %v3180 = vunpack.c.l.s4 1983009808
    %v3181 = vunpack.c.0.s8 %v3180
    %v3182 = vlaneseq
    %v3183 = vshrl.u32 %v3182, 7
    %v3184 = vsub.s32 %v3181, %v3183
    %v3185 = vrot.slane %v3177, %v3184
    %v3187 = vunpack.c.l.s4 1983009808
    %v3188 = vunpack.c.0.s8 %v3187
    %v3189 = vlaneseq
    %v3190 = vshrl.u32 %v3189, 7
    %v3191 = vsub.s32 %v3188, %v3190
    %v3192 = vrot.slane %v3178, %v3191
    %v3193 = vcombine.low %v2846, %v2870
    %v3194 = vcombine.high %v2846, %v2870
    %v3196 = vunpack.c.l.s4 1983009808
    %v3197 = vunpack.c.0.s8 %v3196
    %v3198 = vlaneseq
    %v3199 = vshrl.u32 %v3198, 7
    %v3200 = vsub.s32 %v3197, %v3199
    %v3201 = vrot.slane %v3193, %v3200
    %v3203 = vunpack.c.l.s4 1983009808
    %v3204 = vunpack.c.0.s8 %v3203
    %v3205 = vlaneseq
    %v3206 = vshrl.u32 %v3205, 7
    %v3207 = vsub.s32 %v3204, %v3206
    %v3208 = vrot.slane %v3194, %v3207
    %v3209 = vcombine.low %v2858, %v2882
    %v3210 = vcombine.high %v2858, %v2882
    %v3212 = vunpack.c.l.s4 1983009808
    %v3213 = vunpack.c.0.s8 %v3212
    %v3214 = vlaneseq
    %v3215 = vshrl.u32 %v3214, 7
    %v3216 = vsub.s32 %v3213, %v3215
    %v3217 = vrot.slane %v3209, %v3216
    %v3219 = vunpack.c.l.s4 1983009808
    %v3220 = vunpack.c.0.s8 %v3219
    %v3221 = vlaneseq
    %v3222 = vshrl.u32 %v3221, 7
    %v3223 = vsub.s32 %v3220, %v3222
    %v3224 = vrot.slane %v3210, %v3223
    %v3225 = vcombine.low %v3169, %v3185
    %v3226 = vcombine.high %v3169, %v3185
    %v3228 = vunpack.c.l.s4 1934713408
    %v3229 = vunpack.c.0.s8 %v3228
    %v3230 = vlaneseq
    %v3231 = vshrl.u32 %v3230, 7
    %v3232 = vsub.s32 %v3229, %v3231
    %v3233 = vrot.slane %v3225, %v3232
    %v3235 = vunpack.c.l.s4 1934713408
    %v3236 = vunpack.c.0.s8 %v3235
    %v3237 = vlaneseq
    %v3238 = vshrl.u32 %v3237, 7
    %v3239 = vsub.s32 %v3236, %v3238
    %v3240 = vrot.slane %v3226, %v3239
    %v3241 = vcombine.low %v3176, %v3192
    %v3242 = vcombine.high %v3176, %v3192
    %v3244 = vunpack.c.l.s4 1934713408
    %v3245 = vunpack.c.0.s8 %v3244
    %v3246 = vlaneseq
    %v3247 = vshrl.u32 %v3246, 7
    %v3248 = vsub.s32 %v3245, %v3247
    %v3249 = vrot.slane %v3241, %v3248
    %v3251 = vunpack.c.l.s4 1934713408
    %v3252 = vunpack.c.0.s8 %v3251
    %v3253 = vlaneseq
    %v3254 = vshrl.u32 %v3253, 7
    %v3255 = vsub.s32 %v3252, %v3254
    %v3256 = vrot.slane %v3242, %v3255
    %v3257 = vcombine.low %v3201, %v3217
    %v3258 = vcombine.high %v3201, %v3217
    %v3260 = vunpack.c.l.s4 1934713408
    %v3261 = vunpack.c.0.s8 %v3260
    %v3262 = vlaneseq
    %v3263 = vshrl.u32 %v3262, 7
    %v3264 = vsub.s32 %v3261, %v3263
    %v3265 = vrot.slane %v3257, %v3264
    %v3267 = vunpack.c.l.s4 1934713408
    %v3268 = vunpack.c.0.s8 %v3267
    %v3269 = vlaneseq
    %v3270 = vshrl.u32 %v3269, 7
    %v3271 = vsub.s32 %v3268, %v3270
    %v3272 = vrot.slane %v3258, %v3271
    %v3273 = vcombine.low %v3208, %v3224
    %v3274 = vcombine.high %v3208, %v3224
    %v3276 = vunpack.c.l.s4 1934713408
    %v3277 = vunpack.c.0.s8 %v3276
    %v3278 = vlaneseq
    %v3279 = vshrl.u32 %v3278, 7
    %v3280 = vsub.s32 %v3277, %v3279
    %v3281 = vrot.slane %v3273, %v3280
    %v3283 = vunpack.c.l.s4 1934713408
    %v3284 = vunpack.c.0.s8 %v3283
    %v3285 = vlaneseq
    %v3286 = vshrl.u32 %v3285, 7
    %v3287 = vsub.s32 %v3284, %v3286
    %v3288 = vrot.slane %v3274, %v3287
    %v3289 = vcombine.low %v3233, %v3265
    %v3290 = vcombine.high %v3233, %v3265
    %v3291 = vcombine.low %v3240, %v3272
    %v3292 = vcombine.high %v3240, %v3272
    %v3293 = vcombine.low %v3249, %v3281
    %v3294 = vcombine.high %v3249, %v3281
    %v3295 = vcombine.low %v3256, %v3288
    %v3296 = vcombine.high %v3256, %v3288
    %v3297 = vcombine.low %v446, %v2824
    %v3298 = vcombine.high %v446, %v2824
    %v3300 = vunpack.c.l.s4 1983009808
    %v3301 = vunpack.c.0.s8 %v3300
    %v3302 = vlaneseq
    %v3303 = vshrl.u32 %v3302, 7
    %v3304 = vsub.s32 %v3301, %v3303
    %v3305 = vrot.slane %v3297, %v3304
    %v3307 = vunpack.c.l.s4 1983009808
    %v3308 = vunpack.c.0.s8 %v3307
    %v3309 = vlaneseq
    %v3310 = vshrl.u32 %v3309, 7
    %v3311 = vsub.s32 %v3308, %v3310
    %v3312 = vrot.slane %v3298, %v3311
    %v3313 = vcombine.low %v2812, %v2836
    %v3314 = vcombine.high %v2812, %v2836
    %v3316 = vunpack.c.l.s4 1983009808
    %v3317 = vunpack.c.0.s8 %v3316
    %v3318 = vlaneseq
    %v3319 = vshrl.u32 %v3318, 7
    %v3320 = vsub.s32 %v3317, %v3319
    %v3321 = vrot.slane %v3313, %v3320
    %v3323 = vunpack.c.l.s4 1983009808
    %v3324 = vunpack.c.0.s8 %v3323
    %v3325 = vlaneseq
    %v3326 = vshrl.u32 %v3325, 7
    %v3327 = vsub.s32 %v3324, %v3326
    %v3328 = vrot.slane %v3314, %v3327
    %v3329 = vcombine.low %v2848, %v2872
    %v3330 = vcombine.high %v2848, %v2872
    %v3332 = vunpack.c.l.s4 1983009808
    %v3333 = vunpack.c.0.s8 %v3332
    %v3334 = vlaneseq
    %v3335 = vshrl.u32 %v3334, 7
    %v3336 = vsub.s32 %v3333, %v3335
    %v3337 = vrot.slane %v3329, %v3336
    %v3339 = vunpack.c.l.s4 1983009808
    %v3340 = vunpack.c.0.s8 %v3339
    %v3341 = vlaneseq
    %v3342 = vshrl.u32 %v3341, 7
    %v3343 = vsub.s32 %v3340, %v3342
    %v3344 = vrot.slane %v3330, %v3343
    %v3345 = vcombine.low %v2860, %v2884
    %v3346 = vcombine.high %v2860, %v2884
    %v3348 = vunpack.c.l.s4 1983009808
    %v3349 = vunpack.c.0.s8 %v3348
    %v3350 = vlaneseq
    %v3351 = vshrl.u32 %v3350, 7
    %v3352 = vsub.s32 %v3349, %v3351
    %v3353 = vrot.slane %v3345, %v3352
    %v3355 = vunpack.c.l.s4 1983009808
    %v3356 = vunpack.c.0.s8 %v3355
    %v3357 = vlaneseq
    %v3358 = vshrl.u32 %v3357, 7
    %v3359 = vsub.s32 %v3356, %v3358
    %v3360 = vrot.slane %v3346, %v3359
    %v3361 = vcombine.low %v3305, %v3321
    %v3362 = vcombine.high %v3305, %v3321
    %v3364 = vunpack.c.l.s4 1934713408
    %v3365 = vunpack.c.0.s8 %v3364
    %v3366 = vlaneseq
    %v3367 = vshrl.u32 %v3366, 7
    %v3368 = vsub.s32 %v3365, %v3367
    %v3369 = vrot.slane %v3361, %v3368
    %v3371 = vunpack.c.l.s4 1934713408
    %v3372 = vunpack.c.0.s8 %v3371
    %v3373 = vlaneseq
    %v3374 = vshrl.u32 %v3373, 7
    %v3375 = vsub.s32 %v3372, %v3374
    %v3376 = vrot.slane %v3362, %v3375
    %v3377 = vcombine.low %v3312, %v3328
    %v3378 = vcombine.high %v3312, %v3328
    %v3380 = vunpack.c.l.s4 1934713408
    %v3381 = vunpack.c.0.s8 %v3380
    %v3382 = vlaneseq
    %v3383 = vshrl.u32 %v3382, 7
    %v3384 = vsub.s32 %v3381, %v3383
    %v3385 = vrot.slane %v3377, %v3384
    %v3387 = vunpack.c.l.s4 1934713408
    %v3388 = vunpack.c.0.s8 %v3387
    %v3389 = vlaneseq
    %v3390 = vshrl.u32 %v3389, 7
    %v3391 = vsub.s32 %v3388, %v3390
    %v3392 = vrot.slane %v3378, %v3391
    %v3393 = vcombine.low %v3337, %v3353
    %v3394 = vcombine.high %v3337, %v3353
    %v3396 = vunpack.c.l.s4 1934713408
    %v3397 = vunpack.c.0.s8 %v3396
    %v3398 = vlaneseq
    %v3399 = vshrl.u32 %v3398, 7
    %v3400 = vsub.s32 %v3397, %v3399
    %v3401 = vrot.slane %v3393, %v3400
    %v3403 = vunpack.c.l.s4 1934713408
    %v3404 = vunpack.c.0.s8 %v3403
    %v3405 = vlaneseq
    %v3406 = vshrl.u32 %v3405, 7
    %v3407 = vsub.s32 %v3404, %v3406
    %v3408 = vrot.slane %v3394, %v3407
    %v3409 = vcombine.low %v3344, %v3360
    %v3410 = vcombine.high %v3344, %v3360
    %v3412 = vunpack.c.l.s4 1934713408
    %v3413 = vunpack.c.0.s8 %v3412
    %v3414 = vlaneseq
    %v3415 = vshrl.u32 %v3414, 7
    %v3416 = vsub.s32 %v3413, %v3415
    %v3417 = vrot.slane %v3409, %v3416
    %v3419 = vunpack.c.l.s4 1934713408
    %v3420 = vunpack.c.0.s8 %v3419
    %v3421 = vlaneseq
    %v3422 = vshrl.u32 %v3421, 7
    %v3423 = vsub.s32 %v3420, %v3422
    %v3424 = vrot.slane %v3410, %v3423
    %v3425 = vcombine.low %v3369, %v3401
    %v3426 = vcombine.high %v3369, %v3401
    %v3427 = vcombine.low %v3376, %v3408
    %v3428 = vcombine.high %v3376, %v3408
    %v3429 = vcombine.low %v3385, %v3417
    %v3430 = vcombine.high %v3385, %v3417
    %v3431 = vcombine.low %v3392, %v3424
    %v3432 = vcombine.high %v3392, %v3424
    %v3433 = vcombine.low %v3017, %v3019
    %v3434 = vcombine.high %v3017, %v3019
    %v3436 = vunpack.c.l.s4 1983009808
    %v3437 = vunpack.c.0.s8 %v3436
    %v3438 = vlaneseq
    %v3439 = vshrl.u32 %v3438, 7
    %v3440 = vsub.s32 %v3437, %v3439
    %v3441 = vrot.slane %v3433, %v3440
    %v3443 = vunpack.c.l.s4 1983009808
    %v3444 = vunpack.c.0.s8 %v3443
    %v3445 = vlaneseq
    %v3446 = vshrl.u32 %v3445, 7
    %v3447 = vsub.s32 %v3444, %v3446
    %v3448 = vrot.slane %v3434, %v3447
    %v3449 = vcombine.low %v3018, %v3020
    %v3450 = vcombine.high %v3018, %v3020
    %v3452 = vunpack.c.l.s4 1983009808
    %v3453 = vunpack.c.0.s8 %v3452
    %v3454 = vlaneseq
    %v3455 = vshrl.u32 %v3454, 7
    %v3456 = vsub.s32 %v3453, %v3455
    %v3457 = vrot.slane %v3449, %v3456
    %v3459 = vunpack.c.l.s4 1983009808
    %v3460 = vunpack.c.0.s8 %v3459
    %v3461 = vlaneseq
    %v3462 = vshrl.u32 %v3461, 7
    %v3463 = vsub.s32 %v3460, %v3462
    %v3464 = vrot.slane %v3450, %v3463
    %v3465 = vcombine.low %v3021, %v3023
    %v3466 = vcombine.high %v3021, %v3023
    %v3468 = vunpack.c.l.s4 1983009808
    %v3469 = vunpack.c.0.s8 %v3468
    %v3470 = vlaneseq
    %v3471 = vshrl.u32 %v3470, 7
    %v3472 = vsub.s32 %v3469, %v3471
    %v3473 = vrot.slane %v3465, %v3472
    %v3475 = vunpack.c.l.s4 1983009808
    %v3476 = vunpack.c.0.s8 %v3475
    %v3477 = vlaneseq
    %v3478 = vshrl.u32 %v3477, 7
    %v3479 = vsub.s32 %v3476, %v3478
    %v3480 = vrot.slane %v3466, %v3479
    %v3481 = vcombine.low %v3022, %v3024
    %v3482 = vcombine.high %v3022, %v3024
    %v3484 = vunpack.c.l.s4 1983009808
    %v3485 = vunpack.c.0.s8 %v3484
    %v3486 = vlaneseq
    %v3487 = vshrl.u32 %v3486, 7
    %v3488 = vsub.s32 %v3485, %v3487
    %v3489 = vrot.slane %v3481, %v3488
    %v3491 = vunpack.c.l.s4 1983009808
    %v3492 = vunpack.c.0.s8 %v3491
    %v3493 = vlaneseq
    %v3494 = vshrl.u32 %v3493, 7
    %v3495 = vsub.s32 %v3492, %v3494
    %v3496 = vrot.slane %v3482, %v3495
    %v3497 = vcombine.low %v3441, %v3457
    %v3498 = vcombine.high %v3441, %v3457
    %v3500 = vunpack.c.l.s4 1934713408
    %v3501 = vunpack.c.0.s8 %v3500
    %v3502 = vlaneseq
    %v3503 = vshrl.u32 %v3502, 7
    %v3504 = vsub.s32 %v3501, %v3503
    %v3505 = vrot.slane %v3497, %v3504
    %v3507 = vunpack.c.l.s4 1934713408
    %v3508 = vunpack.c.0.s8 %v3507
    %v3509 = vlaneseq
    %v3510 = vshrl.u32 %v3509, 7
    %v3511 = vsub.s32 %v3508, %v3510
    %v3512 = vrot.slane %v3498, %v3511
    %v3513 = vcombine.low %v3448, %v3464
    %v3514 = vcombine.high %v3448, %v3464
    %v3516 = vunpack.c.l.s4 1934713408
    %v3517 = vunpack.c.0.s8 %v3516
    %v3518 = vlaneseq
    %v3519 = vshrl.u32 %v3518, 7
    %v3520 = vsub.s32 %v3517, %v3519
    %v3521 = vrot.slane %v3513, %v3520
    %v3523 = vunpack.c.l.s4 1934713408
    %v3524 = vunpack.c.0.s8 %v3523
    %v3525 = vlaneseq
    %v3526 = vshrl.u32 %v3525, 7
    %v3527 = vsub.s32 %v3524, %v3526
    %v3528 = vrot.slane %v3514, %v3527
    %v3529 = vcombine.low %v3473, %v3489
    %v3530 = vcombine.high %v3473, %v3489
    %v3532 = vunpack.c.l.s4 1934713408
    %v3533 = vunpack.c.0.s8 %v3532
    %v3534 = vlaneseq
    %v3535 = vshrl.u32 %v3534, 7
    %v3536 = vsub.s32 %v3533, %v3535
    %v3537 = vrot.slane %v3529, %v3536
    %v3539 = vunpack.c.l.s4 1934713408
    %v3540 = vunpack.c.0.s8 %v3539
    %v3541 = vlaneseq
    %v3542 = vshrl.u32 %v3541, 7
    %v3543 = vsub.s32 %v3540, %v3542
    %v3544 = vrot.slane %v3530, %v3543
    %v3545 = vcombine.low %v3480, %v3496
    %v3546 = vcombine.high %v3480, %v3496
    %v3548 = vunpack.c.l.s4 1934713408
    %v3549 = vunpack.c.0.s8 %v3548
    %v3550 = vlaneseq
    %v3551 = vshrl.u32 %v3550, 7
    %v3552 = vsub.s32 %v3549, %v3551
    %v3553 = vrot.slane %v3545, %v3552
    %v3555 = vunpack.c.l.s4 1934713408
    %v3556 = vunpack.c.0.s8 %v3555
    %v3557 = vlaneseq
    %v3558 = vshrl.u32 %v3557, 7
    %v3559 = vsub.s32 %v3556, %v3558
    %v3560 = vrot.slane %v3546, %v3559
    %v3561 = vcombine.low %v3505, %v3537
    %v3562 = vcombine.high %v3505, %v3537
    %v3563 = vcombine.low %v3512, %v3544
    %v3564 = vcombine.high %v3512, %v3544
    %v3565 = vcombine.low %v3521, %v3553
    %v3566 = vcombine.high %v3521, %v3553
    %v3567 = vcombine.low %v3528, %v3560
    %v3568 = vcombine.high %v3528, %v3560
    %v3569 = vcombine.low %v3153, %v3155
    %v3570 = vcombine.high %v3153, %v3155
    %v3572 = vunpack.c.l.s4 1983009808
    %v3573 = vunpack.c.0.s8 %v3572
    %v3574 = vlaneseq
    %v3575 = vshrl.u32 %v3574, 7
    %v3576 = vsub.s32 %v3573, %v3575
    %v3577 = vrot.slane %v3569, %v3576
    %v3579 = vunpack.c.l.s4 1983009808
    %v3580 = vunpack.c.0.s8 %v3579
    %v3581 = vlaneseq
    %v3582 = vshrl.u32 %v3581, 7
    %v3583 = vsub.s32 %v3580, %v3582
    %v3584 = vrot.slane %v3570, %v3583
    %v3585 = vcombine.low %v3154, %v3156
    %v3586 = vcombine.high %v3154, %v3156
    %v3588 = vunpack.c.l.s4 1983009808
    %v3589 = vunpack.c.0.s8 %v3588
    %v3590 = vlaneseq
    %v3591 = vshrl.u32 %v3590, 7
    %v3592 = vsub.s32 %v3589, %v3591
    %v3593 = vrot.slane %v3585, %v3592
    %v3595 = vunpack.c.l.s4 1983009808
    %v3596 = vunpack.c.0.s8 %v3595
    %v3597 = vlaneseq
    %v3598 = vshrl.u32 %v3597, 7
    %v3599 = vsub.s32 %v3596, %v3598
    %v3600 = vrot.slane %v3586, %v3599
    %v3601 = vcombine.low %v3157, %v3159
    %v3602 = vcombine.high %v3157, %v3159
    %v3604 = vunpack.c.l.s4 1983009808
    %v3605 = vunpack.c.0.s8 %v3604
    %v3606 = vlaneseq
    %v3607 = vshrl.u32 %v3606, 7
    %v3608 = vsub.s32 %v3605, %v3607
    %v3609 = vrot.slane %v3601, %v3608
    %v3611 = vunpack.c.l.s4 1983009808
    %v3612 = vunpack.c.0.s8 %v3611
    %v3613 = vlaneseq
    %v3614 = vshrl.u32 %v3613, 7
    %v3615 = vsub.s32 %v3612, %v3614
    %v3616 = vrot.slane %v3602, %v3615
    %v3617 = vcombine.low %v3158, %v3160
    %v3618 = vcombine.high %v3158, %v3160
    %v3620 = vunpack.c.l.s4 1983009808
    %v3621 = vunpack.c.0.s8 %v3620
    %v3622 = vlaneseq
    %v3623 = vshrl.u32 %v3622, 7
    %v3624 = vsub.s32 %v3621, %v3623
    %v3625 = vrot.slane %v3617, %v3624
    %v3627 = vunpack.c.l.s4 1983009808
    %v3628 = vunpack.c.0.s8 %v3627
    %v3629 = vlaneseq
    %v3630 = vshrl.u32 %v3629, 7
    %v3631 = vsub.s32 %v3628, %v3630
    %v3632 = vrot.slane %v3618, %v3631
    %v3633 = vcombine.low %v3577, %v3593
    %v3634 = vcombine.high %v3577, %v3593
    %v3636 = vunpack.c.l.s4 1934713408
    %v3637 = vunpack.c.0.s8 %v3636
    %v3638 = vlaneseq
    %v3639 = vshrl.u32 %v3638, 7
    %v3640 = vsub.s32 %v3637, %v3639
    %v3641 = vrot.slane %v3633, %v3640
    %v3643 = vunpack.c.l.s4 1934713408
    %v3644 = vunpack.c.0.s8 %v3643
    %v3645 = vlaneseq
    %v3646 = vshrl.u32 %v3645, 7
    %v3647 = vsub.s32 %v3644, %v3646
    %v3648 = vrot.slane %v3634, %v3647
    %v3649 = vcombine.low %v3584, %v3600
    %v3650 = vcombine.high %v3584, %v3600
    %v3652 = vunpack.c.l.s4 1934713408
    %v3653 = vunpack.c.0.s8 %v3652
    %v3654 = vlaneseq
    %v3655 = vshrl.u32 %v3654, 7
    %v3656 = vsub.s32 %v3653, %v3655
    %v3657 = vrot.slane %v3649, %v3656
    %v3659 = vunpack.c.l.s4 1934713408
    %v3660 = vunpack.c.0.s8 %v3659
    %v3661 = vlaneseq
    %v3662 = vshrl.u32 %v3661, 7
    %v3663 = vsub.s32 %v3660, %v3662
    %v3664 = vrot.slane %v3650, %v3663
    %v3665 = vcombine.low %v3609, %v3625
    %v3666 = vcombine.high %v3609, %v3625
    %v3668 = vunpack.c.l.s4 1934713408
    %v3669 = vunpack.c.0.s8 %v3668
    %v3670 = vlaneseq
    %v3671 = vshrl.u32 %v3670, 7
    %v3672 = vsub.s32 %v3669, %v3671
    %v3673 = vrot.slane %v3665, %v3672
    %v3675 = vunpack.c.l.s4 1934713408
    %v3676 = vunpack.c.0.s8 %v3675
    %v3677 = vlaneseq
    %v3678 = vshrl.u32 %v3677, 7
    %v3679 = vsub.s32 %v3676, %v3678
    %v3680 = vrot.slane %v3666, %v3679
    %v3681 = vcombine.low %v3616, %v3632
    %v3682 = vcombine.high %v3616, %v3632
    %v3684 = vunpack.c.l.s4 1934713408
    %v3685 = vunpack.c.0.s8 %v3684
    %v3686 = vlaneseq
    %v3687 = vshrl.u32 %v3686, 7
    %v3688 = vsub.s32 %v3685, %v3687
    %v3689 = vrot.slane %v3681, %v3688
    %v3691 = vunpack.c.l.s4 1934713408
    %v3692 = vunpack.c.0.s8 %v3691
    %v3693 = vlaneseq
    %v3694 = vshrl.u32 %v3693, 7
    %v3695 = vsub.s32 %v3692, %v3694
    %v3696 = vrot.slane %v3682, %v3695
    %v3697 = vcombine.low %v3641, %v3673
    %v3698 = vcombine.high %v3641, %v3673
    %v3699 = vcombine.low %v3648, %v3680
    %v3700 = vcombine.high %v3648, %v3680
    %v3701 = vcombine.low %v3657, %v3689
    %v3702 = vcombine.high %v3657, %v3689
    %v3703 = vcombine.low %v3664, %v3696
    %v3704 = vcombine.high %v3664, %v3696
    %v3705 = vcombine.low %v3289, %v3291
    %v3706 = vcombine.high %v3289, %v3291
    %v3708 = vunpack.c.l.s4 1983009808
    %v3709 = vunpack.c.0.s8 %v3708
    %v3710 = vlaneseq
    %v3711 = vshrl.u32 %v3710, 7
    %v3712 = vsub.s32 %v3709, %v3711
    %v3713 = vrot.slane %v3705, %v3712
    %v3715 = vunpack.c.l.s4 1983009808
    %v3716 = vunpack.c.0.s8 %v3715
    %v3717 = vlaneseq
    %v3718 = vshrl.u32 %v3717, 7
    %v3719 = vsub.s32 %v3716, %v3718
    %v3720 = vrot.slane %v3706, %v3719
    %v3721 = vcombine.low %v3290, %v3292
    %v3722 = vcombine.high %v3290, %v3292
    %v3724 = vunpack.c.l.s4 1983009808
    %v3725 = vunpack.c.0.s8 %v3724
    %v3726 = vlaneseq
    %v3727 = vshrl.u32 %v3726, 7
    %v3728 = vsub.s32 %v3725, %v3727
    %v3729 = vrot.slane %v3721, %v3728
    %v3731 = vunpack.c.l.s4 1983009808
    %v3732 = vunpack.c.0.s8 %v3731
    %v3733 = vlaneseq
    %v3734 = vshrl.u32 %v3733, 7
    %v3735 = vsub.s32 %v3732, %v3734
    %v3736 = vrot.slane %v3722, %v3735
    %v3737 = vcombine.low %v3293, %v3295
    %v3738 = vcombine.high %v3293, %v3295
    %v3740 = vunpack.c.l.s4 1983009808
    %v3741 = vunpack.c.0.s8 %v3740
    %v3742 = vlaneseq
    %v3743 = vshrl.u32 %v3742, 7
    %v3744 = vsub.s32 %v3741, %v3743
    %v3745 = vrot.slane %v3737, %v3744
    %v3747 = vunpack.c.l.s4 1983009808
    %v3748 = vunpack.c.0.s8 %v3747
    %v3749 = vlaneseq
    %v3750 = vshrl.u32 %v3749, 7
    %v3751 = vsub.s32 %v3748, %v3750
    %v3752 = vrot.slane %v3738, %v3751
    %v3753 = vcombine.low %v3294, %v3296
    %v3754 = vcombine.high %v3294, %v3296
    %v3756 = vunpack.c.l.s4 1983009808
    %v3757 = vunpack.c.0.s8 %v3756
    %v3758 = vlaneseq
    %v3759 = vshrl.u32 %v3758, 7
    %v3760 = vsub.s32 %v3757, %v3759
    %v3761 = vrot.slane %v3753, %v3760
    %v3763 = vunpack.c.l.s4 1983009808
    %v3764 = vunpack.c.0.s8 %v3763
    %v3765 = vlaneseq
    %v3766 = vshrl.u32 %v3765, 7
    %v3767 = vsub.s32 %v3764, %v3766
    %v3768 = vrot.slane %v3754, %v3767
    %v3769 = vcombine.low %v3713, %v3729
    %v3770 = vcombine.high %v3713, %v3729
    %v3772 = vunpack.c.l.s4 1934713408
    %v3773 = vunpack.c.0.s8 %v3772
    %v3774 = vlaneseq
    %v3775 = vshrl.u32 %v3774, 7
    %v3776 = vsub.s32 %v3773, %v3775
    %v3777 = vrot.slane %v3769, %v3776
    %v3779 = vunpack.c.l.s4 1934713408
    %v3780 = vunpack.c.0.s8 %v3779
    %v3781 = vlaneseq
    %v3782 = vshrl.u32 %v3781, 7
    %v3783 = vsub.s32 %v3780, %v3782
    %v3784 = vrot.slane %v3770, %v3783
    %v3785 = vcombine.low %v3720, %v3736
    %v3786 = vcombine.high %v3720, %v3736
    %v3788 = vunpack.c.l.s4 1934713408
    %v3789 = vunpack.c.0.s8 %v3788
    %v3790 = vlaneseq
    %v3791 = vshrl.u32 %v3790, 7
    %v3792 = vsub.s32 %v3789, %v3791
    %v3793 = vrot.slane %v3785, %v3792
    %v3795 = vunpack.c.l.s4 1934713408
    %v3796 = vunpack.c.0.s8 %v3795
    %v3797 = vlaneseq
    %v3798 = vshrl.u32 %v3797, 7
    %v3799 = vsub.s32 %v3796, %v3798
    %v3800 = vrot.slane %v3786, %v3799
    %v3801 = vcombine.low %v3745, %v3761
    %v3802 = vcombine.high %v3745, %v3761
    %v3804 = vunpack.c.l.s4 1934713408
    %v3805 = vunpack.c.0.s8 %v3804
    %v3806 = vlaneseq
    %v3807 = vshrl.u32 %v3806, 7
    %v3808 = vsub.s32 %v3805, %v3807
    %v3809 = vrot.slane %v3801, %v3808
    %v3811 = vunpack.c.l.s4 1934713408
    %v3812 = vunpack.c.0.s8 %v3811
    %v3813 = vlaneseq
    %v3814 = vshrl.u32 %v3813, 7
    %v3815 = vsub.s32 %v3812, %v3814
    %v3816 = vrot.slane %v3802, %v3815
    %v3817 = vcombine.low %v3752, %v3768
    %v3818 = vcombine.high %v3752, %v3768
    %v3820 = vunpack.c.l.s4 1934713408
    %v3821 = vunpack.c.0.s8 %v3820
    %v3822 = vlaneseq
    %v3823 = vshrl.u32 %v3822, 7
    %v3824 = vsub.s32 %v3821, %v3823
    %v3825 = vrot.slane %v3817, %v3824
    %v3827 = vunpack.c.l.s4 1934713408
    %v3828 = vunpack.c.0.s8 %v3827
    %v3829 = vlaneseq
    %v3830 = vshrl.u32 %v3829, 7
    %v3831 = vsub.s32 %v3828, %v3830
    %v3832 = vrot.slane %v3818, %v3831
    %v3833 = vcombine.low %v3777, %v3809
    %v3834 = vcombine.high %v3777, %v3809
    %v3835 = vcombine.low %v3784, %v3816
    %v3836 = vcombine.high %v3784, %v3816
    %v3837 = vcombine.low %v3793, %v3825
    %v3838 = vcombine.high %v3793, %v3825
    %v3839 = vcombine.low %v3800, %v3832
    %v3840 = vcombine.high %v3800, %v3832
    %v3841 = vcombine.low %v3425, %v3427
    %v3842 = vcombine.high %v3425, %v3427
    %v3844 = vunpack.c.l.s4 1983009808
    %v3845 = vunpack.c.0.s8 %v3844
    %v3846 = vlaneseq
    %v3847 = vshrl.u32 %v3846, 7
    %v3848 = vsub.s32 %v3845, %v3847
    %v3849 = vrot.slane %v3841, %v3848
    %v3851 = vunpack.c.l.s4 1983009808
    %v3852 = vunpack.c.0.s8 %v3851
    %v3853 = vlaneseq
    %v3854 = vshrl.u32 %v3853, 7
    %v3855 = vsub.s32 %v3852, %v3854
    %v3856 = vrot.slane %v3842, %v3855
    %v3857 = vcombine.low %v3426, %v3428
    %v3858 = vcombine.high %v3426, %v3428
    %v3860 = vunpack.c.l.s4 1983009808
    %v3861 = vunpack.c.0.s8 %v3860
    %v3862 = vlaneseq
    %v3863 = vshrl.u32 %v3862, 7
    %v3864 = vsub.s32 %v3861, %v3863
    %v3865 = vrot.slane %v3857, %v3864
    %v3867 = vunpack.c.l.s4 1983009808
    %v3868 = vunpack.c.0.s8 %v3867
    %v3869 = vlaneseq
    %v3870 = vshrl.u32 %v3869, 7
    %v3871 = vsub.s32 %v3868, %v3870
    %v3872 = vrot.slane %v3858, %v3871
    %v3873 = vcombine.low %v3429, %v3431
    %v3874 = vcombine.high %v3429, %v3431
    %v3876 = vunpack.c.l.s4 1983009808
    %v3877 = vunpack.c.0.s8 %v3876
    %v3878 = vlaneseq
    %v3879 = vshrl.u32 %v3878, 7
    %v3880 = vsub.s32 %v3877, %v3879
    %v3881 = vrot.slane %v3873, %v3880
    %v3883 = vunpack.c.l.s4 1983009808
    %v3884 = vunpack.c.0.s8 %v3883
    %v3885 = vlaneseq
    %v3886 = vshrl.u32 %v3885, 7
    %v3887 = vsub.s32 %v3884, %v3886
    %v3888 = vrot.slane %v3874, %v3887
    %v3889 = vcombine.low %v3430, %v3432
    %v3890 = vcombine.high %v3430, %v3432
    %v3892 = vunpack.c.l.s4 1983009808
    %v3893 = vunpack.c.0.s8 %v3892
    %v3894 = vlaneseq
    %v3895 = vshrl.u32 %v3894, 7
    %v3896 = vsub.s32 %v3893, %v3895
    %v3897 = vrot.slane %v3889, %v3896
    %v3899 = vunpack.c.l.s4 1983009808
    %v3900 = vunpack.c.0.s8 %v3899
    %v3901 = vlaneseq
    %v3902 = vshrl.u32 %v3901, 7
    %v3903 = vsub.s32 %v3900, %v3902
    %v3904 = vrot.slane %v3890, %v3903
    %v3905 = vcombine.low %v3849, %v3865
    %v3906 = vcombine.high %v3849, %v3865
    %v3908 = vunpack.c.l.s4 1934713408
    %v3909 = vunpack.c.0.s8 %v3908
    %v3910 = vlaneseq
    %v3911 = vshrl.u32 %v3910, 7
    %v3912 = vsub.s32 %v3909, %v3911
    %v3913 = vrot.slane %v3905, %v3912
    %v3915 = vunpack.c.l.s4 1934713408
    %v3916 = vunpack.c.0.s8 %v3915
    %v3917 = vlaneseq
    %v3918 = vshrl.u32 %v3917, 7
    %v3919 = vsub.s32 %v3916, %v3918
    %v3920 = vrot.slane %v3906, %v3919
    %v3921 = vcombine.low %v3856, %v3872
    %v3922 = vcombine.high %v3856, %v3872
    %v3924 = vunpack.c.l.s4 1934713408
    %v3925 = vunpack.c.0.s8 %v3924
    %v3926 = vlaneseq
    %v3927 = vshrl.u32 %v3926, 7
    %v3928 = vsub.s32 %v3925, %v3927
    %v3929 = vrot.slane %v3921, %v3928
    %v3931 = vunpack.c.l.s4 1934713408
    %v3932 = vunpack.c.0.s8 %v3931
    %v3933 = vlaneseq
    %v3934 = vshrl.u32 %v3933, 7
    %v3935 = vsub.s32 %v3932, %v3934
    %v3936 = vrot.slane %v3922, %v3935
    %v3937 = vcombine.low %v3881, %v3897
    %v3938 = vcombine.high %v3881, %v3897
    %v3940 = vunpack.c.l.s4 1934713408
    %v3941 = vunpack.c.0.s8 %v3940
    %v3942 = vlaneseq
    %v3943 = vshrl.u32 %v3942, 7
    %v3944 = vsub.s32 %v3941, %v3943
    %v3945 = vrot.slane %v3937, %v3944
    %v3947 = vunpack.c.l.s4 1934713408
    %v3948 = vunpack.c.0.s8 %v3947
    %v3949 = vlaneseq
    %v3950 = vshrl.u32 %v3949, 7
    %v3951 = vsub.s32 %v3948, %v3950
    %v3952 = vrot.slane %v3938, %v3951
    %v3953 = vcombine.low %v3888, %v3904
    %v3954 = vcombine.high %v3888, %v3904
    %v3956 = vunpack.c.l.s4 1934713408
    %v3957 = vunpack.c.0.s8 %v3956
    %v3958 = vlaneseq
    %v3959 = vshrl.u32 %v3958, 7
    %v3960 = vsub.s32 %v3957, %v3959
    %v3961 = vrot.slane %v3953, %v3960
    %v3963 = vunpack.c.l.s4 1934713408
    %v3964 = vunpack.c.0.s8 %v3963
    %v3965 = vlaneseq
    %v3966 = vshrl.u32 %v3965, 7
    %v3967 = vsub.s32 %v3964, %v3966
    %v3968 = vrot.slane %v3954, %v3967
    %v3969 = vcombine.low %v3913, %v3945
    %v3970 = vcombine.high %v3913, %v3945
    %v3971 = vcombine.low %v3920, %v3952
    %v3972 = vcombine.high %v3920, %v3952
    %v3973 = vcombine.low %v3929, %v3961
    %v3974 = vcombine.high %v3929, %v3961
    %v3975 = vcombine.low %v3936, %v3968
    %v3976 = vcombine.high %v3936, %v3968
    %vm3977 = vcmask 64512
    %v3979 = vsel %vm3977, %v1209, 0
    %v3982 = vsel %vm3977, %v1345, 0
    %v3985 = vsel %vm3977, %v2385, 0
    %v3988 = vsel %vm3977, %v2521, 0
    %3990 = vmatprep.subr.mxu0 0.0
    %3991 = vmatpush1.xpose.msra.mxu0 %v3985
    %3992 = vmatprep.subr.mxu0 0.0
    %3993 = vmatpush1.xpose.msra.mxu0 %v3988
    %3994 = vmatprep.subr.mxu0 0.0
    %3995 = vmatpush1.xpose.msra.mxu0 0.0
    %3996 = vmatprep.subr.mxu0 0.0
    %3997 = vmatpush1.xpose.msra.mxu0 0.0
    %3998 = vmatprep.subr.mxu0 0.0
    %3999 = vmatpush1.xpose.msra.mxu0 0.0
    %4000 = vmatprep.subr.mxu0 0.0
    %4001 = vmatpush1.xpose.msra.mxu0 0.0
    %4002 = vmatprep.subr.mxu0 0.0
    %4003 = vmatpush1.xpose.msra.mxu0 0.0
    %4004 = vmatprep.subr.mxu0 0.0
    %4005 = vmatpush1.xpose.msra.mxu0 0.0
    %4006 = vmatprep.subr.mxu0 0.0
    %4007 = vmatpush1.xpose.msra.mxu0 0.0
    %4008 = vmatprep.subr.mxu0 0.0
    %4009 = vmatpush1.xpose.msra.mxu0 0.0
    %4010 = vmatprep.subr.mxu0 0.0
    %4011 = vmatpush1.xpose.msra.mxu0 0.0
    %4012 = vmatprep.subr.mxu0 0.0
    %4013 = vmatpush1.xpose.msra.mxu0 0.0
    %4014 = vmatprep.subr.mxu0 0.0
    %4015 = vmatpush1.xpose.msra.mxu0 0.0
    %4016 = vmatprep.subr.mxu0 0.0
    %4017 = vmatpush1.xpose.msra.mxu0 0.0
    %4018 = vmatprep.subr.mxu0 0.0
    %4019 = vmatpush1.xpose.msra.mxu0 0.0
    %4020 = vmatprep.subr.mxu0 0.0
    %4021 = vmatpush1.xpose.msra.mxu0 0.0
    %4022 = vmatprep.subr.mxu0 0.0
    %4023 = vmatpush1.xpose.msra.mxu0 0.0
    %4024 = vmatprep.subr.mxu0 0.0
    %4025 = vmatpush1.xpose.msra.mxu0 0.0
    %4026 = vmatprep.subr.mxu0 0.0
    %4027 = vmatpush1.xpose.msra.mxu0 0.0
    %4028 = vmatprep.subr.mxu0 0.0
    %4029 = vmatpush1.xpose.msra.mxu0 0.0
    %4030 = vmatprep.subr.mxu0 0.0
    %4031 = vmatpush1.xpose.msra.mxu0 0.0
    %4032 = vmatprep.subr.mxu0 0.0
    %4033 = vmatpush1.xpose.msra.mxu0 0.0
    %4034 = vmatprep.subr.mxu0 0.0
    %4035 = vmatpush1.xpose.msra.mxu0 0.0
    %4036 = vmatprep.subr.mxu0 0.0
    %4037 = vmatpush1.xpose.msra.mxu0 0.0
    %4038 = vmatprep.subr.mxu0 0.0
    %4039 = vmatpush1.xpose.msra.mxu0 0.0
    %4040 = vmatprep.subr.mxu0 0.0
    %4041 = vmatpush1.xpose.msra.mxu0 0.0
    %4042 = vmatprep.subr.mxu0 0.0
    %4043 = vmatpush1.xpose.msra.mxu0 0.0
    %4044 = vmatprep.subr.mxu0 0.0
    %4045 = vmatpush1.xpose.msra.mxu0 0.0
    %4046 = vmatprep.subr.mxu0 0.0
    %4047 = vmatpush1.xpose.msra.mxu0 0.0
    %4048 = vmatprep.subr.mxu0 0.0
    %4049 = vmatpush1.xpose.msra.mxu0 0.0
    %4050 = vmatprep.subr.mxu0 0.0
    %4051 = vmatpush1.xpose.msra.mxu0 0.0
    %4052 = vmatprep.subr.mxu0 0.0
    %4053 = vmatpush1.xpose.msra.mxu0 0.0
    %4054 = vmatprep.mubr.f32.mxu0 0.0
    %4055 = vmatmul.mubr.f32.gmra.mrb[0].mxu0 %v3979
    %v4056 = vpop.f32.mrb[0].mxu0
    %v4057 = vadd.f32 0.0, %v4056
    %v4058 = vpop.f32.mrb[0].mxu0
    %4059 = vmatprep.mubr.f32.mxu0 0.0
    %4060 = vmatmul.mubr.f32.gmra.mrb[0].mxu0 %v3982
    %v4061 = vpop.f32.mrb[0].mxu0
    %v4062 = vadd.f32 0.0, %v4061
    %v4063 = vpop.f32.mrb[0].mxu0
    %4064 = vdwg.mxu0
    %v4066 = vsel %vm3977, %v1210, 0
    %v4069 = vsel %vm3977, %v1346, 0
    %v4072 = vsel %vm3977, %v2386, 0
    %v4075 = vsel %vm3977, %v2522, 0
    %4077 = vmatprep.subr.mxu0 0.0
    %4078 = vmatpush1.xpose.msra.mxu0 %v4072
    %4079 = vmatprep.subr.mxu0 0.0
    %4080 = vmatpush1.xpose.msra.mxu0 %v4075
    %4081 = vmatprep.subr.mxu0 0.0
    %4082 = vmatpush1.xpose.msra.mxu0 0.0
    %4083 = vmatprep.subr.mxu0 0.0
    %4084 = vmatpush1.xpose.msra.mxu0 0.0
    %4085 = vmatprep.subr.mxu0 0.0
    %4086 = vmatpush1.xpose.msra.mxu0 0.0
    %4087 = vmatprep.subr.mxu0 0.0
    %4088 = vmatpush1.xpose.msra.mxu0 0.0
    %4089 = vmatprep.subr.mxu0 0.0
    %4090 = vmatpush1.xpose.msra.mxu0 0.0
    %4091 = vmatprep.subr.mxu0 0.0
    %4092 = vmatpush1.xpose.msra.mxu0 0.0
    %4093 = vmatprep.subr.mxu0 0.0
    %4094 = vmatpush1.xpose.msra.mxu0 0.0
    %4095 = vmatprep.subr.mxu0 0.0
    %4096 = vmatpush1.xpose.msra.mxu0 0.0
    %4097 = vmatprep.subr.mxu0 0.0
    %4098 = vmatpush1.xpose.msra.mxu0 0.0
    %4099 = vmatprep.subr.mxu0 0.0
    %4100 = vmatpush1.xpose.msra.mxu0 0.0
    %4101 = vmatprep.subr.mxu0 0.0
    %4102 = vmatpush1.xpose.msra.mxu0 0.0
    %4103 = vmatprep.subr.mxu0 0.0
    %4104 = vmatpush1.xpose.msra.mxu0 0.0
    %4105 = vmatprep.subr.mxu0 0.0
    %4106 = vmatpush1.xpose.msra.mxu0 0.0
    %4107 = vmatprep.subr.mxu0 0.0
    %4108 = vmatpush1.xpose.msra.mxu0 0.0
    %4109 = vmatprep.subr.mxu0 0.0
    %4110 = vmatpush1.xpose.msra.mxu0 0.0
    %4111 = vmatprep.subr.mxu0 0.0
    %4112 = vmatpush1.xpose.msra.mxu0 0.0
    %4113 = vmatprep.subr.mxu0 0.0
    %4114 = vmatpush1.xpose.msra.mxu0 0.0
    %4115 = vmatprep.subr.mxu0 0.0
    %4116 = vmatpush1.xpose.msra.mxu0 0.0
    %4117 = vmatprep.subr.mxu0 0.0
    %4118 = vmatpush1.xpose.msra.mxu0 0.0
    %4119 = vmatprep.subr.mxu0 0.0
    %4120 = vmatpush1.xpose.msra.mxu0 0.0
    %4121 = vmatprep.subr.mxu0 0.0
    %4122 = vmatpush1.xpose.msra.mxu0 0.0
    %4123 = vmatprep.subr.mxu0 0.0
    %4124 = vmatpush1.xpose.msra.mxu0 0.0
    %4125 = vmatprep.subr.mxu0 0.0
    %4126 = vmatpush1.xpose.msra.mxu0 0.0
    %4127 = vmatprep.subr.mxu0 0.0
    %4128 = vmatpush1.xpose.msra.mxu0 0.0
    %4129 = vmatprep.subr.mxu0 0.0
    %4130 = vmatpush1.xpose.msra.mxu0 0.0
    %4131 = vmatprep.subr.mxu0 0.0
    %4132 = vmatpush1.xpose.msra.mxu0 0.0
    %4133 = vmatprep.subr.mxu0 0.0
    %4134 = vmatpush1.xpose.msra.mxu0 0.0
    %4135 = vmatprep.subr.mxu0 0.0
    %4136 = vmatpush1.xpose.msra.mxu0 0.0
    %4137 = vmatprep.subr.mxu0 0.0
    %4138 = vmatpush1.xpose.msra.mxu0 0.0
    %4139 = vmatprep.subr.mxu0 0.0
    %4140 = vmatpush1.xpose.msra.mxu0 0.0
    %4141 = vmatprep.mubr.f32.mxu0 0.0
    %4142 = vmatmul.mubr.f32.gmra.mrb[0].mxu0 %v4066
    %v4143 = vpop.f32.mrb[0].mxu0
    %v4144 = vadd.f32 0.0, %v4143
    %v4145 = vpop.f32.mrb[0].mxu0
    %4146 = vmatprep.mubr.f32.mxu0 0.0
    %4147 = vmatmul.mubr.f32.gmra.mrb[0].mxu0 %v4069
    %v4148 = vpop.f32.mrb[0].mxu0
    %v4149 = vadd.f32 0.0, %v4148
    %v4150 = vpop.f32.mrb[0].mxu0
    %4151 = vdwg.mxu0
    %v4153 = vsel %vm3977, %v1211, 0
    %v4156 = vsel %vm3977, %v1347, 0
    %v4159 = vsel %vm3977, %v2387, 0
    %v4162 = vsel %vm3977, %v2523, 0
    %4164 = vmatprep.subr.mxu0 0.0
    %4165 = vmatpush1.xpose.msra.mxu0 %v4159
    %4166 = vmatprep.subr.mxu0 0.0
    %4167 = vmatpush1.xpose.msra.mxu0 %v4162
    %4168 = vmatprep.subr.mxu0 0.0
    %4169 = vmatpush1.xpose.msra.mxu0 0.0
    %4170 = vmatprep.subr.mxu0 0.0
    %4171 = vmatpush1.xpose.msra.mxu0 0.0
    %4172 = vmatprep.subr.mxu0 0.0
    %4173 = vmatpush1.xpose.msra.mxu0 0.0
    %4174 = vmatprep.subr.mxu0 0.0
    %4175 = vmatpush1.xpose.msra.mxu0 0.0
    %4176 = vmatprep.subr.mxu0 0.0
    %4177 = vmatpush1.xpose.msra.mxu0 0.0
    %4178 = vmatprep.subr.mxu0 0.0
    %4179 = vmatpush1.xpose.msra.mxu0 0.0
    %4180 = vmatprep.subr.mxu0 0.0
    %4181 = vmatpush1.xpose.msra.mxu0 0.0
    %4182 = vmatprep.subr.mxu0 0.0
    %4183 = vmatpush1.xpose.msra.mxu0 0.0
    %4184 = vmatprep.subr.mxu0 0.0
    %4185 = vmatpush1.xpose.msra.mxu0 0.0
    %4186 = vmatprep.subr.mxu0 0.0
    %4187 = vmatpush1.xpose.msra.mxu0 0.0
    %4188 = vmatprep.subr.mxu0 0.0
    %4189 = vmatpush1.xpose.msra.mxu0 0.0
    %4190 = vmatprep.subr.mxu0 0.0
    %4191 = vmatpush1.xpose.msra.mxu0 0.0
    %4192 = vmatprep.subr.mxu0 0.0
    %4193 = vmatpush1.xpose.msra.mxu0 0.0
    %4194 = vmatprep.subr.mxu0 0.0
    %4195 = vmatpush1.xpose.msra.mxu0 0.0
    %4196 = vmatprep.subr.mxu0 0.0
    %4197 = vmatpush1.xpose.msra.mxu0 0.0
    %4198 = vmatprep.subr.mxu0 0.0
    %4199 = vmatpush1.xpose.msra.mxu0 0.0
    %4200 = vmatprep.subr.mxu0 0.0
    %4201 = vmatpush1.xpose.msra.mxu0 0.0
    %4202 = vmatprep.subr.mxu0 0.0
    %4203 = vmatpush1.xpose.msra.mxu0 0.0
    %4204 = vmatprep.subr.mxu0 0.0
    %4205 = vmatpush1.xpose.msra.mxu0 0.0
    %4206 = vmatprep.subr.mxu0 0.0
    %4207 = vmatpush1.xpose.msra.mxu0 0.0
    %4208 = vmatprep.subr.mxu0 0.0
    %4209 = vmatpush1.xpose.msra.mxu0 0.0
    %4210 = vmatprep.subr.mxu0 0.0
    %4211 = vmatpush1.xpose.msra.mxu0 0.0
    %4212 = vmatprep.subr.mxu0 0.0
    %4213 = vmatpush1.xpose.msra.mxu0 0.0
    %4214 = vmatprep.subr.mxu0 0.0
    %4215 = vmatpush1.xpose.msra.mxu0 0.0
    %4216 = vmatprep.subr.mxu0 0.0
    %4217 = vmatpush1.xpose.msra.mxu0 0.0
    %4218 = vmatprep.subr.mxu0 0.0
    %4219 = vmatpush1.xpose.msra.mxu0 0.0
    %4220 = vmatprep.subr.mxu0 0.0
    %4221 = vmatpush1.xpose.msra.mxu0 0.0
    %4222 = vmatprep.subr.mxu0 0.0
    %4223 = vmatpush1.xpose.msra.mxu0 0.0
    %4224 = vmatprep.subr.mxu0 0.0
    %4225 = vmatpush1.xpose.msra.mxu0 0.0
    %4226 = vmatprep.subr.mxu0 0.0
    %4227 = vmatpush1.xpose.msra.mxu0 0.0
    %4228 = vmatprep.mubr.f32.mxu0 0.0
    %4229 = vmatmul.mubr.f32.gmra.mrb[0].mxu0 %v4153
    %v4230 = vpop.f32.mrb[0].mxu0
    %v4231 = vadd.f32 0.0, %v4230
    %v4232 = vpop.f32.mrb[0].mxu0
    %4233 = vmatprep.mubr.f32.mxu0 0.0
    %4234 = vmatmul.mubr.f32.gmra.mrb[0].mxu0 %v4156
    %v4235 = vpop.f32.mrb[0].mxu0
    %v4236 = vadd.f32 0.0, %v4235
    %v4237 = vpop.f32.mrb[0].mxu0
    %4238 = vdwg.mxu0
    %v4240 = vsel %vm3977, %v1212, 0
    %v4243 = vsel %vm3977, %v1348, 0
    %v4246 = vsel %vm3977, %v2388, 0
    %v4249 = vsel %vm3977, %v2524, 0
    %4251 = vmatprep.subr.mxu0 0.0
    %4252 = vmatpush1.xpose.msra.mxu0 %v4246
    %4253 = vmatprep.subr.mxu0 0.0
    %4254 = vmatpush1.xpose.msra.mxu0 %v4249
    %4255 = vmatprep.subr.mxu0 0.0
    %4256 = vmatpush1.xpose.msra.mxu0 0.0
    %4257 = vmatprep.subr.mxu0 0.0
    %4258 = vmatpush1.xpose.msra.mxu0 0.0
    %4259 = vmatprep.subr.mxu0 0.0
    %4260 = vmatpush1.xpose.msra.mxu0 0.0
    %4261 = vmatprep.subr.mxu0 0.0
    %4262 = vmatpush1.xpose.msra.mxu0 0.0
    %4263 = vmatprep.subr.mxu0 0.0
    %4264 = vmatpush1.xpose.msra.mxu0 0.0
    %4265 = vmatprep.subr.mxu0 0.0
    %4266 = vmatpush1.xpose.msra.mxu0 0.0
    %4267 = vmatprep.subr.mxu0 0.0
    %4268 = vmatpush1.xpose.msra.mxu0 0.0
    %4269 = vmatprep.subr.mxu0 0.0
    %4270 = vmatpush1.xpose.msra.mxu0 0.0
    %4271 = vmatprep.subr.mxu0 0.0
    %4272 = vmatpush1.xpose.msra.mxu0 0.0
    %4273 = vmatprep.subr.mxu0 0.0
    %4274 = vmatpush1.xpose.msra.mxu0 0.0
    %4275 = vmatprep.subr.mxu0 0.0
    %4276 = vmatpush1.xpose.msra.mxu0 0.0
    %4277 = vmatprep.subr.mxu0 0.0
    %4278 = vmatpush1.xpose.msra.mxu0 0.0
    %4279 = vmatprep.subr.mxu0 0.0
    %4280 = vmatpush1.xpose.msra.mxu0 0.0
    %4281 = vmatprep.subr.mxu0 0.0
    %4282 = vmatpush1.xpose.msra.mxu0 0.0
    %4283 = vmatprep.subr.mxu0 0.0
    %4284 = vmatpush1.xpose.msra.mxu0 0.0
    %4285 = vmatprep.subr.mxu0 0.0
    %4286 = vmatpush1.xpose.msra.mxu0 0.0
    %4287 = vmatprep.subr.mxu0 0.0
    %4288 = vmatpush1.xpose.msra.mxu0 0.0
    %4289 = vmatprep.subr.mxu0 0.0
    %4290 = vmatpush1.xpose.msra.mxu0 0.0
    %4291 = vmatprep.subr.mxu0 0.0
    %4292 = vmatpush1.xpose.msra.mxu0 0.0
    %4293 = vmatprep.subr.mxu0 0.0
    %4294 = vmatpush1.xpose.msra.mxu0 0.0
    %4295 = vmatprep.subr.mxu0 0.0
    %4296 = vmatpush1.xpose.msra.mxu0 0.0
    %4297 = vmatprep.subr.mxu0 0.0
    %4298 = vmatpush1.xpose.msra.mxu0 0.0
    %4299 = vmatprep.subr.mxu0 0.0
    %4300 = vmatpush1.xpose.msra.mxu0 0.0
    %4301 = vmatprep.subr.mxu0 0.0
    %4302 = vmatpush1.xpose.msra.mxu0 0.0
    %4303 = vmatprep.subr.mxu0 0.0
    %4304 = vmatpush1.xpose.msra.mxu0 0.0
    %4305 = vmatprep.subr.mxu0 0.0
    %4306 = vmatpush1.xpose.msra.mxu0 0.0
    %4307 = vmatprep.subr.mxu0 0.0
    %4308 = vmatpush1.xpose.msra.mxu0 0.0
    %4309 = vmatprep.subr.mxu0 0.0
    %4310 = vmatpush1.xpose.msra.mxu0 0.0
    %4311 = vmatprep.subr.mxu0 0.0
    %4312 = vmatpush1.xpose.msra.mxu0 0.0
    %4313 = vmatprep.subr.mxu0 0.0
    %4314 = vmatpush1.xpose.msra.mxu0 0.0
    %4315 = vmatprep.mubr.f32.mxu0 0.0
    %4316 = vmatmul.mubr.f32.gmra.mrb[0].mxu0 %v4240
    %v4317 = vpop.f32.mrb[0].mxu0
    %v4318 = vadd.f32 0.0, %v4317
    %v4319 = vpop.f32.mrb[0].mxu0
    %4320 = vmatprep.mubr.f32.mxu0 0.0
    %4321 = vmatmul.mubr.f32.gmra.mrb[0].mxu0 %v4243
    %v4322 = vpop.f32.mrb[0].mxu0
    %v4323 = vadd.f32 0.0, %v4322
    %v4324 = vpop.f32.mrb[0].mxu0
    %4325 = vdwg.mxu0
    %v4327 = vsel %vm3977, %v1213, 0
    %v4330 = vsel %vm3977, %v1349, 0
    %v4333 = vsel %vm3977, %v2389, 0
    %v4336 = vsel %vm3977, %v2525, 0
    %4338 = vmatprep.subr.mxu0 0.0
    %4339 = vmatpush1.xpose.msra.mxu0 %v4333
    %4340 = vmatprep.subr.mxu0 0.0
    %4341 = vmatpush1.xpose.msra.mxu0 %v4336
    %4342 = vmatprep.subr.mxu0 0.0
    %4343 = vmatpush1.xpose.msra.mxu0 0.0
    %4344 = vmatprep.subr.mxu0 0.0
    %4345 = vmatpush1.xpose.msra.mxu0 0.0
    %4346 = vmatprep.subr.mxu0 0.0
    %4347 = vmatpush1.xpose.msra.mxu0 0.0
    %4348 = vmatprep.subr.mxu0 0.0
    %4349 = vmatpush1.xpose.msra.mxu0 0.0
    %4350 = vmatprep.subr.mxu0 0.0
    %4351 = vmatpush1.xpose.msra.mxu0 0.0
    %4352 = vmatprep.subr.mxu0 0.0
    %4353 = vmatpush1.xpose.msra.mxu0 0.0
    %4354 = vmatprep.subr.mxu0 0.0
    %4355 = vmatpush1.xpose.msra.mxu0 0.0
    %4356 = vmatprep.subr.mxu0 0.0
    %4357 = vmatpush1.xpose.msra.mxu0 0.0
    %4358 = vmatprep.subr.mxu0 0.0
    %4359 = vmatpush1.xpose.msra.mxu0 0.0
    %4360 = vmatprep.subr.mxu0 0.0
    %4361 = vmatpush1.xpose.msra.mxu0 0.0
    %4362 = vmatprep.subr.mxu0 0.0
    %4363 = vmatpush1.xpose.msra.mxu0 0.0
    %4364 = vmatprep.subr.mxu0 0.0
    %4365 = vmatpush1.xpose.msra.mxu0 0.0
    %4366 = vmatprep.subr.mxu0 0.0
    %4367 = vmatpush1.xpose.msra.mxu0 0.0
    %4368 = vmatprep.subr.mxu0 0.0
    %4369 = vmatpush1.xpose.msra.mxu0 0.0
    %4370 = vmatprep.subr.mxu0 0.0
    %4371 = vmatpush1.xpose.msra.mxu0 0.0
    %4372 = vmatprep.subr.mxu0 0.0
    %4373 = vmatpush1.xpose.msra.mxu0 0.0
    %4374 = vmatprep.subr.mxu0 0.0
    %4375 = vmatpush1.xpose.msra.mxu0 0.0
    %4376 = vmatprep.subr.mxu0 0.0
    %4377 = vmatpush1.xpose.msra.mxu0 0.0
    %4378 = vmatprep.subr.mxu0 0.0
    %4379 = vmatpush1.xpose.msra.mxu0 0.0
    %4380 = vmatprep.subr.mxu0 0.0
    %4381 = vmatpush1.xpose.msra.mxu0 0.0
    %4382 = vmatprep.subr.mxu0 0.0
    %4383 = vmatpush1.xpose.msra.mxu0 0.0
    %4384 = vmatprep.subr.mxu0 0.0
    %4385 = vmatpush1.xpose.msra.mxu0 0.0
    %4386 = vmatprep.subr.mxu0 0.0
    %4387 = vmatpush1.xpose.msra.mxu0 0.0
    %4388 = vmatprep.subr.mxu0 0.0
    %4389 = vmatpush1.xpose.msra.mxu0 0.0
    %4390 = vmatprep.subr.mxu0 0.0
    %4391 = vmatpush1.xpose.msra.mxu0 0.0
    %4392 = vmatprep.subr.mxu0 0.0
    %4393 = vmatpush1.xpose.msra.mxu0 0.0
    %4394 = vmatprep.subr.mxu0 0.0
    %4395 = vmatpush1.xpose.msra.mxu0 0.0
    %4396 = vmatprep.subr.mxu0 0.0
    %4397 = vmatpush1.xpose.msra.mxu0 0.0
    %4398 = vmatprep.subr.mxu0 0.0
    %4399 = vmatpush1.xpose.msra.mxu0 0.0
    %4400 = vmatprep.subr.mxu0 0.0
    %4401 = vmatpush1.xpose.msra.mxu0 0.0
    %4402 = vmatprep.mubr.f32.mxu0 0.0
    %4403 = vmatmul.mubr.f32.gmra.mrb[0].mxu0 %v4327
    %v4404 = vpop.f32.mrb[0].mxu0
    %v4405 = vadd.f32 0.0, %v4404
    %v4406 = vpop.f32.mrb[0].mxu0
    %4407 = vmatprep.mubr.f32.mxu0 0.0
    %4408 = vmatmul.mubr.f32.gmra.mrb[0].mxu0 %v4330
    %v4409 = vpop.f32.mrb[0].mxu0
    %v4410 = vadd.f32 0.0, %v4409
    %v4411 = vpop.f32.mrb[0].mxu0
    %4412 = vdwg.mxu0
    %v4414 = vsel %vm3977, %v1214, 0
    %v4417 = vsel %vm3977, %v1350, 0
    %v4420 = vsel %vm3977, %v2390, 0
    %v4423 = vsel %vm3977, %v2526, 0
    %4425 = vmatprep.subr.mxu0 0.0
    %4426 = vmatpush1.xpose.msra.mxu0 %v4420
    %4427 = vmatprep.subr.mxu0 0.0
    %4428 = vmatpush1.xpose.msra.mxu0 %v4423
    %4429 = vmatprep.subr.mxu0 0.0
    %4430 = vmatpush1.xpose.msra.mxu0 0.0
    %4431 = vmatprep.subr.mxu0 0.0
    %4432 = vmatpush1.xpose.msra.mxu0 0.0
    %4433 = vmatprep.subr.mxu0 0.0
    %4434 = vmatpush1.xpose.msra.mxu0 0.0
    %4435 = vmatprep.subr.mxu0 0.0
    %4436 = vmatpush1.xpose.msra.mxu0 0.0
    %4437 = vmatprep.subr.mxu0 0.0
    %4438 = vmatpush1.xpose.msra.mxu0 0.0
    %4439 = vmatprep.subr.mxu0 0.0
    %4440 = vmatpush1.xpose.msra.mxu0 0.0
    %4441 = vmatprep.subr.mxu0 0.0
    %4442 = vmatpush1.xpose.msra.mxu0 0.0
    %4443 = vmatprep.subr.mxu0 0.0
    %4444 = vmatpush1.xpose.msra.mxu0 0.0
    %4445 = vmatprep.subr.mxu0 0.0
    %4446 = vmatpush1.xpose.msra.mxu0 0.0
    %4447 = vmatprep.subr.mxu0 0.0
    %4448 = vmatpush1.xpose.msra.mxu0 0.0
    %4449 = vmatprep.subr.mxu0 0.0
    %4450 = vmatpush1.xpose.msra.mxu0 0.0
    %4451 = vmatprep.subr.mxu0 0.0
    %4452 = vmatpush1.xpose.msra.mxu0 0.0
    %4453 = vmatprep.subr.mxu0 0.0
    %4454 = vmatpush1.xpose.msra.mxu0 0.0
    %4455 = vmatprep.subr.mxu0 0.0
    %4456 = vmatpush1.xpose.msra.mxu0 0.0
    %4457 = vmatprep.subr.mxu0 0.0
    %4458 = vmatpush1.xpose.msra.mxu0 0.0
    %4459 = vmatprep.subr.mxu0 0.0
    %4460 = vmatpush1.xpose.msra.mxu0 0.0
    %4461 = vmatprep.subr.mxu0 0.0
    %4462 = vmatpush1.xpose.msra.mxu0 0.0
    %4463 = vmatprep.subr.mxu0 0.0
    %4464 = vmatpush1.xpose.msra.mxu0 0.0
    %4465 = vmatprep.subr.mxu0 0.0
    %4466 = vmatpush1.xpose.msra.mxu0 0.0
    %4467 = vmatprep.subr.mxu0 0.0
    %4468 = vmatpush1.xpose.msra.mxu0 0.0
    %4469 = vmatprep.subr.mxu0 0.0
    %4470 = vmatpush1.xpose.msra.mxu0 0.0
    %4471 = vmatprep.subr.mxu0 0.0
    %4472 = vmatpush1.xpose.msra.mxu0 0.0
    %4473 = vmatprep.subr.mxu0 0.0
    %4474 = vmatpush1.xpose.msra.mxu0 0.0
    %4475 = vmatprep.subr.mxu0 0.0
    %4476 = vmatpush1.xpose.msra.mxu0 0.0
    %4477 = vmatprep.subr.mxu0 0.0
    %4478 = vmatpush1.xpose.msra.mxu0 0.0
    %4479 = vmatprep.subr.mxu0 0.0
    %4480 = vmatpush1.xpose.msra.mxu0 0.0
    %4481 = vmatprep.subr.mxu0 0.0
    %4482 = vmatpush1.xpose.msra.mxu0 0.0
    %4483 = vmatprep.subr.mxu0 0.0
    %4484 = vmatpush1.xpose.msra.mxu0 0.0
    %4485 = vmatprep.subr.mxu0 0.0
    %4486 = vmatpush1.xpose.msra.mxu0 0.0
    %4487 = vmatprep.subr.mxu0 0.0
    %4488 = vmatpush1.xpose.msra.mxu0 0.0
    %4489 = vmatprep.mubr.f32.mxu0 0.0
    %4490 = vmatmul.mubr.f32.gmra.mrb[0].mxu0 %v4414
    %v4491 = vpop.f32.mrb[0].mxu0
    %v4492 = vadd.f32 0.0, %v4491
    %v4493 = vpop.f32.mrb[0].mxu0
    %4494 = vmatprep.mubr.f32.mxu0 0.0
    %4495 = vmatmul.mubr.f32.gmra.mrb[0].mxu0 %v4417
    %v4496 = vpop.f32.mrb[0].mxu0
    %v4497 = vadd.f32 0.0, %v4496
    %v4498 = vpop.f32.mrb[0].mxu0
    %4499 = vdwg.mxu0
    %v4501 = vsel %vm3977, %v1215, 0
    %v4504 = vsel %vm3977, %v1351, 0
    %v4507 = vsel %vm3977, %v2391, 0
    %v4510 = vsel %vm3977, %v2527, 0
    %4512 = vmatprep.subr.mxu0 0.0
    %4513 = vmatpush1.xpose.msra.mxu0 %v4507
    %4514 = vmatprep.subr.mxu0 0.0
    %4515 = vmatpush1.xpose.msra.mxu0 %v4510
    %4516 = vmatprep.subr.mxu0 0.0
    %4517 = vmatpush1.xpose.msra.mxu0 0.0
    %4518 = vmatprep.subr.mxu0 0.0
    %4519 = vmatpush1.xpose.msra.mxu0 0.0
    %4520 = vmatprep.subr.mxu0 0.0
    %4521 = vmatpush1.xpose.msra.mxu0 0.0
    %4522 = vmatprep.subr.mxu0 0.0
    %4523 = vmatpush1.xpose.msra.mxu0 0.0
    %4524 = vmatprep.subr.mxu0 0.0
    %4525 = vmatpush1.xpose.msra.mxu0 0.0
    %4526 = vmatprep.subr.mxu0 0.0
    %4527 = vmatpush1.xpose.msra.mxu0 0.0
    %4528 = vmatprep.subr.mxu0 0.0
    %4529 = vmatpush1.xpose.msra.mxu0 0.0
    %4530 = vmatprep.subr.mxu0 0.0
    %4531 = vmatpush1.xpose.msra.mxu0 0.0
    %4532 = vmatprep.subr.mxu0 0.0
    %4533 = vmatpush1.xpose.msra.mxu0 0.0
    %4534 = vmatprep.subr.mxu0 0.0
    %4535 = vmatpush1.xpose.msra.mxu0 0.0
    %4536 = vmatprep.subr.mxu0 0.0
    %4537 = vmatpush1.xpose.msra.mxu0 0.0
    %4538 = vmatprep.subr.mxu0 0.0
    %4539 = vmatpush1.xpose.msra.mxu0 0.0
    %4540 = vmatprep.subr.mxu0 0.0
    %4541 = vmatpush1.xpose.msra.mxu0 0.0
    %4542 = vmatprep.subr.mxu0 0.0
    %4543 = vmatpush1.xpose.msra.mxu0 0.0
    %4544 = vmatprep.subr.mxu0 0.0
    %4545 = vmatpush1.xpose.msra.mxu0 0.0
    %4546 = vmatprep.subr.mxu0 0.0
    %4547 = vmatpush1.xpose.msra.mxu0 0.0
    %4548 = vmatprep.subr.mxu0 0.0
    %4549 = vmatpush1.xpose.msra.mxu0 0.0
    %4550 = vmatprep.subr.mxu0 0.0
    %4551 = vmatpush1.xpose.msra.mxu0 0.0
    %4552 = vmatprep.subr.mxu0 0.0
    %4553 = vmatpush1.xpose.msra.mxu0 0.0
    %4554 = vmatprep.subr.mxu0 0.0
    %4555 = vmatpush1.xpose.msra.mxu0 0.0
    %4556 = vmatprep.subr.mxu0 0.0
    %4557 = vmatpush1.xpose.msra.mxu0 0.0
    %4558 = vmatprep.subr.mxu0 0.0
    %4559 = vmatpush1.xpose.msra.mxu0 0.0
    %4560 = vmatprep.subr.mxu0 0.0
    %4561 = vmatpush1.xpose.msra.mxu0 0.0
    %4562 = vmatprep.subr.mxu0 0.0
    %4563 = vmatpush1.xpose.msra.mxu0 0.0
    %4564 = vmatprep.subr.mxu0 0.0
    %4565 = vmatpush1.xpose.msra.mxu0 0.0
    %4566 = vmatprep.subr.mxu0 0.0
    %4567 = vmatpush1.xpose.msra.mxu0 0.0
    %4568 = vmatprep.subr.mxu0 0.0
    %4569 = vmatpush1.xpose.msra.mxu0 0.0
    %4570 = vmatprep.subr.mxu0 0.0
    %4571 = vmatpush1.xpose.msra.mxu0 0.0
    %4572 = vmatprep.subr.mxu0 0.0
    %4573 = vmatpush1.xpose.msra.mxu0 0.0
    %4574 = vmatprep.subr.mxu0 0.0
    %4575 = vmatpush1.xpose.msra.mxu0 0.0
    %4576 = vmatprep.mubr.f32.mxu0 0.0
    %4577 = vmatmul.mubr.f32.gmra.mrb[0].mxu0 %v4501
    %v4578 = vpop.f32.mrb[0].mxu0
    %v4579 = vadd.f32 0.0, %v4578
    %v4580 = vpop.f32.mrb[0].mxu0
    %4581 = vmatprep.mubr.f32.mxu0 0.0
    %4582 = vmatmul.mubr.f32.gmra.mrb[0].mxu0 %v4504
    %v4583 = vpop.f32.mrb[0].mxu0
    %v4584 = vadd.f32 0.0, %v4583
    %v4585 = vpop.f32.mrb[0].mxu0
    %4586 = vdwg.mxu0
    %v4588 = vsel %vm3977, %v1216, 0
    %v4591 = vsel %vm3977, %v1352, 0
    %v4594 = vsel %vm3977, %v2392, 0
    %v4597 = vsel %vm3977, %v2528, 0
    %4599 = vmatprep.subr.mxu0 0.0
    %4600 = vmatpush1.xpose.msra.mxu0 %v4594
    %4601 = vmatprep.subr.mxu0 0.0
    %4602 = vmatpush1.xpose.msra.mxu0 %v4597
    %4603 = vmatprep.subr.mxu0 0.0
    %4604 = vmatpush1.xpose.msra.mxu0 0.0
    %4605 = vmatprep.subr.mxu0 0.0
    %4606 = vmatpush1.xpose.msra.mxu0 0.0
    %4607 = vmatprep.subr.mxu0 0.0
    %4608 = vmatpush1.xpose.msra.mxu0 0.0
    %4609 = vmatprep.subr.mxu0 0.0
    %4610 = vmatpush1.xpose.msra.mxu0 0.0
    %4611 = vmatprep.subr.mxu0 0.0
    %4612 = vmatpush1.xpose.msra.mxu0 0.0
    %4613 = vmatprep.subr.mxu0 0.0
    %4614 = vmatpush1.xpose.msra.mxu0 0.0
    %4615 = vmatprep.subr.mxu0 0.0
    %4616 = vmatpush1.xpose.msra.mxu0 0.0
    %4617 = vmatprep.subr.mxu0 0.0
    %4618 = vmatpush1.xpose.msra.mxu0 0.0
    %4619 = vmatprep.subr.mxu0 0.0
    %4620 = vmatpush1.xpose.msra.mxu0 0.0
    %4621 = vmatprep.subr.mxu0 0.0
    %4622 = vmatpush1.xpose.msra.mxu0 0.0
    %4623 = vmatprep.subr.mxu0 0.0
    %4624 = vmatpush1.xpose.msra.mxu0 0.0
    %4625 = vmatprep.subr.mxu0 0.0
    %4626 = vmatpush1.xpose.msra.mxu0 0.0
    %4627 = vmatprep.subr.mxu0 0.0
    %4628 = vmatpush1.xpose.msra.mxu0 0.0
    %4629 = vmatprep.subr.mxu0 0.0
    %4630 = vmatpush1.xpose.msra.mxu0 0.0
    %4631 = vmatprep.subr.mxu0 0.0
    %4632 = vmatpush1.xpose.msra.mxu0 0.0
    %4633 = vmatprep.subr.mxu0 0.0
    %4634 = vmatpush1.xpose.msra.mxu0 0.0
    %4635 = vmatprep.subr.mxu0 0.0
    %4636 = vmatpush1.xpose.msra.mxu0 0.0
    %4637 = vmatprep.subr.mxu0 0.0
    %4638 = vmatpush1.xpose.msra.mxu0 0.0
    %4639 = vmatprep.subr.mxu0 0.0
    %4640 = vmatpush1.xpose.msra.mxu0 0.0
    %4641 = vmatprep.subr.mxu0 0.0
    %4642 = vmatpush1.xpose.msra.mxu0 0.0
    %4643 = vmatprep.subr.mxu0 0.0
    %4644 = vmatpush1.xpose.msra.mxu0 0.0
    %4645 = vmatprep.subr.mxu0 0.0
    %4646 = vmatpush1.xpose.msra.mxu0 0.0
    %4647 = vmatprep.subr.mxu0 0.0
    %4648 = vmatpush1.xpose.msra.mxu0 0.0
    %4649 = vmatprep.subr.mxu0 0.0
    %4650 = vmatpush1.xpose.msra.mxu0 0.0
    %4651 = vmatprep.subr.mxu0 0.0
    %4652 = vmatpush1.xpose.msra.mxu0 0.0
    %4653 = vmatprep.subr.mxu0 0.0
    %4654 = vmatpush1.xpose.msra.mxu0 0.0
    %4655 = vmatprep.subr.mxu0 0.0
    %4656 = vmatpush1.xpose.msra.mxu0 0.0
    %4657 = vmatprep.subr.mxu0 0.0
    %4658 = vmatpush1.xpose.msra.mxu0 0.0
    %4659 = vmatprep.subr.mxu0 0.0
    %4660 = vmatpush1.xpose.msra.mxu0 0.0
    %4661 = vmatprep.subr.mxu0 0.0
    %4662 = vmatpush1.xpose.msra.mxu0 0.0
    %4663 = vmatprep.mubr.f32.mxu0 0.0
    %4664 = vmatmul.mubr.f32.gmra.mrb[0].mxu0 %v4588
    %v4665 = vpop.f32.mrb[0].mxu0
    %v4666 = vadd.f32 0.0, %v4665
    %v4667 = vpop.f32.mrb[0].mxu0
    %4668 = vmatprep.mubr.f32.mxu0 0.0
    %4669 = vmatmul.mubr.f32.gmra.mrb[0].mxu0 %v4591
    %v4670 = vpop.f32.mrb[0].mxu0
    %v4671 = vadd.f32 0.0, %v4670
    %v4672 = vpop.f32.mrb[0].mxu0
    %4673 = vdwg.mxu0
    %v4675 = vsel %vm3977, %v1481, 0
    %v4678 = vsel %vm3977, %v1617, 0
    %v4681 = vsel %vm3977, %v2657, 0
    %v4684 = vsel %vm3977, %v2793, 0
    %4686 = vmatprep.subr.mxu0 0.0
    %4687 = vmatpush1.xpose.msra.mxu0 %v4681
    %4688 = vmatprep.subr.mxu0 0.0
    %4689 = vmatpush1.xpose.msra.mxu0 %v4684
    %4690 = vmatprep.subr.mxu0 0.0
    %4691 = vmatpush1.xpose.msra.mxu0 0.0
    %4692 = vmatprep.subr.mxu0 0.0
    %4693 = vmatpush1.xpose.msra.mxu0 0.0
    %4694 = vmatprep.subr.mxu0 0.0
    %4695 = vmatpush1.xpose.msra.mxu0 0.0
    %4696 = vmatprep.subr.mxu0 0.0
    %4697 = vmatpush1.xpose.msra.mxu0 0.0
    %4698 = vmatprep.subr.mxu0 0.0
    %4699 = vmatpush1.xpose.msra.mxu0 0.0
    %4700 = vmatprep.subr.mxu0 0.0
    %4701 = vmatpush1.xpose.msra.mxu0 0.0
    %4702 = vmatprep.subr.mxu0 0.0
    %4703 = vmatpush1.xpose.msra.mxu0 0.0
    %4704 = vmatprep.subr.mxu0 0.0
    %4705 = vmatpush1.xpose.msra.mxu0 0.0
    %4706 = vmatprep.subr.mxu0 0.0
    %4707 = vmatpush1.xpose.msra.mxu0 0.0
    %4708 = vmatprep.subr.mxu0 0.0
    %4709 = vmatpush1.xpose.msra.mxu0 0.0
    %4710 = vmatprep.subr.mxu0 0.0
    %4711 = vmatpush1.xpose.msra.mxu0 0.0
    %4712 = vmatprep.subr.mxu0 0.0
    %4713 = vmatpush1.xpose.msra.mxu0 0.0
    %4714 = vmatprep.subr.mxu0 0.0
    %4715 = vmatpush1.xpose.msra.mxu0 0.0
    %4716 = vmatprep.subr.mxu0 0.0
    %4717 = vmatpush1.xpose.msra.mxu0 0.0
    %4718 = vmatprep.subr.mxu0 0.0
    %4719 = vmatpush1.xpose.msra.mxu0 0.0
    %4720 = vmatprep.subr.mxu0 0.0
    %4721 = vmatpush1.xpose.msra.mxu0 0.0
    %4722 = vmatprep.subr.mxu0 0.0
    %4723 = vmatpush1.xpose.msra.mxu0 0.0
    %4724 = vmatprep.subr.mxu0 0.0
    %4725 = vmatpush1.xpose.msra.mxu0 0.0
    %4726 = vmatprep.subr.mxu0 0.0
    %4727 = vmatpush1.xpose.msra.mxu0 0.0
    %4728 = vmatprep.subr.mxu0 0.0
    %4729 = vmatpush1.xpose.msra.mxu0 0.0
    %4730 = vmatprep.subr.mxu0 0.0
    %4731 = vmatpush1.xpose.msra.mxu0 0.0
    %4732 = vmatprep.subr.mxu0 0.0
    %4733 = vmatpush1.xpose.msra.mxu0 0.0
    %4734 = vmatprep.subr.mxu0 0.0
    %4735 = vmatpush1.xpose.msra.mxu0 0.0
    %4736 = vmatprep.subr.mxu0 0.0
    %4737 = vmatpush1.xpose.msra.mxu0 0.0
    %4738 = vmatprep.subr.mxu0 0.0
    %4739 = vmatpush1.xpose.msra.mxu0 0.0
    %4740 = vmatprep.subr.mxu0 0.0
    %4741 = vmatpush1.xpose.msra.mxu0 0.0
    %4742 = vmatprep.subr.mxu0 0.0
    %4743 = vmatpush1.xpose.msra.mxu0 0.0
    %4744 = vmatprep.subr.mxu0 0.0
    %4745 = vmatpush1.xpose.msra.mxu0 0.0
    %4746 = vmatprep.subr.mxu0 0.0
    %4747 = vmatpush1.xpose.msra.mxu0 0.0
    %4748 = vmatprep.subr.mxu0 0.0
    %4749 = vmatpush1.xpose.msra.mxu0 0.0
    %4750 = vmatprep.mubr.f32.mxu0 0.0
    %4751 = vmatmul.mubr.f32.gmra.mrb[0].mxu0 %v4675
    %v4752 = vpop.f32.mrb[0].mxu0
    %v4753 = vadd.f32 0.0, %v4752
    %v4754 = vpop.f32.mrb[0].mxu0
    %4755 = vmatprep.mubr.f32.mxu0 0.0
    %4756 = vmatmul.mubr.f32.gmra.mrb[0].mxu0 %v4678
    %v4757 = vpop.f32.mrb[0].mxu0
    %v4758 = vadd.f32 0.0, %v4757
    %v4759 = vpop.f32.mrb[0].mxu0
    %4760 = vdwg.mxu0
    %v4762 = vsel %vm3977, %v1482, 0
    %v4765 = vsel %vm3977, %v1618, 0
    %v4768 = vsel %vm3977, %v2658, 0
    %v4771 = vsel %vm3977, %v2794, 0
    %4773 = vmatprep.subr.mxu0 0.0
    %4774 = vmatpush1.xpose.msra.mxu0 %v4768
    %4775 = vmatprep.subr.mxu0 0.0
    %4776 = vmatpush1.xpose.msra.mxu0 %v4771
    %4777 = vmatprep.subr.mxu0 0.0
    %4778 = vmatpush1.xpose.msra.mxu0 0.0
    %4779 = vmatprep.subr.mxu0 0.0
    %4780 = vmatpush1.xpose.msra.mxu0 0.0
    %4781 = vmatprep.subr.mxu0 0.0
    %4782 = vmatpush1.xpose.msra.mxu0 0.0
    %4783 = vmatprep.subr.mxu0 0.0
    %4784 = vmatpush1.xpose.msra.mxu0 0.0
    %4785 = vmatprep.subr.mxu0 0.0
    %4786 = vmatpush1.xpose.msra.mxu0 0.0
    %4787 = vmatprep.subr.mxu0 0.0
    %4788 = vmatpush1.xpose.msra.mxu0 0.0
    %4789 = vmatprep.subr.mxu0 0.0
    %4790 = vmatpush1.xpose.msra.mxu0 0.0
    %4791 = vmatprep.subr.mxu0 0.0
    %4792 = vmatpush1.xpose.msra.mxu0 0.0
    %4793 = vmatprep.subr.mxu0 0.0
    %4794 = vmatpush1.xpose.msra.mxu0 0.0
    %4795 = vmatprep.subr.mxu0 0.0
    %4796 = vmatpush1.xpose.msra.mxu0 0.0
    %4797 = vmatprep.subr.mxu0 0.0
    %4798 = vmatpush1.xpose.msra.mxu0 0.0
    %4799 = vmatprep.subr.mxu0 0.0
    %4800 = vmatpush1.xpose.msra.mxu0 0.0
    %4801 = vmatprep.subr.mxu0 0.0
    %4802 = vmatpush1.xpose.msra.mxu0 0.0
    %4803 = vmatprep.subr.mxu0 0.0
    %4804 = vmatpush1.xpose.msra.mxu0 0.0
    %4805 = vmatprep.subr.mxu0 0.0
    %4806 = vmatpush1.xpose.msra.mxu0 0.0
    %4807 = vmatprep.subr.mxu0 0.0
    %4808 = vmatpush1.xpose.msra.mxu0 0.0
    %4809 = vmatprep.subr.mxu0 0.0
    %4810 = vmatpush1.xpose.msra.mxu0 0.0
    %4811 = vmatprep.subr.mxu0 0.0
    %4812 = vmatpush1.xpose.msra.mxu0 0.0
    %4813 = vmatprep.subr.mxu0 0.0
    %4814 = vmatpush1.xpose.msra.mxu0 0.0
    %4815 = vmatprep.subr.mxu0 0.0
    %4816 = vmatpush1.xpose.msra.mxu0 0.0
    %4817 = vmatprep.subr.mxu0 0.0
    %4818 = vmatpush1.xpose.msra.mxu0 0.0
    %4819 = vmatprep.subr.mxu0 0.0
    %4820 = vmatpush1.xpose.msra.mxu0 0.0
    %4821 = vmatprep.subr.mxu0 0.0
    %4822 = vmatpush1.xpose.msra.mxu0 0.0
    %4823 = vmatprep.subr.mxu0 0.0
    %4824 = vmatpush1.xpose.msra.mxu0 0.0
    %4825 = vmatprep.subr.mxu0 0.0
    %4826 = vmatpush1.xpose.msra.mxu0 0.0
    %4827 = vmatprep.subr.mxu0 0.0
    %4828 = vmatpush1.xpose.msra.mxu0 0.0
    %4829 = vmatprep.subr.mxu0 0.0
    %4830 = vmatpush1.xpose.msra.mxu0 0.0
    %4831 = vmatprep.subr.mxu0 0.0
    %4832 = vmatpush1.xpose.msra.mxu0 0.0
    %4833 = vmatprep.subr.mxu0 0.0
    %4834 = vmatpush1.xpose.msra.mxu0 0.0
    %4835 = vmatprep.subr.mxu0 0.0
    %4836 = vmatpush1.xpose.msra.mxu0 0.0
    %4837 = vmatprep.mubr.f32.mxu0 0.0
    %4838 = vmatmul.mubr.f32.gmra.mrb[0].mxu0 %v4762
    %v4839 = vpop.f32.mrb[0].mxu0
    %v4840 = vadd.f32 0.0, %v4839
    %v4841 = vpop.f32.mrb[0].mxu0
    %4842 = vmatprep.mubr.f32.mxu0 0.0
    %4843 = vmatmul.mubr.f32.gmra.mrb[0].mxu0 %v4765
    %v4844 = vpop.f32.mrb[0].mxu0
    %v4845 = vadd.f32 0.0, %v4844
    %v4846 = vpop.f32.mrb[0].mxu0
    %4847 = vdwg.mxu0
    %v4849 = vsel %vm3977, %v1483, 0
    %v4852 = vsel %vm3977, %v1619, 0
    %v4855 = vsel %vm3977, %v2659, 0
    %v4858 = vsel %vm3977, %v2795, 0
    %4860 = vmatprep.subr.mxu0 0.0
    %4861 = vmatpush1.xpose.msra.mxu0 %v4855
    %4862 = vmatprep.subr.mxu0 0.0
    %4863 = vmatpush1.xpose.msra.mxu0 %v4858
    %4864 = vmatprep.subr.mxu0 0.0
    %4865 = vmatpush1.xpose.msra.mxu0 0.0
    %4866 = vmatprep.subr.mxu0 0.0
    %4867 = vmatpush1.xpose.msra.mxu0 0.0
    %4868 = vmatprep.subr.mxu0 0.0
    %4869 = vmatpush1.xpose.msra.mxu0 0.0
    %4870 = vmatprep.subr.mxu0 0.0
    %4871 = vmatpush1.xpose.msra.mxu0 0.0
    %4872 = vmatprep.subr.mxu0 0.0
    %4873 = vmatpush1.xpose.msra.mxu0 0.0
    %4874 = vmatprep.subr.mxu0 0.0
    %4875 = vmatpush1.xpose.msra.mxu0 0.0
    %4876 = vmatprep.subr.mxu0 0.0
    %4877 = vmatpush1.xpose.msra.mxu0 0.0
    %4878 = vmatprep.subr.mxu0 0.0
    %4879 = vmatpush1.xpose.msra.mxu0 0.0
    %4880 = vmatprep.subr.mxu0 0.0
    %4881 = vmatpush1.xpose.msra.mxu0 0.0
    %4882 = vmatprep.subr.mxu0 0.0
    %4883 = vmatpush1.xpose.msra.mxu0 0.0
    %4884 = vmatprep.subr.mxu0 0.0
    %4885 = vmatpush1.xpose.msra.mxu0 0.0
    %4886 = vmatprep.subr.mxu0 0.0
    %4887 = vmatpush1.xpose.msra.mxu0 0.0
    %4888 = vmatprep.subr.mxu0 0.0
    %4889 = vmatpush1.xpose.msra.mxu0 0.0
    %4890 = vmatprep.subr.mxu0 0.0
    %4891 = vmatpush1.xpose.msra.mxu0 0.0
    %4892 = vmatprep.subr.mxu0 0.0
    %4893 = vmatpush1.xpose.msra.mxu0 0.0
    %4894 = vmatprep.subr.mxu0 0.0
    %4895 = vmatpush1.xpose.msra.mxu0 0.0
    %4896 = vmatprep.subr.mxu0 0.0
    %4897 = vmatpush1.xpose.msra.mxu0 0.0
    %4898 = vmatprep.subr.mxu0 0.0
    %4899 = vmatpush1.xpose.msra.mxu0 0.0
    %4900 = vmatprep.subr.mxu0 0.0
    %4901 = vmatpush1.xpose.msra.mxu0 0.0
    %4902 = vmatprep.subr.mxu0 0.0
    %4903 = vmatpush1.xpose.msra.mxu0 0.0
    %4904 = vmatprep.subr.mxu0 0.0
    %4905 = vmatpush1.xpose.msra.mxu0 0.0
    %4906 = vmatprep.subr.mxu0 0.0
    %4907 = vmatpush1.xpose.msra.mxu0 0.0
    %4908 = vmatprep.subr.mxu0 0.0
    %4909 = vmatpush1.xpose.msra.mxu0 0.0
    %4910 = vmatprep.subr.mxu0 0.0
    %4911 = vmatpush1.xpose.msra.mxu0 0.0
    %4912 = vmatprep.subr.mxu0 0.0
    %4913 = vmatpush1.xpose.msra.mxu0 0.0
    %4914 = vmatprep.subr.mxu0 0.0
    %4915 = vmatpush1.xpose.msra.mxu0 0.0
    %4916 = vmatprep.subr.mxu0 0.0
    %4917 = vmatpush1.xpose.msra.mxu0 0.0
    %4918 = vmatprep.subr.mxu0 0.0
    %4919 = vmatpush1.xpose.msra.mxu0 0.0
    %4920 = vmatprep.subr.mxu0 0.0
    %4921 = vmatpush1.xpose.msra.mxu0 0.0
    %4922 = vmatprep.subr.mxu0 0.0
    %4923 = vmatpush1.xpose.msra.mxu0 0.0
    %4924 = vmatprep.mubr.f32.mxu0 0.0
    %4925 = vmatmul.mubr.f32.gmra.mrb[0].mxu0 %v4849
    %v4926 = vpop.f32.mrb[0].mxu0
    %v4927 = vadd.f32 0.0, %v4926
    %v4928 = vpop.f32.mrb[0].mxu0
    %4929 = vmatprep.mubr.f32.mxu0 0.0
    %4930 = vmatmul.mubr.f32.gmra.mrb[0].mxu0 %v4852
    %v4931 = vpop.f32.mrb[0].mxu0
    %v4932 = vadd.f32 0.0, %v4931
    %v4933 = vpop.f32.mrb[0].mxu0
    %4934 = vdwg.mxu0
    %v4936 = vsel %vm3977, %v1484, 0
    %v4939 = vsel %vm3977, %v1620, 0
    %v4942 = vsel %vm3977, %v2660, 0
    %v4945 = vsel %vm3977, %v2796, 0
    %4947 = vmatprep.subr.mxu0 0.0
    %4948 = vmatpush1.xpose.msra.mxu0 %v4942
    %4949 = vmatprep.subr.mxu0 0.0
    %4950 = vmatpush1.xpose.msra.mxu0 %v4945
    %4951 = vmatprep.subr.mxu0 0.0
    %4952 = vmatpush1.xpose.msra.mxu0 0.0
    %4953 = vmatprep.subr.mxu0 0.0
    %4954 = vmatpush1.xpose.msra.mxu0 0.0
    %4955 = vmatprep.subr.mxu0 0.0
    %4956 = vmatpush1.xpose.msra.mxu0 0.0
    %4957 = vmatprep.subr.mxu0 0.0
    %4958 = vmatpush1.xpose.msra.mxu0 0.0
    %4959 = vmatprep.subr.mxu0 0.0
    %4960 = vmatpush1.xpose.msra.mxu0 0.0
    %4961 = vmatprep.subr.mxu0 0.0
    %4962 = vmatpush1.xpose.msra.mxu0 0.0
    %4963 = vmatprep.subr.mxu0 0.0
    %4964 = vmatpush1.xpose.msra.mxu0 0.0
    %4965 = vmatprep.subr.mxu0 0.0
    %4966 = vmatpush1.xpose.msra.mxu0 0.0
    %4967 = vmatprep.subr.mxu0 0.0
    %4968 = vmatpush1.xpose.msra.mxu0 0.0
    %4969 = vmatprep.subr.mxu0 0.0
    %4970 = vmatpush1.xpose.msra.mxu0 0.0
    %4971 = vmatprep.subr.mxu0 0.0
    %4972 = vmatpush1.xpose.msra.mxu0 0.0
    %4973 = vmatprep.subr.mxu0 0.0
    %4974 = vmatpush1.xpose.msra.mxu0 0.0
    %4975 = vmatprep.subr.mxu0 0.0
    %4976 = vmatpush1.xpose.msra.mxu0 0.0
    %4977 = vmatprep.subr.mxu0 0.0
    %4978 = vmatpush1.xpose.msra.mxu0 0.0
    %4979 = vmatprep.subr.mxu0 0.0
    %4980 = vmatpush1.xpose.msra.mxu0 0.0
    %4981 = vmatprep.subr.mxu0 0.0
    %4982 = vmatpush1.xpose.msra.mxu0 0.0
    %4983 = vmatprep.subr.mxu0 0.0
    %4984 = vmatpush1.xpose.msra.mxu0 0.0
    %4985 = vmatprep.subr.mxu0 0.0
    %4986 = vmatpush1.xpose.msra.mxu0 0.0
    %4987 = vmatprep.subr.mxu0 0.0
    %4988 = vmatpush1.xpose.msra.mxu0 0.0
    %4989 = vmatprep.subr.mxu0 0.0
    %4990 = vmatpush1.xpose.msra.mxu0 0.0
    %4991 = vmatprep.subr.mxu0 0.0
    %4992 = vmatpush1.xpose.msra.mxu0 0.0
    %4993 = vmatprep.subr.mxu0 0.0
    %4994 = vmatpush1.xpose.msra.mxu0 0.0
    %4995 = vmatprep.subr.mxu0 0.0
    %4996 = vmatpush1.xpose.msra.mxu0 0.0
    %4997 = vmatprep.subr.mxu0 0.0
    %4998 = vmatpush1.xpose.msra.mxu0 0.0
    %4999 = vmatprep.subr.mxu0 0.0
    %5000 = vmatpush1.xpose.msra.mxu0 0.0
    %5001 = vmatprep.subr.mxu0 0.0
    %5002 = vmatpush1.xpose.msra.mxu0 0.0
    %5003 = vmatprep.subr.mxu0 0.0
    %5004 = vmatpush1.xpose.msra.mxu0 0.0
    %5005 = vmatprep.subr.mxu0 0.0
    %5006 = vmatpush1.xpose.msra.mxu0 0.0
    %5007 = vmatprep.subr.mxu0 0.0
    %5008 = vmatpush1.xpose.msra.mxu0 0.0
    %5009 = vmatprep.subr.mxu0 0.0
    %5010 = vmatpush1.xpose.msra.mxu0 0.0
    %5011 = vmatprep.mubr.f32.mxu0 0.0
    %5012 = vmatmul.mubr.f32.gmra.mrb[0].mxu0 %v4936
    %v5013 = vpop.f32.mrb[0].mxu0
    %v5014 = vadd.f32 0.0, %v5013
    %v5015 = vpop.f32.mrb[0].mxu0
    %5016 = vmatprep.mubr.f32.mxu0 0.0
    %5017 = vmatmul.mubr.f32.gmra.mrb[0].mxu0 %v4939
    %v5018 = vpop.f32.mrb[0].mxu0
    %v5019 = vadd.f32 0.0, %v5018
    %v5020 = vpop.f32.mrb[0].mxu0
    %5021 = vdwg.mxu0
    %v5023 = vsel %vm3977, %v1485, 0
    %v5026 = vsel %vm3977, %v1621, 0
    %v5029 = vsel %vm3977, %v2661, 0
    %v5032 = vsel %vm3977, %v2797, 0
    %5034 = vmatprep.subr.mxu0 0.0
    %5035 = vmatpush1.xpose.msra.mxu0 %v5029
    %5036 = vmatprep.subr.mxu0 0.0
    %5037 = vmatpush1.xpose.msra.mxu0 %v5032
    %5038 = vmatprep.subr.mxu0 0.0
    %5039 = vmatpush1.xpose.msra.mxu0 0.0
    %5040 = vmatprep.subr.mxu0 0.0
    %5041 = vmatpush1.xpose.msra.mxu0 0.0
    %5042 = vmatprep.subr.mxu0 0.0
    %5043 = vmatpush1.xpose.msra.mxu0 0.0
    %5044 = vmatprep.subr.mxu0 0.0
    %5045 = vmatpush1.xpose.msra.mxu0 0.0
    %5046 = vmatprep.subr.mxu0 0.0
    %5047 = vmatpush1.xpose.msra.mxu0 0.0
    %5048 = vmatprep.subr.mxu0 0.0
    %5049 = vmatpush1.xpose.msra.mxu0 0.0
    %5050 = vmatprep.subr.mxu0 0.0
    %5051 = vmatpush1.xpose.msra.mxu0 0.0
    %5052 = vmatprep.subr.mxu0 0.0
    %5053 = vmatpush1.xpose.msra.mxu0 0.0
    %5054 = vmatprep.subr.mxu0 0.0
    %5055 = vmatpush1.xpose.msra.mxu0 0.0
    %5056 = vmatprep.subr.mxu0 0.0
    %5057 = vmatpush1.xpose.msra.mxu0 0.0
    %5058 = vmatprep.subr.mxu0 0.0
    %5059 = vmatpush1.xpose.msra.mxu0 0.0
    %5060 = vmatprep.subr.mxu0 0.0
    %5061 = vmatpush1.xpose.msra.mxu0 0.0
    %5062 = vmatprep.subr.mxu0 0.0
    %5063 = vmatpush1.xpose.msra.mxu0 0.0
    %5064 = vmatprep.subr.mxu0 0.0
    %5065 = vmatpush1.xpose.msra.mxu0 0.0
    %5066 = vmatprep.subr.mxu0 0.0
    %5067 = vmatpush1.xpose.msra.mxu0 0.0
    %5068 = vmatprep.subr.mxu0 0.0
    %5069 = vmatpush1.xpose.msra.mxu0 0.0
    %5070 = vmatprep.subr.mxu0 0.0
    %5071 = vmatpush1.xpose.msra.mxu0 0.0
    %5072 = vmatprep.subr.mxu0 0.0
    %5073 = vmatpush1.xpose.msra.mxu0 0.0
    %5074 = vmatprep.subr.mxu0 0.0
    %5075 = vmatpush1.xpose.msra.mxu0 0.0
    %5076 = vmatprep.subr.mxu0 0.0
    %5077 = vmatpush1.xpose.msra.mxu0 0.0
    %5078 = vmatprep.subr.mxu0 0.0
    %5079 = vmatpush1.xpose.msra.mxu0 0.0
    %5080 = vmatprep.subr.mxu0 0.0
    %5081 = vmatpush1.xpose.msra.mxu0 0.0
    %5082 = vmatprep.subr.mxu0 0.0
    %5083 = vmatpush1.xpose.msra.mxu0 0.0
    %5084 = vmatprep.subr.mxu0 0.0
    %5085 = vmatpush1.xpose.msra.mxu0 0.0
    %5086 = vmatprep.subr.mxu0 0.0
    %5087 = vmatpush1.xpose.msra.mxu0 0.0
    %5088 = vmatprep.subr.mxu0 0.0
    %5089 = vmatpush1.xpose.msra.mxu0 0.0
    %5090 = vmatprep.subr.mxu0 0.0
    %5091 = vmatpush1.xpose.msra.mxu0 0.0
    %5092 = vmatprep.subr.mxu0 0.0
    %5093 = vmatpush1.xpose.msra.mxu0 0.0
    %5094 = vmatprep.subr.mxu0 0.0
    %5095 = vmatpush1.xpose.msra.mxu0 0.0
    %5096 = vmatprep.subr.mxu0 0.0
    %5097 = vmatpush1.xpose.msra.mxu0 0.0
    %5098 = vmatprep.mubr.f32.mxu0 0.0
    %5099 = vmatmul.mubr.f32.gmra.mrb[0].mxu0 %v5023
    %v5100 = vpop.f32.mrb[0].mxu0
    %v5101 = vadd.f32 0.0, %v5100
    %v5102 = vpop.f32.mrb[0].mxu0
    %5103 = vmatprep.mubr.f32.mxu0 0.0
    %5104 = vmatmul.mubr.f32.gmra.mrb[0].mxu0 %v5026
    %v5105 = vpop.f32.mrb[0].mxu0
    %v5106 = vadd.f32 0.0, %v5105
    %v5107 = vpop.f32.mrb[0].mxu0
    %5108 = vdwg.mxu0
    %v5110 = vsel %vm3977, %v1486, 0
    %v5113 = vsel %vm3977, %v1622, 0
    %v5116 = vsel %vm3977, %v2662, 0
    %v5119 = vsel %vm3977, %v2798, 0
    %5121 = vmatprep.subr.mxu0 0.0
    %5122 = vmatpush1.xpose.msra.mxu0 %v5116
    %5123 = vmatprep.subr.mxu0 0.0
    %5124 = vmatpush1.xpose.msra.mxu0 %v5119
    %5125 = vmatprep.subr.mxu0 0.0
    %5126 = vmatpush1.xpose.msra.mxu0 0.0
    %5127 = vmatprep.subr.mxu0 0.0
    %5128 = vmatpush1.xpose.msra.mxu0 0.0
    %5129 = vmatprep.subr.mxu0 0.0
    %5130 = vmatpush1.xpose.msra.mxu0 0.0
    %5131 = vmatprep.subr.mxu0 0.0
    %5132 = vmatpush1.xpose.msra.mxu0 0.0
    %5133 = vmatprep.subr.mxu0 0.0
    %5134 = vmatpush1.xpose.msra.mxu0 0.0
    %5135 = vmatprep.subr.mxu0 0.0
    %5136 = vmatpush1.xpose.msra.mxu0 0.0
    %5137 = vmatprep.subr.mxu0 0.0
    %5138 = vmatpush1.xpose.msra.mxu0 0.0
    %5139 = vmatprep.subr.mxu0 0.0
    %5140 = vmatpush1.xpose.msra.mxu0 0.0
    %5141 = vmatprep.subr.mxu0 0.0
    %5142 = vmatpush1.xpose.msra.mxu0 0.0
    %5143 = vmatprep.subr.mxu0 0.0
    %5144 = vmatpush1.xpose.msra.mxu0 0.0
    %5145 = vmatprep.subr.mxu0 0.0
    %5146 = vmatpush1.xpose.msra.mxu0 0.0
    %5147 = vmatprep.subr.mxu0 0.0
    %5148 = vmatpush1.xpose.msra.mxu0 0.0
    %5149 = vmatprep.subr.mxu0 0.0
    %5150 = vmatpush1.xpose.msra.mxu0 0.0
    %5151 = vmatprep.subr.mxu0 0.0
    %5152 = vmatpush1.xpose.msra.mxu0 0.0
    %5153 = vmatprep.subr.mxu0 0.0
    %5154 = vmatpush1.xpose.msra.mxu0 0.0
    %5155 = vmatprep.subr.mxu0 0.0
    %5156 = vmatpush1.xpose.msra.mxu0 0.0
    %5157 = vmatprep.subr.mxu0 0.0
    %5158 = vmatpush1.xpose.msra.mxu0 0.0
    %5159 = vmatprep.subr.mxu0 0.0
    %5160 = vmatpush1.xpose.msra.mxu0 0.0
    %5161 = vmatprep.subr.mxu0 0.0
    %5162 = vmatpush1.xpose.msra.mxu0 0.0
    %5163 = vmatprep.subr.mxu0 0.0
    %5164 = vmatpush1.xpose.msra.mxu0 0.0
    %5165 = vmatprep.subr.mxu0 0.0
    %5166 = vmatpush1.xpose.msra.mxu0 0.0
    %5167 = vmatprep.subr.mxu0 0.0
    %5168 = vmatpush1.xpose.msra.mxu0 0.0
    %5169 = vmatprep.subr.mxu0 0.0
    %5170 = vmatpush1.xpose.msra.mxu0 0.0
    %5171 = vmatprep.subr.mxu0 0.0
    %5172 = vmatpush1.xpose.msra.mxu0 0.0
    %5173 = vmatprep.subr.mxu0 0.0
    %5174 = vmatpush1.xpose.msra.mxu0 0.0
    %5175 = vmatprep.subr.mxu0 0.0
    %5176 = vmatpush1.xpose.msra.mxu0 0.0
    %5177 = vmatprep.subr.mxu0 0.0
    %5178 = vmatpush1.xpose.msra.mxu0 0.0
    %5179 = vmatprep.subr.mxu0 0.0
    %5180 = vmatpush1.xpose.msra.mxu0 0.0
    %5181 = vmatprep.subr.mxu0 0.0
    %5182 = vmatpush1.xpose.msra.mxu0 0.0
    %5183 = vmatprep.subr.mxu0 0.0
    %5184 = vmatpush1.xpose.msra.mxu0 0.0
    %5185 = vmatprep.mubr.f32.mxu0 0.0
    %5186 = vmatmul.mubr.f32.gmra.mrb[0].mxu0 %v5110
    %v5187 = vpop.f32.mrb[0].mxu0
    %v5188 = vadd.f32 0.0, %v5187
    %v5189 = vpop.f32.mrb[0].mxu0
    %5190 = vmatprep.mubr.f32.mxu0 0.0
    %5191 = vmatmul.mubr.f32.gmra.mrb[0].mxu0 %v5113
    %v5192 = vpop.f32.mrb[0].mxu0
    %v5193 = vadd.f32 0.0, %v5192
    %v5194 = vpop.f32.mrb[0].mxu0
    %5195 = vdwg.mxu0
    %v5197 = vsel %vm3977, %v1487, 0
    %v5200 = vsel %vm3977, %v1623, 0
    %v5203 = vsel %vm3977, %v2663, 0
    %v5206 = vsel %vm3977, %v2799, 0
    %5208 = vmatprep.subr.mxu0 0.0
    %5209 = vmatpush1.xpose.msra.mxu0 %v5203
    %5210 = vmatprep.subr.mxu0 0.0
    %5211 = vmatpush1.xpose.msra.mxu0 %v5206
    %5212 = vmatprep.subr.mxu0 0.0
    %5213 = vmatpush1.xpose.msra.mxu0 0.0
    %5214 = vmatprep.subr.mxu0 0.0
    %5215 = vmatpush1.xpose.msra.mxu0 0.0
    %5216 = vmatprep.subr.mxu0 0.0
    %5217 = vmatpush1.xpose.msra.mxu0 0.0
    %5218 = vmatprep.subr.mxu0 0.0
    %5219 = vmatpush1.xpose.msra.mxu0 0.0
    %5220 = vmatprep.subr.mxu0 0.0
    %5221 = vmatpush1.xpose.msra.mxu0 0.0
    %5222 = vmatprep.subr.mxu0 0.0
    %5223 = vmatpush1.xpose.msra.mxu0 0.0
    %5224 = vmatprep.subr.mxu0 0.0
    %5225 = vmatpush1.xpose.msra.mxu0 0.0
    %5226 = vmatprep.subr.mxu0 0.0
    %5227 = vmatpush1.xpose.msra.mxu0 0.0
    %5228 = vmatprep.subr.mxu0 0.0
    %5229 = vmatpush1.xpose.msra.mxu0 0.0
    %5230 = vmatprep.subr.mxu0 0.0
    %5231 = vmatpush1.xpose.msra.mxu0 0.0
    %5232 = vmatprep.subr.mxu0 0.0
    %5233 = vmatpush1.xpose.msra.mxu0 0.0
    %5234 = vmatprep.subr.mxu0 0.0
    %5235 = vmatpush1.xpose.msra.mxu0 0.0
    %5236 = vmatprep.subr.mxu0 0.0
    %5237 = vmatpush1.xpose.msra.mxu0 0.0
    %5238 = vmatprep.subr.mxu0 0.0
    %5239 = vmatpush1.xpose.msra.mxu0 0.0
    %5240 = vmatprep.subr.mxu0 0.0
    %5241 = vmatpush1.xpose.msra.mxu0 0.0
    %5242 = vmatprep.subr.mxu0 0.0
    %5243 = vmatpush1.xpose.msra.mxu0 0.0
    %5244 = vmatprep.subr.mxu0 0.0
    %5245 = vmatpush1.xpose.msra.mxu0 0.0
    %5246 = vmatprep.subr.mxu0 0.0
    %5247 = vmatpush1.xpose.msra.mxu0 0.0
    %5248 = vmatprep.subr.mxu0 0.0
    %5249 = vmatpush1.xpose.msra.mxu0 0.0
    %5250 = vmatprep.subr.mxu0 0.0
    %5251 = vmatpush1.xpose.msra.mxu0 0.0
    %5252 = vmatprep.subr.mxu0 0.0
    %5253 = vmatpush1.xpose.msra.mxu0 0.0
    %5254 = vmatprep.subr.mxu0 0.0
    %5255 = vmatpush1.xpose.msra.mxu0 0.0
    %5256 = vmatprep.subr.mxu0 0.0
    %5257 = vmatpush1.xpose.msra.mxu0 0.0
    %5258 = vmatprep.subr.mxu0 0.0
    %5259 = vmatpush1.xpose.msra.mxu0 0.0
    %5260 = vmatprep.subr.mxu0 0.0
    %5261 = vmatpush1.xpose.msra.mxu0 0.0
    %5262 = vmatprep.subr.mxu0 0.0
    %5263 = vmatpush1.xpose.msra.mxu0 0.0
    %5264 = vmatprep.subr.mxu0 0.0
    %5265 = vmatpush1.xpose.msra.mxu0 0.0
    %5266 = vmatprep.subr.mxu0 0.0
    %5267 = vmatpush1.xpose.msra.mxu0 0.0
    %5268 = vmatprep.subr.mxu0 0.0
    %5269 = vmatpush1.xpose.msra.mxu0 0.0
    %5270 = vmatprep.subr.mxu0 0.0
    %5271 = vmatpush1.xpose.msra.mxu0 0.0
    %5272 = vmatprep.mubr.f32.mxu0 0.0
    %5273 = vmatmul.mubr.f32.gmra.mrb[0].mxu0 %v5197
    %v5274 = vpop.f32.mrb[0].mxu0
    %v5275 = vadd.f32 0.0, %v5274
    %v5276 = vpop.f32.mrb[0].mxu0
    %5277 = vmatprep.mubr.f32.mxu0 0.0
    %5278 = vmatmul.mubr.f32.gmra.mrb[0].mxu0 %v5200
    %v5279 = vpop.f32.mrb[0].mxu0
    %v5280 = vadd.f32 0.0, %v5279
    %v5281 = vpop.f32.mrb[0].mxu0
    %5282 = vdwg.mxu0
    %v5284 = vsel %vm3977, %v1488, 0
    %v5287 = vsel %vm3977, %v1624, 0
    %v5290 = vsel %vm3977, %v2664, 0
    %v5293 = vsel %vm3977, %v2800, 0
    %5295 = vmatprep.subr.mxu0 0.0
    %5296 = vmatpush1.xpose.msra.mxu0 %v5290
    %5297 = vmatprep.subr.mxu0 0.0
    %5298 = vmatpush1.xpose.msra.mxu0 %v5293
    %5299 = vmatprep.subr.mxu0 0.0
    %5300 = vmatpush1.xpose.msra.mxu0 0.0
    %5301 = vmatprep.subr.mxu0 0.0
    %5302 = vmatpush1.xpose.msra.mxu0 0.0
    %5303 = vmatprep.subr.mxu0 0.0
    %5304 = vmatpush1.xpose.msra.mxu0 0.0
    %5305 = vmatprep.subr.mxu0 0.0
    %5306 = vmatpush1.xpose.msra.mxu0 0.0
    %5307 = vmatprep.subr.mxu0 0.0
    %5308 = vmatpush1.xpose.msra.mxu0 0.0
    %5309 = vmatprep.subr.mxu0 0.0
    %5310 = vmatpush1.xpose.msra.mxu0 0.0
    %5311 = vmatprep.subr.mxu0 0.0
    %5312 = vmatpush1.xpose.msra.mxu0 0.0
    %5313 = vmatprep.subr.mxu0 0.0
    %5314 = vmatpush1.xpose.msra.mxu0 0.0
    %5315 = vmatprep.subr.mxu0 0.0
    %5316 = vmatpush1.xpose.msra.mxu0 0.0
    %5317 = vmatprep.subr.mxu0 0.0
    %5318 = vmatpush1.xpose.msra.mxu0 0.0
    %5319 = vmatprep.subr.mxu0 0.0
    %5320 = vmatpush1.xpose.msra.mxu0 0.0
    %5321 = vmatprep.subr.mxu0 0.0
    %5322 = vmatpush1.xpose.msra.mxu0 0.0
    %5323 = vmatprep.subr.mxu0 0.0
    %5324 = vmatpush1.xpose.msra.mxu0 0.0
    %5325 = vmatprep.subr.mxu0 0.0
    %5326 = vmatpush1.xpose.msra.mxu0 0.0
    %5327 = vmatprep.subr.mxu0 0.0
    %5328 = vmatpush1.xpose.msra.mxu0 0.0
    %5329 = vmatprep.subr.mxu0 0.0
    %5330 = vmatpush1.xpose.msra.mxu0 0.0
    %5331 = vmatprep.subr.mxu0 0.0
    %5332 = vmatpush1.xpose.msra.mxu0 0.0
    %5333 = vmatprep.subr.mxu0 0.0
    %5334 = vmatpush1.xpose.msra.mxu0 0.0
    %5335 = vmatprep.subr.mxu0 0.0
    %5336 = vmatpush1.xpose.msra.mxu0 0.0
    %5337 = vmatprep.subr.mxu0 0.0
    %5338 = vmatpush1.xpose.msra.mxu0 0.0
    %5339 = vmatprep.subr.mxu0 0.0
    %5340 = vmatpush1.xpose.msra.mxu0 0.0
    %5341 = vmatprep.subr.mxu0 0.0
    %5342 = vmatpush1.xpose.msra.mxu0 0.0
    %5343 = vmatprep.subr.mxu0 0.0
    %5344 = vmatpush1.xpose.msra.mxu0 0.0
    %5345 = vmatprep.subr.mxu0 0.0
    %5346 = vmatpush1.xpose.msra.mxu0 0.0
    %5347 = vmatprep.subr.mxu0 0.0
    %5348 = vmatpush1.xpose.msra.mxu0 0.0
    %5349 = vmatprep.subr.mxu0 0.0
    %5350 = vmatpush1.xpose.msra.mxu0 0.0
    %5351 = vmatprep.subr.mxu0 0.0
    %5352 = vmatpush1.xpose.msra.mxu0 0.0
    %5353 = vmatprep.subr.mxu0 0.0
    %5354 = vmatpush1.xpose.msra.mxu0 0.0
    %5355 = vmatprep.subr.mxu0 0.0
    %5356 = vmatpush1.xpose.msra.mxu0 0.0
    %5357 = vmatprep.subr.mxu0 0.0
    %5358 = vmatpush1.xpose.msra.mxu0 0.0
    %5359 = vmatprep.mubr.f32.mxu0 0.0
    %5360 = vmatmul.mubr.f32.gmra.mrb[0].mxu0 %v5284
    %v5361 = vpop.f32.mrb[0].mxu0
    %v5362 = vadd.f32 0.0, %v5361
    %v5363 = vpop.f32.mrb[0].mxu0
    %5364 = vmatprep.mubr.f32.mxu0 0.0
    %5365 = vmatmul.mubr.f32.gmra.mrb[0].mxu0 %v5287
    %v5366 = vpop.f32.mrb[0].mxu0
    %v5367 = vadd.f32 0.0, %v5366
    %v5368 = vpop.f32.mrb[0].mxu0
    %5369 = vdwg.mxu0
    %vm5370 = vcmask 130048
    %v5371 = vsel %vm5370, %v4057, -inf
    %5372 = vmax.xlane.f32.xlu0 %v5371
    %v5373 = vpop.xlane.xlu0 %5372
    %v5374 = vsel %vm5370, %v4062, -inf
    %5375 = vmax.xlane.f32.xlu0 %v5374
    %v5376 = vpop.xlane.xlu0 %5375
    %v5377 = vsel %vm5370, %v4144, -inf
    %5378 = vmax.xlane.f32.xlu0 %v5377
    %v5379 = vpop.xlane.xlu0 %5378
    %v5380 = vsel %vm5370, %v4149, -inf
    %5381 = vmax.xlane.f32.xlu0 %v5380
    %v5382 = vpop.xlane.xlu0 %5381
    %v5383 = vsel %vm5370, %v4231, -inf
    %5384 = vmax.xlane.f32.xlu0 %v5383
    %v5385 = vpop.xlane.xlu0 %5384
    %v5386 = vsel %vm5370, %v4236, -inf
    %5387 = vmax.xlane.f32.xlu0 %v5386
    %v5388 = vpop.xlane.xlu0 %5387
    %v5389 = vsel %vm5370, %v4318, -inf
    %5390 = vmax.xlane.f32.xlu0 %v5389
    %v5391 = vpop.xlane.xlu0 %5390
    %v5392 = vsel %vm5370, %v4323, -inf
    %5393 = vmax.xlane.f32.xlu0 %v5392
    %v5394 = vpop.xlane.xlu0 %5393
    %v5395 = vsel %vm5370, %v4405, -inf
    %5396 = vmax.xlane.f32.xlu0 %v5395
    %v5397 = vpop.xlane.xlu0 %5396
    %v5398 = vsel %vm5370, %v4410, -inf
    %5399 = vmax.xlane.f32.xlu0 %v5398
    %v5400 = vpop.xlane.xlu0 %5399
    %v5401 = vsel %vm5370, %v4492, -inf
    %5402 = vmax.xlane.f32.xlu0 %v5401
    %v5403 = vpop.xlane.xlu0 %5402
    %v5404 = vsel %vm5370, %v4497, -inf
    %5405 = vmax.xlane.f32.xlu0 %v5404
    %v5406 = vpop.xlane.xlu0 %5405
    %v5407 = vsel %vm5370, %v4579, -inf
    %5408 = vmax.xlane.f32.xlu0 %v5407
    %v5409 = vpop.xlane.xlu0 %5408
    %v5410 = vsel %vm5370, %v4584, -inf
    %5411 = vmax.xlane.f32.xlu0 %v5410
    %v5412 = vpop.xlane.xlu0 %5411
    %v5413 = vsel %vm5370, %v4666, -inf
    %5414 = vmax.xlane.f32.xlu0 %v5413
    %v5415 = vpop.xlane.xlu0 %5414
    %v5416 = vsel %vm5370, %v4671, -inf
    %5417 = vmax.xlane.f32.xlu0 %v5416
    %v5418 = vpop.xlane.xlu0 %5417
    %v5419 = vsel %vm5370, %v4753, -inf
    %5420 = vmax.xlane.f32.xlu0 %v5419
    %v5421 = vpop.xlane.xlu0 %5420
    %v5422 = vsel %vm5370, %v4758, -inf
    %5423 = vmax.xlane.f32.xlu0 %v5422
    %v5424 = vpop.xlane.xlu0 %5423
    %v5425 = vsel %vm5370, %v4840, -inf
    %5426 = vmax.xlane.f32.xlu0 %v5425
    %v5427 = vpop.xlane.xlu0 %5426
    %v5428 = vsel %vm5370, %v4845, -inf
    %5429 = vmax.xlane.f32.xlu0 %v5428
    %v5430 = vpop.xlane.xlu0 %5429
    %v5431 = vsel %vm5370, %v4927, -inf
    %5432 = vmax.xlane.f32.xlu0 %v5431
    %v5433 = vpop.xlane.xlu0 %5432
    %v5434 = vsel %vm5370, %v4932, -inf
    %5435 = vmax.xlane.f32.xlu0 %v5434
    %v5436 = vpop.xlane.xlu0 %5435
    %v5437 = vsel %vm5370, %v5014, -inf
    %5438 = vmax.xlane.f32.xlu0 %v5437
    %v5439 = vpop.xlane.xlu0 %5438
    %v5440 = vsel %vm5370, %v5019, -inf
    %5441 = vmax.xlane.f32.xlu0 %v5440
    %v5442 = vpop.xlane.xlu0 %5441
    %v5443 = vsel %vm5370, %v5101, -inf
    %5444 = vmax.xlane.f32.xlu0 %v5443
    %v5445 = vpop.xlane.xlu0 %5444
    %v5446 = vsel %vm5370, %v5106, -inf
    %5447 = vmax.xlane.f32.xlu0 %v5446
    %v5448 = vpop.xlane.xlu0 %5447
    %v5449 = vsel %vm5370, %v5188, -inf
    %5450 = vmax.xlane.f32.xlu0 %v5449
    %v5451 = vpop.xlane.xlu0 %5450
    %v5452 = vsel %vm5370, %v5193, -inf
    %5453 = vmax.xlane.f32.xlu0 %v5452
    %v5454 = vpop.xlane.xlu0 %5453
    %v5455 = vsel %vm5370, %v5275, -inf
    %5456 = vmax.xlane.f32.xlu0 %v5455
    %v5457 = vpop.xlane.xlu0 %5456
    %v5458 = vsel %vm5370, %v5280, -inf
    %5459 = vmax.xlane.f32.xlu0 %v5458
    %v5460 = vpop.xlane.xlu0 %5459
    %v5461 = vsel %vm5370, %v5362, -inf
    %5462 = vmax.xlane.f32.xlu0 %v5461
    %v5463 = vpop.xlane.xlu0 %5462
    %v5464 = vsel %vm5370, %v5367, -inf
    %5465 = vmax.xlane.f32.xlu0 %v5464
    %v5466 = vpop.xlane.xlu0 %5465
    %v5467 = vsub.f32 %v4057, %v5373
    %v5468 = vsub.f32 %v4062, %v5376
    %v5469 = vsub.f32 %v4144, %v5379
    %v5470 = vsub.f32 %v4149, %v5382
    %v5471 = vsub.f32 %v4231, %v5385
    %v5472 = vsub.f32 %v4236, %v5388
    %v5473 = vsub.f32 %v4318, %v5391
    %v5474 = vsub.f32 %v4323, %v5394
    %v5475 = vsub.f32 %v4405, %v5397
    %v5476 = vsub.f32 %v4410, %v5400
    %v5477 = vsub.f32 %v4492, %v5403
    %v5478 = vsub.f32 %v4497, %v5406
    %v5479 = vsub.f32 %v4579, %v5409
    %v5480 = vsub.f32 %v4584, %v5412
    %v5481 = vsub.f32 %v4666, %v5415
    %v5482 = vsub.f32 %v4671, %v5418
    %v5483 = vsub.f32 %v4753, %v5421
    %v5484 = vsub.f32 %v4758, %v5424
    %v5485 = vsub.f32 %v4840, %v5427
    %v5486 = vsub.f32 %v4845, %v5430
    %v5487 = vsub.f32 %v4927, %v5433
    %v5488 = vsub.f32 %v4932, %v5436
    %v5489 = vsub.f32 %v5014, %v5439
    %v5490 = vsub.f32 %v5019, %v5442
    %v5491 = vsub.f32 %v5101, %v5445
    %v5492 = vsub.f32 %v5106, %v5448
    %v5493 = vsub.f32 %v5188, %v5451
    %v5494 = vsub.f32 %v5193, %v5454
    %v5495 = vsub.f32 %v5275, %v5457
    %v5496 = vsub.f32 %v5280, %v5460
    %v5497 = vsub.f32 %v5362, %v5463
    %v5498 = vsub.f32 %v5367, %v5466
    %v5499 = vmul.f32 %v5467, 1.442695
    %v5500 = vpow.pop %v5499
    %v5501 = vmul.f32 %v5468, 1.442695
    %v5502 = vpow.pop %v5501
    %v5503 = vmul.f32 %v5469, 1.442695
    %v5504 = vpow.pop %v5503
    %v5505 = vmul.f32 %v5470, 1.442695
    %v5506 = vpow.pop %v5505
    %v5507 = vmul.f32 %v5471, 1.442695
    %v5508 = vpow.pop %v5507
    %v5509 = vmul.f32 %v5472, 1.442695
    %v5510 = vpow.pop %v5509
    %v5511 = vmul.f32 %v5473, 1.442695
    %v5512 = vpow.pop %v5511
    %v5513 = vmul.f32 %v5474, 1.442695
    %v5514 = vpow.pop %v5513
    %v5515 = vmul.f32 %v5475, 1.442695
    %v5516 = vpow.pop %v5515
    %v5517 = vmul.f32 %v5476, 1.442695
    %v5518 = vpow.pop %v5517
    %v5519 = vmul.f32 %v5477, 1.442695
    %v5520 = vpow.pop %v5519
    %v5521 = vmul.f32 %v5478, 1.442695
    %v5522 = vpow.pop %v5521
    %v5523 = vmul.f32 %v5479, 1.442695
    %v5524 = vpow.pop %v5523
    %v5525 = vmul.f32 %v5480, 1.442695
    %v5526 = vpow.pop %v5525
    %v5527 = vmul.f32 %v5481, 1.442695
    %v5528 = vpow.pop %v5527
    %v5529 = vmul.f32 %v5482, 1.442695
    %v5530 = vpow.pop %v5529
    %v5531 = vmul.f32 %v5483, 1.442695
    %v5532 = vpow.pop %v5531
    %v5533 = vmul.f32 %v5484, 1.442695
    %v5534 = vpow.pop %v5533
    %v5535 = vmul.f32 %v5485, 1.442695
    %v5536 = vpow.pop %v5535
    %v5537 = vmul.f32 %v5486, 1.442695
    %v5538 = vpow.pop %v5537
    %v5539 = vmul.f32 %v5487, 1.442695
    %v5540 = vpow.pop %v5539
    %v5541 = vmul.f32 %v5488, 1.442695
    %v5542 = vpow.pop %v5541
    %v5543 = vmul.f32 %v5489, 1.442695
    %v5544 = vpow.pop %v5543
    %v5545 = vmul.f32 %v5490, 1.442695
    %v5546 = vpow.pop %v5545
    %v5547 = vmul.f32 %v5491, 1.442695
    %v5548 = vpow.pop %v5547
    %v5549 = vmul.f32 %v5492, 1.442695
    %v5550 = vpow.pop %v5549
    %v5551 = vmul.f32 %v5493, 1.442695
    %v5552 = vpow.pop %v5551
    %v5553 = vmul.f32 %v5494, 1.442695
    %v5554 = vpow.pop %v5553
    %v5555 = vmul.f32 %v5495, 1.442695
    %v5556 = vpow.pop %v5555
    %v5557 = vmul.f32 %v5496, 1.442695
    %v5558 = vpow.pop %v5557
    %v5559 = vmul.f32 %v5497, 1.442695
    %v5560 = vpow.pop %v5559
    %v5561 = vmul.f32 %v5498, 1.442695
    %v5562 = vpow.pop %v5561
    %v5564 = vsel %vm5370, %v5500, 0
    %v5567 = vsel %vm5370, %v5502, 0
    %5569 = vmatprep.subr.mxu0 0.0
    %5570 = vmatpush1.msra.mxu0 %v3561
    %5571 = vmatprep.subr.mxu0 0.0
    %5572 = vmatpush1.msra.mxu0 %v3697
    %5573 = vmatprep.subr.mxu0 0.0
    %5574 = vmatpush1.msra.mxu0 0.0
    %5575 = vmatprep.subr.mxu0 0.0
    %5576 = vmatpush1.msra.mxu0 0.0
    %5577 = vmatprep.subr.mxu0 0.0
    %5578 = vmatpush1.msra.mxu0 0.0
    %5579 = vmatprep.subr.mxu0 0.0
    %5580 = vmatpush1.msra.mxu0 0.0
    %5581 = vmatprep.subr.mxu0 0.0
    %5582 = vmatpush1.msra.mxu0 0.0
    %5583 = vmatprep.subr.mxu0 0.0
    %5584 = vmatpush1.msra.mxu0 0.0
    %5585 = vmatprep.subr.mxu0 0.0
    %5586 = vmatpush1.msra.mxu0 0.0
    %5587 = vmatprep.subr.mxu0 0.0
    %5588 = vmatpush1.msra.mxu0 0.0
    %5589 = vmatprep.subr.mxu0 0.0
    %5590 = vmatpush1.msra.mxu0 0.0
    %5591 = vmatprep.subr.mxu0 0.0
    %5592 = vmatpush1.msra.mxu0 0.0
    %5593 = vmatprep.subr.mxu0 0.0
    %5594 = vmatpush1.msra.mxu0 0.0
    %5595 = vmatprep.subr.mxu0 0.0
    %5596 = vmatpush1.msra.mxu0 0.0
    %5597 = vmatprep.subr.mxu0 0.0
    %5598 = vmatpush1.msra.mxu0 0.0
    %5599 = vmatprep.subr.mxu0 0.0
    %5600 = vmatpush1.msra.mxu0 0.0
    %5601 = vmatprep.subr.mxu0 0.0
    %5602 = vmatpush1.msra.mxu0 0.0
    %5603 = vmatprep.subr.mxu0 0.0
    %5604 = vmatpush1.msra.mxu0 0.0
    %5605 = vmatprep.subr.mxu0 0.0
    %5606 = vmatpush1.msra.mxu0 0.0
    %5607 = vmatprep.subr.mxu0 0.0
    %5608 = vmatpush1.msra.mxu0 0.0
    %5609 = vmatprep.subr.mxu0 0.0
    %5610 = vmatpush1.msra.mxu0 0.0
    %5611 = vmatprep.subr.mxu0 0.0
    %5612 = vmatpush1.msra.mxu0 0.0
    %5613 = vmatprep.subr.mxu0 0.0
    %5614 = vmatpush1.msra.mxu0 0.0
    %5615 = vmatprep.subr.mxu0 0.0
    %5616 = vmatpush1.msra.mxu0 0.0
    %5617 = vmatprep.subr.mxu0 0.0
    %5618 = vmatpush1.msra.mxu0 0.0
    %5619 = vmatprep.subr.mxu0 0.0
    %5620 = vmatpush1.msra.mxu0 0.0
    %5621 = vmatprep.subr.mxu0 0.0
    %5622 = vmatpush1.msra.mxu0 0.0
    %5623 = vmatprep.subr.mxu0 0.0
    %5624 = vmatpush1.msra.mxu0 0.0
    %5625 = vmatprep.subr.mxu0 0.0
    %5626 = vmatpush1.msra.mxu0 0.0
    %5627 = vmatprep.subr.mxu0 0.0
    %5628 = vmatpush1.msra.mxu0 0.0
    %5629 = vmatprep.subr.mxu0 0.0
    %5630 = vmatpush1.msra.mxu0 0.0
    %5631 = vmatprep.subr.mxu0 0.0
    %5632 = vmatpush1.msra.mxu0 0.0
    %5633 = vmatprep.mubr.f32.mxu0 0.0
    %5634 = vmatmul.mubr.f32.gmra.mrb[0].mxu0 %v5564
    %v5635 = vpop.f32.mrb[0].mxu0
    %v5636 = vadd.f32 0.0, %v5635
    %v5637 = vpop.f32.mrb[0].mxu0
    %5638 = vmatprep.mubr.f32.mxu0 0.0
    %5639 = vmatmul.mubr.f32.gmra.mrb[0].mxu0 %v5567
    %v5640 = vpop.f32.mrb[0].mxu0
    %v5641 = vadd.f32 0.0, %v5640
    %v5642 = vpop.f32.mrb[0].mxu0
    %5643 = vdwg.mxu0
    %v5645 = vsel %vm5370, %v5504, 0
    %v5648 = vsel %vm5370, %v5506, 0
    %5650 = vmatprep.subr.mxu0 0.0
    %5651 = vmatpush1.msra.mxu0 %v3562
    %5652 = vmatprep.subr.mxu0 0.0
    %5653 = vmatpush1.msra.mxu0 %v3698
    %5654 = vmatprep.subr.mxu0 0.0
    %5655 = vmatpush1.msra.mxu0 0.0
    %5656 = vmatprep.subr.mxu0 0.0
    %5657 = vmatpush1.msra.mxu0 0.0
    %5658 = vmatprep.subr.mxu0 0.0
    %5659 = vmatpush1.msra.mxu0 0.0
    %5660 = vmatprep.subr.mxu0 0.0
    %5661 = vmatpush1.msra.mxu0 0.0
    %5662 = vmatprep.subr.mxu0 0.0
    %5663 = vmatpush1.msra.mxu0 0.0
    %5664 = vmatprep.subr.mxu0 0.0
    %5665 = vmatpush1.msra.mxu0 0.0
    %5666 = vmatprep.subr.mxu0 0.0
    %5667 = vmatpush1.msra.mxu0 0.0
    %5668 = vmatprep.subr.mxu0 0.0
    %5669 = vmatpush1.msra.mxu0 0.0
    %5670 = vmatprep.subr.mxu0 0.0
    %5671 = vmatpush1.msra.mxu0 0.0
    %5672 = vmatprep.subr.mxu0 0.0
    %5673 = vmatpush1.msra.mxu0 0.0
    %5674 = vmatprep.subr.mxu0 0.0
    %5675 = vmatpush1.msra.mxu0 0.0
    %5676 = vmatprep.subr.mxu0 0.0
    %5677 = vmatpush1.msra.mxu0 0.0
    %5678 = vmatprep.subr.mxu0 0.0
    %5679 = vmatpush1.msra.mxu0 0.0
    %5680 = vmatprep.subr.mxu0 0.0
    %5681 = vmatpush1.msra.mxu0 0.0
    %5682 = vmatprep.subr.mxu0 0.0
    %5683 = vmatpush1.msra.mxu0 0.0
    %5684 = vmatprep.subr.mxu0 0.0
    %5685 = vmatpush1.msra.mxu0 0.0
    %5686 = vmatprep.subr.mxu0 0.0
    %5687 = vmatpush1.msra.mxu0 0.0
    %5688 = vmatprep.subr.mxu0 0.0
    %5689 = vmatpush1.msra.mxu0 0.0
    %5690 = vmatprep.subr.mxu0 0.0
    %5691 = vmatpush1.msra.mxu0 0.0
    %5692 = vmatprep.subr.mxu0 0.0
    %5693 = vmatpush1.msra.mxu0 0.0
    %5694 = vmatprep.subr.mxu0 0.0
    %5695 = vmatpush1.msra.mxu0 0.0
    %5696 = vmatprep.subr.mxu0 0.0
    %5697 = vmatpush1.msra.mxu0 0.0
    %5698 = vmatprep.subr.mxu0 0.0
    %5699 = vmatpush1.msra.mxu0 0.0
    %5700 = vmatprep.subr.mxu0 0.0
    %5701 = vmatpush1.msra.mxu0 0.0
    %5702 = vmatprep.subr.mxu0 0.0
    %5703 = vmatpush1.msra.mxu0 0.0
    %5704 = vmatprep.subr.mxu0 0.0
    %5705 = vmatpush1.msra.mxu0 0.0
    %5706 = vmatprep.subr.mxu0 0.0
    %5707 = vmatpush1.msra.mxu0 0.0
    %5708 = vmatprep.subr.mxu0 0.0
    %5709 = vmatpush1.msra.mxu0 0.0
    %5710 = vmatprep.subr.mxu0 0.0
    %5711 = vmatpush1.msra.mxu0 0.0
    %5712 = vmatprep.subr.mxu0 0.0
    %5713 = vmatpush1.msra.mxu0 0.0
    %5714 = vmatprep.mubr.f32.mxu0 0.0
    %5715 = vmatmul.mubr.f32.gmra.mrb[0].mxu0 %v5645
    %v5716 = vpop.f32.mrb[0].mxu0
    %v5717 = vadd.f32 0.0, %v5716
    %v5718 = vpop.f32.mrb[0].mxu0
    %5719 = vmatprep.mubr.f32.mxu0 0.0
    %5720 = vmatmul.mubr.f32.gmra.mrb[0].mxu0 %v5648
    %v5721 = vpop.f32.mrb[0].mxu0
    %v5722 = vadd.f32 0.0, %v5721
    %v5723 = vpop.f32.mrb[0].mxu0
    %5724 = vdwg.mxu0
    %v5726 = vsel %vm5370, %v5508, 0
    %v5729 = vsel %vm5370, %v5510, 0
    %5731 = vmatprep.subr.mxu0 0.0
    %5732 = vmatpush1.msra.mxu0 %v3563
    %5733 = vmatprep.subr.mxu0 0.0
    %5734 = vmatpush1.msra.mxu0 %v3699
    %5735 = vmatprep.subr.mxu0 0.0
    %5736 = vmatpush1.msra.mxu0 0.0
    %5737 = vmatprep.subr.mxu0 0.0
    %5738 = vmatpush1.msra.mxu0 0.0
    %5739 = vmatprep.subr.mxu0 0.0
    %5740 = vmatpush1.msra.mxu0 0.0
    %5741 = vmatprep.subr.mxu0 0.0
    %5742 = vmatpush1.msra.mxu0 0.0
    %5743 = vmatprep.subr.mxu0 0.0
    %5744 = vmatpush1.msra.mxu0 0.0
    %5745 = vmatprep.subr.mxu0 0.0
    %5746 = vmatpush1.msra.mxu0 0.0
    %5747 = vmatprep.subr.mxu0 0.0
    %5748 = vmatpush1.msra.mxu0 0.0
    %5749 = vmatprep.subr.mxu0 0.0
    %5750 = vmatpush1.msra.mxu0 0.0
    %5751 = vmatprep.subr.mxu0 0.0
    %5752 = vmatpush1.msra.mxu0 0.0
    %5753 = vmatprep.subr.mxu0 0.0
    %5754 = vmatpush1.msra.mxu0 0.0
    %5755 = vmatprep.subr.mxu0 0.0
    %5756 = vmatpush1.msra.mxu0 0.0
    %5757 = vmatprep.subr.mxu0 0.0
    %5758 = vmatpush1.msra.mxu0 0.0
    %5759 = vmatprep.subr.mxu0 0.0
    %5760 = vmatpush1.msra.mxu0 0.0
    %5761 = vmatprep.subr.mxu0 0.0
    %5762 = vmatpush1.msra.mxu0 0.0
    %5763 = vmatprep.subr.mxu0 0.0
    %5764 = vmatpush1.msra.mxu0 0.0
    %5765 = vmatprep.subr.mxu0 0.0
    %5766 = vmatpush1.msra.mxu0 0.0
    %5767 = vmatprep.subr.mxu0 0.0
    %5768 = vmatpush1.msra.mxu0 0.0
    %5769 = vmatprep.subr.mxu0 0.0
    %5770 = vmatpush1.msra.mxu0 0.0
    %5771 = vmatprep.subr.mxu0 0.0
    %5772 = vmatpush1.msra.mxu0 0.0
    %5773 = vmatprep.subr.mxu0 0.0
    %5774 = vmatpush1.msra.mxu0 0.0
    %5775 = vmatprep.subr.mxu0 0.0
    %5776 = vmatpush1.msra.mxu0 0.0
    %5777 = vmatprep.subr.mxu0 0.0
    %5778 = vmatpush1.msra.mxu0 0.0
    %5779 = vmatprep.subr.mxu0 0.0
    %5780 = vmatpush1.msra.mxu0 0.0
    %5781 = vmatprep.subr.mxu0 0.0
    %5782 = vmatpush1.msra.mxu0 0.0
    %5783 = vmatprep.subr.mxu0 0.0
    %5784 = vmatpush1.msra.mxu0 0.0
    %5785 = vmatprep.subr.mxu0 0.0
    %5786 = vmatpush1.msra.mxu0 0.0
    %5787 = vmatprep.subr.mxu0 0.0
    %5788 = vmatpush1.msra.mxu0 0.0
    %5789 = vmatprep.subr.mxu0 0.0
    %5790 = vmatpush1.msra.mxu0 0.0
    %5791 = vmatprep.subr.mxu0 0.0
    %5792 = vmatpush1.msra.mxu0 0.0
    %5793 = vmatprep.subr.mxu0 0.0
    %5794 = vmatpush1.msra.mxu0 0.0
    %5795 = vmatprep.mubr.f32.mxu0 0.0
    %5796 = vmatmul.mubr.f32.gmra.mrb[0].mxu0 %v5726
    %v5797 = vpop.f32.mrb[0].mxu0
    %v5798 = vadd.f32 0.0, %v5797
    %v5799 = vpop.f32.mrb[0].mxu0
    %5800 = vmatprep.mubr.f32.mxu0 0.0
    %5801 = vmatmul.mubr.f32.gmra.mrb[0].mxu0 %v5729
    %v5802 = vpop.f32.mrb[0].mxu0
    %v5803 = vadd.f32 0.0, %v5802
    %v5804 = vpop.f32.mrb[0].mxu0
    %5805 = vdwg.mxu0
    %v5807 = vsel %vm5370, %v5512, 0
    %v5810 = vsel %vm5370, %v5514, 0
    %5812 = vmatprep.subr.mxu0 0.0
    %5813 = vmatpush1.msra.mxu0 %v3564
    %5814 = vmatprep.subr.mxu0 0.0
    %5815 = vmatpush1.msra.mxu0 %v3700
    %5816 = vmatprep.subr.mxu0 0.0
    %5817 = vmatpush1.msra.mxu0 0.0
    %5818 = vmatprep.subr.mxu0 0.0
    %5819 = vmatpush1.msra.mxu0 0.0
    %5820 = vmatprep.subr.mxu0 0.0
    %5821 = vmatpush1.msra.mxu0 0.0
    %5822 = vmatprep.subr.mxu0 0.0
    %5823 = vmatpush1.msra.mxu0 0.0
    %5824 = vmatprep.subr.mxu0 0.0
    %5825 = vmatpush1.msra.mxu0 0.0
    %5826 = vmatprep.subr.mxu0 0.0
    %5827 = vmatpush1.msra.mxu0 0.0
    %5828 = vmatprep.subr.mxu0 0.0
    %5829 = vmatpush1.msra.mxu0 0.0
    %5830 = vmatprep.subr.mxu0 0.0
    %5831 = vmatpush1.msra.mxu0 0.0
    %5832 = vmatprep.subr.mxu0 0.0
    %5833 = vmatpush1.msra.mxu0 0.0
    %5834 = vmatprep.subr.mxu0 0.0
    %5835 = vmatpush1.msra.mxu0 0.0
    %5836 = vmatprep.subr.mxu0 0.0
    %5837 = vmatpush1.msra.mxu0 0.0
    %5838 = vmatprep.subr.mxu0 0.0
    %5839 = vmatpush1.msra.mxu0 0.0
    %5840 = vmatprep.subr.mxu0 0.0
    %5841 = vmatpush1.msra.mxu0 0.0
    %5842 = vmatprep.subr.mxu0 0.0
    %5843 = vmatpush1.msra.mxu0 0.0
    %5844 = vmatprep.subr.mxu0 0.0
    %5845 = vmatpush1.msra.mxu0 0.0
    %5846 = vmatprep.subr.mxu0 0.0
    %5847 = vmatpush1.msra.mxu0 0.0
    %5848 = vmatprep.subr.mxu0 0.0
    %5849 = vmatpush1.msra.mxu0 0.0
    %5850 = vmatprep.subr.mxu0 0.0
    %5851 = vmatpush1.msra.mxu0 0.0
    %5852 = vmatprep.subr.mxu0 0.0
    %5853 = vmatpush1.msra.mxu0 0.0
    %5854 = vmatprep.subr.mxu0 0.0
    %5855 = vmatpush1.msra.mxu0 0.0
    %5856 = vmatprep.subr.mxu0 0.0
    %5857 = vmatpush1.msra.mxu0 0.0
    %5858 = vmatprep.subr.mxu0 0.0
    %5859 = vmatpush1.msra.mxu0 0.0
    %5860 = vmatprep.subr.mxu0 0.0
    %5861 = vmatpush1.msra.mxu0 0.0
    %5862 = vmatprep.subr.mxu0 0.0
    %5863 = vmatpush1.msra.mxu0 0.0
    %5864 = vmatprep.subr.mxu0 0.0
    %5865 = vmatpush1.msra.mxu0 0.0
    %5866 = vmatprep.subr.mxu0 0.0
    %5867 = vmatpush1.msra.mxu0 0.0
    %5868 = vmatprep.subr.mxu0 0.0
    %5869 = vmatpush1.msra.mxu0 0.0
    %5870 = vmatprep.subr.mxu0 0.0
    %5871 = vmatpush1.msra.mxu0 0.0
    %5872 = vmatprep.subr.mxu0 0.0
    %5873 = vmatpush1.msra.mxu0 0.0
    %5874 = vmatprep.subr.mxu0 0.0
    %5875 = vmatpush1.msra.mxu0 0.0
    %5876 = vmatprep.mubr.f32.mxu0 0.0
    %5877 = vmatmul.mubr.f32.gmra.mrb[0].mxu0 %v5807
    %v5878 = vpop.f32.mrb[0].mxu0
    %v5879 = vadd.f32 0.0, %v5878
    %v5880 = vpop.f32.mrb[0].mxu0
    %5881 = vmatprep.mubr.f32.mxu0 0.0
    %5882 = vmatmul.mubr.f32.gmra.mrb[0].mxu0 %v5810
    %v5883 = vpop.f32.mrb[0].mxu0
    %v5884 = vadd.f32 0.0, %v5883
    %v5885 = vpop.f32.mrb[0].mxu0
    %5886 = vdwg.mxu0
    %v5888 = vsel %vm5370, %v5516, 0
    %v5891 = vsel %vm5370, %v5518, 0
    %5893 = vmatprep.subr.mxu0 0.0
    %5894 = vmatpush1.msra.mxu0 %v3565
    %5895 = vmatprep.subr.mxu0 0.0
    %5896 = vmatpush1.msra.mxu0 %v3701
    %5897 = vmatprep.subr.mxu0 0.0
    %5898 = vmatpush1.msra.mxu0 0.0
    %5899 = vmatprep.subr.mxu0 0.0
    %5900 = vmatpush1.msra.mxu0 0.0
    %5901 = vmatprep.subr.mxu0 0.0
    %5902 = vmatpush1.msra.mxu0 0.0
    %5903 = vmatprep.subr.mxu0 0.0
    %5904 = vmatpush1.msra.mxu0 0.0
    %5905 = vmatprep.subr.mxu0 0.0
    %5906 = vmatpush1.msra.mxu0 0.0
    %5907 = vmatprep.subr.mxu0 0.0
    %5908 = vmatpush1.msra.mxu0 0.0
    %5909 = vmatprep.subr.mxu0 0.0
    %5910 = vmatpush1.msra.mxu0 0.0
    %5911 = vmatprep.subr.mxu0 0.0
    %5912 = vmatpush1.msra.mxu0 0.0
    %5913 = vmatprep.subr.mxu0 0.0
    %5914 = vmatpush1.msra.mxu0 0.0
    %5915 = vmatprep.subr.mxu0 0.0
    %5916 = vmatpush1.msra.mxu0 0.0
    %5917 = vmatprep.subr.mxu0 0.0
    %5918 = vmatpush1.msra.mxu0 0.0
    %5919 = vmatprep.subr.mxu0 0.0
    %5920 = vmatpush1.msra.mxu0 0.0
    %5921 = vmatprep.subr.mxu0 0.0
    %5922 = vmatpush1.msra.mxu0 0.0
    %5923 = vmatprep.subr.mxu0 0.0
    %5924 = vmatpush1.msra.mxu0 0.0
    %5925 = vmatprep.subr.mxu0 0.0
    %5926 = vmatpush1.msra.mxu0 0.0
    %5927 = vmatprep.subr.mxu0 0.0
    %5928 = vmatpush1.msra.mxu0 0.0
    %5929 = vmatprep.subr.mxu0 0.0
    %5930 = vmatpush1.msra.mxu0 0.0
    %5931 = vmatprep.subr.mxu0 0.0
    %5932 = vmatpush1.msra.mxu0 0.0
    %5933 = vmatprep.subr.mxu0 0.0
    %5934 = vmatpush1.msra.mxu0 0.0
    %5935 = vmatprep.subr.mxu0 0.0
    %5936 = vmatpush1.msra.mxu0 0.0
    %5937 = vmatprep.subr.mxu0 0.0
    %5938 = vmatpush1.msra.mxu0 0.0
    %5939 = vmatprep.subr.mxu0 0.0
    %5940 = vmatpush1.msra.mxu0 0.0
    %5941 = vmatprep.subr.mxu0 0.0
    %5942 = vmatpush1.msra.mxu0 0.0
    %5943 = vmatprep.subr.mxu0 0.0
    %5944 = vmatpush1.msra.mxu0 0.0
    %5945 = vmatprep.subr.mxu0 0.0
    %5946 = vmatpush1.msra.mxu0 0.0
    %5947 = vmatprep.subr.mxu0 0.0
    %5948 = vmatpush1.msra.mxu0 0.0
    %5949 = vmatprep.subr.mxu0 0.0
    %5950 = vmatpush1.msra.mxu0 0.0
    %5951 = vmatprep.subr.mxu0 0.0
    %5952 = vmatpush1.msra.mxu0 0.0
    %5953 = vmatprep.subr.mxu0 0.0
    %5954 = vmatpush1.msra.mxu0 0.0
    %5955 = vmatprep.subr.mxu0 0.0
    %5956 = vmatpush1.msra.mxu0 0.0
    %5957 = vmatprep.mubr.f32.mxu0 0.0
    %5958 = vmatmul.mubr.f32.gmra.mrb[0].mxu0 %v5888
    %v5959 = vpop.f32.mrb[0].mxu0
    %v5960 = vadd.f32 0.0, %v5959
    %v5961 = vpop.f32.mrb[0].mxu0
    %5962 = vmatprep.mubr.f32.mxu0 0.0
    %5963 = vmatmul.mubr.f32.gmra.mrb[0].mxu0 %v5891
    %v5964 = vpop.f32.mrb[0].mxu0
    %v5965 = vadd.f32 0.0, %v5964
    %v5966 = vpop.f32.mrb[0].mxu0
    %5967 = vdwg.mxu0
    %v5969 = vsel %vm5370, %v5520, 0
    %v5972 = vsel %vm5370, %v5522, 0
    %5974 = vmatprep.subr.mxu0 0.0
    %5975 = vmatpush1.msra.mxu0 %v3566
    %5976 = vmatprep.subr.mxu0 0.0
    %5977 = vmatpush1.msra.mxu0 %v3702
    %5978 = vmatprep.subr.mxu0 0.0
    %5979 = vmatpush1.msra.mxu0 0.0
    %5980 = vmatprep.subr.mxu0 0.0
    %5981 = vmatpush1.msra.mxu0 0.0
    %5982 = vmatprep.subr.mxu0 0.0
    %5983 = vmatpush1.msra.mxu0 0.0
    %5984 = vmatprep.subr.mxu0 0.0
    %5985 = vmatpush1.msra.mxu0 0.0
    %5986 = vmatprep.subr.mxu0 0.0
    %5987 = vmatpush1.msra.mxu0 0.0
    %5988 = vmatprep.subr.mxu0 0.0
    %5989 = vmatpush1.msra.mxu0 0.0
    %5990 = vmatprep.subr.mxu0 0.0
    %5991 = vmatpush1.msra.mxu0 0.0
    %5992 = vmatprep.subr.mxu0 0.0
    %5993 = vmatpush1.msra.mxu0 0.0
    %5994 = vmatprep.subr.mxu0 0.0
    %5995 = vmatpush1.msra.mxu0 0.0
    %5996 = vmatprep.subr.mxu0 0.0
    %5997 = vmatpush1.msra.mxu0 0.0
    %5998 = vmatprep.subr.mxu0 0.0
    %5999 = vmatpush1.msra.mxu0 0.0
    %6000 = vmatprep.subr.mxu0 0.0
    %6001 = vmatpush1.msra.mxu0 0.0
    %6002 = vmatprep.subr.mxu0 0.0
    %6003 = vmatpush1.msra.mxu0 0.0
    %6004 = vmatprep.subr.mxu0 0.0
    %6005 = vmatpush1.msra.mxu0 0.0
    %6006 = vmatprep.subr.mxu0 0.0
    %6007 = vmatpush1.msra.mxu0 0.0
    %6008 = vmatprep.subr.mxu0 0.0
    %6009 = vmatpush1.msra.mxu0 0.0
    %6010 = vmatprep.subr.mxu0 0.0
    %6011 = vmatpush1.msra.mxu0 0.0
    %6012 = vmatprep.subr.mxu0 0.0
    %6013 = vmatpush1.msra.mxu0 0.0
    %6014 = vmatprep.subr.mxu0 0.0
    %6015 = vmatpush1.msra.mxu0 0.0
    %6016 = vmatprep.subr.mxu0 0.0
    %6017 = vmatpush1.msra.mxu0 0.0
    %6018 = vmatprep.subr.mxu0 0.0
    %6019 = vmatpush1.msra.mxu0 0.0
    %6020 = vmatprep.subr.mxu0 0.0
    %6021 = vmatpush1.msra.mxu0 0.0
    %6022 = vmatprep.subr.mxu0 0.0
    %6023 = vmatpush1.msra.mxu0 0.0
    %6024 = vmatprep.subr.mxu0 0.0
    %6025 = vmatpush1.msra.mxu0 0.0
    %6026 = vmatprep.subr.mxu0 0.0
    %6027 = vmatpush1.msra.mxu0 0.0
    %6028 = vmatprep.subr.mxu0 0.0
    %6029 = vmatpush1.msra.mxu0 0.0
    %6030 = vmatprep.subr.mxu0 0.0
    %6031 = vmatpush1.msra.mxu0 0.0
    %6032 = vmatprep.subr.mxu0 0.0
    %6033 = vmatpush1.msra.mxu0 0.0
    %6034 = vmatprep.subr.mxu0 0.0
    %6035 = vmatpush1.msra.mxu0 0.0
    %6036 = vmatprep.subr.mxu0 0.0
    %6037 = vmatpush1.msra.mxu0 0.0
    %6038 = vmatprep.mubr.f32.mxu0 0.0
    %6039 = vmatmul.mubr.f32.gmra.mrb[0].mxu0 %v5969
    %v6040 = vpop.f32.mrb[0].mxu0
    %v6041 = vadd.f32 0.0, %v6040
    %v6042 = vpop.f32.mrb[0].mxu0
    %6043 = vmatprep.mubr.f32.mxu0 0.0
    %6044 = vmatmul.mubr.f32.gmra.mrb[0].mxu0 %v5972
    %v6045 = vpop.f32.mrb[0].mxu0
    %v6046 = vadd.f32 0.0, %v6045
    %v6047 = vpop.f32.mrb[0].mxu0
    %6048 = vdwg.mxu0
    %v6050 = vsel %vm5370, %v5524, 0
    %v6053 = vsel %vm5370, %v5526, 0
    %6055 = vmatprep.subr.mxu0 0.0
    %6056 = vmatpush1.msra.mxu0 %v3567
    %6057 = vmatprep.subr.mxu0 0.0
    %6058 = vmatpush1.msra.mxu0 %v3703
    %6059 = vmatprep.subr.mxu0 0.0
    %6060 = vmatpush1.msra.mxu0 0.0
    %6061 = vmatprep.subr.mxu0 0.0
    %6062 = vmatpush1.msra.mxu0 0.0
    %6063 = vmatprep.subr.mxu0 0.0
    %6064 = vmatpush1.msra.mxu0 0.0
    %6065 = vmatprep.subr.mxu0 0.0
    %6066 = vmatpush1.msra.mxu0 0.0
    %6067 = vmatprep.subr.mxu0 0.0
    %6068 = vmatpush1.msra.mxu0 0.0
    %6069 = vmatprep.subr.mxu0 0.0
    %6070 = vmatpush1.msra.mxu0 0.0
    %6071 = vmatprep.subr.mxu0 0.0
    %6072 = vmatpush1.msra.mxu0 0.0
    %6073 = vmatprep.subr.mxu0 0.0
    %6074 = vmatpush1.msra.mxu0 0.0
    %6075 = vmatprep.subr.mxu0 0.0
    %6076 = vmatpush1.msra.mxu0 0.0
    %6077 = vmatprep.subr.mxu0 0.0
    %6078 = vmatpush1.msra.mxu0 0.0
    %6079 = vmatprep.subr.mxu0 0.0
    %6080 = vmatpush1.msra.mxu0 0.0
    %6081 = vmatprep.subr.mxu0 0.0
    %6082 = vmatpush1.msra.mxu0 0.0
    %6083 = vmatprep.subr.mxu0 0.0
    %6084 = vmatpush1.msra.mxu0 0.0
    %6085 = vmatprep.subr.mxu0 0.0
    %6086 = vmatpush1.msra.mxu0 0.0
    %6087 = vmatprep.subr.mxu0 0.0
    %6088 = vmatpush1.msra.mxu0 0.0
    %6089 = vmatprep.subr.mxu0 0.0
    %6090 = vmatpush1.msra.mxu0 0.0
    %6091 = vmatprep.subr.mxu0 0.0
    %6092 = vmatpush1.msra.mxu0 0.0
    %6093 = vmatprep.subr.mxu0 0.0
    %6094 = vmatpush1.msra.mxu0 0.0
    %6095 = vmatprep.subr.mxu0 0.0
    %6096 = vmatpush1.msra.mxu0 0.0
    %6097 = vmatprep.subr.mxu0 0.0
    %6098 = vmatpush1.msra.mxu0 0.0
    %6099 = vmatprep.subr.mxu0 0.0
    %6100 = vmatpush1.msra.mxu0 0.0
    %6101 = vmatprep.subr.mxu0 0.0
    %6102 = vmatpush1.msra.mxu0 0.0
    %6103 = vmatprep.subr.mxu0 0.0
    %6104 = vmatpush1.msra.mxu0 0.0
    %6105 = vmatprep.subr.mxu0 0.0
    %6106 = vmatpush1.msra.mxu0 0.0
    %6107 = vmatprep.subr.mxu0 0.0
    %6108 = vmatpush1.msra.mxu0 0.0
    %6109 = vmatprep.subr.mxu0 0.0
    %6110 = vmatpush1.msra.mxu0 0.0
    %6111 = vmatprep.subr.mxu0 0.0
    %6112 = vmatpush1.msra.mxu0 0.0
    %6113 = vmatprep.subr.mxu0 0.0
    %6114 = vmatpush1.msra.mxu0 0.0
    %6115 = vmatprep.subr.mxu0 0.0
    %6116 = vmatpush1.msra.mxu0 0.0
    %6117 = vmatprep.subr.mxu0 0.0
    %6118 = vmatpush1.msra.mxu0 0.0
    %6119 = vmatprep.mubr.f32.mxu0 0.0
    %6120 = vmatmul.mubr.f32.gmra.mrb[0].mxu0 %v6050
    %v6121 = vpop.f32.mrb[0].mxu0
    %v6122 = vadd.f32 0.0, %v6121
    %v6123 = vpop.f32.mrb[0].mxu0
    %6124 = vmatprep.mubr.f32.mxu0 0.0
    %6125 = vmatmul.mubr.f32.gmra.mrb[0].mxu0 %v6053
    %v6126 = vpop.f32.mrb[0].mxu0
    %v6127 = vadd.f32 0.0, %v6126
    %v6128 = vpop.f32.mrb[0].mxu0
    %6129 = vdwg.mxu0
    %v6131 = vsel %vm5370, %v5528, 0
    %v6134 = vsel %vm5370, %v5530, 0
    %6136 = vmatprep.subr.mxu0 0.0
    %6137 = vmatpush1.msra.mxu0 %v3568
    %6138 = vmatprep.subr.mxu0 0.0
    %6139 = vmatpush1.msra.mxu0 %v3704
    %6140 = vmatprep.subr.mxu0 0.0
    %6141 = vmatpush1.msra.mxu0 0.0
    %6142 = vmatprep.subr.mxu0 0.0
    %6143 = vmatpush1.msra.mxu0 0.0
    %6144 = vmatprep.subr.mxu0 0.0
    %6145 = vmatpush1.msra.mxu0 0.0
    %6146 = vmatprep.subr.mxu0 0.0
    %6147 = vmatpush1.msra.mxu0 0.0
    %6148 = vmatprep.subr.mxu0 0.0
    %6149 = vmatpush1.msra.mxu0 0.0
    %6150 = vmatprep.subr.mxu0 0.0
    %6151 = vmatpush1.msra.mxu0 0.0
    %6152 = vmatprep.subr.mxu0 0.0
    %6153 = vmatpush1.msra.mxu0 0.0
    %6154 = vmatprep.subr.mxu0 0.0
    %6155 = vmatpush1.msra.mxu0 0.0
    %6156 = vmatprep.subr.mxu0 0.0
    %6157 = vmatpush1.msra.mxu0 0.0
    %6158 = vmatprep.subr.mxu0 0.0
    %6159 = vmatpush1.msra.mxu0 0.0
    %6160 = vmatprep.subr.mxu0 0.0
    %6161 = vmatpush1.msra.mxu0 0.0
    %6162 = vmatprep.subr.mxu0 0.0
    %6163 = vmatpush1.msra.mxu0 0.0
    %6164 = vmatprep.subr.mxu0 0.0
    %6165 = vmatpush1.msra.mxu0 0.0
    %6166 = vmatprep.subr.mxu0 0.0
    %6167 = vmatpush1.msra.mxu0 0.0
    %6168 = vmatprep.subr.mxu0 0.0
    %6169 = vmatpush1.msra.mxu0 0.0
    %6170 = vmatprep.subr.mxu0 0.0
    %6171 = vmatpush1.msra.mxu0 0.0
    %6172 = vmatprep.subr.mxu0 0.0
    %6173 = vmatpush1.msra.mxu0 0.0
    %6174 = vmatprep.subr.mxu0 0.0
    %6175 = vmatpush1.msra.mxu0 0.0
    %6176 = vmatprep.subr.mxu0 0.0
    %6177 = vmatpush1.msra.mxu0 0.0
    %6178 = vmatprep.subr.mxu0 0.0
    %6179 = vmatpush1.msra.mxu0 0.0
    %6180 = vmatprep.subr.mxu0 0.0
    %6181 = vmatpush1.msra.mxu0 0.0
    %6182 = vmatprep.subr.mxu0 0.0
    %6183 = vmatpush1.msra.mxu0 0.0
    %6184 = vmatprep.subr.mxu0 0.0
    %6185 = vmatpush1.msra.mxu0 0.0
    %6186 = vmatprep.subr.mxu0 0.0
    %6187 = vmatpush1.msra.mxu0 0.0
    %6188 = vmatprep.subr.mxu0 0.0
    %6189 = vmatpush1.msra.mxu0 0.0
    %6190 = vmatprep.subr.mxu0 0.0
    %6191 = vmatpush1.msra.mxu0 0.0
    %6192 = vmatprep.subr.mxu0 0.0
    %6193 = vmatpush1.msra.mxu0 0.0
    %6194 = vmatprep.subr.mxu0 0.0
    %6195 = vmatpush1.msra.mxu0 0.0
    %6196 = vmatprep.subr.mxu0 0.0
    %6197 = vmatpush1.msra.mxu0 0.0
    %6198 = vmatprep.subr.mxu0 0.0
    %6199 = vmatpush1.msra.mxu0 0.0
    %6200 = vmatprep.mubr.f32.mxu0 0.0
    %6201 = vmatmul.mubr.f32.gmra.mrb[0].mxu0 %v6131
    %v6202 = vpop.f32.mrb[0].mxu0
    %v6203 = vadd.f32 0.0, %v6202
    %v6204 = vpop.f32.mrb[0].mxu0
    %6205 = vmatprep.mubr.f32.mxu0 0.0
    %6206 = vmatmul.mubr.f32.gmra.mrb[0].mxu0 %v6134
    %v6207 = vpop.f32.mrb[0].mxu0
    %v6208 = vadd.f32 0.0, %v6207
    %v6209 = vpop.f32.mrb[0].mxu0
    %6210 = vdwg.mxu0
    %v6212 = vsel %vm5370, %v5532, 0
    %v6215 = vsel %vm5370, %v5534, 0
    %6217 = vmatprep.subr.mxu0 0.0
    %6218 = vmatpush1.msra.mxu0 %v3833
    %6219 = vmatprep.subr.mxu0 0.0
    %6220 = vmatpush1.msra.mxu0 %v3969
    %6221 = vmatprep.subr.mxu0 0.0
    %6222 = vmatpush1.msra.mxu0 0.0
    %6223 = vmatprep.subr.mxu0 0.0
    %6224 = vmatpush1.msra.mxu0 0.0
    %6225 = vmatprep.subr.mxu0 0.0
    %6226 = vmatpush1.msra.mxu0 0.0
    %6227 = vmatprep.subr.mxu0 0.0
    %6228 = vmatpush1.msra.mxu0 0.0
    %6229 = vmatprep.subr.mxu0 0.0
    %6230 = vmatpush1.msra.mxu0 0.0
    %6231 = vmatprep.subr.mxu0 0.0
    %6232 = vmatpush1.msra.mxu0 0.0
    %6233 = vmatprep.subr.mxu0 0.0
    %6234 = vmatpush1.msra.mxu0 0.0
    %6235 = vmatprep.subr.mxu0 0.0
    %6236 = vmatpush1.msra.mxu0 0.0
    %6237 = vmatprep.subr.mxu0 0.0
    %6238 = vmatpush1.msra.mxu0 0.0
    %6239 = vmatprep.subr.mxu0 0.0
    %6240 = vmatpush1.msra.mxu0 0.0
    %6241 = vmatprep.subr.mxu0 0.0
    %6242 = vmatpush1.msra.mxu0 0.0
    %6243 = vmatprep.subr.mxu0 0.0
    %6244 = vmatpush1.msra.mxu0 0.0
    %6245 = vmatprep.subr.mxu0 0.0
    %6246 = vmatpush1.msra.mxu0 0.0
    %6247 = vmatprep.subr.mxu0 0.0
    %6248 = vmatpush1.msra.mxu0 0.0
    %6249 = vmatprep.subr.mxu0 0.0
    %6250 = vmatpush1.msra.mxu0 0.0
    %6251 = vmatprep.subr.mxu0 0.0
    %6252 = vmatpush1.msra.mxu0 0.0
    %6253 = vmatprep.subr.mxu0 0.0
    %6254 = vmatpush1.msra.mxu0 0.0
    %6255 = vmatprep.subr.mxu0 0.0
    %6256 = vmatpush1.msra.mxu0 0.0
    %6257 = vmatprep.subr.mxu0 0.0
    %6258 = vmatpush1.msra.mxu0 0.0
    %6259 = vmatprep.subr.mxu0 0.0
    %6260 = vmatpush1.msra.mxu0 0.0
    %6261 = vmatprep.subr.mxu0 0.0
    %6262 = vmatpush1.msra.mxu0 0.0
    %6263 = vmatprep.subr.mxu0 0.0
    %6264 = vmatpush1.msra.mxu0 0.0
    %6265 = vmatprep.subr.mxu0 0.0
    %6266 = vmatpush1.msra.mxu0 0.0
    %6267 = vmatprep.subr.mxu0 0.0
    %6268 = vmatpush1.msra.mxu0 0.0
    %6269 = vmatprep.subr.mxu0 0.0
    %6270 = vmatpush1.msra.mxu0 0.0
    %6271 = vmatprep.subr.mxu0 0.0
    %6272 = vmatpush1.msra.mxu0 0.0
    %6273 = vmatprep.subr.mxu0 0.0
    %6274 = vmatpush1.msra.mxu0 0.0
    %6275 = vmatprep.subr.mxu0 0.0
    %6276 = vmatpush1.msra.mxu0 0.0
    %6277 = vmatprep.subr.mxu0 0.0
    %6278 = vmatpush1.msra.mxu0 0.0
    %6279 = vmatprep.subr.mxu0 0.0
    %6280 = vmatpush1.msra.mxu0 0.0
    %6281 = vmatprep.mubr.f32.mxu0 0.0
    %6282 = vmatmul.mubr.f32.gmra.mrb[0].mxu0 %v6212
    %v6283 = vpop.f32.mrb[0].mxu0
    %v6284 = vadd.f32 0.0, %v6283
    %v6285 = vpop.f32.mrb[0].mxu0
    %6286 = vmatprep.mubr.f32.mxu0 0.0
    %6287 = vmatmul.mubr.f32.gmra.mrb[0].mxu0 %v6215
    %v6288 = vpop.f32.mrb[0].mxu0
    %v6289 = vadd.f32 0.0, %v6288
    %v6290 = vpop.f32.mrb[0].mxu0
    %6291 = vdwg.mxu0
    %v6293 = vsel %vm5370, %v5536, 0
    %v6296 = vsel %vm5370, %v5538, 0
    %6298 = vmatprep.subr.mxu0 0.0
    %6299 = vmatpush1.msra.mxu0 %v3834
    %6300 = vmatprep.subr.mxu0 0.0
    %6301 = vmatpush1.msra.mxu0 %v3970
    %6302 = vmatprep.subr.mxu0 0.0
    %6303 = vmatpush1.msra.mxu0 0.0
    %6304 = vmatprep.subr.mxu0 0.0
    %6305 = vmatpush1.msra.mxu0 0.0
    %6306 = vmatprep.subr.mxu0 0.0
    %6307 = vmatpush1.msra.mxu0 0.0
    %6308 = vmatprep.subr.mxu0 0.0
    %6309 = vmatpush1.msra.mxu0 0.0
    %6310 = vmatprep.subr.mxu0 0.0
    %6311 = vmatpush1.msra.mxu0 0.0
    %6312 = vmatprep.subr.mxu0 0.0
    %6313 = vmatpush1.msra.mxu0 0.0
    %6314 = vmatprep.subr.mxu0 0.0
    %6315 = vmatpush1.msra.mxu0 0.0
    %6316 = vmatprep.subr.mxu0 0.0
    %6317 = vmatpush1.msra.mxu0 0.0
    %6318 = vmatprep.subr.mxu0 0.0
    %6319 = vmatpush1.msra.mxu0 0.0
    %6320 = vmatprep.subr.mxu0 0.0
    %6321 = vmatpush1.msra.mxu0 0.0
    %6322 = vmatprep.subr.mxu0 0.0
    %6323 = vmatpush1.msra.mxu0 0.0
    %6324 = vmatprep.subr.mxu0 0.0
    %6325 = vmatpush1.msra.mxu0 0.0
    %6326 = vmatprep.subr.mxu0 0.0
    %6327 = vmatpush1.msra.mxu0 0.0
    %6328 = vmatprep.subr.mxu0 0.0
    %6329 = vmatpush1.msra.mxu0 0.0
    %6330 = vmatprep.subr.mxu0 0.0
    %6331 = vmatpush1.msra.mxu0 0.0
    %6332 = vmatprep.subr.mxu0 0.0
    %6333 = vmatpush1.msra.mxu0 0.0
    %6334 = vmatprep.subr.mxu0 0.0
    %6335 = vmatpush1.msra.mxu0 0.0
    %6336 = vmatprep.subr.mxu0 0.0
    %6337 = vmatpush1.msra.mxu0 0.0
    %6338 = vmatprep.subr.mxu0 0.0
    %6339 = vmatpush1.msra.mxu0 0.0
    %6340 = vmatprep.subr.mxu0 0.0
    %6341 = vmatpush1.msra.mxu0 0.0
    %6342 = vmatprep.subr.mxu0 0.0
    %6343 = vmatpush1.msra.mxu0 0.0
    %6344 = vmatprep.subr.mxu0 0.0
    %6345 = vmatpush1.msra.mxu0 0.0
    %6346 = vmatprep.subr.mxu0 0.0
    %6347 = vmatpush1.msra.mxu0 0.0
    %6348 = vmatprep.subr.mxu0 0.0
    %6349 = vmatpush1.msra.mxu0 0.0
    %6350 = vmatprep.subr.mxu0 0.0
    %6351 = vmatpush1.msra.mxu0 0.0
    %6352 = vmatprep.subr.mxu0 0.0
    %6353 = vmatpush1.msra.mxu0 0.0
    %6354 = vmatprep.subr.mxu0 0.0
    %6355 = vmatpush1.msra.mxu0 0.0
    %6356 = vmatprep.subr.mxu0 0.0
    %6357 = vmatpush1.msra.mxu0 0.0
    %6358 = vmatprep.subr.mxu0 0.0
    %6359 = vmatpush1.msra.mxu0 0.0
    %6360 = vmatprep.subr.mxu0 0.0
    %6361 = vmatpush1.msra.mxu0 0.0
    %6362 = vmatprep.mubr.f32.mxu0 0.0
    %6363 = vmatmul.mubr.f32.gmra.mrb[0].mxu0 %v6293
    %v6364 = vpop.f32.mrb[0].mxu0
    %v6365 = vadd.f32 0.0, %v6364
    %v6366 = vpop.f32.mrb[0].mxu0
    %6367 = vmatprep.mubr.f32.mxu0 0.0
    %6368 = vmatmul.mubr.f32.gmra.mrb[0].mxu0 %v6296
    %v6369 = vpop.f32.mrb[0].mxu0
    %v6370 = vadd.f32 0.0, %v6369
    %v6371 = vpop.f32.mrb[0].mxu0
    %6372 = vdwg.mxu0
    %v6374 = vsel %vm5370, %v5540, 0
    %v6377 = vsel %vm5370, %v5542, 0
    %6379 = vmatprep.subr.mxu0 0.0
    %6380 = vmatpush1.msra.mxu0 %v3835
    %6381 = vmatprep.subr.mxu0 0.0
    %6382 = vmatpush1.msra.mxu0 %v3971
    %6383 = vmatprep.subr.mxu0 0.0
    %6384 = vmatpush1.msra.mxu0 0.0
    %6385 = vmatprep.subr.mxu0 0.0
    %6386 = vmatpush1.msra.mxu0 0.0
    %6387 = vmatprep.subr.mxu0 0.0
    %6388 = vmatpush1.msra.mxu0 0.0
    %6389 = vmatprep.subr.mxu0 0.0
    %6390 = vmatpush1.msra.mxu0 0.0
    %6391 = vmatprep.subr.mxu0 0.0
    %6392 = vmatpush1.msra.mxu0 0.0
    %6393 = vmatprep.subr.mxu0 0.0
    %6394 = vmatpush1.msra.mxu0 0.0
    %6395 = vmatprep.subr.mxu0 0.0
    %6396 = vmatpush1.msra.mxu0 0.0
    %6397 = vmatprep.subr.mxu0 0.0
    %6398 = vmatpush1.msra.mxu0 0.0
    %6399 = vmatprep.subr.mxu0 0.0
    %6400 = vmatpush1.msra.mxu0 0.0
    %6401 = vmatprep.subr.mxu0 0.0
    %6402 = vmatpush1.msra.mxu0 0.0
    %6403 = vmatprep.subr.mxu0 0.0
    %6404 = vmatpush1.msra.mxu0 0.0
    %6405 = vmatprep.subr.mxu0 0.0
    %6406 = vmatpush1.msra.mxu0 0.0
    %6407 = vmatprep.subr.mxu0 0.0
    %6408 = vmatpush1.msra.mxu0 0.0
    %6409 = vmatprep.subr.mxu0 0.0
    %6410 = vmatpush1.msra.mxu0 0.0
    %6411 = vmatprep.subr.mxu0 0.0
    %6412 = vmatpush1.msra.mxu0 0.0
    %6413 = vmatprep.subr.mxu0 0.0
    %6414 = vmatpush1.msra.mxu0 0.0
    %6415 = vmatprep.subr.mxu0 0.0
    %6416 = vmatpush1.msra.mxu0 0.0
    %6417 = vmatprep.subr.mxu0 0.0
    %6418 = vmatpush1.msra.mxu0 0.0
    %6419 = vmatprep.subr.mxu0 0.0
    %6420 = vmatpush1.msra.mxu0 0.0
    %6421 = vmatprep.subr.mxu0 0.0
    %6422 = vmatpush1.msra.mxu0 0.0
    %6423 = vmatprep.subr.mxu0 0.0
    %6424 = vmatpush1.msra.mxu0 0.0
    %6425 = vmatprep.subr.mxu0 0.0
    %6426 = vmatpush1.msra.mxu0 0.0
    %6427 = vmatprep.subr.mxu0 0.0
    %6428 = vmatpush1.msra.mxu0 0.0
    %6429 = vmatprep.subr.mxu0 0.0
    %6430 = vmatpush1.msra.mxu0 0.0
    %6431 = vmatprep.subr.mxu0 0.0
    %6432 = vmatpush1.msra.mxu0 0.0
    %6433 = vmatprep.subr.mxu0 0.0
    %6434 = vmatpush1.msra.mxu0 0.0
    %6435 = vmatprep.subr.mxu0 0.0
    %6436 = vmatpush1.msra.mxu0 0.0
    %6437 = vmatprep.subr.mxu0 0.0
    %6438 = vmatpush1.msra.mxu0 0.0
    %6439 = vmatprep.subr.mxu0 0.0
    %6440 = vmatpush1.msra.mxu0 0.0
    %6441 = vmatprep.subr.mxu0 0.0
    %6442 = vmatpush1.msra.mxu0 0.0
    %6443 = vmatprep.mubr.f32.mxu0 0.0
    %6444 = vmatmul.mubr.f32.gmra.mrb[0].mxu0 %v6374
    %v6445 = vpop.f32.mrb[0].mxu0
    %v6446 = vadd.f32 0.0, %v6445
    %v6447 = vpop.f32.mrb[0].mxu0
    %6448 = vmatprep.mubr.f32.mxu0 0.0
    %6449 = vmatmul.mubr.f32.gmra.mrb[0].mxu0 %v6377
    %v6450 = vpop.f32.mrb[0].mxu0
    %v6451 = vadd.f32 0.0, %v6450
    %v6452 = vpop.f32.mrb[0].mxu0
    %6453 = vdwg.mxu0
    %v6455 = vsel %vm5370, %v5544, 0
    %v6458 = vsel %vm5370, %v5546, 0
    %6460 = vmatprep.subr.mxu0 0.0
    %6461 = vmatpush1.msra.mxu0 %v3836
    %6462 = vmatprep.subr.mxu0 0.0
    %6463 = vmatpush1.msra.mxu0 %v3972
    %6464 = vmatprep.subr.mxu0 0.0
    %6465 = vmatpush1.msra.mxu0 0.0
    %6466 = vmatprep.subr.mxu0 0.0
    %6467 = vmatpush1.msra.mxu0 0.0
    %6468 = vmatprep.subr.mxu0 0.0
    %6469 = vmatpush1.msra.mxu0 0.0
    %6470 = vmatprep.subr.mxu0 0.0
    %6471 = vmatpush1.msra.mxu0 0.0
    %6472 = vmatprep.subr.mxu0 0.0
    %6473 = vmatpush1.msra.mxu0 0.0
    %6474 = vmatprep.subr.mxu0 0.0
    %6475 = vmatpush1.msra.mxu0 0.0
    %6476 = vmatprep.subr.mxu0 0.0
    %6477 = vmatpush1.msra.mxu0 0.0
    %6478 = vmatprep.subr.mxu0 0.0
    %6479 = vmatpush1.msra.mxu0 0.0
    %6480 = vmatprep.subr.mxu0 0.0
    %6481 = vmatpush1.msra.mxu0 0.0
    %6482 = vmatprep.subr.mxu0 0.0
    %6483 = vmatpush1.msra.mxu0 0.0
    %6484 = vmatprep.subr.mxu0 0.0
    %6485 = vmatpush1.msra.mxu0 0.0
    %6486 = vmatprep.subr.mxu0 0.0
    %6487 = vmatpush1.msra.mxu0 0.0
    %6488 = vmatprep.subr.mxu0 0.0
    %6489 = vmatpush1.msra.mxu0 0.0
    %6490 = vmatprep.subr.mxu0 0.0
    %6491 = vmatpush1.msra.mxu0 0.0
    %6492 = vmatprep.subr.mxu0 0.0
    %6493 = vmatpush1.msra.mxu0 0.0
    %6494 = vmatprep.subr.mxu0 0.0
    %6495 = vmatpush1.msra.mxu0 0.0
    %6496 = vmatprep.subr.mxu0 0.0
    %6497 = vmatpush1.msra.mxu0 0.0
    %6498 = vmatprep.subr.mxu0 0.0
    %6499 = vmatpush1.msra.mxu0 0.0
    %6500 = vmatprep.subr.mxu0 0.0
    %6501 = vmatpush1.msra.mxu0 0.0
    %6502 = vmatprep.subr.mxu0 0.0
    %6503 = vmatpush1.msra.mxu0 0.0
    %6504 = vmatprep.subr.mxu0 0.0
    %6505 = vmatpush1.msra.mxu0 0.0
    %6506 = vmatprep.subr.mxu0 0.0
    %6507 = vmatpush1.msra.mxu0 0.0
    %6508 = vmatprep.subr.mxu0 0.0
    %6509 = vmatpush1.msra.mxu0 0.0
    %6510 = vmatprep.subr.mxu0 0.0
    %6511 = vmatpush1.msra.mxu0 0.0
    %6512 = vmatprep.subr.mxu0 0.0
    %6513 = vmatpush1.msra.mxu0 0.0
    %6514 = vmatprep.subr.mxu0 0.0
    %6515 = vmatpush1.msra.mxu0 0.0
    %6516 = vmatprep.subr.mxu0 0.0
    %6517 = vmatpush1.msra.mxu0 0.0
    %6518 = vmatprep.subr.mxu0 0.0
    %6519 = vmatpush1.msra.mxu0 0.0
    %6520 = vmatprep.subr.mxu0 0.0
    %6521 = vmatpush1.msra.mxu0 0.0
    %6522 = vmatprep.subr.mxu0 0.0
    %6523 = vmatpush1.msra.mxu0 0.0
    %6524 = vmatprep.mubr.f32.mxu0 0.0
    %6525 = vmatmul.mubr.f32.gmra.mrb[0].mxu0 %v6455
    %v6526 = vpop.f32.mrb[0].mxu0
    %v6527 = vadd.f32 0.0, %v6526
    %v6528 = vpop.f32.mrb[0].mxu0
    %6529 = vmatprep.mubr.f32.mxu0 0.0
    %6530 = vmatmul.mubr.f32.gmra.mrb[0].mxu0 %v6458
    %v6531 = vpop.f32.mrb[0].mxu0
    %v6532 = vadd.f32 0.0, %v6531
    %v6533 = vpop.f32.mrb[0].mxu0
    %6534 = vdwg.mxu0
    %v6536 = vsel %vm5370, %v5548, 0
    %v6539 = vsel %vm5370, %v5550, 0
    %6541 = vmatprep.subr.mxu0 0.0
    %6542 = vmatpush1.msra.mxu0 %v3837
    %6543 = vmatprep.subr.mxu0 0.0
    %6544 = vmatpush1.msra.mxu0 %v3973
    %6545 = vmatprep.subr.mxu0 0.0
    %6546 = vmatpush1.msra.mxu0 0.0
    %6547 = vmatprep.subr.mxu0 0.0
    %6548 = vmatpush1.msra.mxu0 0.0
    %6549 = vmatprep.subr.mxu0 0.0
    %6550 = vmatpush1.msra.mxu0 0.0
    %6551 = vmatprep.subr.mxu0 0.0
    %6552 = vmatpush1.msra.mxu0 0.0
    %6553 = vmatprep.subr.mxu0 0.0
    %6554 = vmatpush1.msra.mxu0 0.0
    %6555 = vmatprep.subr.mxu0 0.0
    %6556 = vmatpush1.msra.mxu0 0.0
    %6557 = vmatprep.subr.mxu0 0.0
    %6558 = vmatpush1.msra.mxu0 0.0
    %6559 = vmatprep.subr.mxu0 0.0
    %6560 = vmatpush1.msra.mxu0 0.0
    %6561 = vmatprep.subr.mxu0 0.0
    %6562 = vmatpush1.msra.mxu0 0.0
    %6563 = vmatprep.subr.mxu0 0.0
    %6564 = vmatpush1.msra.mxu0 0.0
    %6565 = vmatprep.subr.mxu0 0.0
    %6566 = vmatpush1.msra.mxu0 0.0
    %6567 = vmatprep.subr.mxu0 0.0
    %6568 = vmatpush1.msra.mxu0 0.0
    %6569 = vmatprep.subr.mxu0 0.0
    %6570 = vmatpush1.msra.mxu0 0.0
    %6571 = vmatprep.subr.mxu0 0.0
    %6572 = vmatpush1.msra.mxu0 0.0
    %6573 = vmatprep.subr.mxu0 0.0
    %6574 = vmatpush1.msra.mxu0 0.0
    %6575 = vmatprep.subr.mxu0 0.0
    %6576 = vmatpush1.msra.mxu0 0.0
    %6577 = vmatprep.subr.mxu0 0.0
    %6578 = vmatpush1.msra.mxu0 0.0
    %6579 = vmatprep.subr.mxu0 0.0
    %6580 = vmatpush1.msra.mxu0 0.0
    %6581 = vmatprep.subr.mxu0 0.0
    %6582 = vmatpush1.msra.mxu0 0.0
    %6583 = vmatprep.subr.mxu0 0.0
    %6584 = vmatpush1.msra.mxu0 0.0
    %6585 = vmatprep.subr.mxu0 0.0
    %6586 = vmatpush1.msra.mxu0 0.0
    %6587 = vmatprep.subr.mxu0 0.0
    %6588 = vmatpush1.msra.mxu0 0.0
    %6589 = vmatprep.subr.mxu0 0.0
    %6590 = vmatpush1.msra.mxu0 0.0
    %6591 = vmatprep.subr.mxu0 0.0
    %6592 = vmatpush1.msra.mxu0 0.0
    %6593 = vmatprep.subr.mxu0 0.0
    %6594 = vmatpush1.msra.mxu0 0.0
    %6595 = vmatprep.subr.mxu0 0.0
    %6596 = vmatpush1.msra.mxu0 0.0
    %6597 = vmatprep.subr.mxu0 0.0
    %6598 = vmatpush1.msra.mxu0 0.0
    %6599 = vmatprep.subr.mxu0 0.0
    %6600 = vmatpush1.msra.mxu0 0.0
    %6601 = vmatprep.subr.mxu0 0.0
    %6602 = vmatpush1.msra.mxu0 0.0
    %6603 = vmatprep.subr.mxu0 0.0
    %6604 = vmatpush1.msra.mxu0 0.0
    %6605 = vmatprep.mubr.f32.mxu0 0.0
    %6606 = vmatmul.mubr.f32.gmra.mrb[0].mxu0 %v6536
    %v6607 = vpop.f32.mrb[0].mxu0
    %v6608 = vadd.f32 0.0, %v6607
    %v6609 = vpop.f32.mrb[0].mxu0
    %6610 = vmatprep.mubr.f32.mxu0 0.0
    %6611 = vmatmul.mubr.f32.gmra.mrb[0].mxu0 %v6539
    %v6612 = vpop.f32.mrb[0].mxu0
    %v6613 = vadd.f32 0.0, %v6612
    %v6614 = vpop.f32.mrb[0].mxu0
    %6615 = vdwg.mxu0
    %v6617 = vsel %vm5370, %v5552, 0
    %v6620 = vsel %vm5370, %v5554, 0
    %6622 = vmatprep.subr.mxu0 0.0
    %6623 = vmatpush1.msra.mxu0 %v3838
    %6624 = vmatprep.subr.mxu0 0.0
    %6625 = vmatpush1.msra.mxu0 %v3974
    %6626 = vmatprep.subr.mxu0 0.0
    %6627 = vmatpush1.msra.mxu0 0.0
    %6628 = vmatprep.subr.mxu0 0.0
    %6629 = vmatpush1.msra.mxu0 0.0
    %6630 = vmatprep.subr.mxu0 0.0
    %6631 = vmatpush1.msra.mxu0 0.0
    %6632 = vmatprep.subr.mxu0 0.0
    %6633 = vmatpush1.msra.mxu0 0.0
    %6634 = vmatprep.subr.mxu0 0.0
    %6635 = vmatpush1.msra.mxu0 0.0
    %6636 = vmatprep.subr.mxu0 0.0
    %6637 = vmatpush1.msra.mxu0 0.0
    %6638 = vmatprep.subr.mxu0 0.0
    %6639 = vmatpush1.msra.mxu0 0.0
    %6640 = vmatprep.subr.mxu0 0.0
    %6641 = vmatpush1.msra.mxu0 0.0
    %6642 = vmatprep.subr.mxu0 0.0
    %6643 = vmatpush1.msra.mxu0 0.0
    %6644 = vmatprep.subr.mxu0 0.0
    %6645 = vmatpush1.msra.mxu0 0.0
    %6646 = vmatprep.subr.mxu0 0.0
    %6647 = vmatpush1.msra.mxu0 0.0
    %6648 = vmatprep.subr.mxu0 0.0
    %6649 = vmatpush1.msra.mxu0 0.0
    %6650 = vmatprep.subr.mxu0 0.0
    %6651 = vmatpush1.msra.mxu0 0.0
    %6652 = vmatprep.subr.mxu0 0.0
    %6653 = vmatpush1.msra.mxu0 0.0
    %6654 = vmatprep.subr.mxu0 0.0
    %6655 = vmatpush1.msra.mxu0 0.0
    %6656 = vmatprep.subr.mxu0 0.0
    %6657 = vmatpush1.msra.mxu0 0.0
    %6658 = vmatprep.subr.mxu0 0.0
    %6659 = vmatpush1.msra.mxu0 0.0
    %6660 = vmatprep.subr.mxu0 0.0
    %6661 = vmatpush1.msra.mxu0 0.0
    %6662 = vmatprep.subr.mxu0 0.0
    %6663 = vmatpush1.msra.mxu0 0.0
    %6664 = vmatprep.subr.mxu0 0.0
    %6665 = vmatpush1.msra.mxu0 0.0
    %6666 = vmatprep.subr.mxu0 0.0
    %6667 = vmatpush1.msra.mxu0 0.0
    %6668 = vmatprep.subr.mxu0 0.0
    %6669 = vmatpush1.msra.mxu0 0.0
    %6670 = vmatprep.subr.mxu0 0.0
    %6671 = vmatpush1.msra.mxu0 0.0
    %6672 = vmatprep.subr.mxu0 0.0
    %6673 = vmatpush1.msra.mxu0 0.0
    %6674 = vmatprep.subr.mxu0 0.0
    %6675 = vmatpush1.msra.mxu0 0.0
    %6676 = vmatprep.subr.mxu0 0.0
    %6677 = vmatpush1.msra.mxu0 0.0
    %6678 = vmatprep.subr.mxu0 0.0
    %6679 = vmatpush1.msra.mxu0 0.0
    %6680 = vmatprep.subr.mxu0 0.0
    %6681 = vmatpush1.msra.mxu0 0.0
    %6682 = vmatprep.subr.mxu0 0.0
    %6683 = vmatpush1.msra.mxu0 0.0
    %6684 = vmatprep.subr.mxu0 0.0
    %6685 = vmatpush1.msra.mxu0 0.0
    %6686 = vmatprep.mubr.f32.mxu0 0.0
    %6687 = vmatmul.mubr.f32.gmra.mrb[0].mxu0 %v6617
    %v6688 = vpop.f32.mrb[0].mxu0
    %v6689 = vadd.f32 0.0, %v6688
    %v6690 = vpop.f32.mrb[0].mxu0
    %6691 = vmatprep.mubr.f32.mxu0 0.0
    %6692 = vmatmul.mubr.f32.gmra.mrb[0].mxu0 %v6620
    %v6693 = vpop.f32.mrb[0].mxu0
    %v6694 = vadd.f32 0.0, %v6693
    %v6695 = vpop.f32.mrb[0].mxu0
    %6696 = vdwg.mxu0
    %v6698 = vsel %vm5370, %v5556, 0
    %v6701 = vsel %vm5370, %v5558, 0
    %6703 = vmatprep.subr.mxu0 0.0
    %6704 = vmatpush1.msra.mxu0 %v3839
    %6705 = vmatprep.subr.mxu0 0.0
    %6706 = vmatpush1.msra.mxu0 %v3975
    %6707 = vmatprep.subr.mxu0 0.0
    %6708 = vmatpush1.msra.mxu0 0.0
    %6709 = vmatprep.subr.mxu0 0.0
    %6710 = vmatpush1.msra.mxu0 0.0
    %6711 = vmatprep.subr.mxu0 0.0
    %6712 = vmatpush1.msra.mxu0 0.0
    %6713 = vmatprep.subr.mxu0 0.0
    %6714 = vmatpush1.msra.mxu0 0.0
    %6715 = vmatprep.subr.mxu0 0.0
    %6716 = vmatpush1.msra.mxu0 0.0
    %6717 = vmatprep.subr.mxu0 0.0
    %6718 = vmatpush1.msra.mxu0 0.0
    %6719 = vmatprep.subr.mxu0 0.0
    %6720 = vmatpush1.msra.mxu0 0.0
    %6721 = vmatprep.subr.mxu0 0.0
    %6722 = vmatpush1.msra.mxu0 0.0
    %6723 = vmatprep.subr.mxu0 0.0
    %6724 = vmatpush1.msra.mxu0 0.0
    %6725 = vmatprep.subr.mxu0 0.0
    %6726 = vmatpush1.msra.mxu0 0.0
    %6727 = vmatprep.subr.mxu0 0.0
    %6728 = vmatpush1.msra.mxu0 0.0
    %6729 = vmatprep.subr.mxu0 0.0
    %6730 = vmatpush1.msra.mxu0 0.0
    %6731 = vmatprep.subr.mxu0 0.0
    %6732 = vmatpush1.msra.mxu0 0.0
    %6733 = vmatprep.subr.mxu0 0.0
    %6734 = vmatpush1.msra.mxu0 0.0
    %6735 = vmatprep.subr.mxu0 0.0
    %6736 = vmatpush1.msra.mxu0 0.0
    %6737 = vmatprep.subr.mxu0 0.0
    %6738 = vmatpush1.msra.mxu0 0.0
    %6739 = vmatprep.subr.mxu0 0.0
    %6740 = vmatpush1.msra.mxu0 0.0
    %6741 = vmatprep.subr.mxu0 0.0
    %6742 = vmatpush1.msra.mxu0 0.0
    %6743 = vmatprep.subr.mxu0 0.0
    %6744 = vmatpush1.msra.mxu0 0.0
    %6745 = vmatprep.subr.mxu0 0.0
    %6746 = vmatpush1.msra.mxu0 0.0
    %6747 = vmatprep.subr.mxu0 0.0
    %6748 = vmatpush1.msra.mxu0 0.0
    %6749 = vmatprep.subr.mxu0 0.0
    %6750 = vmatpush1.msra.mxu0 0.0
    %6751 = vmatprep.subr.mxu0 0.0
    %6752 = vmatpush1.msra.mxu0 0.0
    %6753 = vmatprep.subr.mxu0 0.0
    %6754 = vmatpush1.msra.mxu0 0.0
    %6755 = vmatprep.subr.mxu0 0.0
    %6756 = vmatpush1.msra.mxu0 0.0
    %6757 = vmatprep.subr.mxu0 0.0
    %6758 = vmatpush1.msra.mxu0 0.0
    %6759 = vmatprep.subr.mxu0 0.0
    %6760 = vmatpush1.msra.mxu0 0.0
    %6761 = vmatprep.subr.mxu0 0.0
    %6762 = vmatpush1.msra.mxu0 0.0
    %6763 = vmatprep.subr.mxu0 0.0
    %6764 = vmatpush1.msra.mxu0 0.0
    %6765 = vmatprep.subr.mxu0 0.0
    %6766 = vmatpush1.msra.mxu0 0.0
    %6767 = vmatprep.mubr.f32.mxu0 0.0
    %6768 = vmatmul.mubr.f32.gmra.mrb[0].mxu0 %v6698
    %v6769 = vpop.f32.mrb[0].mxu0
    %v6770 = vadd.f32 0.0, %v6769
    %v6771 = vpop.f32.mrb[0].mxu0
    %6772 = vmatprep.mubr.f32.mxu0 0.0
    %6773 = vmatmul.mubr.f32.gmra.mrb[0].mxu0 %v6701
    %v6774 = vpop.f32.mrb[0].mxu0
    %v6775 = vadd.f32 0.0, %v6774
    %v6776 = vpop.f32.mrb[0].mxu0
    %6777 = vdwg.mxu0
    %v6779 = vsel %vm5370, %v5560, 0
    %v6782 = vsel %vm5370, %v5562, 0
    %6784 = vmatprep.subr.mxu0 0.0
    %6785 = vmatpush1.msra.mxu0 %v3840
    %6786 = vmatprep.subr.mxu0 0.0
    %6787 = vmatpush1.msra.mxu0 %v3976
    %6788 = vmatprep.subr.mxu0 0.0
    %6789 = vmatpush1.msra.mxu0 0.0
    %6790 = vmatprep.subr.mxu0 0.0
    %6791 = vmatpush1.msra.mxu0 0.0
    %6792 = vmatprep.subr.mxu0 0.0
    %6793 = vmatpush1.msra.mxu0 0.0
    %6794 = vmatprep.subr.mxu0 0.0
    %6795 = vmatpush1.msra.mxu0 0.0
    %6796 = vmatprep.subr.mxu0 0.0
    %6797 = vmatpush1.msra.mxu0 0.0
    %6798 = vmatprep.subr.mxu0 0.0
    %6799 = vmatpush1.msra.mxu0 0.0
    %6800 = vmatprep.subr.mxu0 0.0
    %6801 = vmatpush1.msra.mxu0 0.0
    %6802 = vmatprep.subr.mxu0 0.0
    %6803 = vmatpush1.msra.mxu0 0.0
    %6804 = vmatprep.subr.mxu0 0.0
    %6805 = vmatpush1.msra.mxu0 0.0
    %6806 = vmatprep.subr.mxu0 0.0
    %6807 = vmatpush1.msra.mxu0 0.0
    %6808 = vmatprep.subr.mxu0 0.0
    %6809 = vmatpush1.msra.mxu0 0.0
    %6810 = vmatprep.subr.mxu0 0.0
    %6811 = vmatpush1.msra.mxu0 0.0
    %6812 = vmatprep.subr.mxu0 0.0
    %6813 = vmatpush1.msra.mxu0 0.0
    %6814 = vmatprep.subr.mxu0 0.0
    %6815 = vmatpush1.msra.mxu0 0.0
    %6816 = vmatprep.subr.mxu0 0.0
    %6817 = vmatpush1.msra.mxu0 0.0
    %6818 = vmatprep.subr.mxu0 0.0
    %6819 = vmatpush1.msra.mxu0 0.0
    %6820 = vmatprep.subr.mxu0 0.0
    %6821 = vmatpush1.msra.mxu0 0.0
    %6822 = vmatprep.subr.mxu0 0.0
    %6823 = vmatpush1.msra.mxu0 0.0
    %6824 = vmatprep.subr.mxu0 0.0
    %6825 = vmatpush1.msra.mxu0 0.0
    %6826 = vmatprep.subr.mxu0 0.0
    %6827 = vmatpush1.msra.mxu0 0.0
    %6828 = vmatprep.subr.mxu0 0.0
    %6829 = vmatpush1.msra.mxu0 0.0
    %6830 = vmatprep.subr.mxu0 0.0
    %6831 = vmatpush1.msra.mxu0 0.0
    %6832 = vmatprep.subr.mxu0 0.0
    %6833 = vmatpush1.msra.mxu0 0.0
    %6834 = vmatprep.subr.mxu0 0.0
    %6835 = vmatpush1.msra.mxu0 0.0
    %6836 = vmatprep.subr.mxu0 0.0
    %6837 = vmatpush1.msra.mxu0 0.0
    %6838 = vmatprep.subr.mxu0 0.0
    %6839 = vmatpush1.msra.mxu0 0.0
    %6840 = vmatprep.subr.mxu0 0.0
    %6841 = vmatpush1.msra.mxu0 0.0
    %6842 = vmatprep.subr.mxu0 0.0
    %6843 = vmatpush1.msra.mxu0 0.0
    %6844 = vmatprep.subr.mxu0 0.0
    %6845 = vmatpush1.msra.mxu0 0.0
    %6846 = vmatprep.subr.mxu0 0.0
    %6847 = vmatpush1.msra.mxu0 0.0
    %6848 = vmatprep.mubr.f32.mxu0 0.0
    %6849 = vmatmul.mubr.f32.gmra.mrb[0].mxu0 %v6779
    %v6850 = vpop.f32.mrb[0].mxu0
    %v6851 = vadd.f32 0.0, %v6850
    %v6852 = vpop.f32.mrb[0].mxu0
    %6853 = vmatprep.mubr.f32.mxu0 0.0
    %6854 = vmatmul.mubr.f32.gmra.mrb[0].mxu0 %v6782
    %v6855 = vpop.f32.mrb[0].mxu0
    %v6856 = vadd.f32 0.0, %v6855
    %v6857 = vpop.f32.mrb[0].mxu0
    %6858 = vdwg.mxu0
    %v6859 = vsel %vm5370, %v5500, 0.0
    %6860 = vadd.xlane.f32.xlu0 %v6859
    %v6861 = vpop.xlane.xlu0 %6860
    %v6862 = vsel %vm5370, %v5502, 0.0
    %6863 = vadd.xlane.f32.xlu0 %v6862
    %v6864 = vpop.xlane.xlu0 %6863
    %v6865 = vsel %vm5370, %v5504, 0.0
    %6866 = vadd.xlane.f32.xlu0 %v6865
    %v6867 = vpop.xlane.xlu0 %6866
    %v6868 = vsel %vm5370, %v5506, 0.0
    %6869 = vadd.xlane.f32.xlu0 %v6868
    %v6870 = vpop.xlane.xlu0 %6869
    %v6871 = vsel %vm5370, %v5508, 0.0
    %6872 = vadd.xlane.f32.xlu0 %v6871
    %v6873 = vpop.xlane.xlu0 %6872
    %v6874 = vsel %vm5370, %v5510, 0.0
    %6875 = vadd.xlane.f32.xlu0 %v6874
    %v6876 = vpop.xlane.xlu0 %6875
    %v6877 = vsel %vm5370, %v5512, 0.0
    %6878 = vadd.xlane.f32.xlu0 %v6877
    %v6879 = vpop.xlane.xlu0 %6878
    %v6880 = vsel %vm5370, %v5514, 0.0
    %6881 = vadd.xlane.f32.xlu0 %v6880
    %v6882 = vpop.xlane.xlu0 %6881
    %v6883 = vsel %vm5370, %v5516, 0.0
    %6884 = vadd.xlane.f32.xlu0 %v6883
    %v6885 = vpop.xlane.xlu0 %6884
    %v6886 = vsel %vm5370, %v5518, 0.0
    %6887 = vadd.xlane.f32.xlu0 %v6886
    %v6888 = vpop.xlane.xlu0 %6887
    %v6889 = vsel %vm5370, %v5520, 0.0
    %6890 = vadd.xlane.f32.xlu0 %v6889
    %v6891 = vpop.xlane.xlu0 %6890
    %v6892 = vsel %vm5370, %v5522, 0.0
    %6893 = vadd.xlane.f32.xlu0 %v6892
    %v6894 = vpop.xlane.xlu0 %6893
    %v6895 = vsel %vm5370, %v5524, 0.0
    %6896 = vadd.xlane.f32.xlu0 %v6895
    %v6897 = vpop.xlane.xlu0 %6896
    %v6898 = vsel %vm5370, %v5526, 0.0
    %6899 = vadd.xlane.f32.xlu0 %v6898
    %v6900 = vpop.xlane.xlu0 %6899
    %v6901 = vsel %vm5370, %v5528, 0.0
    %6902 = vadd.xlane.f32.xlu0 %v6901
    %v6903 = vpop.xlane.xlu0 %6902
    %v6904 = vsel %vm5370, %v5530, 0.0
    %6905 = vadd.xlane.f32.xlu0 %v6904
    %v6906 = vpop.xlane.xlu0 %6905
    %v6907 = vsel %vm5370, %v5532, 0.0
    %6908 = vadd.xlane.f32.xlu0 %v6907
    %v6909 = vpop.xlane.xlu0 %6908
    %v6910 = vsel %vm5370, %v5534, 0.0
    %6911 = vadd.xlane.f32.xlu0 %v6910
    %v6912 = vpop.xlane.xlu0 %6911
    %v6913 = vsel %vm5370, %v5536, 0.0
    %6914 = vadd.xlane.f32.xlu0 %v6913
    %v6915 = vpop.xlane.xlu0 %6914
    %v6916 = vsel %vm5370, %v5538, 0.0
    %6917 = vadd.xlane.f32.xlu0 %v6916
    %v6918 = vpop.xlane.xlu0 %6917
    %v6919 = vsel %vm5370, %v5540, 0.0
    %6920 = vadd.xlane.f32.xlu0 %v6919
    %v6921 = vpop.xlane.xlu0 %6920
    %v6922 = vsel %vm5370, %v5542, 0.0
    %6923 = vadd.xlane.f32.xlu0 %v6922
    %v6924 = vpop.xlane.xlu0 %6923
    %v6925 = vsel %vm5370, %v5544, 0.0
    %6926 = vadd.xlane.f32.xlu0 %v6925
    %v6927 = vpop.xlane.xlu0 %6926
    %v6928 = vsel %vm5370, %v5546, 0.0
    %6929 = vadd.xlane.f32.xlu0 %v6928
    %v6930 = vpop.xlane.xlu0 %6929
    %v6931 = vsel %vm5370, %v5548, 0.0
    %6932 = vadd.xlane.f32.xlu0 %v6931
    %v6933 = vpop.xlane.xlu0 %6932
    %v6934 = vsel %vm5370, %v5550, 0.0
    %6935 = vadd.xlane.f32.xlu0 %v6934
    %v6936 = vpop.xlane.xlu0 %6935
    %v6937 = vsel %vm5370, %v5552, 0.0
    %6938 = vadd.xlane.f32.xlu0 %v6937
    %v6939 = vpop.xlane.xlu0 %6938
    %v6940 = vsel %vm5370, %v5554, 0.0
    %6941 = vadd.xlane.f32.xlu0 %v6940
    %v6942 = vpop.xlane.xlu0 %6941
    %v6943 = vsel %vm5370, %v5556, 0.0
    %6944 = vadd.xlane.f32.xlu0 %v6943
    %v6945 = vpop.xlane.xlu0 %6944
    %v6946 = vsel %vm5370, %v5558, 0.0
    %6947 = vadd.xlane.f32.xlu0 %v6946
    %v6948 = vpop.xlane.xlu0 %6947
    %v6949 = vsel %vm5370, %v5560, 0.0
    %6950 = vadd.xlane.f32.xlu0 %v6949
    %v6951 = vpop.xlane.xlu0 %6950
    %v6952 = vsel %vm5370, %v5562, 0.0
    %6953 = vadd.xlane.f32.xlu0 %v6952
    %v6954 = vpop.xlane.xlu0 %6953
    %v6955 = vrcp.pop %v6861
    %v6956 = vrcp.pop %v6864
    %v6957 = vrcp.pop %v6867
    %v6958 = vrcp.pop %v6870
    %v6959 = vrcp.pop %v6873
    %v6960 = vrcp.pop %v6876
    %v6961 = vrcp.pop %v6879
    %v6962 = vrcp.pop %v6882
    %v6963 = vrcp.pop %v6885
    %v6964 = vrcp.pop %v6888
    %v6965 = vrcp.pop %v6891
    %v6966 = vrcp.pop %v6894
    %v6967 = vrcp.pop %v6897
    %v6968 = vrcp.pop %v6900
    %v6969 = vrcp.pop %v6903
    %v6970 = vrcp.pop %v6906
    %v6971 = vrcp.pop %v6909
    %v6972 = vrcp.pop %v6912
    %v6973 = vrcp.pop %v6915
    %v6974 = vrcp.pop %v6918
    %v6975 = vrcp.pop %v6921
    %v6976 = vrcp.pop %v6924
    %v6977 = vrcp.pop %v6927
    %v6978 = vrcp.pop %v6930
    %v6979 = vrcp.pop %v6933
    %v6980 = vrcp.pop %v6936
    %v6981 = vrcp.pop %v6939
    %v6982 = vrcp.pop %v6942
    %v6983 = vrcp.pop %v6945
    %v6984 = vrcp.pop %v6948
    %v6985 = vrcp.pop %v6951
    %v6986 = vrcp.pop %v6954
    %v6987 = vmul.f32 %v5636, %v6955
    %v6988 = vmul.f32 %v5641, %v6956
    %v6989 = vmul.f32 %v5717, %v6957
    %v6990 = vmul.f32 %v5722, %v6958
    %v6991 = vmul.f32 %v5798, %v6959
    %v6992 = vmul.f32 %v5803, %v6960
    %v6993 = vmul.f32 %v5879, %v6961
    %v6994 = vmul.f32 %v5884, %v6962
    %v6995 = vmul.f32 %v5960, %v6963
    %v6996 = vmul.f32 %v5965, %v6964
    %v6997 = vmul.f32 %v6041, %v6965
    %v6998 = vmul.f32 %v6046, %v6966
    %v6999 = vmul.f32 %v6122, %v6967
    %v7000 = vmul.f32 %v6127, %v6968
    %v7001 = vmul.f32 %v6203, %v6969
    %v7002 = vmul.f32 %v6208, %v6970
    %v7003 = vmul.f32 %v6284, %v6971
    %v7004 = vmul.f32 %v6289, %v6972
    %v7005 = vmul.f32 %v6365, %v6973
    %v7006 = vmul.f32 %v6370, %v6974
    %v7007 = vmul.f32 %v6446, %v6975
    %v7008 = vmul.f32 %v6451, %v6976
    %v7009 = vmul.f32 %v6527, %v6977
    %v7010 = vmul.f32 %v6532, %v6978
    %v7011 = vmul.f32 %v6608, %v6979
    %v7012 = vmul.f32 %v6613, %v6980
    %v7013 = vmul.f32 %v6689, %v6981
    %v7014 = vmul.f32 %v6694, %v6982
    %v7015 = vmul.f32 %v6770, %v6983
    %v7016 = vmul.f32 %v6775, %v6984
    %v7017 = vmul.f32 %v6851, %v6985
    %v7018 = vmul.f32 %v6856, %v6986
    %v7019 = vcombine.low %v6987, %v6991
    %v7020 = vcombine.high %v6987, %v6991
    %v7022 = vunpack.c.l.s4 1983009808
    %v7023 = vunpack.c.0.s8 %v7022
    %v7024 = vlaneseq
    %v7025 = vshrl.u32 %v7024, 7
    %v7026 = vsub.s32 %v7023, %v7025
    %v7027 = vrot.slane %v7019, %v7026
    %v7029 = vunpack.c.l.s4 1983009808
    %v7030 = vunpack.c.0.s8 %v7029
    %v7031 = vlaneseq
    %v7032 = vshrl.u32 %v7031, 7
    %v7033 = vsub.s32 %v7030, %v7032
    %v7034 = vrot.slane %v7020, %v7033
    %v7035 = vcombine.low %v6989, %v6993
    %v7036 = vcombine.high %v6989, %v6993
    %v7038 = vunpack.c.l.s4 1983009808
    %v7039 = vunpack.c.0.s8 %v7038
    %v7040 = vlaneseq
    %v7041 = vshrl.u32 %v7040, 7
    %v7042 = vsub.s32 %v7039, %v7041
    %v7043 = vrot.slane %v7035, %v7042
    %v7045 = vunpack.c.l.s4 1983009808
    %v7046 = vunpack.c.0.s8 %v7045
    %v7047 = vlaneseq
    %v7048 = vshrl.u32 %v7047, 7
    %v7049 = vsub.s32 %v7046, %v7048
    %v7050 = vrot.slane %v7036, %v7049
    %v7051 = vcombine.low %v6995, %v6999
    %v7052 = vcombine.high %v6995, %v6999
    %v7054 = vunpack.c.l.s4 1983009808
    %v7055 = vunpack.c.0.s8 %v7054
    %v7056 = vlaneseq
    %v7057 = vshrl.u32 %v7056, 7
    %v7058 = vsub.s32 %v7055, %v7057
    %v7059 = vrot.slane %v7051, %v7058
    %v7061 = vunpack.c.l.s4 1983009808
    %v7062 = vunpack.c.0.s8 %v7061
    %v7063 = vlaneseq
    %v7064 = vshrl.u32 %v7063, 7
    %v7065 = vsub.s32 %v7062, %v7064
    %v7066 = vrot.slane %v7052, %v7065
    %v7067 = vcombine.low %v6997, %v7001
    %v7068 = vcombine.high %v6997, %v7001
    %v7070 = vunpack.c.l.s4 1983009808
    %v7071 = vunpack.c.0.s8 %v7070
    %v7072 = vlaneseq
    %v7073 = vshrl.u32 %v7072, 7
    %v7074 = vsub.s32 %v7071, %v7073
    %v7075 = vrot.slane %v7067, %v7074
    %v7077 = vunpack.c.l.s4 1983009808
    %v7078 = vunpack.c.0.s8 %v7077
    %v7079 = vlaneseq
    %v7080 = vshrl.u32 %v7079, 7
    %v7081 = vsub.s32 %v7078, %v7080
    %v7082 = vrot.slane %v7068, %v7081
    %v7083 = vcombine.low %v7027, %v7043
    %v7084 = vcombine.high %v7027, %v7043
    %v7086 = vunpack.c.l.s4 1934713408
    %v7087 = vunpack.c.0.s8 %v7086
    %v7088 = vlaneseq
    %v7089 = vshrl.u32 %v7088, 7
    %v7090 = vsub.s32 %v7087, %v7089
    %v7091 = vrot.slane %v7083, %v7090
    %v7093 = vunpack.c.l.s4 1934713408
    %v7094 = vunpack.c.0.s8 %v7093
    %v7095 = vlaneseq
    %v7096 = vshrl.u32 %v7095, 7
    %v7097 = vsub.s32 %v7094, %v7096
    %v7098 = vrot.slane %v7084, %v7097
    %v7099 = vcombine.low %v7034, %v7050
    %v7100 = vcombine.high %v7034, %v7050
    %v7102 = vunpack.c.l.s4 1934713408
    %v7103 = vunpack.c.0.s8 %v7102
    %v7104 = vlaneseq
    %v7105 = vshrl.u32 %v7104, 7
    %v7106 = vsub.s32 %v7103, %v7105
    %v7107 = vrot.slane %v7099, %v7106
    %v7109 = vunpack.c.l.s4 1934713408
    %v7110 = vunpack.c.0.s8 %v7109
    %v7111 = vlaneseq
    %v7112 = vshrl.u32 %v7111, 7
    %v7113 = vsub.s32 %v7110, %v7112
    %v7114 = vrot.slane %v7100, %v7113
    %v7115 = vcombine.low %v7059, %v7075
    %v7116 = vcombine.high %v7059, %v7075
    %v7118 = vunpack.c.l.s4 1934713408
    %v7119 = vunpack.c.0.s8 %v7118
    %v7120 = vlaneseq
    %v7121 = vshrl.u32 %v7120, 7
    %v7122 = vsub.s32 %v7119, %v7121
    %v7123 = vrot.slane %v7115, %v7122
    %v7125 = vunpack.c.l.s4 1934713408
    %v7126 = vunpack.c.0.s8 %v7125
    %v7127 = vlaneseq
    %v7128 = vshrl.u32 %v7127, 7
    %v7129 = vsub.s32 %v7126, %v7128
    %v7130 = vrot.slane %v7116, %v7129
    %v7131 = vcombine.low %v7066, %v7082
    %v7132 = vcombine.high %v7066, %v7082
    %v7134 = vunpack.c.l.s4 1934713408
    %v7135 = vunpack.c.0.s8 %v7134
    %v7136 = vlaneseq
    %v7137 = vshrl.u32 %v7136, 7
    %v7138 = vsub.s32 %v7135, %v7137
    %v7139 = vrot.slane %v7131, %v7138
    %v7141 = vunpack.c.l.s4 1934713408
    %v7142 = vunpack.c.0.s8 %v7141
    %v7143 = vlaneseq
    %v7144 = vshrl.u32 %v7143, 7
    %v7145 = vsub.s32 %v7142, %v7144
    %v7146 = vrot.slane %v7132, %v7145
    %v7147 = vcombine.low %v7091, %v7123
    %v7148 = vcombine.high %v7091, %v7123
    %v7149 = vcombine.low %v7098, %v7130
    %v7150 = vcombine.high %v7098, %v7130
    %v7151 = vcombine.low %v7107, %v7139
    %v7152 = vcombine.high %v7107, %v7139
    %v7153 = vcombine.low %v7114, %v7146
    %v7154 = vcombine.high %v7114, %v7146
    %v7155 = vcombine.low %v6988, %v6992
    %v7156 = vcombine.high %v6988, %v6992
    %v7158 = vunpack.c.l.s4 1983009808
    %v7159 = vunpack.c.0.s8 %v7158
    %v7160 = vlaneseq
    %v7161 = vshrl.u32 %v7160, 7
    %v7162 = vsub.s32 %v7159, %v7161
    %v7163 = vrot.slane %v7155, %v7162
    %v7165 = vunpack.c.l.s4 1983009808
    %v7166 = vunpack.c.0.s8 %v7165
    %v7167 = vlaneseq
    %v7168 = vshrl.u32 %v7167, 7
    %v7169 = vsub.s32 %v7166, %v7168
    %v7170 = vrot.slane %v7156, %v7169
    %v7171 = vcombine.low %v6990, %v6994
    %v7172 = vcombine.high %v6990, %v6994
    %v7174 = vunpack.c.l.s4 1983009808
    %v7175 = vunpack.c.0.s8 %v7174
    %v7176 = vlaneseq
    %v7177 = vshrl.u32 %v7176, 7
    %v7178 = vsub.s32 %v7175, %v7177
    %v7179 = vrot.slane %v7171, %v7178
    %v7181 = vunpack.c.l.s4 1983009808
    %v7182 = vunpack.c.0.s8 %v7181
    %v7183 = vlaneseq
    %v7184 = vshrl.u32 %v7183, 7
    %v7185 = vsub.s32 %v7182, %v7184
    %v7186 = vrot.slane %v7172, %v7185
    %v7187 = vcombine.low %v6996, %v7000
    %v7188 = vcombine.high %v6996, %v7000
    %v7190 = vunpack.c.l.s4 1983009808
    %v7191 = vunpack.c.0.s8 %v7190
    %v7192 = vlaneseq
    %v7193 = vshrl.u32 %v7192, 7
    %v7194 = vsub.s32 %v7191, %v7193
    %v7195 = vrot.slane %v7187, %v7194
    %v7197 = vunpack.c.l.s4 1983009808
    %v7198 = vunpack.c.0.s8 %v7197
    %v7199 = vlaneseq
    %v7200 = vshrl.u32 %v7199, 7
    %v7201 = vsub.s32 %v7198, %v7200
    %v7202 = vrot.slane %v7188, %v7201
    %v7203 = vcombine.low %v6998, %v7002
    %v7204 = vcombine.high %v6998, %v7002
    %v7206 = vunpack.c.l.s4 1983009808
    %v7207 = vunpack.c.0.s8 %v7206
    %v7208 = vlaneseq
    %v7209 = vshrl.u32 %v7208, 7
    %v7210 = vsub.s32 %v7207, %v7209
    %v7211 = vrot.slane %v7203, %v7210
    %v7213 = vunpack.c.l.s4 1983009808
    %v7214 = vunpack.c.0.s8 %v7213
    %v7215 = vlaneseq
    %v7216 = vshrl.u32 %v7215, 7
    %v7217 = vsub.s32 %v7214, %v7216
    %v7218 = vrot.slane %v7204, %v7217
    %v7219 = vcombine.low %v7163, %v7179
    %v7220 = vcombine.high %v7163, %v7179
    %v7222 = vunpack.c.l.s4 1934713408
    %v7223 = vunpack.c.0.s8 %v7222
    %v7224 = vlaneseq
    %v7225 = vshrl.u32 %v7224, 7
    %v7226 = vsub.s32 %v7223, %v7225
    %v7227 = vrot.slane %v7219, %v7226
    %v7229 = vunpack.c.l.s4 1934713408
    %v7230 = vunpack.c.0.s8 %v7229
    %v7231 = vlaneseq
    %v7232 = vshrl.u32 %v7231, 7
    %v7233 = vsub.s32 %v7230, %v7232
    %v7234 = vrot.slane %v7220, %v7233
    %v7235 = vcombine.low %v7170, %v7186
    %v7236 = vcombine.high %v7170, %v7186
    %v7238 = vunpack.c.l.s4 1934713408
    %v7239 = vunpack.c.0.s8 %v7238
    %v7240 = vlaneseq
    %v7241 = vshrl.u32 %v7240, 7
    %v7242 = vsub.s32 %v7239, %v7241
    %v7243 = vrot.slane %v7235, %v7242
    %v7245 = vunpack.c.l.s4 1934713408
    %v7246 = vunpack.c.0.s8 %v7245
    %v7247 = vlaneseq
    %v7248 = vshrl.u32 %v7247, 7
    %v7249 = vsub.s32 %v7246, %v7248
    %v7250 = vrot.slane %v7236, %v7249
    %v7251 = vcombine.low %v7195, %v7211
    %v7252 = vcombine.high %v7195, %v7211
    %v7254 = vunpack.c.l.s4 1934713408
    %v7255 = vunpack.c.0.s8 %v7254
    %v7256 = vlaneseq
    %v7257 = vshrl.u32 %v7256, 7
    %v7258 = vsub.s32 %v7255, %v7257
    %v7259 = vrot.slane %v7251, %v7258
    %v7261 = vunpack.c.l.s4 1934713408
    %v7262 = vunpack.c.0.s8 %v7261
    %v7263 = vlaneseq
    %v7264 = vshrl.u32 %v7263, 7
    %v7265 = vsub.s32 %v7262, %v7264
    %v7266 = vrot.slane %v7252, %v7265
    %v7267 = vcombine.low %v7202, %v7218
    %v7268 = vcombine.high %v7202, %v7218
    %v7270 = vunpack.c.l.s4 1934713408
    %v7271 = vunpack.c.0.s8 %v7270
    %v7272 = vlaneseq
    %v7273 = vshrl.u32 %v7272, 7
    %v7274 = vsub.s32 %v7271, %v7273
    %v7275 = vrot.slane %v7267, %v7274
    %v7277 = vunpack.c.l.s4 1934713408
    %v7278 = vunpack.c.0.s8 %v7277
    %v7279 = vlaneseq
    %v7280 = vshrl.u32 %v7279, 7
    %v7281 = vsub.s32 %v7278, %v7280
    %v7282 = vrot.slane %v7268, %v7281
    %v7283 = vcombine.low %v7227, %v7259
    %v7284 = vcombine.high %v7227, %v7259
    %v7285 = vcombine.low %v7234, %v7266
    %v7286 = vcombine.high %v7234, %v7266
    %v7287 = vcombine.low %v7243, %v7275
    %v7288 = vcombine.high %v7243, %v7275
    %v7289 = vcombine.low %v7250, %v7282
    %v7290 = vcombine.high %v7250, %v7282
    %v7291 = vcombine.low %v7003, %v7007
    %v7292 = vcombine.high %v7003, %v7007
    %v7294 = vunpack.c.l.s4 1983009808
    %v7295 = vunpack.c.0.s8 %v7294
    %v7296 = vlaneseq
    %v7297 = vshrl.u32 %v7296, 7
    %v7298 = vsub.s32 %v7295, %v7297
    %v7299 = vrot.slane %v7291, %v7298
    %v7301 = vunpack.c.l.s4 1983009808
    %v7302 = vunpack.c.0.s8 %v7301
    %v7303 = vlaneseq
    %v7304 = vshrl.u32 %v7303, 7
    %v7305 = vsub.s32 %v7302, %v7304
    %v7306 = vrot.slane %v7292, %v7305
    %v7307 = vcombine.low %v7005, %v7009
    %v7308 = vcombine.high %v7005, %v7009
    %v7310 = vunpack.c.l.s4 1983009808
    %v7311 = vunpack.c.0.s8 %v7310
    %v7312 = vlaneseq
    %v7313 = vshrl.u32 %v7312, 7
    %v7314 = vsub.s32 %v7311, %v7313
    %v7315 = vrot.slane %v7307, %v7314
    %v7317 = vunpack.c.l.s4 1983009808
    %v7318 = vunpack.c.0.s8 %v7317
    %v7319 = vlaneseq
    %v7320 = vshrl.u32 %v7319, 7
    %v7321 = vsub.s32 %v7318, %v7320
    %v7322 = vrot.slane %v7308, %v7321
    %v7323 = vcombine.low %v7011, %v7015
    %v7324 = vcombine.high %v7011, %v7015
    %v7326 = vunpack.c.l.s4 1983009808
    %v7327 = vunpack.c.0.s8 %v7326
    %v7328 = vlaneseq
    %v7329 = vshrl.u32 %v7328, 7
    %v7330 = vsub.s32 %v7327, %v7329
    %v7331 = vrot.slane %v7323, %v7330
    %v7333 = vunpack.c.l.s4 1983009808
    %v7334 = vunpack.c.0.s8 %v7333
    %v7335 = vlaneseq
    %v7336 = vshrl.u32 %v7335, 7
    %v7337 = vsub.s32 %v7334, %v7336
    %v7338 = vrot.slane %v7324, %v7337
    %v7339 = vcombine.low %v7013, %v7017
    %v7340 = vcombine.high %v7013, %v7017
    %v7342 = vunpack.c.l.s4 1983009808
    %v7343 = vunpack.c.0.s8 %v7342
    %v7344 = vlaneseq
    %v7345 = vshrl.u32 %v7344, 7
    %v7346 = vsub.s32 %v7343, %v7345
    %v7347 = vrot.slane %v7339, %v7346
    %v7349 = vunpack.c.l.s4 1983009808
    %v7350 = vunpack.c.0.s8 %v7349
    %v7351 = vlaneseq
    %v7352 = vshrl.u32 %v7351, 7
    %v7353 = vsub.s32 %v7350, %v7352
    %v7354 = vrot.slane %v7340, %v7353
    %v7355 = vcombine.low %v7299, %v7315
    %v7356 = vcombine.high %v7299, %v7315
    %v7358 = vunpack.c.l.s4 1934713408
    %v7359 = vunpack.c.0.s8 %v7358
    %v7360 = vlaneseq
    %v7361 = vshrl.u32 %v7360, 7
    %v7362 = vsub.s32 %v7359, %v7361
    %v7363 = vrot.slane %v7355, %v7362
    %v7365 = vunpack.c.l.s4 1934713408
    %v7366 = vunpack.c.0.s8 %v7365
    %v7367 = vlaneseq
    %v7368 = vshrl.u32 %v7367, 7
    %v7369 = vsub.s32 %v7366, %v7368
    %v7370 = vrot.slane %v7356, %v7369
    %v7371 = vcombine.low %v7306, %v7322
    %v7372 = vcombine.high %v7306, %v7322
    %v7374 = vunpack.c.l.s4 1934713408
    %v7375 = vunpack.c.0.s8 %v7374
    %v7376 = vlaneseq
    %v7377 = vshrl.u32 %v7376, 7
    %v7378 = vsub.s32 %v7375, %v7377
    %v7379 = vrot.slane %v7371, %v7378
    %v7381 = vunpack.c.l.s4 1934713408
    %v7382 = vunpack.c.0.s8 %v7381
    %v7383 = vlaneseq
    %v7384 = vshrl.u32 %v7383, 7
    %v7385 = vsub.s32 %v7382, %v7384
    %v7386 = vrot.slane %v7372, %v7385
    %v7387 = vcombine.low %v7331, %v7347
    %v7388 = vcombine.high %v7331, %v7347
    %v7390 = vunpack.c.l.s4 1934713408
    %v7391 = vunpack.c.0.s8 %v7390
    %v7392 = vlaneseq
    %v7393 = vshrl.u32 %v7392, 7
    %v7394 = vsub.s32 %v7391, %v7393
    %v7395 = vrot.slane %v7387, %v7394
    %v7397 = vunpack.c.l.s4 1934713408
    %v7398 = vunpack.c.0.s8 %v7397
    %v7399 = vlaneseq
    %v7400 = vshrl.u32 %v7399, 7
    %v7401 = vsub.s32 %v7398, %v7400
    %v7402 = vrot.slane %v7388, %v7401
    %v7403 = vcombine.low %v7338, %v7354
    %v7404 = vcombine.high %v7338, %v7354
    %v7406 = vunpack.c.l.s4 1934713408
    %v7407 = vunpack.c.0.s8 %v7406
    %v7408 = vlaneseq
    %v7409 = vshrl.u32 %v7408, 7
    %v7410 = vsub.s32 %v7407, %v7409
    %v7411 = vrot.slane %v7403, %v7410
    %v7413 = vunpack.c.l.s4 1934713408
    %v7414 = vunpack.c.0.s8 %v7413
    %v7415 = vlaneseq
    %v7416 = vshrl.u32 %v7415, 7
    %v7417 = vsub.s32 %v7414, %v7416
    %v7418 = vrot.slane %v7404, %v7417
    %v7419 = vcombine.low %v7363, %v7395
    %v7420 = vcombine.high %v7363, %v7395
    %v7421 = vcombine.low %v7370, %v7402
    %v7422 = vcombine.high %v7370, %v7402
    %v7423 = vcombine.low %v7379, %v7411
    %v7424 = vcombine.high %v7379, %v7411
    %v7425 = vcombine.low %v7386, %v7418
    %v7426 = vcombine.high %v7386, %v7418
    %v7427 = vcombine.low %v7004, %v7008
    %v7428 = vcombine.high %v7004, %v7008
    %v7430 = vunpack.c.l.s4 1983009808
    %v7431 = vunpack.c.0.s8 %v7430
    %v7432 = vlaneseq
    %v7433 = vshrl.u32 %v7432, 7
    %v7434 = vsub.s32 %v7431, %v7433
    %v7435 = vrot.slane %v7427, %v7434
    %v7437 = vunpack.c.l.s4 1983009808
    %v7438 = vunpack.c.0.s8 %v7437
    %v7439 = vlaneseq
    %v7440 = vshrl.u32 %v7439, 7
    %v7441 = vsub.s32 %v7438, %v7440
    %v7442 = vrot.slane %v7428, %v7441
    %v7443 = vcombine.low %v7006, %v7010
    %v7444 = vcombine.high %v7006, %v7010
    %v7446 = vunpack.c.l.s4 1983009808
    %v7447 = vunpack.c.0.s8 %v7446
    %v7448 = vlaneseq
    %v7449 = vshrl.u32 %v7448, 7
    %v7450 = vsub.s32 %v7447, %v7449
    %v7451 = vrot.slane %v7443, %v7450
    %v7453 = vunpack.c.l.s4 1983009808
    %v7454 = vunpack.c.0.s8 %v7453
    %v7455 = vlaneseq
    %v7456 = vshrl.u32 %v7455, 7
    %v7457 = vsub.s32 %v7454, %v7456
    %v7458 = vrot.slane %v7444, %v7457
    %v7459 = vcombine.low %v7012, %v7016
    %v7460 = vcombine.high %v7012, %v7016
    %v7462 = vunpack.c.l.s4 1983009808
    %v7463 = vunpack.c.0.s8 %v7462
    %v7464 = vlaneseq
    %v7465 = vshrl.u32 %v7464, 7
    %v7466 = vsub.s32 %v7463, %v7465
    %v7467 = vrot.slane %v7459, %v7466
    %v7469 = vunpack.c.l.s4 1983009808
    %v7470 = vunpack.c.0.s8 %v7469
    %v7471 = vlaneseq
    %v7472 = vshrl.u32 %v7471, 7
    %v7473 = vsub.s32 %v7470, %v7472
    %v7474 = vrot.slane %v7460, %v7473
    %v7475 = vcombine.low %v7014, %v7018
    %v7476 = vcombine.high %v7014, %v7018
    %v7478 = vunpack.c.l.s4 1983009808
    %v7479 = vunpack.c.0.s8 %v7478
    %v7480 = vlaneseq
    %v7481 = vshrl.u32 %v7480, 7
    %v7482 = vsub.s32 %v7479, %v7481
    %v7483 = vrot.slane %v7475, %v7482
    %v7485 = vunpack.c.l.s4 1983009808
    %v7486 = vunpack.c.0.s8 %v7485
    %v7487 = vlaneseq
    %v7488 = vshrl.u32 %v7487, 7
    %v7489 = vsub.s32 %v7486, %v7488
    %v7490 = vrot.slane %v7476, %v7489
    %v7491 = vcombine.low %v7435, %v7451
    %v7492 = vcombine.high %v7435, %v7451
    %v7494 = vunpack.c.l.s4 1934713408
    %v7495 = vunpack.c.0.s8 %v7494
    %v7496 = vlaneseq
    %v7497 = vshrl.u32 %v7496, 7
    %v7498 = vsub.s32 %v7495, %v7497
    %v7499 = vrot.slane %v7491, %v7498
    %v7501 = vunpack.c.l.s4 1934713408
    %v7502 = vunpack.c.0.s8 %v7501
    %v7503 = vlaneseq
    %v7504 = vshrl.u32 %v7503, 7
    %v7505 = vsub.s32 %v7502, %v7504
    %v7506 = vrot.slane %v7492, %v7505
    %v7507 = vcombine.low %v7442, %v7458
    %v7508 = vcombine.high %v7442, %v7458
    %v7510 = vunpack.c.l.s4 1934713408
    %v7511 = vunpack.c.0.s8 %v7510
    %v7512 = vlaneseq
    %v7513 = vshrl.u32 %v7512, 7
    %v7514 = vsub.s32 %v7511, %v7513
    %v7515 = vrot.slane %v7507, %v7514
    %v7517 = vunpack.c.l.s4 1934713408
    %v7518 = vunpack.c.0.s8 %v7517
    %v7519 = vlaneseq
    %v7520 = vshrl.u32 %v7519, 7
    %v7521 = vsub.s32 %v7518, %v7520
    %v7522 = vrot.slane %v7508, %v7521
    %v7523 = vcombine.low %v7467, %v7483
    %v7524 = vcombine.high %v7467, %v7483
    %v7526 = vunpack.c.l.s4 1934713408
    %v7527 = vunpack.c.0.s8 %v7526
    %v7528 = vlaneseq
    %v7529 = vshrl.u32 %v7528, 7
    %v7530 = vsub.s32 %v7527, %v7529
    %v7531 = vrot.slane %v7523, %v7530
    %v7533 = vunpack.c.l.s4 1934713408
    %v7534 = vunpack.c.0.s8 %v7533
    %v7535 = vlaneseq
    %v7536 = vshrl.u32 %v7535, 7
    %v7537 = vsub.s32 %v7534, %v7536
    %v7538 = vrot.slane %v7524, %v7537
    %v7539 = vcombine.low %v7474, %v7490
    %v7540 = vcombine.high %v7474, %v7490
    %v7542 = vunpack.c.l.s4 1934713408
    %v7543 = vunpack.c.0.s8 %v7542
    %v7544 = vlaneseq
    %v7545 = vshrl.u32 %v7544, 7
    %v7546 = vsub.s32 %v7543, %v7545
    %v7547 = vrot.slane %v7539, %v7546
    %v7549 = vunpack.c.l.s4 1934713408
    %v7550 = vunpack.c.0.s8 %v7549
    %v7551 = vlaneseq
    %v7552 = vshrl.u32 %v7551, 7
    %v7553 = vsub.s32 %v7550, %v7552
    %v7554 = vrot.slane %v7540, %v7553
    %v7555 = vcombine.low %v7499, %v7531
    %v7556 = vcombine.high %v7499, %v7531
    %v7557 = vcombine.low %v7506, %v7538
    %v7558 = vcombine.high %v7506, %v7538
    %v7559 = vcombine.low %v7515, %v7547
    %v7560 = vcombine.high %v7515, %v7547
    %v7561 = vcombine.low %v7522, %v7554
    %v7562 = vcombine.high %v7522, %v7554
    %v7563 = vcombine.low %v7147, %v7149
    %v7564 = vcombine.high %v7147, %v7149
    %v7566 = vunpack.c.l.s4 1983009808
    %v7567 = vunpack.c.0.s8 %v7566
    %v7568 = vlaneseq
    %v7569 = vshrl.u32 %v7568, 7
    %v7570 = vsub.s32 %v7567, %v7569
    %v7571 = vrot.slane %v7563, %v7570
    %v7573 = vunpack.c.l.s4 1983009808
    %v7574 = vunpack.c.0.s8 %v7573
    %v7575 = vlaneseq
    %v7576 = vshrl.u32 %v7575, 7
    %v7577 = vsub.s32 %v7574, %v7576
    %v7578 = vrot.slane %v7564, %v7577
    %v7579 = vcombine.low %v7148, %v7150
    %v7580 = vcombine.high %v7148, %v7150
    %v7582 = vunpack.c.l.s4 1983009808
    %v7583 = vunpack.c.0.s8 %v7582
    %v7584 = vlaneseq
    %v7585 = vshrl.u32 %v7584, 7
    %v7586 = vsub.s32 %v7583, %v7585
    %v7587 = vrot.slane %v7579, %v7586
    %v7589 = vunpack.c.l.s4 1983009808
    %v7590 = vunpack.c.0.s8 %v7589
    %v7591 = vlaneseq
    %v7592 = vshrl.u32 %v7591, 7
    %v7593 = vsub.s32 %v7590, %v7592
    %v7594 = vrot.slane %v7580, %v7593
    %v7595 = vcombine.low %v7151, %v7153
    %v7596 = vcombine.high %v7151, %v7153
    %v7598 = vunpack.c.l.s4 1983009808
    %v7599 = vunpack.c.0.s8 %v7598
    %v7600 = vlaneseq
    %v7601 = vshrl.u32 %v7600, 7
    %v7602 = vsub.s32 %v7599, %v7601
    %v7603 = vrot.slane %v7595, %v7602
    %v7605 = vunpack.c.l.s4 1983009808
    %v7606 = vunpack.c.0.s8 %v7605
    %v7607 = vlaneseq
    %v7608 = vshrl.u32 %v7607, 7
    %v7609 = vsub.s32 %v7606, %v7608
    %v7610 = vrot.slane %v7596, %v7609
    %v7611 = vcombine.low %v7152, %v7154
    %v7612 = vcombine.high %v7152, %v7154
    %v7614 = vunpack.c.l.s4 1983009808
    %v7615 = vunpack.c.0.s8 %v7614
    %v7616 = vlaneseq
    %v7617 = vshrl.u32 %v7616, 7
    %v7618 = vsub.s32 %v7615, %v7617
    %v7619 = vrot.slane %v7611, %v7618
    %v7621 = vunpack.c.l.s4 1983009808
    %v7622 = vunpack.c.0.s8 %v7621
    %v7623 = vlaneseq
    %v7624 = vshrl.u32 %v7623, 7
    %v7625 = vsub.s32 %v7622, %v7624
    %v7626 = vrot.slane %v7612, %v7625
    %v7627 = vcombine.low %v7571, %v7587
    %v7628 = vcombine.high %v7571, %v7587
    %v7630 = vunpack.c.l.s4 1934713408
    %v7631 = vunpack.c.0.s8 %v7630
    %v7632 = vlaneseq
    %v7633 = vshrl.u32 %v7632, 7
    %v7634 = vsub.s32 %v7631, %v7633
    %v7635 = vrot.slane %v7627, %v7634
    %v7637 = vunpack.c.l.s4 1934713408
    %v7638 = vunpack.c.0.s8 %v7637
    %v7639 = vlaneseq
    %v7640 = vshrl.u32 %v7639, 7
    %v7641 = vsub.s32 %v7638, %v7640
    %v7642 = vrot.slane %v7628, %v7641
    %v7643 = vcombine.low %v7578, %v7594
    %v7644 = vcombine.high %v7578, %v7594
    %v7646 = vunpack.c.l.s4 1934713408
    %v7647 = vunpack.c.0.s8 %v7646
    %v7648 = vlaneseq
    %v7649 = vshrl.u32 %v7648, 7
    %v7650 = vsub.s32 %v7647, %v7649
    %v7651 = vrot.slane %v7643, %v7650
    %v7653 = vunpack.c.l.s4 1934713408
    %v7654 = vunpack.c.0.s8 %v7653
    %v7655 = vlaneseq
    %v7656 = vshrl.u32 %v7655, 7
    %v7657 = vsub.s32 %v7654, %v7656
    %v7658 = vrot.slane %v7644, %v7657
    %v7659 = vcombine.low %v7603, %v7619
    %v7660 = vcombine.high %v7603, %v7619
    %v7662 = vunpack.c.l.s4 1934713408
    %v7663 = vunpack.c.0.s8 %v7662
    %v7664 = vlaneseq
    %v7665 = vshrl.u32 %v7664, 7
    %v7666 = vsub.s32 %v7663, %v7665
    %v7667 = vrot.slane %v7659, %v7666
    %v7669 = vunpack.c.l.s4 1934713408
    %v7670 = vunpack.c.0.s8 %v7669
    %v7671 = vlaneseq
    %v7672 = vshrl.u32 %v7671, 7
    %v7673 = vsub.s32 %v7670, %v7672
    %v7674 = vrot.slane %v7660, %v7673
    %v7675 = vcombine.low %v7610, %v7626
    %v7676 = vcombine.high %v7610, %v7626
    %v7678 = vunpack.c.l.s4 1934713408
    %v7679 = vunpack.c.0.s8 %v7678
    %v7680 = vlaneseq
    %v7681 = vshrl.u32 %v7680, 7
    %v7682 = vsub.s32 %v7679, %v7681
    %v7683 = vrot.slane %v7675, %v7682
    %v7685 = vunpack.c.l.s4 1934713408
    %v7686 = vunpack.c.0.s8 %v7685
    %v7687 = vlaneseq
    %v7688 = vshrl.u32 %v7687, 7
    %v7689 = vsub.s32 %v7686, %v7688
    %v7690 = vrot.slane %v7676, %v7689
    %v7691 = vcombine.low %v7635, %v7667
    %v7692 = vcombine.high %v7635, %v7667
    %v7693 = vcombine.low %v7642, %v7674
    %v7694 = vcombine.high %v7642, %v7674
    %v7695 = vcombine.low %v7651, %v7683
    %v7696 = vcombine.high %v7651, %v7683
    %v7697 = vcombine.low %v7658, %v7690
    %v7698 = vcombine.high %v7658, %v7690
    %v7699 = vcombine.low %v7283, %v7285
    %v7700 = vcombine.high %v7283, %v7285
    %v7702 = vunpack.c.l.s4 1983009808
    %v7703 = vunpack.c.0.s8 %v7702
    %v7704 = vlaneseq
    %v7705 = vshrl.u32 %v7704, 7
    %v7706 = vsub.s32 %v7703, %v7705
    %v7707 = vrot.slane %v7699, %v7706
    %v7709 = vunpack.c.l.s4 1983009808
    %v7710 = vunpack.c.0.s8 %v7709
    %v7711 = vlaneseq
    %v7712 = vshrl.u32 %v7711, 7
    %v7713 = vsub.s32 %v7710, %v7712
    %v7714 = vrot.slane %v7700, %v7713
    %v7715 = vcombine.low %v7284, %v7286
    %v7716 = vcombine.high %v7284, %v7286
    %v7718 = vunpack.c.l.s4 1983009808
    %v7719 = vunpack.c.0.s8 %v7718
    %v7720 = vlaneseq
    %v7721 = vshrl.u32 %v7720, 7
    %v7722 = vsub.s32 %v7719, %v7721
    %v7723 = vrot.slane %v7715, %v7722
    %v7725 = vunpack.c.l.s4 1983009808
    %v7726 = vunpack.c.0.s8 %v7725
    %v7727 = vlaneseq
    %v7728 = vshrl.u32 %v7727, 7
    %v7729 = vsub.s32 %v7726, %v7728
    %v7730 = vrot.slane %v7716, %v7729
    %v7731 = vcombine.low %v7287, %v7289
    %v7732 = vcombine.high %v7287, %v7289
    %v7734 = vunpack.c.l.s4 1983009808
    %v7735 = vunpack.c.0.s8 %v7734
    %v7736 = vlaneseq
    %v7737 = vshrl.u32 %v7736, 7
    %v7738 = vsub.s32 %v7735, %v7737
    %v7739 = vrot.slane %v7731, %v7738
    %v7741 = vunpack.c.l.s4 1983009808
    %v7742 = vunpack.c.0.s8 %v7741
    %v7743 = vlaneseq
    %v7744 = vshrl.u32 %v7743, 7
    %v7745 = vsub.s32 %v7742, %v7744
    %v7746 = vrot.slane %v7732, %v7745
    %v7747 = vcombine.low %v7288, %v7290
    %v7748 = vcombine.high %v7288, %v7290
    %v7750 = vunpack.c.l.s4 1983009808
    %v7751 = vunpack.c.0.s8 %v7750
    %v7752 = vlaneseq
    %v7753 = vshrl.u32 %v7752, 7
    %v7754 = vsub.s32 %v7751, %v7753
    %v7755 = vrot.slane %v7747, %v7754
    %v7757 = vunpack.c.l.s4 1983009808
    %v7758 = vunpack.c.0.s8 %v7757
    %v7759 = vlaneseq
    %v7760 = vshrl.u32 %v7759, 7
    %v7761 = vsub.s32 %v7758, %v7760
    %v7762 = vrot.slane %v7748, %v7761
    %v7763 = vcombine.low %v7707, %v7723
    %v7764 = vcombine.high %v7707, %v7723
    %v7766 = vunpack.c.l.s4 1934713408
    %v7767 = vunpack.c.0.s8 %v7766
    %v7768 = vlaneseq
    %v7769 = vshrl.u32 %v7768, 7
    %v7770 = vsub.s32 %v7767, %v7769
    %v7771 = vrot.slane %v7763, %v7770
    %v7773 = vunpack.c.l.s4 1934713408
    %v7774 = vunpack.c.0.s8 %v7773
    %v7775 = vlaneseq
    %v7776 = vshrl.u32 %v7775, 7
    %v7777 = vsub.s32 %v7774, %v7776
    %v7778 = vrot.slane %v7764, %v7777
    %v7779 = vcombine.low %v7714, %v7730
    %v7780 = vcombine.high %v7714, %v7730
    %v7782 = vunpack.c.l.s4 1934713408
    %v7783 = vunpack.c.0.s8 %v7782
    %v7784 = vlaneseq
    %v7785 = vshrl.u32 %v7784, 7
    %v7786 = vsub.s32 %v7783, %v7785
    %v7787 = vrot.slane %v7779, %v7786
    %v7789 = vunpack.c.l.s4 1934713408
    %v7790 = vunpack.c.0.s8 %v7789
    %v7791 = vlaneseq
    %v7792 = vshrl.u32 %v7791, 7
    %v7793 = vsub.s32 %v7790, %v7792
    %v7794 = vrot.slane %v7780, %v7793
    %v7795 = vcombine.low %v7739, %v7755
    %v7796 = vcombine.high %v7739, %v7755
    %v7798 = vunpack.c.l.s4 1934713408
    %v7799 = vunpack.c.0.s8 %v7798
    %v7800 = vlaneseq
    %v7801 = vshrl.u32 %v7800, 7
    %v7802 = vsub.s32 %v7799, %v7801
    %v7803 = vrot.slane %v7795, %v7802
    %v7805 = vunpack.c.l.s4 1934713408
    %v7806 = vunpack.c.0.s8 %v7805
    %v7807 = vlaneseq
    %v7808 = vshrl.u32 %v7807, 7
    %v7809 = vsub.s32 %v7806, %v7808
    %v7810 = vrot.slane %v7796, %v7809
    %v7811 = vcombine.low %v7746, %v7762
    %v7812 = vcombine.high %v7746, %v7762
    %v7814 = vunpack.c.l.s4 1934713408
    %v7815 = vunpack.c.0.s8 %v7814
    %v7816 = vlaneseq
    %v7817 = vshrl.u32 %v7816, 7
    %v7818 = vsub.s32 %v7815, %v7817
    %v7819 = vrot.slane %v7811, %v7818
    %v7821 = vunpack.c.l.s4 1934713408
    %v7822 = vunpack.c.0.s8 %v7821
    %v7823 = vlaneseq
    %v7824 = vshrl.u32 %v7823, 7
    %v7825 = vsub.s32 %v7822, %v7824
    %v7826 = vrot.slane %v7812, %v7825
    %v7827 = vcombine.low %v7771, %v7803
    %v7828 = vcombine.high %v7771, %v7803
    %v7829 = vcombine.low %v7778, %v7810
    %v7830 = vcombine.high %v7778, %v7810
    %v7831 = vcombine.low %v7787, %v7819
    %v7832 = vcombine.high %v7787, %v7819
    %v7833 = vcombine.low %v7794, %v7826
    %v7834 = vcombine.high %v7794, %v7826
    %v7835 = vcombine.low %v7419, %v7421
    %v7836 = vcombine.high %v7419, %v7421
    %v7838 = vunpack.c.l.s4 1983009808
    %v7839 = vunpack.c.0.s8 %v7838
    %v7840 = vlaneseq
    %v7841 = vshrl.u32 %v7840, 7
    %v7842 = vsub.s32 %v7839, %v7841
    %v7843 = vrot.slane %v7835, %v7842
    %v7845 = vunpack.c.l.s4 1983009808
    %v7846 = vunpack.c.0.s8 %v7845
    %v7847 = vlaneseq
    %v7848 = vshrl.u32 %v7847, 7
    %v7849 = vsub.s32 %v7846, %v7848
    %v7850 = vrot.slane %v7836, %v7849
    %v7851 = vcombine.low %v7420, %v7422
    %v7852 = vcombine.high %v7420, %v7422
    %v7854 = vunpack.c.l.s4 1983009808
    %v7855 = vunpack.c.0.s8 %v7854
    %v7856 = vlaneseq
    %v7857 = vshrl.u32 %v7856, 7
    %v7858 = vsub.s32 %v7855, %v7857
    %v7859 = vrot.slane %v7851, %v7858
    %v7861 = vunpack.c.l.s4 1983009808
    %v7862 = vunpack.c.0.s8 %v7861
    %v7863 = vlaneseq
    %v7864 = vshrl.u32 %v7863, 7
    %v7865 = vsub.s32 %v7862, %v7864
    %v7866 = vrot.slane %v7852, %v7865
    %v7867 = vcombine.low %v7423, %v7425
    %v7868 = vcombine.high %v7423, %v7425
    %v7870 = vunpack.c.l.s4 1983009808
    %v7871 = vunpack.c.0.s8 %v7870
    %v7872 = vlaneseq
    %v7873 = vshrl.u32 %v7872, 7
    %v7874 = vsub.s32 %v7871, %v7873
    %v7875 = vrot.slane %v7867, %v7874
    %v7877 = vunpack.c.l.s4 1983009808
    %v7878 = vunpack.c.0.s8 %v7877
    %v7879 = vlaneseq
    %v7880 = vshrl.u32 %v7879, 7
    %v7881 = vsub.s32 %v7878, %v7880
    %v7882 = vrot.slane %v7868, %v7881
    %v7883 = vcombine.low %v7424, %v7426
    %v7884 = vcombine.high %v7424, %v7426
    %v7886 = vunpack.c.l.s4 1983009808
    %v7887 = vunpack.c.0.s8 %v7886
    %v7888 = vlaneseq
    %v7889 = vshrl.u32 %v7888, 7
    %v7890 = vsub.s32 %v7887, %v7889
    %v7891 = vrot.slane %v7883, %v7890
    %v7893 = vunpack.c.l.s4 1983009808
    %v7894 = vunpack.c.0.s8 %v7893
    %v7895 = vlaneseq
    %v7896 = vshrl.u32 %v7895, 7
    %v7897 = vsub.s32 %v7894, %v7896
    %v7898 = vrot.slane %v7884, %v7897
    %v7899 = vcombine.low %v7843, %v7859
    %v7900 = vcombine.high %v7843, %v7859
    %v7902 = vunpack.c.l.s4 1934713408
    %v7903 = vunpack.c.0.s8 %v7902
    %v7904 = vlaneseq
    %v7905 = vshrl.u32 %v7904, 7
    %v7906 = vsub.s32 %v7903, %v7905
    %v7907 = vrot.slane %v7899, %v7906
    %v7909 = vunpack.c.l.s4 1934713408
    %v7910 = vunpack.c.0.s8 %v7909
    %v7911 = vlaneseq
    %v7912 = vshrl.u32 %v7911, 7
    %v7913 = vsub.s32 %v7910, %v7912
    %v7914 = vrot.slane %v7900, %v7913
    %v7915 = vcombine.low %v7850, %v7866
    %v7916 = vcombine.high %v7850, %v7866
    %v7918 = vunpack.c.l.s4 1934713408
    %v7919 = vunpack.c.0.s8 %v7918
    %v7920 = vlaneseq
    %v7921 = vshrl.u32 %v7920, 7
    %v7922 = vsub.s32 %v7919, %v7921
    %v7923 = vrot.slane %v7915, %v7922
    %v7925 = vunpack.c.l.s4 1934713408
    %v7926 = vunpack.c.0.s8 %v7925
    %v7927 = vlaneseq
    %v7928 = vshrl.u32 %v7927, 7
    %v7929 = vsub.s32 %v7926, %v7928
    %v7930 = vrot.slane %v7916, %v7929
    %v7931 = vcombine.low %v7875, %v7891
    %v7932 = vcombine.high %v7875, %v7891
    %v7934 = vunpack.c.l.s4 1934713408
    %v7935 = vunpack.c.0.s8 %v7934
    %v7936 = vlaneseq
    %v7937 = vshrl.u32 %v7936, 7
    %v7938 = vsub.s32 %v7935, %v7937
    %v7939 = vrot.slane %v7931, %v7938
    %v7941 = vunpack.c.l.s4 1934713408
    %v7942 = vunpack.c.0.s8 %v7941
    %v7943 = vlaneseq
    %v7944 = vshrl.u32 %v7943, 7
    %v7945 = vsub.s32 %v7942, %v7944
    %v7946 = vrot.slane %v7932, %v7945
    %v7947 = vcombine.low %v7882, %v7898
    %v7948 = vcombine.high %v7882, %v7898
    %v7950 = vunpack.c.l.s4 1934713408
    %v7951 = vunpack.c.0.s8 %v7950
    %v7952 = vlaneseq
    %v7953 = vshrl.u32 %v7952, 7
    %v7954 = vsub.s32 %v7951, %v7953
    %v7955 = vrot.slane %v7947, %v7954
    %v7957 = vunpack.c.l.s4 1934713408
    %v7958 = vunpack.c.0.s8 %v7957
    %v7959 = vlaneseq
    %v7960 = vshrl.u32 %v7959, 7
    %v7961 = vsub.s32 %v7958, %v7960
    %v7962 = vrot.slane %v7948, %v7961
    %v7963 = vcombine.low %v7907, %v7939
    %v7964 = vcombine.high %v7907, %v7939
    %v7965 = vcombine.low %v7914, %v7946
    %v7966 = vcombine.high %v7914, %v7946
    %v7967 = vcombine.low %v7923, %v7955
    %v7968 = vcombine.high %v7923, %v7955
    %v7969 = vcombine.low %v7930, %v7962
    %v7970 = vcombine.high %v7930, %v7962
    %v7971 = vcombine.low %v7555, %v7557
    %v7972 = vcombine.high %v7555, %v7557
    %v7974 = vunpack.c.l.s4 1983009808
    %v7975 = vunpack.c.0.s8 %v7974
    %v7976 = vlaneseq
    %v7977 = vshrl.u32 %v7976, 7
    %v7978 = vsub.s32 %v7975, %v7977
    %v7979 = vrot.slane %v7971, %v7978
    %v7981 = vunpack.c.l.s4 1983009808
    %v7982 = vunpack.c.0.s8 %v7981
    %v7983 = vlaneseq
    %v7984 = vshrl.u32 %v7983, 7
    %v7985 = vsub.s32 %v7982, %v7984
    %v7986 = vrot.slane %v7972, %v7985
    %v7987 = vcombine.low %v7556, %v7558
    %v7988 = vcombine.high %v7556, %v7558
    %v7990 = vunpack.c.l.s4 1983009808
    %v7991 = vunpack.c.0.s8 %v7990
    %v7992 = vlaneseq
    %v7993 = vshrl.u32 %v7992, 7
    %v7994 = vsub.s32 %v7991, %v7993
    %v7995 = vrot.slane %v7987, %v7994
    %v7997 = vunpack.c.l.s4 1983009808
    %v7998 = vunpack.c.0.s8 %v7997
    %v7999 = vlaneseq
    %v8000 = vshrl.u32 %v7999, 7
    %v8001 = vsub.s32 %v7998, %v8000
    %v8002 = vrot.slane %v7988, %v8001
    %v8003 = vcombine.low %v7559, %v7561
    %v8004 = vcombine.high %v7559, %v7561
    %v8006 = vunpack.c.l.s4 1983009808
    %v8007 = vunpack.c.0.s8 %v8006
    %v8008 = vlaneseq
    %v8009 = vshrl.u32 %v8008, 7
    %v8010 = vsub.s32 %v8007, %v8009
    %v8011 = vrot.slane %v8003, %v8010
    %v8013 = vunpack.c.l.s4 1983009808
    %v8014 = vunpack.c.0.s8 %v8013
    %v8015 = vlaneseq
    %v8016 = vshrl.u32 %v8015, 7
    %v8017 = vsub.s32 %v8014, %v8016
    %v8018 = vrot.slane %v8004, %v8017
    %v8019 = vcombine.low %v7560, %v7562
    %v8020 = vcombine.high %v7560, %v7562
    %v8022 = vunpack.c.l.s4 1983009808
    %v8023 = vunpack.c.0.s8 %v8022
    %v8024 = vlaneseq
    %v8025 = vshrl.u32 %v8024, 7
    %v8026 = vsub.s32 %v8023, %v8025
    %v8027 = vrot.slane %v8019, %v8026
    %v8029 = vunpack.c.l.s4 1983009808
    %v8030 = vunpack.c.0.s8 %v8029
    %v8031 = vlaneseq
    %v8032 = vshrl.u32 %v8031, 7
    %v8033 = vsub.s32 %v8030, %v8032
    %v8034 = vrot.slane %v8020, %v8033
    %v8035 = vcombine.low %v7979, %v7995
    %v8036 = vcombine.high %v7979, %v7995
    %v8038 = vunpack.c.l.s4 1934713408
    %v8039 = vunpack.c.0.s8 %v8038
    %v8040 = vlaneseq
    %v8041 = vshrl.u32 %v8040, 7
    %v8042 = vsub.s32 %v8039, %v8041
    %v8043 = vrot.slane %v8035, %v8042
    %v8045 = vunpack.c.l.s4 1934713408
    %v8046 = vunpack.c.0.s8 %v8045
    %v8047 = vlaneseq
    %v8048 = vshrl.u32 %v8047, 7
    %v8049 = vsub.s32 %v8046, %v8048
    %v8050 = vrot.slane %v8036, %v8049
    %v8051 = vcombine.low %v7986, %v8002
    %v8052 = vcombine.high %v7986, %v8002
    %v8054 = vunpack.c.l.s4 1934713408
    %v8055 = vunpack.c.0.s8 %v8054
    %v8056 = vlaneseq
    %v8057 = vshrl.u32 %v8056, 7
    %v8058 = vsub.s32 %v8055, %v8057
    %v8059 = vrot.slane %v8051, %v8058
    %v8061 = vunpack.c.l.s4 1934713408
    %v8062 = vunpack.c.0.s8 %v8061
    %v8063 = vlaneseq
    %v8064 = vshrl.u32 %v8063, 7
    %v8065 = vsub.s32 %v8062, %v8064
    %v8066 = vrot.slane %v8052, %v8065
    %v8067 = vcombine.low %v8011, %v8027
    %v8068 = vcombine.high %v8011, %v8027
    %v8070 = vunpack.c.l.s4 1934713408
    %v8071 = vunpack.c.0.s8 %v8070
    %v8072 = vlaneseq
    %v8073 = vshrl.u32 %v8072, 7
    %v8074 = vsub.s32 %v8071, %v8073
    %v8075 = vrot.slane %v8067, %v8074
    %v8077 = vunpack.c.l.s4 1934713408
    %v8078 = vunpack.c.0.s8 %v8077
    %v8079 = vlaneseq
    %v8080 = vshrl.u32 %v8079, 7
    %v8081 = vsub.s32 %v8078, %v8080
    %v8082 = vrot.slane %v8068, %v8081
    %v8083 = vcombine.low %v8018, %v8034
    %v8084 = vcombine.high %v8018, %v8034
    %v8086 = vunpack.c.l.s4 1934713408
    %v8087 = vunpack.c.0.s8 %v8086
    %v8088 = vlaneseq
    %v8089 = vshrl.u32 %v8088, 7
    %v8090 = vsub.s32 %v8087, %v8089
    %v8091 = vrot.slane %v8083, %v8090
    %v8093 = vunpack.c.l.s4 1934713408
    %v8094 = vunpack.c.0.s8 %v8093
    %v8095 = vlaneseq
    %v8096 = vshrl.u32 %v8095, 7
    %v8097 = vsub.s32 %v8094, %v8096
    %v8098 = vrot.slane %v8084, %v8097
    %v8099 = vcombine.low %v8043, %v8075
    %v8100 = vcombine.high %v8043, %v8075
    %v8101 = vcombine.low %v8050, %v8082
    %v8102 = vcombine.high %v8050, %v8082
    %v8103 = vcombine.low %v8059, %v8091
    %v8104 = vcombine.high %v8059, %v8091
    %v8105 = vcombine.low %v8066, %v8098
    %v8106 = vcombine.high %v8066, %v8098
    %8111 = vrot.lane.b32.xlu0 %v7692, 8
    %v8112 = vpop.permute.xlu0 %8111
    %8113 = vrot.lane.b32.xlu0 %v7828, 8
    %v8114 = vpop.permute.xlu0 %8113
    %8115 = vrot.lane.b32.xlu0 %v7964, 8
    %v8116 = vpop.permute.xlu0 %8115
    %8117 = vrot.lane.b32.xlu0 %v8100, 8
    %v8118 = vpop.permute.xlu0 %8117
    %8127 = vrot.lane.b32.xlu0 %v7693, 16
    %v8128 = vpop.permute.xlu0 %8127
    %8129 = vrot.lane.b32.xlu0 %v7829, 16
    %v8130 = vpop.permute.xlu0 %8129
    %8131 = vrot.lane.b32.xlu0 %v7965, 16
    %v8132 = vpop.permute.xlu0 %8131
    %8133 = vrot.lane.b32.xlu0 %v8101, 16
    %v8134 = vpop.permute.xlu0 %8133
    %8143 = vrot.lane.b32.xlu0 %v7694, 24
    %v8144 = vpop.permute.xlu0 %8143
    %8145 = vrot.lane.b32.xlu0 %v7830, 24
    %v8146 = vpop.permute.xlu0 %8145
    %8147 = vrot.lane.b32.xlu0 %v7966, 24
    %v8148 = vpop.permute.xlu0 %8147
    %8149 = vrot.lane.b32.xlu0 %v8102, 24
    %v8150 = vpop.permute.xlu0 %8149
    %8159 = vrot.lane.b32.xlu0 %v7695, 32
    %v8160 = vpop.permute.xlu0 %8159
    %8161 = vrot.lane.b32.xlu0 %v7831, 32
    %v8162 = vpop.permute.xlu0 %8161
    %8163 = vrot.lane.b32.xlu0 %v7967, 32
    %v8164 = vpop.permute.xlu0 %8163
    %8165 = vrot.lane.b32.xlu0 %v8103, 32
    %v8166 = vpop.permute.xlu0 %8165
    %8175 = vrot.lane.b32.xlu0 %v7696, 40
    %v8176 = vpop.permute.xlu0 %8175
    %8177 = vrot.lane.b32.xlu0 %v7832, 40
    %v8178 = vpop.permute.xlu0 %8177
    %8179 = vrot.lane.b32.xlu0 %v7968, 40
    %v8180 = vpop.permute.xlu0 %8179
    %8181 = vrot.lane.b32.xlu0 %v8104, 40
    %v8182 = vpop.permute.xlu0 %8181
    %8191 = vrot.lane.b32.xlu0 %v7697, 48
    %v8192 = vpop.permute.xlu0 %8191
    %8193 = vrot.lane.b32.xlu0 %v7833, 48
    %v8194 = vpop.permute.xlu0 %8193
    %8195 = vrot.lane.b32.xlu0 %v7969, 48
    %v8196 = vpop.permute.xlu0 %8195
    %8197 = vrot.lane.b32.xlu0 %v8105, 48
    %v8198 = vpop.permute.xlu0 %8197
    %8207 = vrot.lane.b32.xlu0 %v7698, 56
    %v8208 = vpop.permute.xlu0 %8207
    %8209 = vrot.lane.b32.xlu0 %v7834, 56
    %v8210 = vpop.permute.xlu0 %8209
    %8211 = vrot.lane.b32.xlu0 %v7970, 56
    %v8212 = vpop.permute.xlu0 %8211
    %8213 = vrot.lane.b32.xlu0 %v8106, 56
    %v8214 = vpop.permute.xlu0 %8213
    %v8219 = vsel %vm3977, %v7691, %v8112
    %v8220 = vsel %vm3977, %v7827, %v8114
    %v8221 = vsel %vm3977, %v7963, %v8116
    %v8222 = vsel %vm3977, %v8099, %v8118
    %v8223 = vsel %vm5370, %v8219, %v8128
    %v8224 = vsel %vm5370, %v8220, %v8130
    %v8225 = vsel %vm5370, %v8221, %v8132
    %v8226 = vsel %vm5370, %v8222, %v8134
    %vm8227 = vcmask 195584
    %v8228 = vsel %vm8227, %v8223, %v8144
    %v8229 = vsel %vm8227, %v8224, %v8146
    %v8230 = vsel %vm8227, %v8225, %v8148
    %v8231 = vsel %vm8227, %v8226, %v8150
    %vm8232 = vcmask 261120
    %v8233 = vsel %vm8232, %v8228, %v8160
    %v8234 = vsel %vm8232, %v8229, %v8162
    %v8235 = vsel %vm8232, %v8230, %v8164
    %v8236 = vsel %vm8232, %v8231, %v8166
    %vm8237 = vcmask 326656
    %v8238 = vsel %vm8237, %v8233, %v8176
    %v8239 = vsel %vm8237, %v8234, %v8178
    %v8240 = vsel %vm8237, %v8235, %v8180
    %v8241 = vsel %vm8237, %v8236, %v8182
    %vm8242 = vcmask 392192
    %v8243 = vsel %vm8242, %v8238, %v8192
    %v8244 = vsel %vm8242, %v8239, %v8194
    %v8245 = vsel %vm8242, %v8240, %v8196
    %v8246 = vsel %vm8242, %v8241, %v8198
    %vm8247 = vcmask 457728
    %v8248 = vsel %vm8247, %v8243, %v8208
    %v8249 = vsel %vm8247, %v8244, %v8210
    %v8250 = vsel %vm8247, %v8245, %v8212
    %v8251 = vsel %vm8247, %v8246, %v8214
    %v8252 = vld [vmem:[%s6] sm:$0xff]
    %v8253 = vld [vmem:[%s6 + $0x8] sm:$0xff]
    %v8254 = vld [vmem:[%s6 + $0x10] sm:$0xff]
    %v8255 = vld [vmem:[%s6 + $0x18] sm:$0xff]
    %v8256 = vld [vmem:[%s6 + $0x20] sm:$0xff]
    %v8257 = vld [vmem:[%s6 + $0x28] sm:$0xff]
    %v8258 = vld [vmem:[%s6 + $0x30] sm:$0xff]
    %v8259 = vld [vmem:[%s6 + $0x38] sm:$0xff]
    %v8260 = vld [vmem:[%s7] sm:$0x1]
    %v8262 = vlaneseq
    %v8263 = vshrl.u32 %v8262, 7
    %v8264 = vsub.s32 0, %v8263
    %v8265 = vrot.slane %v8260, %v8264
    %v8268 = vsel %vm80, %v8248, 0
    %v8271 = vsel %vm80, %v8249, 0
    %v8274 = vsel %vm80, %v8250, 0
    %v8277 = vsel %vm80, %v8251, 0
    %8279 = vmatprep.subr.mxu0 0.0
    %8280 = vmatpush1.msra.mxu0 %v8252
    %8281 = vmatprep.subr.mxu0 0.0
    %8282 = vmatpush1.msra.mxu0 %v8253
    %8283 = vmatprep.subr.mxu0 0.0
    %8284 = vmatpush1.msra.mxu0 %v8254
    %8285 = vmatprep.subr.mxu0 0.0
    %8286 = vmatpush1.msra.mxu0 %v8255
    %8287 = vmatprep.subr.mxu0 0.0
    %8288 = vmatpush1.msra.mxu0 %v8256
    %8289 = vmatprep.subr.mxu0 0.0
    %8290 = vmatpush1.msra.mxu0 %v8257
    %8291 = vmatprep.subr.mxu0 0.0
    %8292 = vmatpush1.msra.mxu0 %v8258
    %8293 = vmatprep.subr.mxu0 0.0
    %8294 = vmatpush1.msra.mxu0 %v8259
    %8295 = vmatprep.subr.mxu0 0.0
    %8296 = vmatpush1.msra.mxu0 0.0
    %8297 = vmatprep.subr.mxu0 0.0
    %8298 = vmatpush1.msra.mxu0 0.0
    %8299 = vmatprep.subr.mxu0 0.0
    %8300 = vmatpush1.msra.mxu0 0.0
    %8301 = vmatprep.subr.mxu0 0.0
    %8302 = vmatpush1.msra.mxu0 0.0
    %8303 = vmatprep.subr.mxu0 0.0
    %8304 = vmatpush1.msra.mxu0 0.0
    %8305 = vmatprep.subr.mxu0 0.0
    %8306 = vmatpush1.msra.mxu0 0.0
    %8307 = vmatprep.subr.mxu0 0.0
    %8308 = vmatpush1.msra.mxu0 0.0
    %8309 = vmatprep.subr.mxu0 0.0
    %8310 = vmatpush1.msra.mxu0 0.0
    %8311 = vmatprep.subr.mxu0 0.0
    %8312 = vmatpush1.msra.mxu0 0.0
    %8313 = vmatprep.subr.mxu0 0.0
    %8314 = vmatpush1.msra.mxu0 0.0
    %8315 = vmatprep.subr.mxu0 0.0
    %8316 = vmatpush1.msra.mxu0 0.0
    %8317 = vmatprep.subr.mxu0 0.0
    %8318 = vmatpush1.msra.mxu0 0.0
    %8319 = vmatprep.subr.mxu0 0.0
    %8320 = vmatpush1.msra.mxu0 0.0
    %8321 = vmatprep.subr.mxu0 0.0
    %8322 = vmatpush1.msra.mxu0 0.0
    %8323 = vmatprep.subr.mxu0 0.0
    %8324 = vmatpush1.msra.mxu0 0.0
    %8325 = vmatprep.subr.mxu0 0.0
    %8326 = vmatpush1.msra.mxu0 0.0
    %8327 = vmatprep.subr.mxu0 0.0
    %8328 = vmatpush1.msra.mxu0 0.0
    %8329 = vmatprep.subr.mxu0 0.0
    %8330 = vmatpush1.msra.mxu0 0.0
    %8331 = vmatprep.subr.mxu0 0.0
    %8332 = vmatpush1.msra.mxu0 0.0
    %8333 = vmatprep.subr.mxu0 0.0
    %8334 = vmatpush1.msra.mxu0 0.0
    %8335 = vmatprep.subr.mxu0 0.0
    %8336 = vmatpush1.msra.mxu0 0.0
    %8337 = vmatprep.subr.mxu0 0.0
    %8338 = vmatpush1.msra.mxu0 0.0
    %8339 = vmatprep.subr.mxu0 0.0
    %8340 = vmatpush1.msra.mxu0 0.0
    %8341 = vmatprep.subr.mxu0 0.0
    %8342 = vmatpush1.msra.mxu0 0.0
    %8343 = vmatprep.mubr.f32.mxu0 0.0
    %8344 = vmatmul.mubr.f32.gmra.mrb[0].mxu0 %v8268
    %v8345 = vpop.f32.mrb[0].mxu0
    %v8346 = vadd.f32 %v8265, %v8345
    %v8347 = vpop.f32.mrb[0].mxu0
    %8348 = vmatprep.mubr.f32.mxu0 0.0
    %8349 = vmatmul.mubr.f32.gmra.mrb[0].mxu0 %v8271
    %v8350 = vpop.f32.mrb[0].mxu0
    %v8351 = vadd.f32 %v8265, %v8350
    %v8352 = vpop.f32.mrb[0].mxu0
    %8353 = vmatprep.mubr.f32.mxu0 0.0
    %8354 = vmatmul.mubr.f32.gmra.mrb[0].mxu0 %v8274
    %v8355 = vpop.f32.mrb[0].mxu0
    %v8356 = vadd.f32 %v8265, %v8355
    %v8357 = vpop.f32.mrb[0].mxu0
    %8358 = vmatprep.mubr.f32.mxu0 0.0
    %8359 = vmatmul.mubr.f32.gmra.mrb[0].mxu0 %v8277
    %v8360 = vpop.f32.mrb[0].mxu0
    %v8361 = vadd.f32 %v8265, %v8360
    %v8362 = vpop.f32.mrb[0].mxu0
    %8363 = vdwg.mxu0
    %v8364 = vadd.f32 %v74, %v8346
    %v8365 = vadd.f32 %v75, %v8351
    %v8366 = vadd.f32 %v76, %v8356
    %v8367 = vadd.f32 %v77, %v8361
    %v8368 = vld [vmem:[%s8] sm:$0x1]
    %v8369 = vld [vmem:[%s9] sm:$0x1]
    %v8370 = vsel %vm80, %v8364, 0.0
    %8371 = vadd.xlane.f32.xlu0 %v8370
    %v8372 = vpop.xlane.xlu0 %8371
    %v8373 = vsel %vm80, %v8365, 0.0
    %8374 = vadd.xlane.f32.xlu0 %v8373
    %v8375 = vpop.xlane.xlu0 %8374
    %v8376 = vsel %vm80, %v8366, 0.0
    %8377 = vadd.xlane.f32.xlu0 %v8376
    %v8378 = vpop.xlane.xlu0 %8377
    %v8379 = vsel %vm80, %v8367, 0.0
    %8380 = vadd.xlane.f32.xlu0 %v8379
    %v8381 = vpop.xlane.xlu0 %8380
    %v8382 = vmul.f32 %v8372, %v93
    %v8383 = vmul.f32 %v8375, %v93
    %v8384 = vmul.f32 %v8378, %v93
    %v8385 = vmul.f32 %v8381, %v93
    %v8386 = vsub.f32 %v8364, %v8382
    %v8387 = vsub.f32 %v8365, %v8383
    %v8388 = vsub.f32 %v8366, %v8384
    %v8389 = vsub.f32 %v8367, %v8385
    %v8390 = vmul.f32 %v8386, %v8386
    %v8391 = vmul.f32 %v8387, %v8387
    %v8392 = vmul.f32 %v8388, %v8388
    %v8393 = vmul.f32 %v8389, %v8389
    %v8394 = vsel %vm80, %v8390, 0.0
    %8395 = vadd.xlane.f32.xlu0 %v8394
    %v8396 = vpop.xlane.xlu0 %8395
    %v8397 = vsel %vm80, %v8391, 0.0
    %8398 = vadd.xlane.f32.xlu0 %v8397
    %v8399 = vpop.xlane.xlu0 %8398
    %v8400 = vsel %vm80, %v8392, 0.0
    %8401 = vadd.xlane.f32.xlu0 %v8400
    %v8402 = vpop.xlane.xlu0 %8401
    %v8403 = vsel %vm80, %v8393, 0.0
    %8404 = vadd.xlane.f32.xlu0 %v8403
    %v8405 = vpop.xlane.xlu0 %8404
    %v8406 = vmul.f32 %v8396, %v93
    %v8407 = vmul.f32 %v8399, %v93
    %v8408 = vmul.f32 %v8402, %v93
    %v8409 = vmul.f32 %v8405, %v93
    %v8410 = vadd.f32 %v8406, 1e-05
    %v8411 = vadd.f32 %v8407, 1e-05
    %v8412 = vadd.f32 %v8408, 1e-05
    %v8413 = vadd.f32 %v8409, 1e-05
    %v8414 = vrsqrt.pop %v8410
    %v8415 = vrsqrt.pop %v8411
    %v8416 = vrsqrt.pop %v8412
    %v8417 = vrsqrt.pop %v8413
    %v8418 = vmul.f32 %v8386, %v8414
    %v8419 = vmul.f32 %v8387, %v8415
    %v8420 = vmul.f32 %v8388, %v8416
    %v8421 = vmul.f32 %v8389, %v8417
    %v8423 = vlaneseq
    %v8424 = vshrl.u32 %v8423, 7
    %v8425 = vsub.s32 0, %v8424
    %v8426 = vrot.slane %v8368, %v8425
    %v8428 = vmul.f32 %v8418, %v8426
    %v8429 = vmul.f32 %v8419, %v8426
    %v8430 = vmul.f32 %v8420, %v8426
    %v8431 = vmul.f32 %v8421, %v8426
    %v8433 = vlaneseq
    %v8434 = vshrl.u32 %v8433, 7
    %v8435 = vsub.s32 0, %v8434
    %v8436 = vrot.slane %v8369, %v8435
    %v8438 = vadd.f32 %v8428, %v8436
    %v8439 = vadd.f32 %v8429, %v8436
    %v8440 = vadd.f32 %v8430, %v8436
    %v8441 = vadd.f32 %v8431, %v8436
    %v8442 = vld [vmem:[%s10] sm:$0xff]
    %v8443 = vld [vmem:[%s10 + $0x8] sm:$0xff]
    %v8444 = vld [vmem:[%s10 + $0x10] sm:$0xff]
    %v8445 = vld [vmem:[%s10 + $0x18] sm:$0xff]
    %v8446 = vld [vmem:[%s10 + $0x20] sm:$0xff]
    %v8447 = vld [vmem:[%s10 + $0x28] sm:$0xff]
    %v8448 = vld [vmem:[%s10 + $0x30] sm:$0xff]
    %v8449 = vld [vmem:[%s10 + $0x38] sm:$0xff]
    %v8450 = vld [vmem:[%s10 + $0x40] sm:$0xff]
    %v8451 = vld [vmem:[%s10 + $0x48] sm:$0xff]
    %v8452 = vld [vmem:[%s10 + $0x50] sm:$0xff]
    %v8453 = vld [vmem:[%s10 + $0x58] sm:$0xff]
    %v8454 = vld [vmem:[%s10 + $0x60] sm:$0xff]
    %v8455 = vld [vmem:[%s10 + $0x68] sm:$0xff]
    %v8456 = vld [vmem:[%s10 + $0x70] sm:$0xff]
    %v8457 = vld [vmem:[%s10 + $0x78] sm:$0xff]
    %v8458 = vld [vmem:[%s11] sm:$0x3]
    %v8460 = vlaneseq
    %v8461 = vshrl.u32 %v8460, 7
    %v8462 = vsub.s32 0, %v8461
    %v8463 = vrot.slane %v8458, %v8462
    %v8464 = vlaneseq
    %v8465 = vshrl.u32 %v8464, 7
    %v8466 = vsub.s32 1, %v8465
    %v8467 = vrot.slane %v8458, %v8466
    %v8471 = vsel %vm80, %v8438, 0
    %v8474 = vsel %vm80, %v8439, 0
    %v8477 = vsel %vm80, %v8440, 0
    %v8480 = vsel %vm80, %v8441, 0
    %8482 = vmatprep.subr.mxu0 %v8443
    %8483 = vmatpush1.msra.mxu0 %v8442
    %8484 = vmatprep.subr.mxu0 %v8445
    %8485 = vmatpush1.msra.mxu0 %v8444
    %8486 = vmatprep.subr.mxu0 %v8447
    %8487 = vmatpush1.msra.mxu0 %v8446
    %8488 = vmatprep.subr.mxu0 %v8449
    %8489 = vmatpush1.msra.mxu0 %v8448
    %8490 = vmatprep.subr.mxu0 %v8451
    %8491 = vmatpush1.msra.mxu0 %v8450
    %8492 = vmatprep.subr.mxu0 %v8453
    %8493 = vmatpush1.msra.mxu0 %v8452
    %8494 = vmatprep.subr.mxu0 %v8455
    %8495 = vmatpush1.msra.mxu0 %v8454
    %8496 = vmatprep.subr.mxu0 %v8457
    %8497 = vmatpush1.msra.mxu0 %v8456
    %8498 = vmatprep.subr.mxu0 0.0
    %8499 = vmatpush1.msra.mxu0 0.0
    %8500 = vmatprep.subr.mxu0 0.0
    %8501 = vmatpush1.msra.mxu0 0.0
    %8502 = vmatprep.subr.mxu0 0.0
    %8503 = vmatpush1.msra.mxu0 0.0
    %8504 = vmatprep.subr.mxu0 0.0
    %8505 = vmatpush1.msra.mxu0 0.0
    %8506 = vmatprep.subr.mxu0 0.0
    %8507 = vmatpush1.msra.mxu0 0.0
    %8508 = vmatprep.subr.mxu0 0.0
    %8509 = vmatpush1.msra.mxu0 0.0
    %8510 = vmatprep.subr.mxu0 0.0
    %8511 = vmatpush1.msra.mxu0 0.0
    %8512 = vmatprep.subr.mxu0 0.0
    %8513 = vmatpush1.msra.mxu0 0.0
    %8514 = vmatprep.subr.mxu0 0.0
    %8515 = vmatpush1.msra.mxu0 0.0
    %8516 = vmatprep.subr.mxu0 0.0
    %8517 = vmatpush1.msra.mxu0 0.0
    %8518 = vmatprep.subr.mxu0 0.0
    %8519 = vmatpush1.msra.mxu0 0.0
    %8520 = vmatprep.subr.mxu0 0.0
    %8521 = vmatpush1.msra.mxu0 0.0
    %8522 = vmatprep.subr.mxu0 0.0
    %8523 = vmatpush1.msra.mxu0 0.0
    %8524 = vmatprep.subr.mxu0 0.0
    %8525 = vmatpush1.msra.mxu0 0.0
    %8526 = vmatprep.subr.mxu0 0.0
    %8527 = vmatpush1.msra.mxu0 0.0
    %8528 = vmatprep.subr.mxu0 0.0
    %8529 = vmatpush1.msra.mxu0 0.0
    %8530 = vmatprep.subr.mxu0 0.0
    %8531 = vmatpush1.msra.mxu0 0.0
    %8532 = vmatprep.subr.mxu0 0.0
    %8533 = vmatpush1.msra.mxu0 0.0
    %8534 = vmatprep.subr.mxu0 0.0
    %8535 = vmatpush1.msra.mxu0 0.0
    %8536 = vmatprep.subr.mxu0 0.0
    %8537 = vmatpush1.msra.mxu0 0.0
    %8538 = vmatprep.subr.mxu0 0.0
    %8539 = vmatpush1.msra.mxu0 0.0
    %8540 = vmatprep.subr.mxu0 0.0
    %8541 = vmatpush1.msra.mxu0 0.0
    %8542 = vmatprep.subr.mxu0 0.0
    %8543 = vmatpush1.msra.mxu0 0.0
    %8544 = vmatprep.subr.mxu0 0.0
    %8545 = vmatpush1.msra.mxu0 0.0
    %8546 = vmatprep.mubr.f32.mxu0 0.0
    %8547 = vmatmul.mubr.f32.gmra.mrb[0].mxu0 %v8471
    %v8548 = vpop.f32.mrb[0].mxu0
    %v8549 = vadd.f32 %v8463, %v8548
    %v8550 = vpop.f32.mrb[0].mxu0
    %v8551 = vadd.f32 %v8467, %v8550
    %8552 = vmatprep.mubr.f32.mxu0 0.0
    %8553 = vmatmul.mubr.f32.gmra.mrb[0].mxu0 %v8474
    %v8554 = vpop.f32.mrb[0].mxu0
    %v8555 = vadd.f32 %v8463, %v8554
    %v8556 = vpop.f32.mrb[0].mxu0
    %v8557 = vadd.f32 %v8467, %v8556
    %8558 = vmatprep.mubr.f32.mxu0 0.0
    %8559 = vmatmul.mubr.f32.gmra.mrb[0].mxu0 %v8477
    %v8560 = vpop.f32.mrb[0].mxu0
    %v8561 = vadd.f32 %v8463, %v8560
    %v8562 = vpop.f32.mrb[0].mxu0
    %v8563 = vadd.f32 %v8467, %v8562
    %8564 = vmatprep.mubr.f32.mxu0 0.0
    %8565 = vmatmul.mubr.f32.gmra.mrb[0].mxu0 %v8480
    %v8566 = vpop.f32.mrb[0].mxu0
    %v8567 = vadd.f32 %v8463, %v8566
    %v8568 = vpop.f32.mrb[0].mxu0
    %v8569 = vadd.f32 %v8467, %v8568
    %8570 = vdwg.mxu0
    %v8571 = vmul.f32 %v8549, 0.5
    %v8572 = vmul.f32 %v8551, 0.5
    %v8573 = vmul.f32 %v8555, 0.5
    %v8574 = vmul.f32 %v8557, 0.5
    %v8575 = vmul.f32 %v8561, 0.5
    %v8576 = vmul.f32 %v8563, 0.5
    %v8577 = vmul.f32 %v8567, 0.5
    %v8578 = vmul.f32 %v8569, 0.5
    %v8579 = vmul.f32 %v8549, 0.70710677
    %v8580 = vmul.f32 %v8551, 0.70710677
    %v8581 = vmul.f32 %v8555, 0.70710677
    %v8582 = vmul.f32 %v8557, 0.70710677
    %v8583 = vmul.f32 %v8561, 0.70710677
    %v8584 = vmul.f32 %v8563, 0.70710677
    %v8585 = vmul.f32 %v8567, 0.70710677
    %v8586 = vmul.f32 %v8569, 0.70710677
    %vm8587 = vcmp.ge.f32.partialorder %v8579, 0.0
    %vm8588 = vcmp.ge.f32.partialorder %v8580, 0.0
    %vm8589 = vcmp.ge.f32.partialorder %v8581, 0.0
    %vm8590 = vcmp.ge.f32.partialorder %v8582, 0.0
    %vm8591 = vcmp.ge.f32.partialorder %v8583, 0.0
    %vm8592 = vcmp.ge.f32.partialorder %v8584, 0.0
    %vm8593 = vcmp.ge.f32.partialorder %v8585, 0.0
    %vm8594 = vcmp.ge.f32.partialorder %v8586, 0.0
    %v8595 = vsel %vm8587, 1.0, -1.0
    %v8596 = vsel %vm8588, 1.0, -1.0
    %v8597 = vsel %vm8589, 1.0, -1.0
    %v8598 = vsel %vm8590, 1.0, -1.0
    %v8599 = vsel %vm8591, 1.0, -1.0
    %v8600 = vsel %vm8592, 1.0, -1.0
    %v8601 = vsel %vm8593, 1.0, -1.0
    %v8602 = vsel %vm8594, 1.0, -1.0
    %v8603 = vand.u32 2147483647, %v8579
    %v8604 = vand.u32 2147483647, %v8580
    %v8605 = vand.u32 2147483647, %v8581
    %v8606 = vand.u32 2147483647, %v8582
    %v8607 = vand.u32 2147483647, %v8583
    %v8608 = vand.u32 2147483647, %v8584
    %v8609 = vand.u32 2147483647, %v8585
    %v8610 = vand.u32 2147483647, %v8586
    %v8611 = vmul.f32 %v8603, 0.3275911
    %v8612 = vmul.f32 %v8604, 0.3275911
    %v8613 = vmul.f32 %v8605, 0.3275911
    %v8614 = vmul.f32 %v8606, 0.3275911
    %v8615 = vmul.f32 %v8607, 0.3275911
    %v8616 = vmul.f32 %v8608, 0.3275911
    %v8617 = vmul.f32 %v8609, 0.3275911
    %v8618 = vmul.f32 %v8610, 0.3275911
    %v8619 = vadd.f32 %v8611, 1.0
    %v8620 = vadd.f32 %v8612, 1.0
    %v8621 = vadd.f32 %v8613, 1.0
    %v8622 = vadd.f32 %v8614, 1.0
    %v8623 = vadd.f32 %v8615, 1.0
    %v8624 = vadd.f32 %v8616, 1.0
    %v8625 = vadd.f32 %v8617, 1.0
    %v8626 = vadd.f32 %v8618, 1.0
    %v8627 = vrcp.pop %v8619
    %v8628 = vmul.f32 1.0, %v8627
    %v8629 = vrcp.pop %v8620
    %v8630 = vmul.f32 1.0, %v8629
    %v8631 = vrcp.pop %v8621
    %v8632 = vmul.f32 1.0, %v8631
    %v8633 = vrcp.pop %v8622
    %v8634 = vmul.f32 1.0, %v8633
    %v8635 = vrcp.pop %v8623
    %v8636 = vmul.f32 1.0, %v8635
    %v8637 = vrcp.pop %v8624
    %v8638 = vmul.f32 1.0, %v8637
    %v8639 = vrcp.pop %v8625
    %v8640 = vmul.f32 1.0, %v8639
    %v8641 = vrcp.pop %v8626
    %v8642 = vmul.f32 1.0, %v8641
    %v8643 = vmul.f32 %v8628, 1.0614054
    %v8644 = vmul.f32 %v8630, 1.0614054
    %v8645 = vmul.f32 %v8632, 1.0614054
    %v8646 = vmul.f32 %v8634, 1.0614054
    %v8647 = vmul.f32 %v8636, 1.0614054
    %v8648 = vmul.f32 %v8638, 1.0614054
    %v8649 = vmul.f32 %v8640, 1.0614054
    %v8650 = vmul.f32 %v8642, 1.0614054
    %v8651 = vadd.f32 %v8643, -1.4531521
    %v8652 = vadd.f32 %v8644, -1.4531521
    %v8653 = vadd.f32 %v8645, -1.4531521
    %v8654 = vadd.f32 %v8646, -1.4531521
    %v8655 = vadd.f32 %v8647, -1.4531521
    %v8656 = vadd.f32 %v8648, -1.4531521
    %v8657 = vadd.f32 %v8649, -1.4531521
    %v8658 = vadd.f32 %v8650, -1.4531521
    %v8659 = vmul.f32 %v8651, %v8628
    %v8660 = vmul.f32 %v8652, %v8630
    %v8661 = vmul.f32 %v8653, %v8632
    %v8662 = vmul.f32 %v8654, %v8634
    %v8663 = vmul.f32 %v8655, %v8636
    %v8664 = vmul.f32 %v8656, %v8638
    %v8665 = vmul.f32 %v8657, %v8640
    %v8666 = vmul.f32 %v8658, %v8642
    %v8667 = vadd.f32 %v8659, 1.4214138
    %v8668 = vadd.f32 %v8660, 1.4214138
    %v8669 = vadd.f32 %v8661, 1.4214138
    %v8670 = vadd.f32 %v8662, 1.4214138
    %v8671 = vadd.f32 %v8663, 1.4214138
    %v8672 = vadd.f32 %v8664, 1.4214138
    %v8673 = vadd.f32 %v8665, 1.4214138
    %v8674 = vadd.f32 %v8666, 1.4214138
    %v8675 = vmul.f32 %v8667, %v8628
    %v8676 = vmul.f32 %v8668, %v8630
    %v8677 = vmul.f32 %v8669, %v8632
    %v8678 = vmul.f32 %v8670, %v8634
    %v8679 = vmul.f32 %v8671, %v8636
    %v8680 = vmul.f32 %v8672, %v8638
    %v8681 = vmul.f32 %v8673, %v8640
    %v8682 = vmul.f32 %v8674, %v8642
    %v8683 = vadd.f32 %v8675, -0.28449672
    %v8684 = vadd.f32 %v8676, -0.28449672
    %v8685 = vadd.f32 %v8677, -0.28449672
    %v8686 = vadd.f32 %v8678, -0.28449672
    %v8687 = vadd.f32 %v8679, -0.28449672
    %v8688 = vadd.f32 %v8680, -0.28449672
    %v8689 = vadd.f32 %v8681, -0.28449672
    %v8690 = vadd.f32 %v8682, -0.28449672
    %v8691 = vmul.f32 %v8683, %v8628
    %v8692 = vmul.f32 %v8684, %v8630
    %v8693 = vmul.f32 %v8685, %v8632
    %v8694 = vmul.f32 %v8686, %v8634
    %v8695 = vmul.f32 %v8687, %v8636
    %v8696 = vmul.f32 %v8688, %v8638
    %v8697 = vmul.f32 %v8689, %v8640
    %v8698 = vmul.f32 %v8690, %v8642
    %v8699 = vadd.f32 %v8691, 0.2548296
    %v8700 = vadd.f32 %v8692, 0.2548296
    %v8701 = vadd.f32 %v8693, 0.2548296
    %v8702 = vadd.f32 %v8694, 0.2548296
    %v8703 = vadd.f32 %v8695, 0.2548296
    %v8704 = vadd.f32 %v8696, 0.2548296
    %v8705 = vadd.f32 %v8697, 0.2548296
    %v8706 = vadd.f32 %v8698, 0.2548296
    %v8707 = vmul.f32 %v8699, %v8628
    %v8708 = vmul.f32 %v8700, %v8630
    %v8709 = vmul.f32 %v8701, %v8632
    %v8710 = vmul.f32 %v8702, %v8634
    %v8711 = vmul.f32 %v8703, %v8636
    %v8712 = vmul.f32 %v8704, %v8638
    %v8713 = vmul.f32 %v8705, %v8640
    %v8714 = vmul.f32 %v8706, %v8642
    %v8715 = vsub.f32 0.0, %v8603
    %v8716 = vsub.f32 0.0, %v8604
    %v8717 = vsub.f32 0.0, %v8605
    %v8718 = vsub.f32 0.0, %v8606
    %v8719 = vsub.f32 0.0, %v8607
    %v8720 = vsub.f32 0.0, %v8608
    %v8721 = vsub.f32 0.0, %v8609
    %v8722 = vsub.f32 0.0, %v8610
    %v8723 = vmul.f32 %v8715, %v8603
    %v8724 = vmul.f32 %v8716, %v8604
    %v8725 = vmul.f32 %v8717, %v8605
    %v8726 = vmul.f32 %v8718, %v8606
    %v8727 = vmul.f32 %v8719, %v8607
    %v8728 = vmul.f32 %v8720, %v8608
    %v8729 = vmul.f32 %v8721, %v8609
    %v8730 = vmul.f32 %v8722, %v8610
    %v8731 = vmul.f32 %v8723, 1.442695
    %v8732 = vpow.pop %v8731
    %v8733 = vmul.f32 %v8724, 1.442695
    %v8734 = vpow.pop %v8733
    %v8735 = vmul.f32 %v8725, 1.442695
    %v8736 = vpow.pop %v8735
    %v8737 = vmul.f32 %v8726, 1.442695
    %v8738 = vpow.pop %v8737
    %v8739 = vmul.f32 %v8727, 1.442695
    %v8740 = vpow.pop %v8739
    %v8741 = vmul.f32 %v8728, 1.442695
    %v8742 = vpow.pop %v8741
    %v8743 = vmul.f32 %v8729, 1.442695
    %v8744 = vpow.pop %v8743
    %v8745 = vmul.f32 %v8730, 1.442695
    %v8746 = vpow.pop %v8745
    %v8747 = vmul.f32 %v8707, %v8732
    %v8748 = vmul.f32 %v8708, %v8734
    %v8749 = vmul.f32 %v8709, %v8736
    %v8750 = vmul.f32 %v8710, %v8738
    %v8751 = vmul.f32 %v8711, %v8740
    %v8752 = vmul.f32 %v8712, %v8742
    %v8753 = vmul.f32 %v8713, %v8744
    %v8754 = vmul.f32 %v8714, %v8746
    %v8755 = vsub.f32 1.0, %v8747
    %v8756 = vsub.f32 1.0, %v8748
    %v8757 = vsub.f32 1.0, %v8749
    %v8758 = vsub.f32 1.0, %v8750
    %v8759 = vsub.f32 1.0, %v8751
    %v8760 = vsub.f32 1.0, %v8752
    %v8761 = vsub.f32 1.0, %v8753
    %v8762 = vsub.f32 1.0, %v8754
    %v8763 = vmul.f32 %v8595, %v8755
    %v8764 = vmul.f32 %v8596, %v8756
    %v8765 = vmul.f32 %v8597, %v8757
    %v8766 = vmul.f32 %v8598, %v8758
    %v8767 = vmul.f32 %v8599, %v8759
    %v8768 = vmul.f32 %v8600, %v8760
    %v8769 = vmul.f32 %v8601, %v8761
    %v8770 = vmul.f32 %v8602, %v8762
    %v8771 = vadd.f32 %v8763, 1.0
    %v8772 = vadd.f32 %v8764, 1.0
    %v8773 = vadd.f32 %v8765, 1.0
    %v8774 = vadd.f32 %v8766, 1.0
    %v8775 = vadd.f32 %v8767, 1.0
    %v8776 = vadd.f32 %v8768, 1.0
    %v8777 = vadd.f32 %v8769, 1.0
    %v8778 = vadd.f32 %v8770, 1.0
    %v8779 = vmul.f32 %v8571, %v8771
    %v8780 = vmul.f32 %v8572, %v8772
    %v8781 = vmul.f32 %v8573, %v8773
    %v8782 = vmul.f32 %v8574, %v8774
    %v8783 = vmul.f32 %v8575, %v8775
    %v8784 = vmul.f32 %v8576, %v8776
    %v8785 = vmul.f32 %v8577, %v8777
    %v8786 = vmul.f32 %v8578, %v8778
    %v8787 = vld [vmem:[%s12] sm:$0xff]
    %v8788 = vld [vmem:[%s12 + $0x8] sm:$0xff]
    %v8789 = vld [vmem:[%s12 + $0x10] sm:$0xff]
    %v8790 = vld [vmem:[%s12 + $0x18] sm:$0xff]
    %v8791 = vld [vmem:[%s12 + $0x20] sm:$0xff]
    %v8792 = vld [vmem:[%s12 + $0x28] sm:$0xff]
    %v8793 = vld [vmem:[%s12 + $0x30] sm:$0xff]
    %v8794 = vld [vmem:[%s12 + $0x38] sm:$0xff]
    %v8795 = vld [vmem:[%s12 + $0x40] sm:$0xff]
    %v8796 = vld [vmem:[%s12 + $0x48] sm:$0xff]
    %v8797 = vld [vmem:[%s12 + $0x50] sm:$0xff]
    %v8798 = vld [vmem:[%s12 + $0x58] sm:$0xff]
    %v8799 = vld [vmem:[%s12 + $0x60] sm:$0xff]
    %v8800 = vld [vmem:[%s12 + $0x68] sm:$0xff]
    %v8801 = vld [vmem:[%s12 + $0x70] sm:$0xff]
    %v8802 = vld [vmem:[%s12 + $0x78] sm:$0xff]
    %v8803 = vld [vmem:[%s12 + $0x80] sm:$0xff]
    %v8804 = vld [vmem:[%s12 + $0x88] sm:$0xff]
    %v8805 = vld [vmem:[%s12 + $0x90] sm:$0xff]
    %v8806 = vld [vmem:[%s12 + $0x98] sm:$0xff]
    %v8807 = vld [vmem:[%s12 + $0xa0] sm:$0xff]
    %v8808 = vld [vmem:[%s12 + $0xa8] sm:$0xff]
    %v8809 = vld [vmem:[%s12 + $0xb0] sm:$0xff]
    %v8810 = vld [vmem:[%s12 + $0xb8] sm:$0xff]
    %v8811 = vld [vmem:[%s12 + $0xc0] sm:$0xff]
    %v8812 = vld [vmem:[%s12 + $0xc8] sm:$0xff]
    %v8813 = vld [vmem:[%s12 + $0xd0] sm:$0xff]
    %v8814 = vld [vmem:[%s12 + $0xd8] sm:$0xff]
    %v8815 = vld [vmem:[%s12 + $0xe0] sm:$0xff]
    %v8816 = vld [vmem:[%s12 + $0xe8] sm:$0xff]
    %v8817 = vld [vmem:[%s12 + $0xf0] sm:$0xff]
    %v8818 = vld [vmem:[%s12 + $0xf8] sm:$0xff]
    %v8819 = vld [vmem:[%s13] sm:$0x1]
    %v8821 = vlaneseq
    %v8822 = vshrl.u32 %v8821, 7
    %v8823 = vsub.s32 0, %v8822
    %v8824 = vrot.slane %v8819, %v8823
    %8826 = vmatprep.subr.mxu0 0.0
    %8827 = vmatpush1.msra.mxu0 %v8787
    %8828 = vmatprep.subr.mxu0 0.0
    %8829 = vmatpush1.msra.mxu0 %v8788
    %8830 = vmatprep.subr.mxu0 0.0
    %8831 = vmatpush1.msra.mxu0 %v8789
    %8832 = vmatprep.subr.mxu0 0.0
    %8833 = vmatpush1.msra.mxu0 %v8790
    %8834 = vmatprep.subr.mxu0 0.0
    %8835 = vmatpush1.msra.mxu0 %v8791
    %8836 = vmatprep.subr.mxu0 0.0
    %8837 = vmatpush1.msra.mxu0 %v8792
    %8838 = vmatprep.subr.mxu0 0.0
    %8839 = vmatpush1.msra.mxu0 %v8793
    %8840 = vmatprep.subr.mxu0 0.0
    %8841 = vmatpush1.msra.mxu0 %v8794
    %8842 = vmatprep.subr.mxu0 0.0
    %8843 = vmatpush1.msra.mxu0 %v8795
    %8844 = vmatprep.subr.mxu0 0.0
    %8845 = vmatpush1.msra.mxu0 %v8796
    %8846 = vmatprep.subr.mxu0 0.0
    %8847 = vmatpush1.msra.mxu0 %v8797
    %8848 = vmatprep.subr.mxu0 0.0
    %8849 = vmatpush1.msra.mxu0 %v8798
    %8850 = vmatprep.subr.mxu0 0.0
    %8851 = vmatpush1.msra.mxu0 %v8799
    %8852 = vmatprep.subr.mxu0 0.0
    %8853 = vmatpush1.msra.mxu0 %v8800
    %8854 = vmatprep.subr.mxu0 0.0
    %8855 = vmatpush1.msra.mxu0 %v8801
    %8856 = vmatprep.subr.mxu0 0.0
    %8857 = vmatpush1.msra.mxu0 %v8802
    %8858 = vmatprep.subr.mxu0 0.0
    %8859 = vmatpush1.msra.mxu0 %v8803
    %8860 = vmatprep.subr.mxu0 0.0
    %8861 = vmatpush1.msra.mxu0 %v8804
    %8862 = vmatprep.subr.mxu0 0.0
    %8863 = vmatpush1.msra.mxu0 %v8805
    %8864 = vmatprep.subr.mxu0 0.0
    %8865 = vmatpush1.msra.mxu0 %v8806
    %8866 = vmatprep.subr.mxu0 0.0
    %8867 = vmatpush1.msra.mxu0 %v8807
    %8868 = vmatprep.subr.mxu0 0.0
    %8869 = vmatpush1.msra.mxu0 %v8808
    %8870 = vmatprep.subr.mxu0 0.0
    %8871 = vmatpush1.msra.mxu0 %v8809
    %8872 = vmatprep.subr.mxu0 0.0
    %8873 = vmatpush1.msra.mxu0 %v8810
    %8874 = vmatprep.subr.mxu0 0.0
    %8875 = vmatpush1.msra.mxu0 %v8811
    %8876 = vmatprep.subr.mxu0 0.0
    %8877 = vmatpush1.msra.mxu0 %v8812
    %8878 = vmatprep.subr.mxu0 0.0
    %8879 = vmatpush1.msra.mxu0 %v8813
    %8880 = vmatprep.subr.mxu0 0.0
    %8881 = vmatpush1.msra.mxu0 %v8814
    %8882 = vmatprep.subr.mxu0 0.0
    %8883 = vmatpush1.msra.mxu0 %v8815
    %8884 = vmatprep.subr.mxu0 0.0
    %8885 = vmatpush1.msra.mxu0 %v8816
    %8886 = vmatprep.subr.mxu0 0.0
    %8887 = vmatpush1.msra.mxu0 %v8817
    %8888 = vmatprep.subr.mxu0 0.0
    %8889 = vmatpush1.msra.mxu0 %v8818
    %8890 = vmatprep.mubr.f32.mxu0 %v8780
    %8891 = vmatmul.mubr.f32.gmra.mrb[0].mxu0 %v8779
    %v8892 = vpop.f32.mrb[0].mxu0
    %v8893 = vadd.f32 %v8824, %v8892
    %v8894 = vpop.f32.mrb[0].mxu0
    %8895 = vmatprep.mubr.f32.mxu0 %v8782
    %8896 = vmatmul.mubr.f32.gmra.mrb[0].mxu0 %v8781
    %v8897 = vpop.f32.mrb[0].mxu0
    %v8898 = vadd.f32 %v8824, %v8897
    %v8899 = vpop.f32.mrb[0].mxu0
    %8900 = vmatprep.mubr.f32.mxu0 %v8784
    %8901 = vmatmul.mubr.f32.gmra.mrb[0].mxu0 %v8783
    %v8902 = vpop.f32.mrb[0].mxu0
    %v8903 = vadd.f32 %v8824, %v8902
    %v8904 = vpop.f32.mrb[0].mxu0
    %8905 = vmatprep.mubr.f32.mxu0 %v8786
    %8906 = vmatmul.mubr.f32.gmra.mrb[0].mxu0 %v8785
    %v8907 = vpop.f32.mrb[0].mxu0
    %v8908 = vadd.f32 %v8824, %v8907
    %v8909 = vpop.f32.mrb[0].mxu0
    %8910 = vdwg.mxu0
    %v8911 = vadd.f32 %v8364, %v8893
    %v8912 = vadd.f32 %v8365, %v8898
    %v8913 = vadd.f32 %v8366, %v8903
    %v8914 = vadd.f32 %v8367, %v8908
    %8915 = vst.msk [vmem:[#allocation7] sm:$0xff] %vm80, %v8911
    %8916 = vst.msk [vmem:[#allocation7 + $0x8] sm:$0xff] %vm80, %v8912
    %8917 = vst.msk [vmem:[#allocation7 + $0x10] sm:$0xff] %vm80, %v8913
    %8918 = vst.msk [vmem:[#allocation7 + $0x18] sm:$0xff] %vm80, %v8914
    // Predicated region
    $region66: #{tpu_custom_call.1} parent=1 // pred_check
      _
    $region67: #{tpu_custom_call.1} parent=1 // pred_check_branch
      %8920 = sbr.rel (0) target = $region69
    $region68: #{tpu_custom_call.1} parent=1 // pred_region
      %s8922 = ssub.s32 512, 512
      %8923 = vsyncadd [#allocation4], %s8922
      %s8924 = sshll.u32 [#allocation7], 4
      %s8925 = int_to_ptr.vmem [resolvable:$true] %s8924
      %8930 = dma.vmem_to_hbm [thread:$0]  %s8925, 512, %s14, [#allocation4], 128, 128, 8
    $region69: #{tpu_custom_call.1} parent=1 // pred_fallthru
      _
    // Predicated region
    $region70: #{tpu_custom_call.1} parent=1 // pred_check
      _
    $region71: #{tpu_custom_call.1} parent=1 // pred_check_branch
      %8932 = sbr.rel (0) target = $region73
    $region72: #{tpu_custom_call.1} parent=1 // pred_region
      %8933 = dma.done [#allocation4], 512
    $region73: #{tpu_custom_call.1} parent=1 // pred_fallthru
      _
    %8934 = vsyncpa [#allocation3], 1
    %8935 = vsyncpa [#allocation6], 1
    %8936 = vsyncpa [#allocation4], 1

</llo_original>
